<compile_context>
chip_gen: v6e
topology: v6e:2x2x1
jax: 0.10.0
libtpu: 0.0.40
codegen_flags: <defaults>
</compile_context>

<pallas_src>
import jax
import jax.numpy as jnp
from jax.experimental import pallas as pl
from jax.experimental.pallas import tpu as pltpu

EPS = 1e-5  # nn.BatchNorm2d default eps


def _relu_bn(h, g_ref, beta_ref):
    """ReLU -> train-mode BatchNorm (biased variance), all in f32. h: [M, C]."""
    h = jnp.maximum(h, 0.0)
    mean = jnp.mean(h, axis=0, keepdims=True)
    var = jnp.mean(jnp.square(h - mean), axis=0, keepdims=True)
    return (h - mean) * jax.lax.rsqrt(var + EPS) * g_ref[...] + beta_ref[...]


def bridge_fused_kernel(x_ref,
                        w1_ref, b1_ref, g1_ref, be1_ref,
                        w2_ref, b2_ref, g2_ref, be2_ref,
                        w3_ref, b3_ref, g3_ref, be3_ref,
                        wl_ref, bl_ref,
                        out_ref,
                        acc_ref, flat_ref):
    k = pl.program_id(0)

    @pl.when(k == 0)
    def _init():
        acc_ref[...] = jnp.zeros_like(acc_ref)

    # conv1 partial sum over the K (input-channel) grid axis: bf16 x bf16 -> f32 acc.
    acc_ref[...] += jnp.dot(x_ref[...], w1_ref[...],
                            preferred_element_type=jnp.float32)

    @pl.when(k == pl.num_programs(0) - 1)
    def _finish():
        B = out_ref.shape[0]
        M = acc_ref.shape[0]
        P = M // B                # number of pixels (49)
        C3 = w3_ref.shape[1]      # 32

        # conv1 bias + ReLU + BN (f32)
        h = _relu_bn(acc_ref[...] + b1_ref[...], g1_ref, be1_ref)          # [M,1024]
        # conv2 -> ReLU -> BN
        h = jnp.dot(h.astype(jnp.bfloat16), w2_ref[...],
                    preferred_element_type=jnp.float32) + b2_ref[...]
        h = _relu_bn(h, g2_ref, be2_ref)                                    # [M,128]
        # conv3 -> ReLU -> BN
        h = jnp.dot(h.astype(jnp.bfloat16), w3_ref[...],
                    preferred_element_type=jnp.float32) + b3_ref[...]
        h = _relu_bn(h, g3_ref, be3_ref)                                    # [M,32]

        # Regroup to the Linear input layout: flat[b, p*32 + c] = h[p*B + b, c].
        # Rows of pixel p are contiguous (pixel-major ordering), so this is 49 static
        # slice copies inside VMEM (torch's channel-major flatten was absorbed into
        # the pre-permuted Linear weight wl_perm).
        for p in range(P):
            flat_ref[:, p * C3:(p + 1) * C3] = h[p * B:(p + 1) * B, :]

        # Fused Linear(1568, 768)
        out_ref[...] = (jnp.dot(flat_ref[...].astype(jnp.bfloat16), wl_ref[...],
                                preferred_element_type=jnp.float32)
                        + bl_ref[...]).astype(out_ref.dtype)


def resnet50_bridge_forward(x_nchw, params, *, tk=512):
    B, C, H, W = x_nchw.shape
    P = H * W
    M = B * P
    assert C % tk == 0
    kt = C // tk

    # NCHW -> channels-last, pixel-major rows: row = (h*W + w)*B + b. Cast to bf16
    # (activation feeds a bf16 MXU matmul anyway) to also halve its HBM traffic.
    x_flat = jnp.transpose(x_nchw, (2, 3, 0, 1)).reshape(M, C).astype(jnp.bfloat16)

    def const(shape):
        return pl.BlockSpec(shape, lambda k: (0, 0))

    grid_spec = pltpu.PrefetchScalarGridSpec(
        num_scalar_prefetch=0,
        grid=(kt,),
        in_specs=[
            pl.BlockSpec((M, tk), lambda k: (0, k)),      # x   (streamed over K)
            pl.BlockSpec((tk, 1024), lambda k: (k, 0)),   # w1  (streamed over K)
            const((1, 1024)), const((1, 1024)), const((1, 1024)),   # b1, g1, be1
            const((1024, 128)),                                      # w2
            const((1, 128)), const((1, 128)), const((1, 128)),       # b2, g2, be2
            const((128, 32)),                                        # w3
            const((1, 32)), const((1, 32)), const((1, 32)),          # b3, g3, be3
            const((P * 32, 768)),                                    # wl_perm
            const((1, 768)),                                         # bl
        ],
        out_specs=pl.BlockSpec((B, 768), lambda k: (0, 0)),
        scratch_shapes=[
            pltpu.VMEM((M, 1024), jnp.float32),    # conv1 f32 accumulator
            pltpu.VMEM((B, P * 32), jnp.float32),  # flatten buffer [B, 1568]
        ],
    )

    return pl.pallas_call(
        bridge_fused_kernel,
        out_shape=jax.ShapeDtypeStruct((B, 768), jnp.float32),
        grid_spec=grid_spec,
        compiler_params=pltpu.CompilerParams(
            dimension_semantics=("arbitrary",),
            vmem_limit_bytes=32 << 20,   # well under v7x's 64 MiB per-core VMEM
        ),
    )(x_flat,
      params["w1"], params["b1"], params["g1"], params["be1"],
      params["w2"], params["b2"], params["g2"], params["be2"],
      params["w3"], params["b3"], params["g3"], params["be3"],
      params["wl_perm"], params["bl"])


def build_params(key):
    """Deterministic synthetic parameters matching the torch module's shapes.
    Matmul weights are stored as bf16 (streamed to the kernel as bf16)."""
    ks = jax.random.split(key, 16)

    def conv_w(k, cin, cout):   # torch Conv2d weight [cout,cin,1,1] stored as [cin,cout]
        w = jax.random.normal(k, (cin, cout), jnp.float32) / jnp.sqrt(cin)
        return w.astype(jnp.bfloat16)

    def vec(k, c, scale):
        return (scale * jax.random.normal(k, (1, c), jnp.float32)).astype(jnp.float32)

    params = {
        "w1": conv_w(ks[0], 2048, 1024), "b1": vec(ks[1], 1024, 0.02),
        "g1": 1.0 + vec(ks[2], 1024, 0.1), "be1": vec(ks[3], 1024, 0.05),
        "w2": conv_w(ks[4], 1024, 128),  "b2": vec(ks[5], 128, 0.02),
        "g2": 1.0 + vec(ks[6], 128, 0.1), "be2": vec(ks[7], 128, 0.05),
        "w3": conv_w(ks[8], 128, 32),    "b3": vec(ks[9], 32, 0.02),
        "g3": 1.0 + vec(ks[10], 32, 0.1), "be3": vec(ks[11], 32, 0.05),
    }
    # torch nn.Linear(1568, 768): weight [768, 1568] (input index = c*49 + p), bias [768].
    wl_torch = (jax.random.normal(ks[12], (768, 1568), jnp.float32)
                / jnp.sqrt(1568.0)).astype(jnp.float32)
    params["wl_torch"] = wl_torch
    params["bl"] = vec(ks[13], 768, 0.02)
    # Permute columns from torch's channel-major flatten (c*49+p) to our (p*32+c) order,
    # stored as bf16 for the kernel.
    params["wl_perm"] = (wl_torch.T.reshape(32, 49, 768)
                         .transpose(1, 0, 2).reshape(1568, 768)).astype(jnp.bfloat16)
    return params


def reference_forward(x_nchw, p):
    """Pure-JAX f32 reference following the torch NCHW semantics exactly, using the
    same (bf16-rounded) parameter and input values the kernel consumes, so the check
    isolates kernel structure/math rather than bf16 quantization of the params."""
    B = x_nchw.shape[0]
    x = x_nchw.astype(jnp.bfloat16).astype(jnp.float32)
    w1 = p["w1"].astype(jnp.float32)
    w2 = p["w2"].astype(jnp.float32)
    w3 = p["w3"].astype(jnp.float32)
    wl = p["wl_torch"].astype(jnp.bfloat16).astype(jnp.float32)

    def conv_relu_bn(h, w, b, g, be):
        h = jnp.einsum("bchw,cd->bdhw", h, w) + b.reshape(1, -1, 1, 1)
        h = jnp.maximum(h, 0.0)
        mean = jnp.mean(h, axis=(0, 2, 3), keepdims=True)
        var = jnp.mean(jnp.square(h - mean), axis=(0, 2, 3), keepdims=True)
        return (h - mean) / jnp.sqrt(var + EPS) * g.reshape(1, -1, 1, 1) + be.reshape(1, -1, 1, 1)

    h = conv_relu_bn(x, w1, p["b1"], p["g1"], p["be1"])
    h = conv_relu_bn(h, w2, p["b2"], p["g2"], p["be2"])
    h = conv_relu_bn(h, w3, p["b3"], p["g3"], p["be3"])
    flat = h.reshape(B, -1)                 # torch nn.Flatten: channel-major
    return flat @ wl.T + p["bl"]            # torch nn.Linear


if __name__ == "__main__":
    # TODO(synk): checkpoint loading / .share_memory() are host-side concerns with no
    # kernel equivalent; parameters are initialized deterministically in-script instead.
    key = jax.random.PRNGKey(0)
    k_params, k_x = jax.random.split(key)
    params = build_params(k_params)

    B, H, W = 2, 7, 7  # spatial must be 7x7 so that Flatten -> 32*7*7 = 1568
    x = jax.random.normal(k_x, (B, 2048, H, W), jnp.float32)

    out = jax.jit(resnet50_bridge_forward)(x, params)
    out = jax.block_until_ready(out)
    assert out.shape == (B, 768) and out.dtype == jnp.float32

    ref = reference_forward(x, params)
    # bf16 MXU math (f32 accumulation) vs f32 reference: small drift expected.
    assert jnp.allclose(out, ref, rtol=2e-2, atol=2e-2), (
        f"max abs diff {jnp.max(jnp.abs(out - ref))}")

    print("KERNEL_OK")
</pallas_src>

<mosaic_0001>
module attributes {stable_mosaic.version = 11 : i64} {
  func.func @bridge_fused_kernel(%arg0: i32, %arg1: memref<98x512xbf16, #tpu.memory_space<vmem>>, %arg2: memref<512x1024xbf16, #tpu.memory_space<vmem>>, %arg3: memref<1x1024xf32, #tpu.memory_space<vmem>>, %arg4: memref<1x1024xf32, #tpu.memory_space<vmem>>, %arg5: memref<1x1024xf32, #tpu.memory_space<vmem>>, %arg6: memref<1024x128xbf16, #tpu.memory_space<vmem>>, %arg7: memref<1x128xf32, #tpu.memory_space<vmem>>, %arg8: memref<1x128xf32, #tpu.memory_space<vmem>>, %arg9: memref<1x128xf32, #tpu.memory_space<vmem>>, %arg10: memref<128x32xbf16, #tpu.memory_space<vmem>>, %arg11: memref<1x32xf32, #tpu.memory_space<vmem>>, %arg12: memref<1x32xf32, #tpu.memory_space<vmem>>, %arg13: memref<1x32xf32, #tpu.memory_space<vmem>>, %arg14: memref<1568x768xbf16, #tpu.memory_space<vmem>>, %arg15: memref<1x768xf32, #tpu.memory_space<vmem>>, %arg16: memref<2x768xf32, #tpu.memory_space<vmem>>, %arg17: memref<98x1024xf32, #tpu.memory_space<vmem>>, %arg18: memref<2x1568xf32, #tpu.memory_space<vmem>>) attributes {dimension_semantics = [#tpu.dimension_semantics<arbitrary>], iteration_bounds = array<i64: 4>, scalar_prefetch = 0 : i64, scratch_operands = 2 : i64, tpu.core_type = #tpu.core_type<tc>, window_params = [{transform_indices = @transform_0, window_bounds = array<i64: 98, 512>}, {transform_indices = @transform_1, window_bounds = array<i64: 512, 1024>}, {pipeline_mode = #tpu.pipeline_mode<synchronous>, transform_indices = @transform_2, window_bounds = array<i64: 1, 1024>}, {pipeline_mode = #tpu.pipeline_mode<synchronous>, transform_indices = @transform_3, window_bounds = array<i64: 1, 1024>}, {pipeline_mode = #tpu.pipeline_mode<synchronous>, transform_indices = @transform_4, window_bounds = array<i64: 1, 1024>}, {pipeline_mode = #tpu.pipeline_mode<synchronous>, transform_indices = @transform_5, window_bounds = array<i64: 1024, 128>}, {pipeline_mode = #tpu.pipeline_mode<synchronous>, transform_indices = @transform_6, window_bounds = array<i64: 1, 128>}, {pipeline_mode = #tpu.pipeline_mode<synchronous>, transform_indices = @transform_7, window_bounds = array<i64: 1, 128>}, {pipeline_mode = #tpu.pipeline_mode<synchronous>, transform_indices = @transform_8, window_bounds = array<i64: 1, 128>}, {pipeline_mode = #tpu.pipeline_mode<synchronous>, transform_indices = @transform_9, window_bounds = array<i64: 128, 32>}, {pipeline_mode = #tpu.pipeline_mode<synchronous>, transform_indices = @transform_10, window_bounds = array<i64: 1, 32>}, {pipeline_mode = #tpu.pipeline_mode<synchronous>, transform_indices = @transform_11, window_bounds = array<i64: 1, 32>}, {pipeline_mode = #tpu.pipeline_mode<synchronous>, transform_indices = @transform_12, window_bounds = array<i64: 1, 32>}, {pipeline_mode = #tpu.pipeline_mode<synchronous>, transform_indices = @transform_13, window_bounds = array<i64: 1568, 768>}, {pipeline_mode = #tpu.pipeline_mode<synchronous>, transform_indices = @transform_14, window_bounds = array<i64: 1, 768>}, {pipeline_mode = #tpu.pipeline_mode<synchronous>, transform_indices = @transform_15, window_bounds = array<i64: 2, 768>}]} {
    %c0_i32 = arith.constant 0 : i32
    %0 = arith.cmpi eq, %arg0, %c0_i32 : i32
    %1 = arith.extui %0 : i1 to i32
    %c0_i32_0 = arith.constant 0 : i32
    %2 = arith.cmpi ne, %1, %c0_i32_0 : i32
    scf.if %2 {
      %cst_9 = arith.constant 0.000000e+00 : f32
      %12 = vector.broadcast %cst_9 : f32 to vector<98x1024xf32>
      %c0_10 = arith.constant 0 : index
      %c0_11 = arith.constant 0 : index
      %13 = vector.load %arg17[%c0_10, %c0_11] : memref<98x1024xf32, #tpu.memory_space<vmem>>, vector<98x1024xf32>
      tpu.vector_store %arg17[%c0_10, %c0_11], %12 {strides = array<i32>} : memref<98x1024xf32, #tpu.memory_space<vmem>>, vector<98x1024xf32>,
    } else {
    }
    %c0 = arith.constant 0 : index
    %c0_1 = arith.constant 0 : index
    %3 = vector.load %arg17[%c0, %c0_1] : memref<98x1024xf32, #tpu.memory_space<vmem>>, vector<98x1024xf32>
    %c0_2 = arith.constant 0 : index
    %c0_3 = arith.constant 0 : index
    %4 = vector.load %arg1[%c0_2, %c0_3] : memref<98x512xbf16, #tpu.memory_space<vmem>>, vector<98x512xbf16>
    %c0_4 = arith.constant 0 : index
    %c0_5 = arith.constant 0 : index
    %5 = vector.load %arg2[%c0_4, %c0_5] : memref<512x1024xbf16, #tpu.memory_space<vmem>>, vector<512x1024xbf16>
    %cst = arith.constant dense<0.000000e+00> : vector<98x1024xf32>
    %6 = tpu.matmul %4, %5, %cst {dimension_numbers = #tpu.dot_dimension_numbers<[1], [0], [0], [1], [0, 0, 1, 1], [], []>} : vector<98x512xbf16>, vector<512x1024xbf16>, vector<98x1024xf32> -> vector<98x1024xf32>
    %7 = arith.addf %3, %6 : vector<98x1024xf32>
    %c0_6 = arith.constant 0 : index
    %c0_7 = arith.constant 0 : index
    %8 = vector.load %arg17[%c0_6, %c0_7] : memref<98x1024xf32, #tpu.memory_space<vmem>>, vector<98x1024xf32>
    tpu.vector_store %arg17[%c0_6, %c0_7], %7 {strides = array<i32>} : memref<98x1024xf32, #tpu.memory_space<vmem>>, vector<98x1024xf32>,
    %c3_i32 = arith.constant 3 : i32
    %9 = arith.cmpi eq, %arg0, %c3_i32 : i32
    %10 = arith.extui %9 : i1 to i32
    %c0_i32_8 = arith.constant 0 : i32
    %11 = arith.cmpi ne, %10, %c0_i32_8 : i32
    scf.if %11 {
      %c0_9 = arith.constant 0 : index
      %c0_10 = arith.constant 0 : index
      %12 = vector.load %arg17[%c0_9, %c0_10] : memref<98x1024xf32, #tpu.memory_space<vmem>>, vector<98x1024xf32>
      %c0_11 = arith.constant 0 : index
      %c0_12 = arith.constant 0 : index
      %13 = vector.load %arg3[%c0_11, %c0_12] : memref<1x1024xf32, #tpu.memory_space<vmem>>, vector<1x1024xf32>
      %14 = vector.broadcast %13 : vector<1x1024xf32> to vector<98x1024xf32>
      %15 = arith.addf %12, %14 : vector<98x1024xf32>
      %cst_13 = arith.constant 0.000000e+00 : f32
      %16 = vector.broadcast %cst_13 : f32 to vector<98x1024xf32>
      %17 = arith.maximumf %15, %16 : vector<98x1024xf32>
      %cst_14 = arith.constant dense<0.000000e+00> : vector<1024xf32>
      %18 = vector.multi_reduction <add>, %17, %cst_14 [0] : vector<98x1024xf32> to vector<1024xf32>
      %19 = vector.shape_cast %18 : vector<1024xf32> to vector<1x1024xf32>
      %cst_15 = arith.constant 9.800000e+01 : f32
      %20 = vector.broadcast %cst_15 : f32 to vector<1x1024xf32>
      %21 = arith.divf %19, %20 : vector<1x1024xf32>
      %22 = vector.broadcast %21 : vector<1x1024xf32> to vector<98x1024xf32>
      %23 = arith.subf %17, %22 : vector<98x1024xf32>
      %24 = arith.mulf %23, %23 : vector<98x1024xf32>
      %cst_16 = arith.constant dense<0.000000e+00> : vector<1024xf32>
      %25 = vector.multi_reduction <add>, %24, %cst_16 [0] : vector<98x1024xf32> to vector<1024xf32>
      %26 = vector.shape_cast %25 : vector<1024xf32> to vector<1x1024xf32>
      %cst_17 = arith.constant 9.800000e+01 : f32
      %27 = vector.broadcast %cst_17 : f32 to vector<1x1024xf32>
      %28 = arith.divf %26, %27 : vector<1x1024xf32>
      %29 = vector.broadcast %21 : vector<1x1024xf32> to vector<98x1024xf32>
      %30 = arith.subf %17, %29 : vector<98x1024xf32>
      %cst_18 = arith.constant 9.99999974E-6 : f32
      %31 = vector.broadcast %cst_18 : f32 to vector<1x1024xf32>
      %32 = arith.addf %28, %31 : vector<1x1024xf32>
      %33 = math.rsqrt %32 : vector<1x1024xf32>
      %34 = vector.broadcast %33 : vector<1x1024xf32> to vector<98x1024xf32>
      %35 = arith.mulf %30, %34 : vector<98x1024xf32>
      %c0_19 = arith.constant 0 : index
      %c0_20 = arith.constant 0 : index
      %36 = vector.load %arg4[%c0_19, %c0_20] : memref<1x1024xf32, #tpu.memory_space<vmem>>, vector<1x1024xf32>
      %37 = vector.broadcast %36 : vector<1x1024xf32> to vector<98x1024xf32>
      %38 = arith.mulf %35, %37 : vector<98x1024xf32>
      %c0_21 = arith.constant 0 : index
      %c0_22 = arith.constant 0 : index
      %39 = vector.load %arg5[%c0_21, %c0_22] : memref<1x1024xf32, #tpu.memory_space<vmem>>, vector<1x1024xf32>
      %40 = vector.broadcast %39 : vector<1x1024xf32> to vector<98x1024xf32>
      %41 = arith.addf %38, %40 : vector<98x1024xf32>
      %42 = arith.truncf %41 : vector<98x1024xf32> to vector<98x1024xbf16>
      %c0_23 = arith.constant 0 : index
      %c0_24 = arith.constant 0 : index
      %43 = vector.load %arg6[%c0_23, %c0_24] : memref<1024x128xbf16, #tpu.memory_space<vmem>>, vector<1024x128xbf16>
      %cst_25 = arith.constant dense<0.000000e+00> : vector<98x128xf32>
      %44 = tpu.matmul %42, %43, %cst_25 {dimension_numbers = #tpu.dot_dimension_numbers<[1], [0], [0], [1], [0, 0, 1, 1], [], []>} : vector<98x1024xbf16>, vector<1024x128xbf16>, vector<98x128xf32> -> vector<98x128xf32>
      %c0_26 = arith.constant 0 : index
      %c0_27 = arith.constant 0 : index
      %45 = vector.load %arg7[%c0_26, %c0_27] : memref<1x128xf32, #tpu.memory_space<vmem>>, vector<1x128xf32>
      %46 = vector.broadcast %45 : vector<1x128xf32> to vector<98x128xf32>
      %47 = arith.addf %44, %46 : vector<98x128xf32>
      %cst_28 = arith.constant 0.000000e+00 : f32
      %48 = vector.broadcast %cst_28 : f32 to vector<98x128xf32>
      %49 = arith.maximumf %47, %48 : vector<98x128xf32>
      %cst_29 = arith.constant dense<0.000000e+00> : vector<128xf32>
      %50 = vector.multi_reduction <add>, %49, %cst_29 [0] : vector<98x128xf32> to vector<128xf32>
      %51 = vector.shape_cast %50 : vector<128xf32> to vector<1x128xf32>
      %cst_30 = arith.constant 9.800000e+01 : f32
      %52 = vector.broadcast %cst_30 : f32 to vector<1x128xf32>
      %53 = arith.divf %51, %52 : vector<1x128xf32>
      %54 = vector.broadcast %53 : vector<1x128xf32> to vector<98x128xf32>
      %55 = arith.subf %49, %54 : vector<98x128xf32>
      %56 = arith.mulf %55, %55 : vector<98x128xf32>
      %cst_31 = arith.constant dense<0.000000e+00> : vector<128xf32>
      %57 = vector.multi_reduction <add>, %56, %cst_31 [0] : vector<98x128xf32> to vector<128xf32>
      %58 = vector.shape_cast %57 : vector<128xf32> to vector<1x128xf32>
      %cst_32 = arith.constant 9.800000e+01 : f32
      %59 = vector.broadcast %cst_32 : f32 to vector<1x128xf32>
      %60 = arith.divf %58, %59 : vector<1x128xf32>
      %61 = vector.broadcast %53 : vector<1x128xf32> to vector<98x128xf32>
      %62 = arith.subf %49, %61 : vector<98x128xf32>
      %cst_33 = arith.constant 9.99999974E-6 : f32
      %63 = vector.broadcast %cst_33 : f32 to vector<1x128xf32>
      %64 = arith.addf %60, %63 : vector<1x128xf32>
      %65 = math.rsqrt %64 : vector<1x128xf32>
      %66 = vector.broadcast %65 : vector<1x128xf32> to vector<98x128xf32>
      %67 = arith.mulf %62, %66 : vector<98x128xf32>
      %c0_34 = arith.constant 0 : index
      %c0_35 = arith.constant 0 : index
      %68 = vector.load %arg8[%c0_34, %c0_35] : memref<1x128xf32, #tpu.memory_space<vmem>>, vector<1x128xf32>
      %69 = vector.broadcast %68 : vector<1x128xf32> to vector<98x128xf32>
      %70 = arith.mulf %67, %69 : vector<98x128xf32>
      %c0_36 = arith.constant 0 : index
      %c0_37 = arith.constant 0 : index
      %71 = vector.load %arg9[%c0_36, %c0_37] : memref<1x128xf32, #tpu.memory_space<vmem>>, vector<1x128xf32>
      %72 = vector.broadcast %71 : vector<1x128xf32> to vector<98x128xf32>
      %73 = arith.addf %70, %72 : vector<98x128xf32>
      %74 = arith.truncf %73 : vector<98x128xf32> to vector<98x128xbf16>
      %c0_38 = arith.constant 0 : index
      %c0_39 = arith.constant 0 : index
      %75 = vector.load %arg10[%c0_38, %c0_39] : memref<128x32xbf16, #tpu.memory_space<vmem>>, vector<128x32xbf16>
      %cst_40 = arith.constant dense<0.000000e+00> : vector<98x32xf32>
      %76 = tpu.matmul %74, %75, %cst_40 {dimension_numbers = #tpu.dot_dimension_numbers<[1], [0], [0], [1], [0, 0, 1, 1], [], []>} : vector<98x128xbf16>, vector<128x32xbf16>, vector<98x32xf32> -> vector<98x32xf32>
      %c0_41 = arith.constant 0 : index
      %c0_42 = arith.constant 0 : index
      %77 = vector.load %arg11[%c0_41, %c0_42] : memref<1x32xf32, #tpu.memory_space<vmem>>, vector<1x32xf32>
      %78 = vector.broadcast %77 : vector<1x32xf32> to vector<98x32xf32>
      %79 = arith.addf %76, %78 : vector<98x32xf32>
      %cst_43 = arith.constant 0.000000e+00 : f32
      %80 = vector.broadcast %cst_43 : f32 to vector<98x32xf32>
      %81 = arith.maximumf %79, %80 : vector<98x32xf32>
      %cst_44 = arith.constant dense<0.000000e+00> : vector<32xf32>
      %82 = vector.multi_reduction <add>, %81, %cst_44 [0] : vector<98x32xf32> to vector<32xf32>
      %83 = vector.shape_cast %82 : vector<32xf32> to vector<1x32xf32>
      %cst_45 = arith.constant 9.800000e+01 : f32
      %84 = vector.broadcast %cst_45 : f32 to vector<1x32xf32>
      %85 = arith.divf %83, %84 : vector<1x32xf32>
      %86 = vector.broadcast %85 : vector<1x32xf32> to vector<98x32xf32>
      %87 = arith.subf %81, %86 : vector<98x32xf32>
      %88 = arith.mulf %87, %87 : vector<98x32xf32>
      %cst_46 = arith.constant dense<0.000000e+00> : vector<32xf32>
      %89 = vector.multi_reduction <add>, %88, %cst_46 [0] : vector<98x32xf32> to vector<32xf32>
      %90 = vector.shape_cast %89 : vector<32xf32> to vector<1x32xf32>
      %cst_47 = arith.constant 9.800000e+01 : f32
      %91 = vector.broadcast %cst_47 : f32 to vector<1x32xf32>
      %92 = arith.divf %90, %91 : vector<1x32xf32>
      %93 = vector.broadcast %85 : vector<1x32xf32> to vector<98x32xf32>
      %94 = arith.subf %81, %93 : vector<98x32xf32>
      %cst_48 = arith.constant 9.99999974E-6 : f32
      %95 = vector.broadcast %cst_48 : f32 to vector<1x32xf32>
      %96 = arith.addf %92, %95 : vector<1x32xf32>
      %97 = math.rsqrt %96 : vector<1x32xf32>
      %98 = vector.broadcast %97 : vector<1x32xf32> to vector<98x32xf32>
      %99 = arith.mulf %94, %98 : vector<98x32xf32>
      %c0_49 = arith.constant 0 : index
      %c0_50 = arith.constant 0 : index
      %100 = vector.load %arg12[%c0_49, %c0_50] : memref<1x32xf32, #tpu.memory_space<vmem>>, vector<1x32xf32>
      %101 = vector.broadcast %100 : vector<1x32xf32> to vector<98x32xf32>
      %102 = arith.mulf %99, %101 : vector<98x32xf32>
      %c0_51 = arith.constant 0 : index
      %c0_52 = arith.constant 0 : index
      %103 = vector.load %arg13[%c0_51, %c0_52] : memref<1x32xf32, #tpu.memory_space<vmem>>, vector<1x32xf32>
      %104 = vector.broadcast %103 : vector<1x32xf32> to vector<98x32xf32>
      %105 = arith.addf %102, %104 : vector<98x32xf32>
      %106 = vector.extract_strided_slice %105 {offsets = [0, 0], sizes = [2, 32], strides = [1, 1]} : vector<98x32xf32> to vector<2x32xf32>
      %c0_53 = arith.constant 0 : index
      %c0_54 = arith.constant 0 : index
      %107 = vector.load %arg18[%c0_53, %c0_54] : memref<2x1568xf32, #tpu.memory_space<vmem>>, vector<2x32xf32>
      tpu.vector_store %arg18[%c0_53, %c0_54], %106 {strides = array<i32>} : memref<2x1568xf32, #tpu.memory_space<vmem>>, vector<2x32xf32>,
      %108 = vector.extract_strided_slice %105 {offsets = [2, 0], sizes = [2, 32], strides = [1, 1]} : vector<98x32xf32> to vector<2x32xf32>
      %c0_55 = arith.constant 0 : index
      %c32 = arith.constant 32 : index
      %109 = vector.load %arg18[%c0_55, %c32] : memref<2x1568xf32, #tpu.memory_space<vmem>>, vector<2x32xf32>
      tpu.vector_store %arg18[%c0_55, %c32], %108 {strides = array<i32>} : memref<2x1568xf32, #tpu.memory_space<vmem>>, vector<2x32xf32>,
      %110 = vector.extract_strided_slice %105 {offsets = [4, 0], sizes = [2, 32], strides = [1, 1]} : vector<98x32xf32> to vector<2x32xf32>
      %c0_56 = arith.constant 0 : index
      %c64 = arith.constant 64 : index
      %111 = vector.load %arg18[%c0_56, %c64] : memref<2x1568xf32, #tpu.memory_space<vmem>>, vector<2x32xf32>
      tpu.vector_store %arg18[%c0_56, %c64], %110 {strides = array<i32>} : memref<2x1568xf32, #tpu.memory_space<vmem>>, vector<2x32xf32>,
      %112 = vector.extract_strided_slice %105 {offsets = [6, 0], sizes = [2, 32], strides = [1, 1]} : vector<98x32xf32> to vector<2x32xf32>
      %c0_57 = arith.constant 0 : index
      %c96 = arith.constant 96 : index
      %113 = vector.load %arg18[%c0_57, %c96] : memref<2x1568xf32, #tpu.memory_space<vmem>>, vector<2x32xf32>
      tpu.vector_store %arg18[%c0_57, %c96], %112 {strides = array<i32>} : memref<2x1568xf32, #tpu.memory_space<vmem>>, vector<2x32xf32>,
      %114 = vector.extract_strided_slice %105 {offsets = [8, 0], sizes = [2, 32], strides = [1, 1]} : vector<98x32xf32> to vector<2x32xf32>
      %c0_58 = arith.constant 0 : index
      %c128 = arith.constant 128 : index
      %115 = vector.load %arg18[%c0_58, %c128] : memref<2x1568xf32, #tpu.memory_space<vmem>>, vector<2x32xf32>
      tpu.vector_store %arg18[%c0_58, %c128], %114 {strides = array<i32>} : memref<2x1568xf32, #tpu.memory_space<vmem>>, vector<2x32xf32>,
      %116 = vector.extract_strided_slice %105 {offsets = [10, 0], sizes = [2, 32], strides = [1, 1]} : vector<98x32xf32> to vector<2x32xf32>
      %c0_59 = arith.constant 0 : index
      %c160 = arith.constant 160 : index
      %117 = vector.load %arg18[%c0_59, %c160] : memref<2x1568xf32, #tpu.memory_space<vmem>>, vector<2x32xf32>
      tpu.vector_store %arg18[%c0_59, %c160], %116 {strides = array<i32>} : memref<2x1568xf32, #tpu.memory_space<vmem>>, vector<2x32xf32>,
      %118 = vector.extract_strided_slice %105 {offsets = [12, 0], sizes = [2, 32], strides = [1, 1]} : vector<98x32xf32> to vector<2x32xf32>
      %c0_60 = arith.constant 0 : index
      %c192 = arith.constant 192 : index
      %119 = vector.load %arg18[%c0_60, %c192] : memref<2x1568xf32, #tpu.memory_space<vmem>>, vector<2x32xf32>
      tpu.vector_store %arg18[%c0_60, %c192], %118 {strides = array<i32>} : memref<2x1568xf32, #tpu.memory_space<vmem>>, vector<2x32xf32>,
      %120 = vector.extract_strided_slice %105 {offsets = [14, 0], sizes = [2, 32], strides = [1, 1]} : vector<98x32xf32> to vector<2x32xf32>
      %c0_61 = arith.constant 0 : index
      %c224 = arith.constant 224 : index
      %121 = vector.load %arg18[%c0_61, %c224] : memref<2x1568xf32, #tpu.memory_space<vmem>>, vector<2x32xf32>
      tpu.vector_store %arg18[%c0_61, %c224], %120 {strides = array<i32>} : memref<2x1568xf32, #tpu.memory_space<vmem>>, vector<2x32xf32>,
      %122 = vector.extract_strided_slice %105 {offsets = [16, 0], sizes = [2, 32], strides = [1, 1]} : vector<98x32xf32> to vector<2x32xf32>
      %c0_62 = arith.constant 0 : index
      %c256 = arith.constant 256 : index
      %123 = vector.load %arg18[%c0_62, %c256] : memref<2x1568xf32, #tpu.memory_space<vmem>>, vector<2x32xf32>
      tpu.vector_store %arg18[%c0_62, %c256], %122 {strides = array<i32>} : memref<2x1568xf32, #tpu.memory_space<vmem>>, vector<2x32xf32>,
      %124 = vector.extract_strided_slice %105 {offsets = [18, 0], sizes = [2, 32], strides = [1, 1]} : vector<98x32xf32> to vector<2x32xf32>
      %c0_63 = arith.constant 0 : index
      %c288 = arith.constant 288 : index
      %125 = vector.load %arg18[%c0_63, %c288] : memref<2x1568xf32, #tpu.memory_space<vmem>>, vector<2x32xf32>
      tpu.vector_store %arg18[%c0_63, %c288], %124 {strides = array<i32>} : memref<2x1568xf32, #tpu.memory_space<vmem>>, vector<2x32xf32>,
      %126 = vector.extract_strided_slice %105 {offsets = [20, 0], sizes = [2, 32], strides = [1, 1]} : vector<98x32xf32> to vector<2x32xf32>
      %c0_64 = arith.constant 0 : index
      %c320 = arith.constant 320 : index
      %127 = vector.load %arg18[%c0_64, %c320] : memref<2x1568xf32, #tpu.memory_space<vmem>>, vector<2x32xf32>
      tpu.vector_store %arg18[%c0_64, %c320], %126 {strides = array<i32>} : memref<2x1568xf32, #tpu.memory_space<vmem>>, vector<2x32xf32>,
      %128 = vector.extract_strided_slice %105 {offsets = [22, 0], sizes = [2, 32], strides = [1, 1]} : vector<98x32xf32> to vector<2x32xf32>
      %c0_65 = arith.constant 0 : index
      %c352 = arith.constant 352 : index
      %129 = vector.load %arg18[%c0_65, %c352] : memref<2x1568xf32, #tpu.memory_space<vmem>>, vector<2x32xf32>
      tpu.vector_store %arg18[%c0_65, %c352], %128 {strides = array<i32>} : memref<2x1568xf32, #tpu.memory_space<vmem>>, vector<2x32xf32>,
      %130 = vector.extract_strided_slice %105 {offsets = [24, 0], sizes = [2, 32], strides = [1, 1]} : vector<98x32xf32> to vector<2x32xf32>
      %c0_66 = arith.constant 0 : index
      %c384 = arith.constant 384 : index
      %131 = vector.load %arg18[%c0_66, %c384] : memref<2x1568xf32, #tpu.memory_space<vmem>>, vector<2x32xf32>
      tpu.vector_store %arg18[%c0_66, %c384], %130 {strides = array<i32>} : memref<2x1568xf32, #tpu.memory_space<vmem>>, vector<2x32xf32>,
      %132 = vector.extract_strided_slice %105 {offsets = [26, 0], sizes = [2, 32], strides = [1, 1]} : vector<98x32xf32> to vector<2x32xf32>
      %c0_67 = arith.constant 0 : index
      %c416 = arith.constant 416 : index
      %133 = vector.load %arg18[%c0_67, %c416] : memref<2x1568xf32, #tpu.memory_space<vmem>>, vector<2x32xf32>
      tpu.vector_store %arg18[%c0_67, %c416], %132 {strides = array<i32>} : memref<2x1568xf32, #tpu.memory_space<vmem>>, vector<2x32xf32>,
      %134 = vector.extract_strided_slice %105 {offsets = [28, 0], sizes = [2, 32], strides = [1, 1]} : vector<98x32xf32> to vector<2x32xf32>
      %c0_68 = arith.constant 0 : index
      %c448 = arith.constant 448 : index
      %135 = vector.load %arg18[%c0_68, %c448] : memref<2x1568xf32, #tpu.memory_space<vmem>>, vector<2x32xf32>
      tpu.vector_store %arg18[%c0_68, %c448], %134 {strides = array<i32>} : memref<2x1568xf32, #tpu.memory_space<vmem>>, vector<2x32xf32>,
      %136 = vector.extract_strided_slice %105 {offsets = [30, 0], sizes = [2, 32], strides = [1, 1]} : vector<98x32xf32> to vector<2x32xf32>
      %c0_69 = arith.constant 0 : index
      %c480 = arith.constant 480 : index
      %137 = vector.load %arg18[%c0_69, %c480] : memref<2x1568xf32, #tpu.memory_space<vmem>>, vector<2x32xf32>
      tpu.vector_store %arg18[%c0_69, %c480], %136 {strides = array<i32>} : memref<2x1568xf32, #tpu.memory_space<vmem>>, vector<2x32xf32>,
      %138 = vector.extract_strided_slice %105 {offsets = [32, 0], sizes = [2, 32], strides = [1, 1]} : vector<98x32xf32> to vector<2x32xf32>
      %c0_70 = arith.constant 0 : index
      %c512 = arith.constant 512 : index
      %139 = vector.load %arg18[%c0_70, %c512] : memref<2x1568xf32, #tpu.memory_space<vmem>>, vector<2x32xf32>
      tpu.vector_store %arg18[%c0_70, %c512], %138 {strides = array<i32>} : memref<2x1568xf32, #tpu.memory_space<vmem>>, vector<2x32xf32>,
      %140 = vector.extract_strided_slice %105 {offsets = [34, 0], sizes = [2, 32], strides = [1, 1]} : vector<98x32xf32> to vector<2x32xf32>
      %c0_71 = arith.constant 0 : index
      %c544 = arith.constant 544 : index
      %141 = vector.load %arg18[%c0_71, %c544] : memref<2x1568xf32, #tpu.memory_space<vmem>>, vector<2x32xf32>
      tpu.vector_store %arg18[%c0_71, %c544], %140 {strides = array<i32>} : memref<2x1568xf32, #tpu.memory_space<vmem>>, vector<2x32xf32>,
      %142 = vector.extract_strided_slice %105 {offsets = [36, 0], sizes = [2, 32], strides = [1, 1]} : vector<98x32xf32> to vector<2x32xf32>
      %c0_72 = arith.constant 0 : index
      %c576 = arith.constant 576 : index
      %143 = vector.load %arg18[%c0_72, %c576] : memref<2x1568xf32, #tpu.memory_space<vmem>>, vector<2x32xf32>
      tpu.vector_store %arg18[%c0_72, %c576], %142 {strides = array<i32>} : memref<2x1568xf32, #tpu.memory_space<vmem>>, vector<2x32xf32>,
      %144 = vector.extract_strided_slice %105 {offsets = [38, 0], sizes = [2, 32], strides = [1, 1]} : vector<98x32xf32> to vector<2x32xf32>
      %c0_73 = arith.constant 0 : index
      %c608 = arith.constant 608 : index
      %145 = vector.load %arg18[%c0_73, %c608] : memref<2x1568xf32, #tpu.memory_space<vmem>>, vector<2x32xf32>
      tpu.vector_store %arg18[%c0_73, %c608], %144 {strides = array<i32>} : memref<2x1568xf32, #tpu.memory_space<vmem>>, vector<2x32xf32>,
      %146 = vector.extract_strided_slice %105 {offsets = [40, 0], sizes = [2, 32], strides = [1, 1]} : vector<98x32xf32> to vector<2x32xf32>
      %c0_74 = arith.constant 0 : index
      %c640 = arith.constant 640 : index
      %147 = vector.load %arg18[%c0_74, %c640] : memref<2x1568xf32, #tpu.memory_space<vmem>>, vector<2x32xf32>
      tpu.vector_store %arg18[%c0_74, %c640], %146 {strides = array<i32>} : memref<2x1568xf32, #tpu.memory_space<vmem>>, vector<2x32xf32>,
      %148 = vector.extract_strided_slice %105 {offsets = [42, 0], sizes = [2, 32], strides = [1, 1]} : vector<98x32xf32> to vector<2x32xf32>
      %c0_75 = arith.constant 0 : index
      %c672 = arith.constant 672 : index
      %149 = vector.load %arg18[%c0_75, %c672] : memref<2x1568xf32, #tpu.memory_space<vmem>>, vector<2x32xf32>
      tpu.vector_store %arg18[%c0_75, %c672], %148 {strides = array<i32>} : memref<2x1568xf32, #tpu.memory_space<vmem>>, vector<2x32xf32>,
      %150 = vector.extract_strided_slice %105 {offsets = [44, 0], sizes = [2, 32], strides = [1, 1]} : vector<98x32xf32> to vector<2x32xf32>
      %c0_76 = arith.constant 0 : index
      %c704 = arith.constant 704 : index
      %151 = vector.load %arg18[%c0_76, %c704] : memref<2x1568xf32, #tpu.memory_space<vmem>>, vector<2x32xf32>
      tpu.vector_store %arg18[%c0_76, %c704], %150 {strides = array<i32>} : memref<2x1568xf32, #tpu.memory_space<vmem>>, vector<2x32xf32>,
      %152 = vector.extract_strided_slice %105 {offsets = [46, 0], sizes = [2, 32], strides = [1, 1]} : vector<98x32xf32> to vector<2x32xf32>
      %c0_77 = arith.constant 0 : index
      %c736 = arith.constant 736 : index
      %153 = vector.load %arg18[%c0_77, %c736] : memref<2x1568xf32, #tpu.memory_space<vmem>>, vector<2x32xf32>
      tpu.vector_store %arg18[%c0_77, %c736], %152 {strides = array<i32>} : memref<2x1568xf32, #tpu.memory_space<vmem>>, vector<2x32xf32>,
      %154 = vector.extract_strided_slice %105 {offsets = [48, 0], sizes = [2, 32], strides = [1, 1]} : vector<98x32xf32> to vector<2x32xf32>
      %c0_78 = arith.constant 0 : index
      %c768 = arith.constant 768 : index
      %155 = vector.load %arg18[%c0_78, %c768] : memref<2x1568xf32, #tpu.memory_space<vmem>>, vector<2x32xf32>
      tpu.vector_store %arg18[%c0_78, %c768], %154 {strides = array<i32>} : memref<2x1568xf32, #tpu.memory_space<vmem>>, vector<2x32xf32>,
      %156 = vector.extract_strided_slice %105 {offsets = [50, 0], sizes = [2, 32], strides = [1, 1]} : vector<98x32xf32> to vector<2x32xf32>
      %c0_79 = arith.constant 0 : index
      %c800 = arith.constant 800 : index
      %157 = vector.load %arg18[%c0_79, %c800] : memref<2x1568xf32, #tpu.memory_space<vmem>>, vector<2x32xf32>
      tpu.vector_store %arg18[%c0_79, %c800], %156 {strides = array<i32>} : memref<2x1568xf32, #tpu.memory_space<vmem>>, vector<2x32xf32>,
      %158 = vector.extract_strided_slice %105 {offsets = [52, 0], sizes = [2, 32], strides = [1, 1]} : vector<98x32xf32> to vector<2x32xf32>
      %c0_80 = arith.constant 0 : index
      %c832 = arith.constant 832 : index
      %159 = vector.load %arg18[%c0_80, %c832] : memref<2x1568xf32, #tpu.memory_space<vmem>>, vector<2x32xf32>
      tpu.vector_store %arg18[%c0_80, %c832], %158 {strides = array<i32>} : memref<2x1568xf32, #tpu.memory_space<vmem>>, vector<2x32xf32>,
      %160 = vector.extract_strided_slice %105 {offsets = [54, 0], sizes = [2, 32], strides = [1, 1]} : vector<98x32xf32> to vector<2x32xf32>
      %c0_81 = arith.constant 0 : index
      %c864 = arith.constant 864 : index
      %161 = vector.load %arg18[%c0_81, %c864] : memref<2x1568xf32, #tpu.memory_space<vmem>>, vector<2x32xf32>
      tpu.vector_store %arg18[%c0_81, %c864], %160 {strides = array<i32>} : memref<2x1568xf32, #tpu.memory_space<vmem>>, vector<2x32xf32>,
      %162 = vector.extract_strided_slice %105 {offsets = [56, 0], sizes = [2, 32], strides = [1, 1]} : vector<98x32xf32> to vector<2x32xf32>
      %c0_82 = arith.constant 0 : index
      %c896 = arith.constant 896 : index
      %163 = vector.load %arg18[%c0_82, %c896] : memref<2x1568xf32, #tpu.memory_space<vmem>>, vector<2x32xf32>
      tpu.vector_store %arg18[%c0_82, %c896], %162 {strides = array<i32>} : memref<2x1568xf32, #tpu.memory_space<vmem>>, vector<2x32xf32>,
      %164 = vector.extract_strided_slice %105 {offsets = [58, 0], sizes = [2, 32], strides = [1, 1]} : vector<98x32xf32> to vector<2x32xf32>
      %c0_83 = arith.constant 0 : index
      %c928 = arith.constant 928 : index
      %165 = vector.load %arg18[%c0_83, %c928] : memref<2x1568xf32, #tpu.memory_space<vmem>>, vector<2x32xf32>
      tpu.vector_store %arg18[%c0_83, %c928], %164 {strides = array<i32>} : memref<2x1568xf32, #tpu.memory_space<vmem>>, vector<2x32xf32>,
      %166 = vector.extract_strided_slice %105 {offsets = [60, 0], sizes = [2, 32], strides = [1, 1]} : vector<98x32xf32> to vector<2x32xf32>
      %c0_84 = arith.constant 0 : index
      %c960 = arith.constant 960 : index
      %167 = vector.load %arg18[%c0_84, %c960] : memref<2x1568xf32, #tpu.memory_space<vmem>>, vector<2x32xf32>
      tpu.vector_store %arg18[%c0_84, %c960], %166 {strides = array<i32>} : memref<2x1568xf32, #tpu.memory_space<vmem>>, vector<2x32xf32>,
      %168 = vector.extract_strided_slice %105 {offsets = [62, 0], sizes = [2, 32], strides = [1, 1]} : vector<98x32xf32> to vector<2x32xf32>
      %c0_85 = arith.constant 0 : index
      %c992 = arith.constant 992 : index
      %169 = vector.load %arg18[%c0_85, %c992] : memref<2x1568xf32, #tpu.memory_space<vmem>>, vector<2x32xf32>
      tpu.vector_store %arg18[%c0_85, %c992], %168 {strides = array<i32>} : memref<2x1568xf32, #tpu.memory_space<vmem>>, vector<2x32xf32>,
      %170 = vector.extract_strided_slice %105 {offsets = [64, 0], sizes = [2, 32], strides = [1, 1]} : vector<98x32xf32> to vector<2x32xf32>
      %c0_86 = arith.constant 0 : index
      %c1024 = arith.constant 1024 : index
      %171 = vector.load %arg18[%c0_86, %c1024] : memref<2x1568xf32, #tpu.memory_space<vmem>>, vector<2x32xf32>
      tpu.vector_store %arg18[%c0_86, %c1024], %170 {strides = array<i32>} : memref<2x1568xf32, #tpu.memory_space<vmem>>, vector<2x32xf32>,
      %172 = vector.extract_strided_slice %105 {offsets = [66, 0], sizes = [2, 32], strides = [1, 1]} : vector<98x32xf32> to vector<2x32xf32>
      %c0_87 = arith.constant 0 : index
      %c1056 = arith.constant 1056 : index
      %173 = vector.load %arg18[%c0_87, %c1056] : memref<2x1568xf32, #tpu.memory_space<vmem>>, vector<2x32xf32>
      tpu.vector_store %arg18[%c0_87, %c1056], %172 {strides = array<i32>} : memref<2x1568xf32, #tpu.memory_space<vmem>>, vector<2x32xf32>,
      %174 = vector.extract_strided_slice %105 {offsets = [68, 0], sizes = [2, 32], strides = [1, 1]} : vector<98x32xf32> to vector<2x32xf32>
      %c0_88 = arith.constant 0 : index
      %c1088 = arith.constant 1088 : index
      %175 = vector.load %arg18[%c0_88, %c1088] : memref<2x1568xf32, #tpu.memory_space<vmem>>, vector<2x32xf32>
      tpu.vector_store %arg18[%c0_88, %c1088], %174 {strides = array<i32>} : memref<2x1568xf32, #tpu.memory_space<vmem>>, vector<2x32xf32>,
      %176 = vector.extract_strided_slice %105 {offsets = [70, 0], sizes = [2, 32], strides = [1, 1]} : vector<98x32xf32> to vector<2x32xf32>
      %c0_89 = arith.constant 0 : index
      %c1120 = arith.constant 1120 : index
      %177 = vector.load %arg18[%c0_89, %c1120] : memref<2x1568xf32, #tpu.memory_space<vmem>>, vector<2x32xf32>
      tpu.vector_store %arg18[%c0_89, %c1120], %176 {strides = array<i32>} : memref<2x1568xf32, #tpu.memory_space<vmem>>, vector<2x32xf32>,
      %178 = vector.extract_strided_slice %105 {offsets = [72, 0], sizes = [2, 32], strides = [1, 1]} : vector<98x32xf32> to vector<2x32xf32>
      %c0_90 = arith.constant 0 : index
      %c1152 = arith.constant 1152 : index
      %179 = vector.load %arg18[%c0_90, %c1152] : memref<2x1568xf32, #tpu.memory_space<vmem>>, vector<2x32xf32>
      tpu.vector_store %arg18[%c0_90, %c1152], %178 {strides = array<i32>} : memref<2x1568xf32, #tpu.memory_space<vmem>>, vector<2x32xf32>,
      %180 = vector.extract_strided_slice %105 {offsets = [74, 0], sizes = [2, 32], strides = [1, 1]} : vector<98x32xf32> to vector<2x32xf32>
      %c0_91 = arith.constant 0 : index
      %c1184 = arith.constant 1184 : index
      %181 = vector.load %arg18[%c0_91, %c1184] : memref<2x1568xf32, #tpu.memory_space<vmem>>, vector<2x32xf32>
      tpu.vector_store %arg18[%c0_91, %c1184], %180 {strides = array<i32>} : memref<2x1568xf32, #tpu.memory_space<vmem>>, vector<2x32xf32>,
      %182 = vector.extract_strided_slice %105 {offsets = [76, 0], sizes = [2, 32], strides = [1, 1]} : vector<98x32xf32> to vector<2x32xf32>
      %c0_92 = arith.constant 0 : index
      %c1216 = arith.constant 1216 : index
      %183 = vector.load %arg18[%c0_92, %c1216] : memref<2x1568xf32, #tpu.memory_space<vmem>>, vector<2x32xf32>
      tpu.vector_store %arg18[%c0_92, %c1216], %182 {strides = array<i32>} : memref<2x1568xf32, #tpu.memory_space<vmem>>, vector<2x32xf32>,
      %184 = vector.extract_strided_slice %105 {offsets = [78, 0], sizes = [2, 32], strides = [1, 1]} : vector<98x32xf32> to vector<2x32xf32>
      %c0_93 = arith.constant 0 : index
      %c1248 = arith.constant 1248 : index
      %185 = vector.load %arg18[%c0_93, %c1248] : memref<2x1568xf32, #tpu.memory_space<vmem>>, vector<2x32xf32>
      tpu.vector_store %arg18[%c0_93, %c1248], %184 {strides = array<i32>} : memref<2x1568xf32, #tpu.memory_space<vmem>>, vector<2x32xf32>,
      %186 = vector.extract_strided_slice %105 {offsets = [80, 0], sizes = [2, 32], strides = [1, 1]} : vector<98x32xf32> to vector<2x32xf32>
      %c0_94 = arith.constant 0 : index
      %c1280 = arith.constant 1280 : index
      %187 = vector.load %arg18[%c0_94, %c1280] : memref<2x1568xf32, #tpu.memory_space<vmem>>, vector<2x32xf32>
      tpu.vector_store %arg18[%c0_94, %c1280], %186 {strides = array<i32>} : memref<2x1568xf32, #tpu.memory_space<vmem>>, vector<2x32xf32>,
      %188 = vector.extract_strided_slice %105 {offsets = [82, 0], sizes = [2, 32], strides = [1, 1]} : vector<98x32xf32> to vector<2x32xf32>
      %c0_95 = arith.constant 0 : index
      %c1312 = arith.constant 1312 : index
      %189 = vector.load %arg18[%c0_95, %c1312] : memref<2x1568xf32, #tpu.memory_space<vmem>>, vector<2x32xf32>
      tpu.vector_store %arg18[%c0_95, %c1312], %188 {strides = array<i32>} : memref<2x1568xf32, #tpu.memory_space<vmem>>, vector<2x32xf32>,
      %190 = vector.extract_strided_slice %105 {offsets = [84, 0], sizes = [2, 32], strides = [1, 1]} : vector<98x32xf32> to vector<2x32xf32>
      %c0_96 = arith.constant 0 : index
      %c1344 = arith.constant 1344 : index
      %191 = vector.load %arg18[%c0_96, %c1344] : memref<2x1568xf32, #tpu.memory_space<vmem>>, vector<2x32xf32>
      tpu.vector_store %arg18[%c0_96, %c1344], %190 {strides = array<i32>} : memref<2x1568xf32, #tpu.memory_space<vmem>>, vector<2x32xf32>,
      %192 = vector.extract_strided_slice %105 {offsets = [86, 0], sizes = [2, 32], strides = [1, 1]} : vector<98x32xf32> to vector<2x32xf32>
      %c0_97 = arith.constant 0 : index
      %c1376 = arith.constant 1376 : index
      %193 = vector.load %arg18[%c0_97, %c1376] : memref<2x1568xf32, #tpu.memory_space<vmem>>, vector<2x32xf32>
      tpu.vector_store %arg18[%c0_97, %c1376], %192 {strides = array<i32>} : memref<2x1568xf32, #tpu.memory_space<vmem>>, vector<2x32xf32>,
      %194 = vector.extract_strided_slice %105 {offsets = [88, 0], sizes = [2, 32], strides = [1, 1]} : vector<98x32xf32> to vector<2x32xf32>
      %c0_98 = arith.constant 0 : index
      %c1408 = arith.constant 1408 : index
      %195 = vector.load %arg18[%c0_98, %c1408] : memref<2x1568xf32, #tpu.memory_space<vmem>>, vector<2x32xf32>
      tpu.vector_store %arg18[%c0_98, %c1408], %194 {strides = array<i32>} : memref<2x1568xf32, #tpu.memory_space<vmem>>, vector<2x32xf32>,
      %196 = vector.extract_strided_slice %105 {offsets = [90, 0], sizes = [2, 32], strides = [1, 1]} : vector<98x32xf32> to vector<2x32xf32>
      %c0_99 = arith.constant 0 : index
      %c1440 = arith.constant 1440 : index
      %197 = vector.load %arg18[%c0_99, %c1440] : memref<2x1568xf32, #tpu.memory_space<vmem>>, vector<2x32xf32>
      tpu.vector_store %arg18[%c0_99, %c1440], %196 {strides = array<i32>} : memref<2x1568xf32, #tpu.memory_space<vmem>>, vector<2x32xf32>,
      %198 = vector.extract_strided_slice %105 {offsets = [92, 0], sizes = [2, 32], strides = [1, 1]} : vector<98x32xf32> to vector<2x32xf32>
      %c0_100 = arith.constant 0 : index
      %c1472 = arith.constant 1472 : index
      %199 = vector.load %arg18[%c0_100, %c1472] : memref<2x1568xf32, #tpu.memory_space<vmem>>, vector<2x32xf32>
      tpu.vector_store %arg18[%c0_100, %c1472], %198 {strides = array<i32>} : memref<2x1568xf32, #tpu.memory_space<vmem>>, vector<2x32xf32>,
      %200 = vector.extract_strided_slice %105 {offsets = [94, 0], sizes = [2, 32], strides = [1, 1]} : vector<98x32xf32> to vector<2x32xf32>
      %c0_101 = arith.constant 0 : index
      %c1504 = arith.constant 1504 : index
      %201 = vector.load %arg18[%c0_101, %c1504] : memref<2x1568xf32, #tpu.memory_space<vmem>>, vector<2x32xf32>
      tpu.vector_store %arg18[%c0_101, %c1504], %200 {strides = array<i32>} : memref<2x1568xf32, #tpu.memory_space<vmem>>, vector<2x32xf32>,
      %202 = vector.extract_strided_slice %105 {offsets = [96, 0], sizes = [2, 32], strides = [1, 1]} : vector<98x32xf32> to vector<2x32xf32>
      %c0_102 = arith.constant 0 : index
      %c1536 = arith.constant 1536 : index
      %203 = vector.load %arg18[%c0_102, %c1536] : memref<2x1568xf32, #tpu.memory_space<vmem>>, vector<2x32xf32>
      tpu.vector_store %arg18[%c0_102, %c1536], %202 {strides = array<i32>} : memref<2x1568xf32, #tpu.memory_space<vmem>>, vector<2x32xf32>,
      %c0_103 = arith.constant 0 : index
      %c0_104 = arith.constant 0 : index
      %204 = vector.load %arg18[%c0_103, %c0_104] : memref<2x1568xf32, #tpu.memory_space<vmem>>, vector<2x1568xf32>
      %205 = arith.truncf %204 : vector<2x1568xf32> to vector<2x1568xbf16>
      %c0_105 = arith.constant 0 : index
      %c0_106 = arith.constant 0 : index
      %206 = vector.load %arg14[%c0_105, %c0_106] : memref<1568x768xbf16, #tpu.memory_space<vmem>>, vector<1568x768xbf16>
      %cst_107 = arith.constant dense<0.000000e+00> : vector<2x768xf32>
      %207 = tpu.matmul %205, %206, %cst_107 {dimension_numbers = #tpu.dot_dimension_numbers<[1], [0], [0], [1], [0, 0, 1, 1], [], []>} : vector<2x1568xbf16>, vector<1568x768xbf16>, vector<2x768xf32> -> vector<2x768xf32>
      %c0_108 = arith.constant 0 : index
      %c0_109 = arith.constant 0 : index
      %208 = vector.load %arg15[%c0_108, %c0_109] : memref<1x768xf32, #tpu.memory_space<vmem>>, vector<1x768xf32>
      %209 = vector.broadcast %208 : vector<1x768xf32> to vector<2x768xf32>
      %210 = arith.addf %207, %209 : vector<2x768xf32>
      %c0_110 = arith.constant 0 : index
      %c0_111 = arith.constant 0 : index
      %211 = vector.load %arg16[%c0_110, %c0_111] : memref<2x768xf32, #tpu.memory_space<vmem>>, vector<2x768xf32>
      tpu.vector_store %arg16[%c0_110, %c0_111], %210 {strides = array<i32>} : memref<2x768xf32, #tpu.memory_space<vmem>>, vector<2x768xf32>,
    } else {
    }
    return
  }
  func.func @transform_0(%arg0: i32) -> (i32, i32) {
    %c0_i32 = arith.constant 0 : i32
    %c0_i32_0 = arith.constant 0 : i32
    return %c0_i32, %arg0 : i32, i32
  }
  func.func @transform_1(%arg0: i32) -> (i32, i32) {
    %c0_i32 = arith.constant 0 : i32
    %c0_i32_0 = arith.constant 0 : i32
    return %arg0, %c0_i32 : i32, i32
  }
  func.func @transform_2(%arg0: i32) -> (i32, i32) {
    %c0_i32 = arith.constant 0 : i32
    %c0_i32_0 = arith.constant 0 : i32
    %c0_i32_1 = arith.constant 0 : i32
    return %c0_i32, %c0_i32_0 : i32, i32
  }
  func.func @transform_3(%arg0: i32) -> (i32, i32) {
    %c0_i32 = arith.constant 0 : i32
    %c0_i32_0 = arith.constant 0 : i32
    %c0_i32_1 = arith.constant 0 : i32
    return %c0_i32, %c0_i32_0 : i32, i32
  }
  func.func @transform_4(%arg0: i32) -> (i32, i32) {
    %c0_i32 = arith.constant 0 : i32
    %c0_i32_0 = arith.constant 0 : i32
    %c0_i32_1 = arith.constant 0 : i32
    return %c0_i32, %c0_i32_0 : i32, i32
  }
  func.func @transform_5(%arg0: i32) -> (i32, i32) {
    %c0_i32 = arith.constant 0 : i32
    %c0_i32_0 = arith.constant 0 : i32
    %c0_i32_1 = arith.constant 0 : i32
    return %c0_i32, %c0_i32_0 : i32, i32
  }
  func.func @transform_6(%arg0: i32) -> (i32, i32) {
    %c0_i32 = arith.constant 0 : i32
    %c0_i32_0 = arith.constant 0 : i32
    %c0_i32_1 = arith.constant 0 : i32
    return %c0_i32, %c0_i32_0 : i32, i32
  }
  func.func @transform_7(%arg0: i32) -> (i32, i32) {
    %c0_i32 = arith.constant 0 : i32
    %c0_i32_0 = arith.constant 0 : i32
    %c0_i32_1 = arith.constant 0 : i32
    return %c0_i32, %c0_i32_0 : i32, i32
  }
  func.func @transform_8(%arg0: i32) -> (i32, i32) {
    %c0_i32 = arith.constant 0 : i32
    %c0_i32_0 = arith.constant 0 : i32
    %c0_i32_1 = arith.constant 0 : i32
    return %c0_i32, %c0_i32_0 : i32, i32
  }
  func.func @transform_9(%arg0: i32) -> (i32, i32) {
    %c0_i32 = arith.constant 0 : i32
    %c0_i32_0 = arith.constant 0 : i32
    %c0_i32_1 = arith.constant 0 : i32
    return %c0_i32, %c0_i32_0 : i32, i32
  }
  func.func @transform_10(%arg0: i32) -> (i32, i32) {
    %c0_i32 = arith.constant 0 : i32
    %c0_i32_0 = arith.constant 0 : i32
    %c0_i32_1 = arith.constant 0 : i32
    return %c0_i32, %c0_i32_0 : i32, i32
  }
  func.func @transform_11(%arg0: i32) -> (i32, i32) {
    %c0_i32 = arith.constant 0 : i32
    %c0_i32_0 = arith.constant 0 : i32
    %c0_i32_1 = arith.constant 0 : i32
    return %c0_i32, %c0_i32_0 : i32, i32
  }
  func.func @transform_12(%arg0: i32) -> (i32, i32) {
    %c0_i32 = arith.constant 0 : i32
    %c0_i32_0 = arith.constant 0 : i32
    %c0_i32_1 = arith.constant 0 : i32
    return %c0_i32, %c0_i32_0 : i32, i32
  }
  func.func @transform_13(%arg0: i32) -> (i32, i32) {
    %c0_i32 = arith.constant 0 : i32
    %c0_i32_0 = arith.constant 0 : i32
    %c0_i32_1 = arith.constant 0 : i32
    return %c0_i32, %c0_i32_0 : i32, i32
  }
  func.func @transform_14(%arg0: i32) -> (i32, i32) {
    %c0_i32 = arith.constant 0 : i32
    %c0_i32_0 = arith.constant 0 : i32
    %c0_i32_1 = arith.constant 0 : i32
    return %c0_i32, %c0_i32_0 : i32, i32
  }
  func.func @transform_15(%arg0: i32) -> (i32, i32) {
    %c0_i32 = arith.constant 0 : i32
    %c0_i32_0 = arith.constant 0 : i32
    %c0_i32_1 = arith.constant 0 : i32
    return %c0_i32, %c0_i32_0 : i32, i32
  }
}

</mosaic_0001>

<llo_original>
// kernel: resnet50_bridge_forward.1
$region0: #{resnet50_bridge_forward.1}
  #allocation0 [shape = 'u32[]', space=smem, size = 0x4, offset = 0x4, fixed_abs, tag = 'smem constant byte address 0x4 - core index']
  #allocation1 [shape = 'u32[144,128]{1,0:T(1,128)}', space=vmem, size = 0x12000, scoped, tag = 'internal scratch']
  #allocation2 [shape = 'f32[98,1024]{1,0:T(8,128)}', space=vmem, size = 0x68000, scoped, tag = 'scratch operand']
  #allocation3 [shape = 'f32[2,1568]{1,0:T(2,128)}', space=vmem, size = 0x3400, scoped, tag = 'scratch operand']
  %s0 = inlined_call_operand.vmem [shape: bf16[98,2048], index: 0, kind: input, shape index: {}]
  %s1 = inlined_call_operand.hbm [shape: bf16[2048,1024], index: 1, kind: input, shape index: {}]
  %s2 = inlined_call_operand.hbm [shape: f32[1,1024], index: 2, kind: input, shape index: {}]
  %s3 = inlined_call_operand.hbm [shape: f32[1,1024], index: 3, kind: input, shape index: {}]
  %s4 = inlined_call_operand.hbm [shape: f32[1,1024], index: 4, kind: input, shape index: {}]
  %s5 = inlined_call_operand.hbm [shape: bf16[1024,128], index: 5, kind: input, shape index: {}]
  %s6 = inlined_call_operand.hbm [shape: f32[1,128], index: 6, kind: input, shape index: {}]
  %s7 = inlined_call_operand.hbm [shape: f32[1,128], index: 7, kind: input, shape index: {}]
  %s8 = inlined_call_operand.hbm [shape: f32[1,128], index: 8, kind: input, shape index: {}]
  %s9 = inlined_call_operand.vmem [shape: bf16[128,32], index: 9, kind: input, shape index: {}]
  %s10 = inlined_call_operand.hbm [shape: f32[1,32], index: 10, kind: input, shape index: {}]
  %s11 = inlined_call_operand.hbm [shape: f32[1,32], index: 11, kind: input, shape index: {}]
  %s12 = inlined_call_operand.hbm [shape: f32[1,32], index: 12, kind: input, shape index: {}]
  %s13 = inlined_call_operand.hbm [shape: bf16[1568,768], index: 13, kind: input, shape index: {}]
  %s14 = inlined_call_operand.hbm [shape: f32[1,768], index: 14, kind: input, shape index: {}]
  %s15 = inlined_call_operand.hbm [shape: f32[2,768], index: 15, kind: output, shape index: {}]
  %s16 = sld [smem:[#allocation0]]
  $region176: #{resnet50_bridge_forward.1} parent=0
    _
  %s18 = ssub.s32 1, %s16
  %s19 = scalar_select 0, %s18, %s16
  $region1: #{resnet50_bridge_forward.1} parent=0
    #allocation4 [shape = 'u8[212992]{0}', space=vmem, size = 0x34000, scoped, tag = 'input window, operand 0']
    #allocation5 [shape = 'u8[2097152]{0}', space=vmem, size = 0x200000, scoped, tag = 'input window, operand 1']
    #allocation6 [shape = 's32[2]{0}', space=sflag, size = 0x8, scoped, tag = 'scoped memory for resnet50_bridge_forward.1']
    #allocation7 [shape = 's32[2]{0}', space=sflag, size = 0x8, scoped, tag = 'scoped memory for resnet50_bridge_forward.1']
    #allocation8 [shape = 'u8[4096]{0}', space=vmem, size = 0x1000, scoped, tag = 'input window, operand 2, single buffered']
    #allocation9 [shape = 's32[1]{0}', space=sflag, size = 0x4, scoped, tag = 'scoped memory for resnet50_bridge_forward.1']
    #allocation10 [shape = 'u8[4096]{0}', space=vmem, size = 0x1000, scoped, tag = 'input window, operand 3, single buffered']
    #allocation11 [shape = 'u8[4096]{0}', space=vmem, size = 0x1000, scoped, tag = 'input window, operand 4, single buffered']
    #allocation12 [shape = 's32[1]{0}', space=sflag, size = 0x4, scoped, tag = 'scoped memory for resnet50_bridge_forward.1']
    #allocation13 [shape = 'u8[262144]{0}', space=vmem, size = 0x40000, scoped, tag = 'input window, operand 5, single buffered']
    #allocation14 [shape = 'u8[512]{0}', space=vmem, size = 0x400, scoped, tag = 'input window, operand 6, single buffered']
    #allocation15 [shape = 's32[1]{0}', space=sflag, size = 0x4, scoped, tag = 'scoped memory for resnet50_bridge_forward.1']
    #allocation16 [shape = 'u8[512]{0}', space=vmem, size = 0x400, scoped, tag = 'input window, operand 7, single buffered']
    #allocation17 [shape = 'u8[512]{0}', space=vmem, size = 0x400, scoped, tag = 'input window, operand 8, single buffered']
    #allocation18 [shape = 's32[1]{0}', space=sflag, size = 0x4, scoped, tag = 'scoped memory for resnet50_bridge_forward.1']
    #allocation19 [shape = 'u8[512]{0}', space=vmem, size = 0x400, scoped, tag = 'input window, operand 10, single buffered']
    #allocation20 [shape = 'u8[512]{0}', space=vmem, size = 0x400, scoped, tag = 'input window, operand 11, single buffered']
    #allocation21 [shape = 's32[1]{0}', space=sflag, size = 0x4, scoped, tag = 'scoped memory for resnet50_bridge_forward.1']
    #allocation22 [shape = 'u8[512]{0}', space=vmem, size = 0x400, scoped, tag = 'input window, operand 12, single buffered']
    #allocation23 [shape = 'u8[2408448]{0}', space=vmem, size = 0x24c000, scoped, tag = 'input window, operand 13, single buffered']
    #allocation24 [shape = 's32[1]{0}', space=sflag, size = 0x4, scoped, tag = 'scoped memory for resnet50_bridge_forward.1']
    #allocation25 [shape = 'u8[3072]{0}', space=vmem, size = 0xc00, scoped, tag = 'input window, operand 14, single buffered']
    #allocation26 [shape = 'u8[6144]{0}', space=vmem, size = 0x1800, scoped, tag = 'output window, operand 0, single buffered']
    %20 = vsyncpa [#allocation6], 0
    %s21 = scalar_lea.sflag [#allocation6], 1
    %22 = vsyncpa %s21, 0
    %23 = vsyncpa [#allocation9], 0
    %24 = vsyncpa [#allocation12], 0
    %25 = vsyncpa [#allocation15], 0
    %26 = vsyncpa [#allocation18], 0
    %27 = vsyncpa [#allocation21], 0
    %28 = vsyncpa [#allocation24], 0
    %29 = vsyncpa [#allocation7], 0
    loop: start=0, step=1, limit=6
    $region2: #{resnet50_bridge_forward.1} parent=1 // loop_pre_header
      _
    $region3: #{resnet50_bridge_forward.1} parent=1 // loop_header
      %s31 = sphi 0, %s35
      %p32 = scmp.ge.s32.totalorder %s31, 6
      %s41 = sphi 0, %s43
      %s44 = sphi 0, %s41
      %s45 = sphi 0, %s44
      %s61 = sphi 0, %s45
      %s67 = sphi 0, %s69
      %s70 = sphi 0, %s67
      %s71 = sphi 0, %s70
      %s87 = sphi 0, %s71
      %s91 = sphi 0, %s91
      %s93 = sphi 0, %s91
      %s94 = sphi 0, %s93
      %s108 = sphi 0, %s94
      %s112 = sphi 0, %s112
      %s114 = sphi 0, %s112
      %s115 = sphi 0, %s114
      %s129 = sphi 0, %s115
      %s133 = sphi 0, %s133
      %s135 = sphi 0, %s133
      %s136 = sphi 0, %s135
      %s150 = sphi 0, %s136
      %s154 = sphi 0, %s154
      %s156 = sphi 0, %s154
      %s157 = sphi 0, %s156
      %s171 = sphi 0, %s157
      %s175 = sphi 0, %s175
      %s177 = sphi 0, %s175
      %s178 = sphi 0, %s177
      %s192 = sphi 0, %s178
      %s196 = sphi 0, %s196
      %s198 = sphi 0, %s196
      %s199 = sphi 0, %s198
      %s213 = sphi 0, %s199
      %s217 = sphi 0, %s217
      %s219 = sphi 0, %s217
      %s220 = sphi 0, %s219
      %s234 = sphi 0, %s220
      %s238 = sphi 0, %s238
      %s240 = sphi 0, %s238
      %s241 = sphi 0, %s240
      %s255 = sphi 0, %s241
      %s259 = sphi 0, %s259
      %s261 = sphi 0, %s259
      %s262 = sphi 0, %s261
      %s276 = sphi 0, %s262
      %s280 = sphi 0, %s280
      %s282 = sphi 0, %s280
      %s283 = sphi 0, %s282
      %s297 = sphi 0, %s283
      %s301 = sphi 0, %s301
      %s303 = sphi 0, %s301
      %s304 = sphi 0, %s303
      %s318 = sphi 0, %s304
      %s322 = sphi 0, %s322
      %s324 = sphi 0, %s322
      %s325 = sphi 0, %s324
      %s339 = sphi 0, %s325
      %s343 = sphi 0, %s343
      %s345 = sphi 0, %s343
      %s346 = sphi 0, %s345
      %s360 = sphi 0, %s346
      %s364 = sphi 0, %s364
      %s366 = sphi 0, %s364
      %s367 = sphi 0, %s366
      %s381 = sphi 0, %s367
    $region4: #{resnet50_bridge_forward.1} parent=1 // loop_header_branch
      %34 = sbr.rel (%p32) target = $region8
    $region5: #{resnet50_bridge_forward.1} parent=1 // loop_body
      %s36 = ssub.s32 %s31, 1
      %s37 = ssub.s32 %s31, 2
      %s38 = sadd.s32 %s31, 1
      %s39 = ssub.s32 %s31, %s38
      %p40 = scmp.eq.s32.totalorder %s39, 0
      %s42 = sadd.s32 %s41, 1
      %s43 = scalar_select %p40, %s41, %s42
      %p46 = pneg %p40
      %p47 = scmp.eq.s32.totalorder %s31, 3
      %p48 = por %p46, %p47
      %p49 = scmp.ne.s32.totalorder %s41, %s44
      %p50 = scmp.eq.s32.totalorder %s31, 0
      %p51 = por %p49, %p50
      %p52 = scmp.ne.s32.totalorder %s41, %s44
      %p53 = scmp.eq.s32.totalorder %s36, 3
      %p54 = por %p52, %p53
      %p55 = scmp.ne.s32.totalorder %s44, %s45
      %p56 = scmp.eq.s32.totalorder %s36, 0
      %p57 = por %p55, %p56
      %p58 = scmp.ne.s32.totalorder %s44, %s45
      %p59 = scmp.eq.s32.totalorder %s37, 3
      %p60 = por %p58, %p59
      %p62 = scmp.ne.s32.totalorder %s45, %s61
      %p63 = scmp.eq.s32.totalorder %s37, 0
      %p64 = por %p62, %p63
      %s65 = ssub.s32 %s31, %s38
      %p66 = scmp.eq.s32.totalorder %s65, 0
      %s68 = sadd.s32 %s67, 1
      %s69 = scalar_select %p66, %s67, %s68
      %p72 = pneg %p66
      %p73 = scmp.eq.s32.totalorder %s31, 3
      %p74 = por %p72, %p73
      %p75 = scmp.ne.s32.totalorder %s67, %s70
      %p76 = scmp.eq.s32.totalorder %s31, 0
      %p77 = por %p75, %p76
      %p78 = scmp.ne.s32.totalorder %s67, %s70
      %p79 = scmp.eq.s32.totalorder %s36, 3
      %p80 = por %p78, %p79
      %p81 = scmp.ne.s32.totalorder %s70, %s71
      %p82 = scmp.eq.s32.totalorder %s36, 0
      %p83 = por %p81, %p82
      %p84 = scmp.ne.s32.totalorder %s70, %s71
      %p85 = scmp.eq.s32.totalorder %s37, 3
      %p86 = por %p84, %p85
      %p88 = scmp.ne.s32.totalorder %s71, %s87
      %p89 = scmp.eq.s32.totalorder %s37, 0
      %p90 = por %p88, %p89
      %s92 = sadd.s32 %s91, 1
      %p95 = scmp.eq.s32.totalorder %s31, 3
      %p96 = scmp.ne.s32.totalorder %s91, %s93
      %p97 = scmp.eq.s32.totalorder %s31, 0
      %p98 = por %p96, %p97
      %p99 = scmp.ne.s32.totalorder %s91, %s93
      %p100 = scmp.eq.s32.totalorder %s36, 3
      %p101 = por %p99, %p100
      %p102 = scmp.ne.s32.totalorder %s93, %s94
      %p103 = scmp.eq.s32.totalorder %s36, 0
      %p104 = por %p102, %p103
      %p105 = scmp.ne.s32.totalorder %s93, %s94
      %p106 = scmp.eq.s32.totalorder %s37, 3
      %p107 = por %p105, %p106
      %p109 = scmp.ne.s32.totalorder %s94, %s108
      %p110 = scmp.eq.s32.totalorder %s37, 0
      %p111 = por %p109, %p110
      %s113 = sadd.s32 %s112, 1
      %p116 = scmp.eq.s32.totalorder %s31, 3
      %p117 = scmp.ne.s32.totalorder %s112, %s114
      %p118 = scmp.eq.s32.totalorder %s31, 0
      %p119 = por %p117, %p118
      %p120 = scmp.ne.s32.totalorder %s112, %s114
      %p121 = scmp.eq.s32.totalorder %s36, 3
      %p122 = por %p120, %p121
      %p123 = scmp.ne.s32.totalorder %s114, %s115
      %p124 = scmp.eq.s32.totalorder %s36, 0
      %p125 = por %p123, %p124
      %p126 = scmp.ne.s32.totalorder %s114, %s115
      %p127 = scmp.eq.s32.totalorder %s37, 3
      %p128 = por %p126, %p127
      %p130 = scmp.ne.s32.totalorder %s115, %s129
      %p131 = scmp.eq.s32.totalorder %s37, 0
      %p132 = por %p130, %p131
      %s134 = sadd.s32 %s133, 1
      %p137 = scmp.eq.s32.totalorder %s31, 3
      %p138 = scmp.ne.s32.totalorder %s133, %s135
      %p139 = scmp.eq.s32.totalorder %s31, 0
      %p140 = por %p138, %p139
      %p141 = scmp.ne.s32.totalorder %s133, %s135
      %p142 = scmp.eq.s32.totalorder %s36, 3
      %p143 = por %p141, %p142
      %p144 = scmp.ne.s32.totalorder %s135, %s136
      %p145 = scmp.eq.s32.totalorder %s36, 0
      %p146 = por %p144, %p145
      %p147 = scmp.ne.s32.totalorder %s135, %s136
      %p148 = scmp.eq.s32.totalorder %s37, 3
      %p149 = por %p147, %p148
      %p151 = scmp.ne.s32.totalorder %s136, %s150
      %p152 = scmp.eq.s32.totalorder %s37, 0
      %p153 = por %p151, %p152
      %s155 = sadd.s32 %s154, 1
      %p158 = scmp.eq.s32.totalorder %s31, 3
      %p159 = scmp.ne.s32.totalorder %s154, %s156
      %p160 = scmp.eq.s32.totalorder %s31, 0
      %p161 = por %p159, %p160
      %p162 = scmp.ne.s32.totalorder %s154, %s156
      %p163 = scmp.eq.s32.totalorder %s36, 3
      %p164 = por %p162, %p163
      %p165 = scmp.ne.s32.totalorder %s156, %s157
      %p166 = scmp.eq.s32.totalorder %s36, 0
      %p167 = por %p165, %p166
      %p168 = scmp.ne.s32.totalorder %s156, %s157
      %p169 = scmp.eq.s32.totalorder %s37, 3
      %p170 = por %p168, %p169
      %p172 = scmp.ne.s32.totalorder %s157, %s171
      %p173 = scmp.eq.s32.totalorder %s37, 0
      %p174 = por %p172, %p173
      %s176 = sadd.s32 %s175, 1
      %p179 = scmp.eq.s32.totalorder %s31, 3
      %p180 = scmp.ne.s32.totalorder %s175, %s177
      %p181 = scmp.eq.s32.totalorder %s31, 0
      %p182 = por %p180, %p181
      %p183 = scmp.ne.s32.totalorder %s175, %s177
      %p184 = scmp.eq.s32.totalorder %s36, 3
      %p185 = por %p183, %p184
      %p186 = scmp.ne.s32.totalorder %s177, %s178
      %p187 = scmp.eq.s32.totalorder %s36, 0
      %p188 = por %p186, %p187
      %p189 = scmp.ne.s32.totalorder %s177, %s178
      %p190 = scmp.eq.s32.totalorder %s37, 3
      %p191 = por %p189, %p190
      %p193 = scmp.ne.s32.totalorder %s178, %s192
      %p194 = scmp.eq.s32.totalorder %s37, 0
      %p195 = por %p193, %p194
      %s197 = sadd.s32 %s196, 1
      %p200 = scmp.eq.s32.totalorder %s31, 3
      %p201 = scmp.ne.s32.totalorder %s196, %s198
      %p202 = scmp.eq.s32.totalorder %s31, 0
      %p203 = por %p201, %p202
      %p204 = scmp.ne.s32.totalorder %s196, %s198
      %p205 = scmp.eq.s32.totalorder %s36, 3
      %p206 = por %p204, %p205
      %p207 = scmp.ne.s32.totalorder %s198, %s199
      %p208 = scmp.eq.s32.totalorder %s36, 0
      %p209 = por %p207, %p208
      %p210 = scmp.ne.s32.totalorder %s198, %s199
      %p211 = scmp.eq.s32.totalorder %s37, 3
      %p212 = por %p210, %p211
      %p214 = scmp.ne.s32.totalorder %s199, %s213
      %p215 = scmp.eq.s32.totalorder %s37, 0
      %p216 = por %p214, %p215
      %s218 = sadd.s32 %s217, 1
      %p221 = scmp.eq.s32.totalorder %s31, 3
      %p222 = scmp.ne.s32.totalorder %s217, %s219
      %p223 = scmp.eq.s32.totalorder %s31, 0
      %p224 = por %p222, %p223
      %p225 = scmp.ne.s32.totalorder %s217, %s219
      %p226 = scmp.eq.s32.totalorder %s36, 3
      %p227 = por %p225, %p226
      %p228 = scmp.ne.s32.totalorder %s219, %s220
      %p229 = scmp.eq.s32.totalorder %s36, 0
      %p230 = por %p228, %p229
      %p231 = scmp.ne.s32.totalorder %s219, %s220
      %p232 = scmp.eq.s32.totalorder %s37, 3
      %p233 = por %p231, %p232
      %p235 = scmp.ne.s32.totalorder %s220, %s234
      %p236 = scmp.eq.s32.totalorder %s37, 0
      %p237 = por %p235, %p236
      %s239 = sadd.s32 %s238, 1
      %p242 = scmp.eq.s32.totalorder %s31, 3
      %p243 = scmp.ne.s32.totalorder %s238, %s240
      %p244 = scmp.eq.s32.totalorder %s31, 0
      %p245 = por %p243, %p244
      %p246 = scmp.ne.s32.totalorder %s238, %s240
      %p247 = scmp.eq.s32.totalorder %s36, 3
      %p248 = por %p246, %p247
      %p249 = scmp.ne.s32.totalorder %s240, %s241
      %p250 = scmp.eq.s32.totalorder %s36, 0
      %p251 = por %p249, %p250
      %p252 = scmp.ne.s32.totalorder %s240, %s241
      %p253 = scmp.eq.s32.totalorder %s37, 3
      %p254 = por %p252, %p253
      %p256 = scmp.ne.s32.totalorder %s241, %s255
      %p257 = scmp.eq.s32.totalorder %s37, 0
      %p258 = por %p256, %p257
      %s260 = sadd.s32 %s259, 1
      %p263 = scmp.eq.s32.totalorder %s31, 3
      %p264 = scmp.ne.s32.totalorder %s259, %s261
      %p265 = scmp.eq.s32.totalorder %s31, 0
      %p266 = por %p264, %p265
      %p267 = scmp.ne.s32.totalorder %s259, %s261
      %p268 = scmp.eq.s32.totalorder %s36, 3
      %p269 = por %p267, %p268
      %p270 = scmp.ne.s32.totalorder %s261, %s262
      %p271 = scmp.eq.s32.totalorder %s36, 0
      %p272 = por %p270, %p271
      %p273 = scmp.ne.s32.totalorder %s261, %s262
      %p274 = scmp.eq.s32.totalorder %s37, 3
      %p275 = por %p273, %p274
      %p277 = scmp.ne.s32.totalorder %s262, %s276
      %p278 = scmp.eq.s32.totalorder %s37, 0
      %p279 = por %p277, %p278
      %s281 = sadd.s32 %s280, 1
      %p284 = scmp.eq.s32.totalorder %s31, 3
      %p285 = scmp.ne.s32.totalorder %s280, %s282
      %p286 = scmp.eq.s32.totalorder %s31, 0
      %p287 = por %p285, %p286
      %p288 = scmp.ne.s32.totalorder %s280, %s282
      %p289 = scmp.eq.s32.totalorder %s36, 3
      %p290 = por %p288, %p289
      %p291 = scmp.ne.s32.totalorder %s282, %s283
      %p292 = scmp.eq.s32.totalorder %s36, 0
      %p293 = por %p291, %p292
      %p294 = scmp.ne.s32.totalorder %s282, %s283
      %p295 = scmp.eq.s32.totalorder %s37, 3
      %p296 = por %p294, %p295
      %p298 = scmp.ne.s32.totalorder %s283, %s297
      %p299 = scmp.eq.s32.totalorder %s37, 0
      %p300 = por %p298, %p299
      %s302 = sadd.s32 %s301, 1
      %p305 = scmp.eq.s32.totalorder %s31, 3
      %p306 = scmp.ne.s32.totalorder %s301, %s303
      %p307 = scmp.eq.s32.totalorder %s31, 0
      %p308 = por %p306, %p307
      %p309 = scmp.ne.s32.totalorder %s301, %s303
      %p310 = scmp.eq.s32.totalorder %s36, 3
      %p311 = por %p309, %p310
      %p312 = scmp.ne.s32.totalorder %s303, %s304
      %p313 = scmp.eq.s32.totalorder %s36, 0
      %p314 = por %p312, %p313
      %p315 = scmp.ne.s32.totalorder %s303, %s304
      %p316 = scmp.eq.s32.totalorder %s37, 3
      %p317 = por %p315, %p316
      %p319 = scmp.ne.s32.totalorder %s304, %s318
      %p320 = scmp.eq.s32.totalorder %s37, 0
      %p321 = por %p319, %p320
      %s323 = sadd.s32 %s322, 1
      %p326 = scmp.eq.s32.totalorder %s31, 3
      %p327 = scmp.ne.s32.totalorder %s322, %s324
      %p328 = scmp.eq.s32.totalorder %s31, 0
      %p329 = por %p327, %p328
      %p330 = scmp.ne.s32.totalorder %s322, %s324
      %p331 = scmp.eq.s32.totalorder %s36, 3
      %p332 = por %p330, %p331
      %p333 = scmp.ne.s32.totalorder %s324, %s325
      %p334 = scmp.eq.s32.totalorder %s36, 0
      %p335 = por %p333, %p334
      %p336 = scmp.ne.s32.totalorder %s324, %s325
      %p337 = scmp.eq.s32.totalorder %s37, 3
      %p338 = por %p336, %p337
      %p340 = scmp.ne.s32.totalorder %s325, %s339
      %p341 = scmp.eq.s32.totalorder %s37, 0
      %p342 = por %p340, %p341
      %s344 = sadd.s32 %s343, 1
      %p347 = scmp.eq.s32.totalorder %s31, 3
      %p348 = scmp.ne.s32.totalorder %s343, %s345
      %p349 = scmp.eq.s32.totalorder %s31, 0
      %p350 = por %p348, %p349
      %p351 = scmp.ne.s32.totalorder %s343, %s345
      %p352 = scmp.eq.s32.totalorder %s36, 3
      %p353 = por %p351, %p352
      %p354 = scmp.ne.s32.totalorder %s345, %s346
      %p355 = scmp.eq.s32.totalorder %s36, 0
      %p356 = por %p354, %p355
      %p357 = scmp.ne.s32.totalorder %s345, %s346
      %p358 = scmp.eq.s32.totalorder %s37, 3
      %p359 = por %p357, %p358
      %p361 = scmp.ne.s32.totalorder %s346, %s360
      %p362 = scmp.eq.s32.totalorder %s37, 0
      %p363 = por %p361, %p362
      %s365 = sadd.s32 %s364, 1
      %p368 = scmp.eq.s32.totalorder %s31, 3
      %p369 = scmp.ne.s32.totalorder %s364, %s366
      %p370 = scmp.eq.s32.totalorder %s31, 0
      %p371 = por %p369, %p370
      %p372 = scmp.ne.s32.totalorder %s364, %s366
      %p373 = scmp.eq.s32.totalorder %s36, 3
      %p374 = por %p372, %p373
      %p375 = scmp.ne.s32.totalorder %s366, %s367
      %p376 = scmp.eq.s32.totalorder %s36, 0
      %p377 = por %p375, %p376
      %p378 = scmp.ne.s32.totalorder %s366, %s367
      %p379 = scmp.eq.s32.totalorder %s37, 3
      %p380 = por %p378, %p379
      %p382 = scmp.ne.s32.totalorder %s367, %s381
      %p383 = scmp.eq.s32.totalorder %s37, 0
      %p384 = por %p382, %p383
      %p385 = scmp.le.s32.totalorder 1, %s31
      %p386 = scmp.lt.s32.totalorder %s31, 5
      %p387 = pnand %p385, %p386
      %p388 = pneg %p387
      // Predicated region
      $region9: #{resnet50_bridge_forward.1} parent=5 // pred_check
        _
      $region10: #{resnet50_bridge_forward.1} parent=5 // pred_check_branch
        %390 = sbr.rel (%p387) target = $region12
      $region11: #{resnet50_bridge_forward.1} parent=5 // pred_region
        %s391 = ssub.s32 %s31, 1
        // Predicated region
        $region13: #{resnet50_bridge_forward.1} parent=11 // pred_check
          %p392 = pneg %p104
        $region14: #{resnet50_bridge_forward.1} parent=11 // pred_check_branch
          %394 = sbr.rel (%p392) target = $region16
        $region15: #{resnet50_bridge_forward.1} parent=11 // pred_region
          %s396 = ssub.s32 128, 128
          %397 = vsyncadd [#allocation9], %s396
          %s399 = sshll.u32 [#allocation8], 4
          %s400 = int_to_ptr.vmem [resolvable:$true] %s399
          %402 = dma.hbm_to_vmem [thread:$0]  %s2, 128, %s400, [#allocation9]
        $region16: #{resnet50_bridge_forward.1} parent=11 // pred_fallthru
          _
        // Predicated region
        $region17: #{resnet50_bridge_forward.1} parent=11 // pred_check
          %p403 = pneg %p125
        $region18: #{resnet50_bridge_forward.1} parent=11 // pred_check_branch
          %405 = sbr.rel (%p403) target = $region20
        $region19: #{resnet50_bridge_forward.1} parent=11 // pred_region
          %s407 = ssub.s32 128, 128
          %408 = vsyncadd [#allocation9], %s407
          %s410 = sshll.u32 [#allocation10], 4
          %s411 = int_to_ptr.vmem [resolvable:$true] %s410
          %413 = dma.hbm_to_vmem [thread:$0]  %s3, 128, %s411, [#allocation9]
        $region20: #{resnet50_bridge_forward.1} parent=11 // pred_fallthru
          _
        // Predicated region
        $region21: #{resnet50_bridge_forward.1} parent=11 // pred_check
          %p414 = pneg %p146
        $region22: #{resnet50_bridge_forward.1} parent=11 // pred_check_branch
          %416 = sbr.rel (%p414) target = $region24
        $region23: #{resnet50_bridge_forward.1} parent=11 // pred_region
          %s418 = ssub.s32 128, 128
          %419 = vsyncadd [#allocation12], %s418
          %s421 = sshll.u32 [#allocation11], 4
          %s422 = int_to_ptr.vmem [resolvable:$true] %s421
          %424 = dma.hbm_to_vmem [thread:$0]  %s4, 128, %s422, [#allocation12]
        $region24: #{resnet50_bridge_forward.1} parent=11 // pred_fallthru
          _
        // Predicated region
        $region25: #{resnet50_bridge_forward.1} parent=11 // pred_check
          %p425 = pneg %p167
        $region26: #{resnet50_bridge_forward.1} parent=11 // pred_check_branch
          %427 = sbr.rel (%p425) target = $region28
        $region27: #{resnet50_bridge_forward.1} parent=11 // pred_region
          %s429 = ssub.s32 8192, 8192
          %430 = vsyncadd [#allocation12], %s429
          %s431 = sshll.u32 [#allocation13], 4
          %s432 = int_to_ptr.vmem [resolvable:$true] %s431
          %437 = dma.hbm_to_vmem [thread:$0]  %s5, 8192, %s432, [#allocation12], 64, 64, 4
        $region28: #{resnet50_bridge_forward.1} parent=11 // pred_fallthru
          _
        // Predicated region
        $region29: #{resnet50_bridge_forward.1} parent=11 // pred_check
          %p438 = pneg %p188
        $region30: #{resnet50_bridge_forward.1} parent=11 // pred_check_branch
          %440 = sbr.rel (%p438) target = $region32
        $region31: #{resnet50_bridge_forward.1} parent=11 // pred_region
          %s442 = ssub.s32 16, 16
          %443 = vsyncadd [#allocation15], %s442
          %s445 = sshll.u32 [#allocation14], 4
          %s446 = int_to_ptr.vmem [resolvable:$true] %s445
          %448 = dma.hbm_to_vmem [thread:$0]  %s6, 16, %s446, [#allocation15]
        $region32: #{resnet50_bridge_forward.1} parent=11 // pred_fallthru
          _
        // Predicated region
        $region33: #{resnet50_bridge_forward.1} parent=11 // pred_check
          %p449 = pneg %p209
        $region34: #{resnet50_bridge_forward.1} parent=11 // pred_check_branch
          %451 = sbr.rel (%p449) target = $region36
        $region35: #{resnet50_bridge_forward.1} parent=11 // pred_region
          %s453 = ssub.s32 16, 16
          %454 = vsyncadd [#allocation15], %s453
          %s456 = sshll.u32 [#allocation16], 4
          %s457 = int_to_ptr.vmem [resolvable:$true] %s456
          %459 = dma.hbm_to_vmem [thread:$0]  %s7, 16, %s457, [#allocation15]
        $region36: #{resnet50_bridge_forward.1} parent=11 // pred_fallthru
          _
        // Predicated region
        $region37: #{resnet50_bridge_forward.1} parent=11 // pred_check
          %p460 = pneg %p230
        $region38: #{resnet50_bridge_forward.1} parent=11 // pred_check_branch
          %462 = sbr.rel (%p460) target = $region40
        $region39: #{resnet50_bridge_forward.1} parent=11 // pred_region
          %s464 = ssub.s32 16, 16
          %465 = vsyncadd [#allocation18], %s464
          %s467 = sshll.u32 [#allocation17], 4
          %s468 = int_to_ptr.vmem [resolvable:$true] %s467
          %470 = dma.hbm_to_vmem [thread:$0]  %s8, 16, %s468, [#allocation18]
        $region40: #{resnet50_bridge_forward.1} parent=11 // pred_fallthru
          _
        // Predicated region
        $region41: #{resnet50_bridge_forward.1} parent=11 // pred_check
          %p471 = pneg %p251
        $region42: #{resnet50_bridge_forward.1} parent=11 // pred_check_branch
          %473 = sbr.rel (%p471) target = $region44
        $region43: #{resnet50_bridge_forward.1} parent=11 // pred_region
          _
        $region44: #{resnet50_bridge_forward.1} parent=11 // pred_fallthru
          _
        // Predicated region
        $region45: #{resnet50_bridge_forward.1} parent=11 // pred_check
          %p474 = pneg %p272
        $region46: #{resnet50_bridge_forward.1} parent=11 // pred_check_branch
          %476 = sbr.rel (%p474) target = $region48
        $region47: #{resnet50_bridge_forward.1} parent=11 // pred_region
          %s478 = ssub.s32 16, 16
          %479 = vsyncadd [#allocation18], %s478
          %s481 = sshll.u32 [#allocation19], 4
          %s482 = int_to_ptr.vmem [resolvable:$true] %s481
          %484 = dma.hbm_to_vmem [thread:$0]  %s10, 16, %s482, [#allocation18]
        $region48: #{resnet50_bridge_forward.1} parent=11 // pred_fallthru
          _
        // Predicated region
        $region49: #{resnet50_bridge_forward.1} parent=11 // pred_check
          %p485 = pneg %p293
        $region50: #{resnet50_bridge_forward.1} parent=11 // pred_check_branch
          %487 = sbr.rel (%p485) target = $region52
        $region51: #{resnet50_bridge_forward.1} parent=11 // pred_region
          %s489 = ssub.s32 16, 16
          %490 = vsyncadd [#allocation21], %s489
          %s492 = sshll.u32 [#allocation20], 4
          %s493 = int_to_ptr.vmem [resolvable:$true] %s492
          %495 = dma.hbm_to_vmem [thread:$0]  %s11, 16, %s493, [#allocation21]
        $region52: #{resnet50_bridge_forward.1} parent=11 // pred_fallthru
          _
        // Predicated region
        $region53: #{resnet50_bridge_forward.1} parent=11 // pred_check
          %p496 = pneg %p314
        $region54: #{resnet50_bridge_forward.1} parent=11 // pred_check_branch
          %498 = sbr.rel (%p496) target = $region56
        $region55: #{resnet50_bridge_forward.1} parent=11 // pred_region
          %s500 = ssub.s32 16, 16
          %501 = vsyncadd [#allocation21], %s500
          %s503 = sshll.u32 [#allocation22], 4
          %s504 = int_to_ptr.vmem [resolvable:$true] %s503
          %506 = dma.hbm_to_vmem [thread:$0]  %s12, 16, %s504, [#allocation21]
        $region56: #{resnet50_bridge_forward.1} parent=11 // pred_fallthru
          _
        // Predicated region
        $region57: #{resnet50_bridge_forward.1} parent=11 // pred_check
          %p507 = pneg %p335
        $region58: #{resnet50_bridge_forward.1} parent=11 // pred_check_branch
          %509 = sbr.rel (%p507) target = $region60
        $region59: #{resnet50_bridge_forward.1} parent=11 // pred_region
          %s511 = ssub.s32 75264, 75264
          %512 = vsyncadd [#allocation24], %s511
          %s513 = sshll.u32 [#allocation23], 4
          %s514 = int_to_ptr.vmem [resolvable:$true] %s513
          %519 = dma.hbm_to_vmem [thread:$0]  %s13, 75264, %s514, [#allocation24], 384, 384, 24
        $region60: #{resnet50_bridge_forward.1} parent=11 // pred_fallthru
          _
        // Predicated region
        $region61: #{resnet50_bridge_forward.1} parent=11 // pred_check
          %p520 = pneg %p356
        $region62: #{resnet50_bridge_forward.1} parent=11 // pred_check_branch
          %522 = sbr.rel (%p520) target = $region64
        $region63: #{resnet50_bridge_forward.1} parent=11 // pred_region
          %s524 = ssub.s32 96, 96
          %525 = vsyncadd [#allocation24], %s524
          %s527 = sshll.u32 [#allocation25], 4
          %s528 = int_to_ptr.vmem [resolvable:$true] %s527
          %530 = dma.hbm_to_vmem [thread:$0]  %s14, 96, %s528, [#allocation24]
        $region64: #{resnet50_bridge_forward.1} parent=11 // pred_fallthru
          _
      $region12: #{resnet50_bridge_forward.1} parent=5 // pred_fallthru
        _
      %p531 = scmp.lt.s32.totalorder %s31, 4
      // Predicated region
      $region65: #{resnet50_bridge_forward.1} parent=5 // pred_check
        %p532 = pneg %p531
      $region66: #{resnet50_bridge_forward.1} parent=5 // pred_check_branch
        %534 = sbr.rel (%p532) target = $region68
      $region67: #{resnet50_bridge_forward.1} parent=5 // pred_region
        // Predicated region
        $region69: #{resnet50_bridge_forward.1} parent=67 // pred_check
          %p535 = pneg %p51
        $region70: #{resnet50_bridge_forward.1} parent=67 // pred_check_branch
          %537 = sbr.rel (%p535) target = $region72
        $region71: #{resnet50_bridge_forward.1} parent=67 // pred_region
          %s538 = sand.u32 %s41, 1
          %s539 = sand.u32 %s41, 1
          %s540 = smul.addr %s539, 208
          %s541 = scalar_lea.vmem [#allocation4], %s540
          %s542 = smul.u32 4, %s31
          %s543 = smul.addr %s542, 4
          %s544 = scalar_lea.vmem %s0, %s543
          // Predicated region
          $region73: #{resnet50_bridge_forward.1} parent=71 // pred_check
            _
          $region74: #{resnet50_bridge_forward.1} parent=71 // pred_check_branch
            %546 = sbr.rel (0) target = $region76
          $region75: #{resnet50_bridge_forward.1} parent=71 // pred_region
            // Predicated region
            $region77: #{resnet50_bridge_forward.1} parent=75 // pred_check
              _
            $region78: #{resnet50_bridge_forward.1} parent=75 // pred_check_branch
              %548 = sbr.rel (0) target = $region80
            $region79: #{resnet50_bridge_forward.1} parent=75 // pred_region
              loop: start=0, step=1, limit=1
              $region81: #{resnet50_bridge_forward.1} parent=79 // loop_pre_header
                _
              $region82: #{resnet50_bridge_forward.1} parent=79 // loop_header
                %s550 = sphi 0, %s554
                %p551 = scmp.ge.s32.totalorder %s550, 1
                %s555 = sphi %s544, %s544
                %s556 = sphi %s541, %s541
              $region83: #{resnet50_bridge_forward.1} parent=79 // loop_header_branch
                %553 = sbr.rel (%p551) target = $region87
              $region84: #{resnet50_bridge_forward.1} parent=79 // loop_body
                %v557 = vld [vmem:[%s555] sm:$0xff]
                %558 = vst [vmem:[%s556] sm:$0xff] %v557
                %v559 = vld [vmem:[%s555 + $0x8] sm:$0xff]
                %560 = vst [vmem:[%s556 + $0x8] sm:$0xff] %v559
                %v561 = vld [vmem:[%s555 + $0x40] sm:$0xff]
                %562 = vst [vmem:[%s556 + $0x10] sm:$0xff] %v561
                %v563 = vld [vmem:[%s555 + $0x48] sm:$0xff]
                %564 = vst [vmem:[%s556 + $0x18] sm:$0xff] %v563
                %v565 = vld [vmem:[%s555 + $0x80] sm:$0xff]
                %566 = vst [vmem:[%s556 + $0x20] sm:$0xff] %v565
                %v567 = vld [vmem:[%s555 + $0x88] sm:$0xff]
                %568 = vst [vmem:[%s556 + $0x28] sm:$0xff] %v567
                %v569 = vld [vmem:[%s555 + $0xc0] sm:$0xff]
                %570 = vst [vmem:[%s556 + $0x30] sm:$0xff] %v569
                %v571 = vld [vmem:[%s555 + $0xc8] sm:$0xff]
                %572 = vst [vmem:[%s556 + $0x38] sm:$0xff] %v571
                %v573 = vld [vmem:[%s555 + $0x100] sm:$0xff]
                %574 = vst [vmem:[%s556 + $0x40] sm:$0xff] %v573
                %v575 = vld [vmem:[%s555 + $0x108] sm:$0xff]
                %576 = vst [vmem:[%s556 + $0x48] sm:$0xff] %v575
                %v577 = vld [vmem:[%s555 + $0x140] sm:$0xff]
                %578 = vst [vmem:[%s556 + $0x50] sm:$0xff] %v577
                %v579 = vld [vmem:[%s555 + $0x148] sm:$0xff]
                %580 = vst [vmem:[%s556 + $0x58] sm:$0xff] %v579
                %v581 = vld [vmem:[%s555 + $0x180] sm:$0xff]
                %582 = vst [vmem:[%s556 + $0x60] sm:$0xff] %v581
                %v583 = vld [vmem:[%s555 + $0x188] sm:$0xff]
                %584 = vst [vmem:[%s556 + $0x68] sm:$0xff] %v583
                %v585 = vld [vmem:[%s555 + $0x1c0] sm:$0xff]
                %586 = vst [vmem:[%s556 + $0x70] sm:$0xff] %v585
                %v587 = vld [vmem:[%s555 + $0x1c8] sm:$0xff]
                %588 = vst [vmem:[%s556 + $0x78] sm:$0xff] %v587
                %v589 = vld [vmem:[%s555 + $0x200] sm:$0xff]
                %590 = vst [vmem:[%s556 + $0x80] sm:$0xff] %v589
                %v591 = vld [vmem:[%s555 + $0x208] sm:$0xff]
                %592 = vst [vmem:[%s556 + $0x88] sm:$0xff] %v591
                %v593 = vld [vmem:[%s555 + $0x240] sm:$0xff]
                %594 = vst [vmem:[%s556 + $0x90] sm:$0xff] %v593
                %v595 = vld [vmem:[%s555 + $0x248] sm:$0xff]
                %596 = vst [vmem:[%s556 + $0x98] sm:$0xff] %v595
                %v597 = vld [vmem:[%s555 + $0x280] sm:$0xff]
                %598 = vst [vmem:[%s556 + $0xa0] sm:$0xff] %v597
                %v599 = vld [vmem:[%s555 + $0x288] sm:$0xff]
                %600 = vst [vmem:[%s556 + $0xa8] sm:$0xff] %v599
                %v601 = vld [vmem:[%s555 + $0x2c0] sm:$0xff]
                %602 = vst [vmem:[%s556 + $0xb0] sm:$0xff] %v601
                %v603 = vld [vmem:[%s555 + $0x2c8] sm:$0xff]
                %604 = vst [vmem:[%s556 + $0xb8] sm:$0xff] %v603
                %v605 = vld [vmem:[%s555 + $0x300] sm:$0xff]
                %606 = vst [vmem:[%s556 + $0xc0] sm:$0xff] %v605
                %v607 = vld [vmem:[%s555 + $0x308] sm:$0xff]
                %608 = vst [vmem:[%s556 + $0xc8] sm:$0xff] %v607
              $region85: #{resnet50_bridge_forward.1} parent=79 // loop_footer
                %s554 = sadd.s32 1, %s550
              $region86: #{resnet50_bridge_forward.1} parent=79 // loop_footer_branch
                %549 = sbr.rel target = $region82
              $region87: #{resnet50_bridge_forward.1} parent=79 // loop_exit
                _
            $region80: #{resnet50_bridge_forward.1} parent=75 // pred_fallthru
              _
            // Predicated region
            $region88: #{resnet50_bridge_forward.1} parent=75 // pred_check
              _
            $region89: #{resnet50_bridge_forward.1} parent=75 // pred_check_branch
              %610 = sbr.rel target = $region91
            $region90: #{resnet50_bridge_forward.1} parent=75 // pred_region
              _
            $region91: #{resnet50_bridge_forward.1} parent=75 // pred_fallthru
              _
          $region76: #{resnet50_bridge_forward.1} parent=71 // pred_fallthru
            _
          %611 = vnop
        $region72: #{resnet50_bridge_forward.1} parent=67 // pred_fallthru
          _
        // Predicated region
        $region92: #{resnet50_bridge_forward.1} parent=67 // pred_check
          %p612 = pneg %p77
        $region93: #{resnet50_bridge_forward.1} parent=67 // pred_check_branch
          %614 = sbr.rel (%p612) target = $region95
        $region94: #{resnet50_bridge_forward.1} parent=67 // pred_region
          %s615 = sand.u32 %s67, 1
          %s616 = scalar_lea.sflag [#allocation6], %s615
          %s617 = sand.u32 %s67, 1
          %s618 = smul.addr %s617, 2048
          %s619 = scalar_lea.vmem [#allocation5], %s618
          %s620 = smul.u32 64, %s31
          %s622 = ssub.s32 32768, 32768
          %623 = vsyncadd %s616, %s622
          %s624 = smul.addr %s620, 8
          %s625 = smul.addr %s624, 64
          %s626 = scalar_lea.hbm %s1, %s625
          %s627 = sshll.u32 %s619, 4
          %s628 = int_to_ptr.vmem [resolvable:$true] %s627
          %633 = dma.hbm_to_vmem [thread:$0]  %s626, 32768, %s628, %s616, 512, 512, 32
        $region95: #{resnet50_bridge_forward.1} parent=67 // pred_fallthru
          _
      $region68: #{resnet50_bridge_forward.1} parent=5 // pred_fallthru
        _
      %p634 = scmp.le.s32.totalorder 1, %s31
      %p635 = scmp.lt.s32.totalorder %s31, 5
      %p636 = pnand %p634, %p635
      %p637 = pneg %p636
      // Predicated region
      $region96: #{resnet50_bridge_forward.1} parent=5 // pred_check
        _
      $region97: #{resnet50_bridge_forward.1} parent=5 // pred_check_branch
        %639 = sbr.rel (%p636) target = $region99
      $region98: #{resnet50_bridge_forward.1} parent=5 // pred_region
        %s640 = ssub.s32 %s31, 1
        %s641 = sand.u32 %s44, 1
        %s642 = sand.u32 %s44, 1
        %s643 = smul.addr %s642, 208
        %s644 = scalar_lea.vmem [#allocation4], %s643
        // Predicated region
        $region100: #{resnet50_bridge_forward.1} parent=98 // pred_check
          %p645 = pneg %p57
        $region101: #{resnet50_bridge_forward.1} parent=98 // pred_check_branch
          %647 = sbr.rel (%p645) target = $region103
        $region102: #{resnet50_bridge_forward.1} parent=98 // pred_region
          _
        $region103: #{resnet50_bridge_forward.1} parent=98 // pred_fallthru
          _
        %s648 = sand.u32 %s70, 1
        %s649 = scalar_lea.sflag [#allocation6], %s648
        %s650 = sand.u32 %s70, 1
        %s651 = smul.addr %s650, 2048
        %s652 = scalar_lea.vmem [#allocation5], %s651
        // Predicated region
        $region104: #{resnet50_bridge_forward.1} parent=98 // pred_check
          %p653 = pneg %p83
        $region105: #{resnet50_bridge_forward.1} parent=98 // pred_check_branch
          %655 = sbr.rel (%p653) target = $region107
        $region106: #{resnet50_bridge_forward.1} parent=98 // pred_region
          %656 = dma.done %s649, 32768
        $region107: #{resnet50_bridge_forward.1} parent=98 // pred_fallthru
          _
        // Predicated region
        $region108: #{resnet50_bridge_forward.1} parent=98 // pred_check
          %p657 = pneg %p104
        $region109: #{resnet50_bridge_forward.1} parent=98 // pred_check_branch
          %659 = sbr.rel (%p657) target = $region111
        $region110: #{resnet50_bridge_forward.1} parent=98 // pred_region
          %660 = dma.done [#allocation9], 128
        $region111: #{resnet50_bridge_forward.1} parent=98 // pred_fallthru
          _
        // Predicated region
        $region112: #{resnet50_bridge_forward.1} parent=98 // pred_check
          %p661 = pneg %p125
        $region113: #{resnet50_bridge_forward.1} parent=98 // pred_check_branch
          %663 = sbr.rel (%p661) target = $region115
        $region114: #{resnet50_bridge_forward.1} parent=98 // pred_region
          %664 = dma.done [#allocation9], 128
        $region115: #{resnet50_bridge_forward.1} parent=98 // pred_fallthru
          _
        // Predicated region
        $region116: #{resnet50_bridge_forward.1} parent=98 // pred_check
          %p665 = pneg %p146
        $region117: #{resnet50_bridge_forward.1} parent=98 // pred_check_branch
          %667 = sbr.rel (%p665) target = $region119
        $region118: #{resnet50_bridge_forward.1} parent=98 // pred_region
          %668 = dma.done [#allocation12], 128
        $region119: #{resnet50_bridge_forward.1} parent=98 // pred_fallthru
          _
        // Predicated region
        $region120: #{resnet50_bridge_forward.1} parent=98 // pred_check
          %p669 = pneg %p167
        $region121: #{resnet50_bridge_forward.1} parent=98 // pred_check_branch
          %671 = sbr.rel (%p669) target = $region123
        $region122: #{resnet50_bridge_forward.1} parent=98 // pred_region
          %672 = dma.done [#allocation12], 8192
        $region123: #{resnet50_bridge_forward.1} parent=98 // pred_fallthru
          _
        // Predicated region
        $region124: #{resnet50_bridge_forward.1} parent=98 // pred_check
          %p673 = pneg %p188
        $region125: #{resnet50_bridge_forward.1} parent=98 // pred_check_branch
          %675 = sbr.rel (%p673) target = $region127
        $region126: #{resnet50_bridge_forward.1} parent=98 // pred_region
          %676 = dma.done [#allocation15], 16
        $region127: #{resnet50_bridge_forward.1} parent=98 // pred_fallthru
          _
        // Predicated region
        $region128: #{resnet50_bridge_forward.1} parent=98 // pred_check
          %p677 = pneg %p209
        $region129: #{resnet50_bridge_forward.1} parent=98 // pred_check_branch
          %679 = sbr.rel (%p677) target = $region131
        $region130: #{resnet50_bridge_forward.1} parent=98 // pred_region
          %680 = dma.done [#allocation15], 16
        $region131: #{resnet50_bridge_forward.1} parent=98 // pred_fallthru
          _
        // Predicated region
        $region132: #{resnet50_bridge_forward.1} parent=98 // pred_check
          %p681 = pneg %p230
        $region133: #{resnet50_bridge_forward.1} parent=98 // pred_check_branch
          %683 = sbr.rel (%p681) target = $region135
        $region134: #{resnet50_bridge_forward.1} parent=98 // pred_region
          %684 = dma.done [#allocation18], 16
        $region135: #{resnet50_bridge_forward.1} parent=98 // pred_fallthru
          _
        // Predicated region
        $region136: #{resnet50_bridge_forward.1} parent=98 // pred_check
          %p685 = pneg %p272
        $region137: #{resnet50_bridge_forward.1} parent=98 // pred_check_branch
          %687 = sbr.rel (%p685) target = $region139
        $region138: #{resnet50_bridge_forward.1} parent=98 // pred_region
          %688 = dma.done [#allocation18], 16
        $region139: #{resnet50_bridge_forward.1} parent=98 // pred_fallthru
          _
        // Predicated region
        $region140: #{resnet50_bridge_forward.1} parent=98 // pred_check
          %p689 = pneg %p293
        $region141: #{resnet50_bridge_forward.1} parent=98 // pred_check_branch
          %691 = sbr.rel (%p689) target = $region143
        $region142: #{resnet50_bridge_forward.1} parent=98 // pred_region
          %692 = dma.done [#allocation21], 16
        $region143: #{resnet50_bridge_forward.1} parent=98 // pred_fallthru
          _
        // Predicated region
        $region144: #{resnet50_bridge_forward.1} parent=98 // pred_check
          %p693 = pneg %p314
        $region145: #{resnet50_bridge_forward.1} parent=98 // pred_check_branch
          %695 = sbr.rel (%p693) target = $region147
        $region146: #{resnet50_bridge_forward.1} parent=98 // pred_region
          %696 = dma.done [#allocation21], 16
        $region147: #{resnet50_bridge_forward.1} parent=98 // pred_fallthru
          _
        // Predicated region
        $region148: #{resnet50_bridge_forward.1} parent=98 // pred_check
          %p697 = pneg %p335
        $region149: #{resnet50_bridge_forward.1} parent=98 // pred_check_branch
          %699 = sbr.rel (%p697) target = $region151
        $region150: #{resnet50_bridge_forward.1} parent=98 // pred_region
          %700 = dma.done [#allocation24], 75264
        $region151: #{resnet50_bridge_forward.1} parent=98 // pred_fallthru
          _
        // Predicated region
        $region152: #{resnet50_bridge_forward.1} parent=98 // pred_check
          %p701 = pneg %p356
        $region153: #{resnet50_bridge_forward.1} parent=98 // pred_check_branch
          %703 = sbr.rel (%p701) target = $region155
        $region154: #{resnet50_bridge_forward.1} parent=98 // pred_region
          %704 = dma.done [#allocation24], 96
        $region155: #{resnet50_bridge_forward.1} parent=98 // pred_fallthru
          _
        %s705 = sand.u32 %s44, 1
        %s706 = sand.u32 %s44, 1
        %s707 = smul.addr %s706, 208
        %s708 = scalar_lea.vmem [#allocation4], %s707
        %p709 = pneg %p57
        %p710 = pneg %p54
        %s711 = sand.u32 %s70, 1
        %s712 = scalar_lea.sflag [#allocation6], %s711
        %s713 = sand.u32 %s70, 1
        %s714 = smul.addr %s713, 2048
        %s715 = scalar_lea.vmem [#allocation5], %s714
        %p716 = pneg %p83
        %p717 = pneg %p80
        %p718 = pneg %p104
        %p719 = pneg %p101
        %p720 = pneg %p125
        %p721 = pneg %p122
        %p722 = pneg %p146
        %p723 = pneg %p143
        %p724 = pneg %p167
        %p725 = pneg %p164
        %p726 = pneg %p188
        %p727 = pneg %p185
        %p728 = pneg %p209
        %p729 = pneg %p206
        %p730 = pneg %p230
        %p731 = pneg %p227
        %p732 = pneg %p251
        %p733 = pneg %p248
        %p734 = pneg %p272
        %p735 = pneg %p269
        %p736 = pneg %p293
        %p737 = pneg %p290
        %p738 = pneg %p314
        %p739 = pneg %p311
        %p740 = pneg %p335
        %p741 = pneg %p332
        %p742 = pneg %p356
        %p743 = pneg %p353
        %p744 = pneg %p377
        %p745 = pneg %p374
        %s746 = smul.u32 4, %s36
        %s747 = smul.u32 64, %s36
        %p749 = scmp.eq.s32.totalorder %s36, 0
        // Predicated region
        $region156: #{resnet50_bridge_forward.1} parent=98 // pred_check
          %p750 = pneg %p749
        $region157: #{resnet50_bridge_forward.1} parent=98 // pred_check_branch
          %752 = sbr.rel (%p750) target = $region159
        $region158: #{resnet50_bridge_forward.1} parent=98 // pred_region
          %753 = vst [vmem:[#allocation2] sm:$0xff] 0.0
          %754 = vst [vmem:[#allocation2 + $0x8] sm:$0xff] 0.0
          %755 = vst [vmem:[#allocation2 + $0x10] sm:$0xff] 0.0
          %756 = vst [vmem:[#allocation2 + $0x18] sm:$0xff] 0.0
          %757 = vst [vmem:[#allocation2 + $0x20] sm:$0xff] 0.0
          %758 = vst [vmem:[#allocation2 + $0x28] sm:$0xff] 0.0
          %759 = vst [vmem:[#allocation2 + $0x30] sm:$0xff] 0.0
          %760 = vst [vmem:[#allocation2 + $0x38] sm:$0xff] 0.0
          %761 = vst [vmem:[#allocation2 + $0x40] sm:$0xff] 0.0
          %762 = vst [vmem:[#allocation2 + $0x48] sm:$0xff] 0.0
          %763 = vst [vmem:[#allocation2 + $0x50] sm:$0xff] 0.0
          %764 = vst [vmem:[#allocation2 + $0x58] sm:$0xff] 0.0
          %765 = vst [vmem:[#allocation2 + $0x60] sm:$0xff] 0.0
          %766 = vst [vmem:[#allocation2 + $0x68] sm:$0xff] 0.0
          %767 = vst [vmem:[#allocation2 + $0x70] sm:$0xff] 0.0
          %768 = vst [vmem:[#allocation2 + $0x78] sm:$0xff] 0.0
          %769 = vst [vmem:[#allocation2 + $0x80] sm:$0xff] 0.0
          %770 = vst [vmem:[#allocation2 + $0x88] sm:$0xff] 0.0
          %771 = vst [vmem:[#allocation2 + $0x90] sm:$0xff] 0.0
          %772 = vst [vmem:[#allocation2 + $0x98] sm:$0xff] 0.0
          %773 = vst [vmem:[#allocation2 + $0xa0] sm:$0xff] 0.0
          %774 = vst [vmem:[#allocation2 + $0xa8] sm:$0xff] 0.0
          %775 = vst [vmem:[#allocation2 + $0xb0] sm:$0xff] 0.0
          %776 = vst [vmem:[#allocation2 + $0xb8] sm:$0xff] 0.0
          %777 = vst [vmem:[#allocation2 + $0xc0] sm:$0xff] 0.0
          %778 = vst [vmem:[#allocation2 + $0xc8] sm:$0xff] 0.0
          %779 = vst [vmem:[#allocation2 + $0xd0] sm:$0xff] 0.0
          %780 = vst [vmem:[#allocation2 + $0xd8] sm:$0xff] 0.0
          %781 = vst [vmem:[#allocation2 + $0xe0] sm:$0xff] 0.0
          %782 = vst [vmem:[#allocation2 + $0xe8] sm:$0xff] 0.0
          %783 = vst [vmem:[#allocation2 + $0xf0] sm:$0xff] 0.0
          %784 = vst [vmem:[#allocation2 + $0xf8] sm:$0xff] 0.0
          %785 = vst [vmem:[#allocation2 + $0x100] sm:$0xff] 0.0
          %786 = vst [vmem:[#allocation2 + $0x108] sm:$0xff] 0.0
          %787 = vst [vmem:[#allocation2 + $0x110] sm:$0xff] 0.0
          %788 = vst [vmem:[#allocation2 + $0x118] sm:$0xff] 0.0
          %789 = vst [vmem:[#allocation2 + $0x120] sm:$0xff] 0.0
          %790 = vst [vmem:[#allocation2 + $0x128] sm:$0xff] 0.0
          %791 = vst [vmem:[#allocation2 + $0x130] sm:$0xff] 0.0
          %792 = vst [vmem:[#allocation2 + $0x138] sm:$0xff] 0.0
          %793 = vst [vmem:[#allocation2 + $0x140] sm:$0xff] 0.0
          %794 = vst [vmem:[#allocation2 + $0x148] sm:$0xff] 0.0
          %795 = vst [vmem:[#allocation2 + $0x150] sm:$0xff] 0.0
          %796 = vst [vmem:[#allocation2 + $0x158] sm:$0xff] 0.0
          %797 = vst [vmem:[#allocation2 + $0x160] sm:$0xff] 0.0
          %798 = vst [vmem:[#allocation2 + $0x168] sm:$0xff] 0.0
          %799 = vst [vmem:[#allocation2 + $0x170] sm:$0xff] 0.0
          %800 = vst [vmem:[#allocation2 + $0x178] sm:$0xff] 0.0
          %801 = vst [vmem:[#allocation2 + $0x180] sm:$0xff] 0.0
          %802 = vst [vmem:[#allocation2 + $0x188] sm:$0xff] 0.0
          %803 = vst [vmem:[#allocation2 + $0x190] sm:$0xff] 0.0
          %804 = vst [vmem:[#allocation2 + $0x198] sm:$0xff] 0.0
          %805 = vst [vmem:[#allocation2 + $0x1a0] sm:$0xff] 0.0
          %806 = vst [vmem:[#allocation2 + $0x1a8] sm:$0xff] 0.0
          %807 = vst [vmem:[#allocation2 + $0x1b0] sm:$0xff] 0.0
          %808 = vst [vmem:[#allocation2 + $0x1b8] sm:$0xff] 0.0
          %809 = vst [vmem:[#allocation2 + $0x1c0] sm:$0xff] 0.0
          %810 = vst [vmem:[#allocation2 + $0x1c8] sm:$0xff] 0.0
          %811 = vst [vmem:[#allocation2 + $0x1d0] sm:$0xff] 0.0
          %812 = vst [vmem:[#allocation2 + $0x1d8] sm:$0xff] 0.0
          %813 = vst [vmem:[#allocation2 + $0x1e0] sm:$0xff] 0.0
          %814 = vst [vmem:[#allocation2 + $0x1e8] sm:$0xff] 0.0
          %815 = vst [vmem:[#allocation2 + $0x1f0] sm:$0xff] 0.0
          %816 = vst [vmem:[#allocation2 + $0x1f8] sm:$0xff] 0.0
          %817 = vst [vmem:[#allocation2 + $0x200] sm:$0xff] 0.0
          %818 = vst [vmem:[#allocation2 + $0x208] sm:$0xff] 0.0
          %819 = vst [vmem:[#allocation2 + $0x210] sm:$0xff] 0.0
          %820 = vst [vmem:[#allocation2 + $0x218] sm:$0xff] 0.0
          %821 = vst [vmem:[#allocation2 + $0x220] sm:$0xff] 0.0
          %822 = vst [vmem:[#allocation2 + $0x228] sm:$0xff] 0.0
          %823 = vst [vmem:[#allocation2 + $0x230] sm:$0xff] 0.0
          %824 = vst [vmem:[#allocation2 + $0x238] sm:$0xff] 0.0
          %825 = vst [vmem:[#allocation2 + $0x240] sm:$0xff] 0.0
          %826 = vst [vmem:[#allocation2 + $0x248] sm:$0xff] 0.0
          %827 = vst [vmem:[#allocation2 + $0x250] sm:$0xff] 0.0
          %828 = vst [vmem:[#allocation2 + $0x258] sm:$0xff] 0.0
          %829 = vst [vmem:[#allocation2 + $0x260] sm:$0xff] 0.0
          %830 = vst [vmem:[#allocation2 + $0x268] sm:$0xff] 0.0
          %831 = vst [vmem:[#allocation2 + $0x270] sm:$0xff] 0.0
          %832 = vst [vmem:[#allocation2 + $0x278] sm:$0xff] 0.0
          %833 = vst [vmem:[#allocation2 + $0x280] sm:$0xff] 0.0
          %834 = vst [vmem:[#allocation2 + $0x288] sm:$0xff] 0.0
          %835 = vst [vmem:[#allocation2 + $0x290] sm:$0xff] 0.0
          %836 = vst [vmem:[#allocation2 + $0x298] sm:$0xff] 0.0
          %837 = vst [vmem:[#allocation2 + $0x2a0] sm:$0xff] 0.0
          %838 = vst [vmem:[#allocation2 + $0x2a8] sm:$0xff] 0.0
          %839 = vst [vmem:[#allocation2 + $0x2b0] sm:$0xff] 0.0
          %840 = vst [vmem:[#allocation2 + $0x2b8] sm:$0xff] 0.0
          %841 = vst [vmem:[#allocation2 + $0x2c0] sm:$0xff] 0.0
          %842 = vst [vmem:[#allocation2 + $0x2c8] sm:$0xff] 0.0
          %843 = vst [vmem:[#allocation2 + $0x2d0] sm:$0xff] 0.0
          %844 = vst [vmem:[#allocation2 + $0x2d8] sm:$0xff] 0.0
          %845 = vst [vmem:[#allocation2 + $0x2e0] sm:$0xff] 0.0
          %846 = vst [vmem:[#allocation2 + $0x2e8] sm:$0xff] 0.0
          %847 = vst [vmem:[#allocation2 + $0x2f0] sm:$0xff] 0.0
          %848 = vst [vmem:[#allocation2 + $0x2f8] sm:$0xff] 0.0
          %849 = vst [vmem:[#allocation2 + $0x300] sm:$0x3] 0.0
          %850 = vst [vmem:[#allocation2 + $0x308] sm:$0x3] 0.0
          %851 = vst [vmem:[#allocation2 + $0x310] sm:$0x3] 0.0
          %852 = vst [vmem:[#allocation2 + $0x318] sm:$0x3] 0.0
          %853 = vst [vmem:[#allocation2 + $0x320] sm:$0x3] 0.0
          %854 = vst [vmem:[#allocation2 + $0x328] sm:$0x3] 0.0
          %855 = vst [vmem:[#allocation2 + $0x330] sm:$0x3] 0.0
          %856 = vst [vmem:[#allocation2 + $0x338] sm:$0x3] 0.0
        $region159: #{resnet50_bridge_forward.1} parent=98 // pred_fallthru
          _
        %v857 = vld [vmem:[#allocation2] sm:$0xff]
        %v858 = vld [vmem:[#allocation2 + $0x8] sm:$0xff]
        %v859 = vld [vmem:[#allocation2 + $0x10] sm:$0xff]
        %v860 = vld [vmem:[#allocation2 + $0x18] sm:$0xff]
        %v861 = vld [vmem:[#allocation2 + $0x20] sm:$0xff]
        %v862 = vld [vmem:[#allocation2 + $0x28] sm:$0xff]
        %v863 = vld [vmem:[#allocation2 + $0x30] sm:$0xff]
        %v864 = vld [vmem:[#allocation2 + $0x38] sm:$0xff]
        %v865 = vld [vmem:[#allocation2 + $0x40] sm:$0xff]
        %v866 = vld [vmem:[#allocation2 + $0x48] sm:$0xff]
        %v867 = vld [vmem:[#allocation2 + $0x50] sm:$0xff]
        %v868 = vld [vmem:[#allocation2 + $0x58] sm:$0xff]
        %v869 = vld [vmem:[#allocation2 + $0x60] sm:$0xff]
        %v870 = vld [vmem:[#allocation2 + $0x68] sm:$0xff]
        %v871 = vld [vmem:[#allocation2 + $0x70] sm:$0xff]
        %v872 = vld [vmem:[#allocation2 + $0x78] sm:$0xff]
        %v873 = vld [vmem:[#allocation2 + $0x80] sm:$0xff]
        %v874 = vld [vmem:[#allocation2 + $0x88] sm:$0xff]
        %v875 = vld [vmem:[#allocation2 + $0x90] sm:$0xff]
        %v876 = vld [vmem:[#allocation2 + $0x98] sm:$0xff]
        %v877 = vld [vmem:[#allocation2 + $0xa0] sm:$0xff]
        %v878 = vld [vmem:[#allocation2 + $0xa8] sm:$0xff]
        %v879 = vld [vmem:[#allocation2 + $0xb0] sm:$0xff]
        %v880 = vld [vmem:[#allocation2 + $0xb8] sm:$0xff]
        %v881 = vld [vmem:[#allocation2 + $0xc0] sm:$0xff]
        %v882 = vld [vmem:[#allocation2 + $0xc8] sm:$0xff]
        %v883 = vld [vmem:[#allocation2 + $0xd0] sm:$0xff]
        %v884 = vld [vmem:[#allocation2 + $0xd8] sm:$0xff]
        %v885 = vld [vmem:[#allocation2 + $0xe0] sm:$0xff]
        %v886 = vld [vmem:[#allocation2 + $0xe8] sm:$0xff]
        %v887 = vld [vmem:[#allocation2 + $0xf0] sm:$0xff]
        %v888 = vld [vmem:[#allocation2 + $0xf8] sm:$0xff]
        %v889 = vld [vmem:[#allocation2 + $0x100] sm:$0xff]
        %v890 = vld [vmem:[#allocation2 + $0x108] sm:$0xff]
        %v891 = vld [vmem:[#allocation2 + $0x110] sm:$0xff]
        %v892 = vld [vmem:[#allocation2 + $0x118] sm:$0xff]
        %v893 = vld [vmem:[#allocation2 + $0x120] sm:$0xff]
        %v894 = vld [vmem:[#allocation2 + $0x128] sm:$0xff]
        %v895 = vld [vmem:[#allocation2 + $0x130] sm:$0xff]
        %v896 = vld [vmem:[#allocation2 + $0x138] sm:$0xff]
        %v897 = vld [vmem:[#allocation2 + $0x140] sm:$0xff]
        %v898 = vld [vmem:[#allocation2 + $0x148] sm:$0xff]
        %v899 = vld [vmem:[#allocation2 + $0x150] sm:$0xff]
        %v900 = vld [vmem:[#allocation2 + $0x158] sm:$0xff]
        %v901 = vld [vmem:[#allocation2 + $0x160] sm:$0xff]
        %v902 = vld [vmem:[#allocation2 + $0x168] sm:$0xff]
        %v903 = vld [vmem:[#allocation2 + $0x170] sm:$0xff]
        %v904 = vld [vmem:[#allocation2 + $0x178] sm:$0xff]
        %v905 = vld [vmem:[#allocation2 + $0x180] sm:$0xff]
        %v906 = vld [vmem:[#allocation2 + $0x188] sm:$0xff]
        %v907 = vld [vmem:[#allocation2 + $0x190] sm:$0xff]
        %v908 = vld [vmem:[#allocation2 + $0x198] sm:$0xff]
        %v909 = vld [vmem:[#allocation2 + $0x1a0] sm:$0xff]
        %v910 = vld [vmem:[#allocation2 + $0x1a8] sm:$0xff]
        %v911 = vld [vmem:[#allocation2 + $0x1b0] sm:$0xff]
        %v912 = vld [vmem:[#allocation2 + $0x1b8] sm:$0xff]
        %v913 = vld [vmem:[#allocation2 + $0x1c0] sm:$0xff]
        %v914 = vld [vmem:[#allocation2 + $0x1c8] sm:$0xff]
        %v915 = vld [vmem:[#allocation2 + $0x1d0] sm:$0xff]
        %v916 = vld [vmem:[#allocation2 + $0x1d8] sm:$0xff]
        %v917 = vld [vmem:[#allocation2 + $0x1e0] sm:$0xff]
        %v918 = vld [vmem:[#allocation2 + $0x1e8] sm:$0xff]
        %v919 = vld [vmem:[#allocation2 + $0x1f0] sm:$0xff]
        %v920 = vld [vmem:[#allocation2 + $0x1f8] sm:$0xff]
        %v921 = vld [vmem:[#allocation2 + $0x200] sm:$0xff]
        %v922 = vld [vmem:[#allocation2 + $0x208] sm:$0xff]
        %v923 = vld [vmem:[#allocation2 + $0x210] sm:$0xff]
        %v924 = vld [vmem:[#allocation2 + $0x218] sm:$0xff]
        %v925 = vld [vmem:[#allocation2 + $0x220] sm:$0xff]
        %v926 = vld [vmem:[#allocation2 + $0x228] sm:$0xff]
        %v927 = vld [vmem:[#allocation2 + $0x230] sm:$0xff]
        %v928 = vld [vmem:[#allocation2 + $0x238] sm:$0xff]
        %v929 = vld [vmem:[#allocation2 + $0x240] sm:$0xff]
        %v930 = vld [vmem:[#allocation2 + $0x248] sm:$0xff]
        %v931 = vld [vmem:[#allocation2 + $0x250] sm:$0xff]
        %v932 = vld [vmem:[#allocation2 + $0x258] sm:$0xff]
        %v933 = vld [vmem:[#allocation2 + $0x260] sm:$0xff]
        %v934 = vld [vmem:[#allocation2 + $0x268] sm:$0xff]
        %v935 = vld [vmem:[#allocation2 + $0x270] sm:$0xff]
        %v936 = vld [vmem:[#allocation2 + $0x278] sm:$0xff]
        %v937 = vld [vmem:[#allocation2 + $0x280] sm:$0xff]
        %v938 = vld [vmem:[#allocation2 + $0x288] sm:$0xff]
        %v939 = vld [vmem:[#allocation2 + $0x290] sm:$0xff]
        %v940 = vld [vmem:[#allocation2 + $0x298] sm:$0xff]
        %v941 = vld [vmem:[#allocation2 + $0x2a0] sm:$0xff]
        %v942 = vld [vmem:[#allocation2 + $0x2a8] sm:$0xff]
        %v943 = vld [vmem:[#allocation2 + $0x2b0] sm:$0xff]
        %v944 = vld [vmem:[#allocation2 + $0x2b8] sm:$0xff]
        %v945 = vld [vmem:[#allocation2 + $0x2c0] sm:$0xff]
        %v946 = vld [vmem:[#allocation2 + $0x2c8] sm:$0xff]
        %v947 = vld [vmem:[#allocation2 + $0x2d0] sm:$0xff]
        %v948 = vld [vmem:[#allocation2 + $0x2d8] sm:$0xff]
        %v949 = vld [vmem:[#allocation2 + $0x2e0] sm:$0xff]
        %v950 = vld [vmem:[#allocation2 + $0x2e8] sm:$0xff]
        %v951 = vld [vmem:[#allocation2 + $0x2f0] sm:$0xff]
        %v952 = vld [vmem:[#allocation2 + $0x2f8] sm:$0xff]
        %v953 = vld [vmem:[#allocation2 + $0x300] sm:$0x3]
        %v954 = vld [vmem:[#allocation2 + $0x308] sm:$0x3]
        %v955 = vld [vmem:[#allocation2 + $0x310] sm:$0x3]
        %v956 = vld [vmem:[#allocation2 + $0x318] sm:$0x3]
        %v957 = vld [vmem:[#allocation2 + $0x320] sm:$0x3]
        %v958 = vld [vmem:[#allocation2 + $0x328] sm:$0x3]
        %v959 = vld [vmem:[#allocation2 + $0x330] sm:$0x3]
        %v960 = vld [vmem:[#allocation2 + $0x338] sm:$0x3]
        %v961 = vld [vmem:[%s644] sm:$0xff]
        %v962 = vld [vmem:[%s644 + $0x8] sm:$0xff]
        %v963 = vld [vmem:[%s644 + $0x10] sm:$0xff]
        %v964 = vld [vmem:[%s644 + $0x18] sm:$0xff]
        %v965 = vld [vmem:[%s644 + $0x20] sm:$0xff]
        %v966 = vld [vmem:[%s644 + $0x28] sm:$0xff]
        %v967 = vld [vmem:[%s644 + $0x30] sm:$0xff]
        %v968 = vld [vmem:[%s644 + $0x38] sm:$0xff]
        %v969 = vld [vmem:[%s644 + $0x40] sm:$0xff]
        %v970 = vld [vmem:[%s644 + $0x48] sm:$0xff]
        %v971 = vld [vmem:[%s644 + $0x50] sm:$0xff]
        %v972 = vld [vmem:[%s644 + $0x58] sm:$0xff]
        %v973 = vld [vmem:[%s644 + $0x60] sm:$0xff]
        %v974 = vld [vmem:[%s644 + $0x68] sm:$0xff]
        %v975 = vld [vmem:[%s644 + $0x70] sm:$0xff]
        %v976 = vld [vmem:[%s644 + $0x78] sm:$0xff]
        %v977 = vld [vmem:[%s644 + $0x80] sm:$0xff]
        %v978 = vld [vmem:[%s644 + $0x88] sm:$0xff]
        %v979 = vld [vmem:[%s644 + $0x90] sm:$0xff]
        %v980 = vld [vmem:[%s644 + $0x98] sm:$0xff]
        %v981 = vld [vmem:[%s644 + $0xa0] sm:$0xff]
        %v982 = vld [vmem:[%s644 + $0xa8] sm:$0xff]
        %v983 = vld [vmem:[%s644 + $0xb0] sm:$0xff]
        %v984 = vld [vmem:[%s644 + $0xb8] sm:$0xff]
        %v985 = vld [vmem:[%s644 + $0xc0] sm:$0x11]
        %v986 = vld [vmem:[%s644 + $0xc8] sm:$0x11]
        %v987 = vld [vmem:[%s652] sm:$0xff]
        %v988 = vld [vmem:[%s652 + $0x8] sm:$0xff]
        %v989 = vld [vmem:[%s652 + $0x10] sm:$0xff]
        %v990 = vld [vmem:[%s652 + $0x18] sm:$0xff]
        %v991 = vld [vmem:[%s652 + $0x20] sm:$0xff]
        %v992 = vld [vmem:[%s652 + $0x28] sm:$0xff]
        %v993 = vld [vmem:[%s652 + $0x30] sm:$0xff]
        %v994 = vld [vmem:[%s652 + $0x38] sm:$0xff]
        %v995 = vld [vmem:[%s652 + $0x40] sm:$0xff]
        %v996 = vld [vmem:[%s652 + $0x48] sm:$0xff]
        %v997 = vld [vmem:[%s652 + $0x50] sm:$0xff]
        %v998 = vld [vmem:[%s652 + $0x58] sm:$0xff]
        %v999 = vld [vmem:[%s652 + $0x60] sm:$0xff]
        %v1000 = vld [vmem:[%s652 + $0x68] sm:$0xff]
        %v1001 = vld [vmem:[%s652 + $0x70] sm:$0xff]
        %v1002 = vld [vmem:[%s652 + $0x78] sm:$0xff]
        %v1003 = vld [vmem:[%s652 + $0x80] sm:$0xff]
        %v1004 = vld [vmem:[%s652 + $0x88] sm:$0xff]
        %v1005 = vld [vmem:[%s652 + $0x90] sm:$0xff]
        %v1006 = vld [vmem:[%s652 + $0x98] sm:$0xff]
        %v1007 = vld [vmem:[%s652 + $0xa0] sm:$0xff]
        %v1008 = vld [vmem:[%s652 + $0xa8] sm:$0xff]
        %v1009 = vld [vmem:[%s652 + $0xb0] sm:$0xff]
        %v1010 = vld [vmem:[%s652 + $0xb8] sm:$0xff]
        %v1011 = vld [vmem:[%s652 + $0xc0] sm:$0xff]
        %v1012 = vld [vmem:[%s652 + $0xc8] sm:$0xff]
        %v1013 = vld [vmem:[%s652 + $0xd0] sm:$0xff]
        %v1014 = vld [vmem:[%s652 + $0xd8] sm:$0xff]
        %v1015 = vld [vmem:[%s652 + $0xe0] sm:$0xff]
        %v1016 = vld [vmem:[%s652 + $0xe8] sm:$0xff]
        %v1017 = vld [vmem:[%s652 + $0xf0] sm:$0xff]
        %v1018 = vld [vmem:[%s652 + $0xf8] sm:$0xff]
        %v1019 = vld [vmem:[%s652 + $0x100] sm:$0xff]
        %v1020 = vld [vmem:[%s652 + $0x108] sm:$0xff]
        %v1021 = vld [vmem:[%s652 + $0x110] sm:$0xff]
        %v1022 = vld [vmem:[%s652 + $0x118] sm:$0xff]
        %v1023 = vld [vmem:[%s652 + $0x120] sm:$0xff]
        %v1024 = vld [vmem:[%s652 + $0x128] sm:$0xff]
        %v1025 = vld [vmem:[%s652 + $0x130] sm:$0xff]
        %v1026 = vld [vmem:[%s652 + $0x138] sm:$0xff]
        %v1027 = vld [vmem:[%s652 + $0x140] sm:$0xff]
        %v1028 = vld [vmem:[%s652 + $0x148] sm:$0xff]
        %v1029 = vld [vmem:[%s652 + $0x150] sm:$0xff]
        %v1030 = vld [vmem:[%s652 + $0x158] sm:$0xff]
        %v1031 = vld [vmem:[%s652 + $0x160] sm:$0xff]
        %v1032 = vld [vmem:[%s652 + $0x168] sm:$0xff]
        %v1033 = vld [vmem:[%s652 + $0x170] sm:$0xff]
        %v1034 = vld [vmem:[%s652 + $0x178] sm:$0xff]
        %v1035 = vld [vmem:[%s652 + $0x180] sm:$0xff]
        %v1036 = vld [vmem:[%s652 + $0x188] sm:$0xff]
        %v1037 = vld [vmem:[%s652 + $0x190] sm:$0xff]
        %v1038 = vld [vmem:[%s652 + $0x198] sm:$0xff]
        %v1039 = vld [vmem:[%s652 + $0x1a0] sm:$0xff]
        %v1040 = vld [vmem:[%s652 + $0x1a8] sm:$0xff]
        %v1041 = vld [vmem:[%s652 + $0x1b0] sm:$0xff]
        %v1042 = vld [vmem:[%s652 + $0x1b8] sm:$0xff]
        %v1043 = vld [vmem:[%s652 + $0x1c0] sm:$0xff]
        %v1044 = vld [vmem:[%s652 + $0x1c8] sm:$0xff]
        %v1045 = vld [vmem:[%s652 + $0x1d0] sm:$0xff]
        %v1046 = vld [vmem:[%s652 + $0x1d8] sm:$0xff]
        %v1047 = vld [vmem:[%s652 + $0x1e0] sm:$0xff]
        %v1048 = vld [vmem:[%s652 + $0x1e8] sm:$0xff]
        %v1049 = vld [vmem:[%s652 + $0x1f0] sm:$0xff]
        %v1050 = vld [vmem:[%s652 + $0x1f8] sm:$0xff]
        %v1051 = vld [vmem:[%s652 + $0x200] sm:$0xff]
        %v1052 = vld [vmem:[%s652 + $0x208] sm:$0xff]
        %v1053 = vld [vmem:[%s652 + $0x210] sm:$0xff]
        %v1054 = vld [vmem:[%s652 + $0x218] sm:$0xff]
        %v1055 = vld [vmem:[%s652 + $0x220] sm:$0xff]
        %v1056 = vld [vmem:[%s652 + $0x228] sm:$0xff]
        %v1057 = vld [vmem:[%s652 + $0x230] sm:$0xff]
        %v1058 = vld [vmem:[%s652 + $0x238] sm:$0xff]
        %v1059 = vld [vmem:[%s652 + $0x240] sm:$0xff]
        %v1060 = vld [vmem:[%s652 + $0x248] sm:$0xff]
        %v1061 = vld [vmem:[%s652 + $0x250] sm:$0xff]
        %v1062 = vld [vmem:[%s652 + $0x258] sm:$0xff]
        %v1063 = vld [vmem:[%s652 + $0x260] sm:$0xff]
        %v1064 = vld [vmem:[%s652 + $0x268] sm:$0xff]
        %v1065 = vld [vmem:[%s652 + $0x270] sm:$0xff]
        %v1066 = vld [vmem:[%s652 + $0x278] sm:$0xff]
        %v1067 = vld [vmem:[%s652 + $0x280] sm:$0xff]
        %v1068 = vld [vmem:[%s652 + $0x288] sm:$0xff]
        %v1069 = vld [vmem:[%s652 + $0x290] sm:$0xff]
        %v1070 = vld [vmem:[%s652 + $0x298] sm:$0xff]
        %v1071 = vld [vmem:[%s652 + $0x2a0] sm:$0xff]
        %v1072 = vld [vmem:[%s652 + $0x2a8] sm:$0xff]
        %v1073 = vld [vmem:[%s652 + $0x2b0] sm:$0xff]
        %v1074 = vld [vmem:[%s652 + $0x2b8] sm:$0xff]
        %v1075 = vld [vmem:[%s652 + $0x2c0] sm:$0xff]
        %v1076 = vld [vmem:[%s652 + $0x2c8] sm:$0xff]
        %v1077 = vld [vmem:[%s652 + $0x2d0] sm:$0xff]
        %v1078 = vld [vmem:[%s652 + $0x2d8] sm:$0xff]
        %v1079 = vld [vmem:[%s652 + $0x2e0] sm:$0xff]
        %v1080 = vld [vmem:[%s652 + $0x2e8] sm:$0xff]
        %v1081 = vld [vmem:[%s652 + $0x2f0] sm:$0xff]
        %v1082 = vld [vmem:[%s652 + $0x2f8] sm:$0xff]
        %v1083 = vld [vmem:[%s652 + $0x300] sm:$0xff]
        %v1084 = vld [vmem:[%s652 + $0x308] sm:$0xff]
        %v1085 = vld [vmem:[%s652 + $0x310] sm:$0xff]
        %v1086 = vld [vmem:[%s652 + $0x318] sm:$0xff]
        %v1087 = vld [vmem:[%s652 + $0x320] sm:$0xff]
        %v1088 = vld [vmem:[%s652 + $0x328] sm:$0xff]
        %v1089 = vld [vmem:[%s652 + $0x330] sm:$0xff]
        %v1090 = vld [vmem:[%s652 + $0x338] sm:$0xff]
        %v1091 = vld [vmem:[%s652 + $0x340] sm:$0xff]
        %v1092 = vld [vmem:[%s652 + $0x348] sm:$0xff]
        %v1093 = vld [vmem:[%s652 + $0x350] sm:$0xff]
        %v1094 = vld [vmem:[%s652 + $0x358] sm:$0xff]
        %v1095 = vld [vmem:[%s652 + $0x360] sm:$0xff]
        %v1096 = vld [vmem:[%s652 + $0x368] sm:$0xff]
        %v1097 = vld [vmem:[%s652 + $0x370] sm:$0xff]
        %v1098 = vld [vmem:[%s652 + $0x378] sm:$0xff]
        %v1099 = vld [vmem:[%s652 + $0x380] sm:$0xff]
        %v1100 = vld [vmem:[%s652 + $0x388] sm:$0xff]
        %v1101 = vld [vmem:[%s652 + $0x390] sm:$0xff]
        %v1102 = vld [vmem:[%s652 + $0x398] sm:$0xff]
        %v1103 = vld [vmem:[%s652 + $0x3a0] sm:$0xff]
        %v1104 = vld [vmem:[%s652 + $0x3a8] sm:$0xff]
        %v1105 = vld [vmem:[%s652 + $0x3b0] sm:$0xff]
        %v1106 = vld [vmem:[%s652 + $0x3b8] sm:$0xff]
        %v1107 = vld [vmem:[%s652 + $0x3c0] sm:$0xff]
        %v1108 = vld [vmem:[%s652 + $0x3c8] sm:$0xff]
        %v1109 = vld [vmem:[%s652 + $0x3d0] sm:$0xff]
        %v1110 = vld [vmem:[%s652 + $0x3d8] sm:$0xff]
        %v1111 = vld [vmem:[%s652 + $0x3e0] sm:$0xff]
        %v1112 = vld [vmem:[%s652 + $0x3e8] sm:$0xff]
        %v1113 = vld [vmem:[%s652 + $0x3f0] sm:$0xff]
        %v1114 = vld [vmem:[%s652 + $0x3f8] sm:$0xff]
        %v1115 = vld [vmem:[%s652 + $0x400] sm:$0xff]
        %v1116 = vld [vmem:[%s652 + $0x408] sm:$0xff]
        %v1117 = vld [vmem:[%s652 + $0x410] sm:$0xff]
        %v1118 = vld [vmem:[%s652 + $0x418] sm:$0xff]
        %v1119 = vld [vmem:[%s652 + $0x420] sm:$0xff]
        %v1120 = vld [vmem:[%s652 + $0x428] sm:$0xff]
        %v1121 = vld [vmem:[%s652 + $0x430] sm:$0xff]
        %v1122 = vld [vmem:[%s652 + $0x438] sm:$0xff]
        %v1123 = vld [vmem:[%s652 + $0x440] sm:$0xff]
        %v1124 = vld [vmem:[%s652 + $0x448] sm:$0xff]
        %v1125 = vld [vmem:[%s652 + $0x450] sm:$0xff]
        %v1126 = vld [vmem:[%s652 + $0x458] sm:$0xff]
        %v1127 = vld [vmem:[%s652 + $0x460] sm:$0xff]
        %v1128 = vld [vmem:[%s652 + $0x468] sm:$0xff]
        %v1129 = vld [vmem:[%s652 + $0x470] sm:$0xff]
        %v1130 = vld [vmem:[%s652 + $0x478] sm:$0xff]
        %v1131 = vld [vmem:[%s652 + $0x480] sm:$0xff]
        %v1132 = vld [vmem:[%s652 + $0x488] sm:$0xff]
        %v1133 = vld [vmem:[%s652 + $0x490] sm:$0xff]
        %v1134 = vld [vmem:[%s652 + $0x498] sm:$0xff]
        %v1135 = vld [vmem:[%s652 + $0x4a0] sm:$0xff]
        %v1136 = vld [vmem:[%s652 + $0x4a8] sm:$0xff]
        %v1137 = vld [vmem:[%s652 + $0x4b0] sm:$0xff]
        %v1138 = vld [vmem:[%s652 + $0x4b8] sm:$0xff]
        %v1139 = vld [vmem:[%s652 + $0x4c0] sm:$0xff]
        %v1140 = vld [vmem:[%s652 + $0x4c8] sm:$0xff]
        %v1141 = vld [vmem:[%s652 + $0x4d0] sm:$0xff]
        %v1142 = vld [vmem:[%s652 + $0x4d8] sm:$0xff]
        %v1143 = vld [vmem:[%s652 + $0x4e0] sm:$0xff]
        %v1144 = vld [vmem:[%s652 + $0x4e8] sm:$0xff]
        %v1145 = vld [vmem:[%s652 + $0x4f0] sm:$0xff]
        %v1146 = vld [vmem:[%s652 + $0x4f8] sm:$0xff]
        %v1147 = vld [vmem:[%s652 + $0x500] sm:$0xff]
        %v1148 = vld [vmem:[%s652 + $0x508] sm:$0xff]
        %v1149 = vld [vmem:[%s652 + $0x510] sm:$0xff]
        %v1150 = vld [vmem:[%s652 + $0x518] sm:$0xff]
        %v1151 = vld [vmem:[%s652 + $0x520] sm:$0xff]
        %v1152 = vld [vmem:[%s652 + $0x528] sm:$0xff]
        %v1153 = vld [vmem:[%s652 + $0x530] sm:$0xff]
        %v1154 = vld [vmem:[%s652 + $0x538] sm:$0xff]
        %v1155 = vld [vmem:[%s652 + $0x540] sm:$0xff]
        %v1156 = vld [vmem:[%s652 + $0x548] sm:$0xff]
        %v1157 = vld [vmem:[%s652 + $0x550] sm:$0xff]
        %v1158 = vld [vmem:[%s652 + $0x558] sm:$0xff]
        %v1159 = vld [vmem:[%s652 + $0x560] sm:$0xff]
        %v1160 = vld [vmem:[%s652 + $0x568] sm:$0xff]
        %v1161 = vld [vmem:[%s652 + $0x570] sm:$0xff]
        %v1162 = vld [vmem:[%s652 + $0x578] sm:$0xff]
        %v1163 = vld [vmem:[%s652 + $0x580] sm:$0xff]
        %v1164 = vld [vmem:[%s652 + $0x588] sm:$0xff]
        %v1165 = vld [vmem:[%s652 + $0x590] sm:$0xff]
        %v1166 = vld [vmem:[%s652 + $0x598] sm:$0xff]
        %v1167 = vld [vmem:[%s652 + $0x5a0] sm:$0xff]
        %v1168 = vld [vmem:[%s652 + $0x5a8] sm:$0xff]
        %v1169 = vld [vmem:[%s652 + $0x5b0] sm:$0xff]
        %v1170 = vld [vmem:[%s652 + $0x5b8] sm:$0xff]
        %v1171 = vld [vmem:[%s652 + $0x5c0] sm:$0xff]
        %v1172 = vld [vmem:[%s652 + $0x5c8] sm:$0xff]
        %v1173 = vld [vmem:[%s652 + $0x5d0] sm:$0xff]
        %v1174 = vld [vmem:[%s652 + $0x5d8] sm:$0xff]
        %v1175 = vld [vmem:[%s652 + $0x5e0] sm:$0xff]
        %v1176 = vld [vmem:[%s652 + $0x5e8] sm:$0xff]
        %v1177 = vld [vmem:[%s652 + $0x5f0] sm:$0xff]
        %v1178 = vld [vmem:[%s652 + $0x5f8] sm:$0xff]
        %v1179 = vld [vmem:[%s652 + $0x600] sm:$0xff]
        %v1180 = vld [vmem:[%s652 + $0x608] sm:$0xff]
        %v1181 = vld [vmem:[%s652 + $0x610] sm:$0xff]
        %v1182 = vld [vmem:[%s652 + $0x618] sm:$0xff]
        %v1183 = vld [vmem:[%s652 + $0x620] sm:$0xff]
        %v1184 = vld [vmem:[%s652 + $0x628] sm:$0xff]
        %v1185 = vld [vmem:[%s652 + $0x630] sm:$0xff]
        %v1186 = vld [vmem:[%s652 + $0x638] sm:$0xff]
        %v1187 = vld [vmem:[%s652 + $0x640] sm:$0xff]
        %v1188 = vld [vmem:[%s652 + $0x648] sm:$0xff]
        %v1189 = vld [vmem:[%s652 + $0x650] sm:$0xff]
        %v1190 = vld [vmem:[%s652 + $0x658] sm:$0xff]
        %v1191 = vld [vmem:[%s652 + $0x660] sm:$0xff]
        %v1192 = vld [vmem:[%s652 + $0x668] sm:$0xff]
        %v1193 = vld [vmem:[%s652 + $0x670] sm:$0xff]
        %v1194 = vld [vmem:[%s652 + $0x678] sm:$0xff]
        %v1195 = vld [vmem:[%s652 + $0x680] sm:$0xff]
        %v1196 = vld [vmem:[%s652 + $0x688] sm:$0xff]
        %v1197 = vld [vmem:[%s652 + $0x690] sm:$0xff]
        %v1198 = vld [vmem:[%s652 + $0x698] sm:$0xff]
        %v1199 = vld [vmem:[%s652 + $0x6a0] sm:$0xff]
        %v1200 = vld [vmem:[%s652 + $0x6a8] sm:$0xff]
        %v1201 = vld [vmem:[%s652 + $0x6b0] sm:$0xff]
        %v1202 = vld [vmem:[%s652 + $0x6b8] sm:$0xff]
        %v1203 = vld [vmem:[%s652 + $0x6c0] sm:$0xff]
        %v1204 = vld [vmem:[%s652 + $0x6c8] sm:$0xff]
        %v1205 = vld [vmem:[%s652 + $0x6d0] sm:$0xff]
        %v1206 = vld [vmem:[%s652 + $0x6d8] sm:$0xff]
        %v1207 = vld [vmem:[%s652 + $0x6e0] sm:$0xff]
        %v1208 = vld [vmem:[%s652 + $0x6e8] sm:$0xff]
        %v1209 = vld [vmem:[%s652 + $0x6f0] sm:$0xff]
        %v1210 = vld [vmem:[%s652 + $0x6f8] sm:$0xff]
        %v1211 = vld [vmem:[%s652 + $0x700] sm:$0xff]
        %v1212 = vld [vmem:[%s652 + $0x708] sm:$0xff]
        %v1213 = vld [vmem:[%s652 + $0x710] sm:$0xff]
        %v1214 = vld [vmem:[%s652 + $0x718] sm:$0xff]
        %v1215 = vld [vmem:[%s652 + $0x720] sm:$0xff]
        %v1216 = vld [vmem:[%s652 + $0x728] sm:$0xff]
        %v1217 = vld [vmem:[%s652 + $0x730] sm:$0xff]
        %v1218 = vld [vmem:[%s652 + $0x738] sm:$0xff]
        %v1219 = vld [vmem:[%s652 + $0x740] sm:$0xff]
        %v1220 = vld [vmem:[%s652 + $0x748] sm:$0xff]
        %v1221 = vld [vmem:[%s652 + $0x750] sm:$0xff]
        %v1222 = vld [vmem:[%s652 + $0x758] sm:$0xff]
        %v1223 = vld [vmem:[%s652 + $0x760] sm:$0xff]
        %v1224 = vld [vmem:[%s652 + $0x768] sm:$0xff]
        %v1225 = vld [vmem:[%s652 + $0x770] sm:$0xff]
        %v1226 = vld [vmem:[%s652 + $0x778] sm:$0xff]
        %v1227 = vld [vmem:[%s652 + $0x780] sm:$0xff]
        %v1228 = vld [vmem:[%s652 + $0x788] sm:$0xff]
        %v1229 = vld [vmem:[%s652 + $0x790] sm:$0xff]
        %v1230 = vld [vmem:[%s652 + $0x798] sm:$0xff]
        %v1231 = vld [vmem:[%s652 + $0x7a0] sm:$0xff]
        %v1232 = vld [vmem:[%s652 + $0x7a8] sm:$0xff]
        %v1233 = vld [vmem:[%s652 + $0x7b0] sm:$0xff]
        %v1234 = vld [vmem:[%s652 + $0x7b8] sm:$0xff]
        %v1235 = vld [vmem:[%s652 + $0x7c0] sm:$0xff]
        %v1236 = vld [vmem:[%s652 + $0x7c8] sm:$0xff]
        %v1237 = vld [vmem:[%s652 + $0x7d0] sm:$0xff]
        %v1238 = vld [vmem:[%s652 + $0x7d8] sm:$0xff]
        %v1239 = vld [vmem:[%s652 + $0x7e0] sm:$0xff]
        %v1240 = vld [vmem:[%s652 + $0x7e8] sm:$0xff]
        %v1241 = vld [vmem:[%s652 + $0x7f0] sm:$0xff]
        %v1242 = vld [vmem:[%s652 + $0x7f8] sm:$0xff]
        %v1269 = vunpack.c.l.b16 %v961
        %v1270 = vunpack.c.h.b16 %v961
        %v1271 = vunpack.c.l.b16 %v962
        %v1272 = vunpack.c.h.b16 %v962
        %v1273 = vunpack.c.l.b16 %v963
        %v1274 = vunpack.c.h.b16 %v963
        %v1275 = vunpack.c.l.b16 %v964
        %v1276 = vunpack.c.h.b16 %v964
        %v1277 = vunpack.c.l.b16 %v965
        %v1278 = vunpack.c.h.b16 %v965
        %v1279 = vunpack.c.l.b16 %v966
        %v1280 = vunpack.c.h.b16 %v966
        %v1281 = vunpack.c.l.b16 %v967
        %v1282 = vunpack.c.h.b16 %v967
        %v1283 = vunpack.c.l.b16 %v968
        %v1284 = vunpack.c.h.b16 %v968
        %v1285 = vunpack.c.l.b16 %v969
        %v1286 = vunpack.c.h.b16 %v969
        %v1287 = vunpack.c.l.b16 %v970
        %v1288 = vunpack.c.h.b16 %v970
        %v1289 = vunpack.c.l.b16 %v971
        %v1290 = vunpack.c.h.b16 %v971
        %v1291 = vunpack.c.l.b16 %v972
        %v1292 = vunpack.c.h.b16 %v972
        %v1293 = vunpack.c.l.b16 %v973
        %v1294 = vunpack.c.h.b16 %v973
        %v1295 = vunpack.c.l.b16 %v974
        %v1296 = vunpack.c.h.b16 %v974
        %v1297 = vunpack.c.l.b16 %v975
        %v1298 = vunpack.c.h.b16 %v975
        %v1299 = vunpack.c.l.b16 %v976
        %v1300 = vunpack.c.h.b16 %v976
        %v1301 = vunpack.c.l.b16 %v977
        %v1302 = vunpack.c.h.b16 %v977
        %v1303 = vunpack.c.l.b16 %v978
        %v1304 = vunpack.c.h.b16 %v978
        %v1305 = vunpack.c.l.b16 %v979
        %v1306 = vunpack.c.h.b16 %v979
        %v1307 = vunpack.c.l.b16 %v980
        %v1308 = vunpack.c.h.b16 %v980
        %v1309 = vunpack.c.l.b16 %v981
        %v1310 = vunpack.c.h.b16 %v981
        %v1311 = vunpack.c.l.b16 %v982
        %v1312 = vunpack.c.h.b16 %v982
        %v1313 = vunpack.c.l.b16 %v983
        %v1314 = vunpack.c.h.b16 %v983
        %v1315 = vunpack.c.l.b16 %v984
        %v1316 = vunpack.c.h.b16 %v984
        %v1317 = vunpack.c.l.b16 %v985
        %v1318 = vunpack.c.h.b16 %v985
        %v1319 = vunpack.c.l.b16 %v986
        %v1320 = vunpack.c.h.b16 %v986
        %v1321 = vpack.c.b16 %v1273, %v1269
        %v1322 = vpack.c.b16 %v1274, %v1270
        %v1323 = vpack.c.b16 %v1275, %v1271
        %v1324 = vpack.c.b16 %v1276, %v1272
        %v1325 = vpack.c.b16 %v1281, %v1277
        %v1326 = vpack.c.b16 %v1282, %v1278
        %v1327 = vpack.c.b16 %v1283, %v1279
        %v1328 = vpack.c.b16 %v1284, %v1280
        %v1329 = vpack.c.b16 %v1289, %v1285
        %v1330 = vpack.c.b16 %v1290, %v1286
        %v1331 = vpack.c.b16 %v1291, %v1287
        %v1332 = vpack.c.b16 %v1292, %v1288
        %v1333 = vpack.c.b16 %v1297, %v1293
        %v1334 = vpack.c.b16 %v1298, %v1294
        %v1335 = vpack.c.b16 %v1299, %v1295
        %v1336 = vpack.c.b16 %v1300, %v1296
        %v1337 = vpack.c.b16 %v1305, %v1301
        %v1338 = vpack.c.b16 %v1306, %v1302
        %v1339 = vpack.c.b16 %v1307, %v1303
        %v1340 = vpack.c.b16 %v1308, %v1304
        %v1341 = vpack.c.b16 %v1313, %v1309
        %v1342 = vpack.c.b16 %v1314, %v1310
        %v1343 = vpack.c.b16 %v1315, %v1311
        %v1344 = vpack.c.b16 %v1316, %v1312
        %v1345 = vpack.c.b16 %v1317, %v1317
        %v1346 = vpack.c.b16 %v1318, %v1318
        %v1347 = vpack.c.b16 %v1319, %v1319
        %v1348 = vpack.c.b16 %v1320, %v1320
        %v1633 = vunpack.c.l.b16 %v987
        %v1634 = vunpack.c.h.b16 %v987
        %v1635 = vunpack.c.l.b16 %v988
        %v1636 = vunpack.c.h.b16 %v988
        %v1637 = vunpack.c.l.b16 %v989
        %v1638 = vunpack.c.h.b16 %v989
        %v1639 = vunpack.c.l.b16 %v990
        %v1640 = vunpack.c.h.b16 %v990
        %v1641 = vunpack.c.l.b16 %v991
        %v1642 = vunpack.c.h.b16 %v991
        %v1643 = vunpack.c.l.b16 %v992
        %v1644 = vunpack.c.h.b16 %v992
        %v1645 = vunpack.c.l.b16 %v993
        %v1646 = vunpack.c.h.b16 %v993
        %v1647 = vunpack.c.l.b16 %v994
        %v1648 = vunpack.c.h.b16 %v994
        %v1649 = vunpack.c.l.b16 %v995
        %v1650 = vunpack.c.h.b16 %v995
        %v1651 = vunpack.c.l.b16 %v996
        %v1652 = vunpack.c.h.b16 %v996
        %v1653 = vunpack.c.l.b16 %v997
        %v1654 = vunpack.c.h.b16 %v997
        %v1655 = vunpack.c.l.b16 %v998
        %v1656 = vunpack.c.h.b16 %v998
        %v1657 = vunpack.c.l.b16 %v999
        %v1658 = vunpack.c.h.b16 %v999
        %v1659 = vunpack.c.l.b16 %v1000
        %v1660 = vunpack.c.h.b16 %v1000
        %v1661 = vunpack.c.l.b16 %v1001
        %v1662 = vunpack.c.h.b16 %v1001
        %v1663 = vunpack.c.l.b16 %v1002
        %v1664 = vunpack.c.h.b16 %v1002
        %v1665 = vunpack.c.l.b16 %v1003
        %v1666 = vunpack.c.h.b16 %v1003
        %v1667 = vunpack.c.l.b16 %v1004
        %v1668 = vunpack.c.h.b16 %v1004
        %v1669 = vunpack.c.l.b16 %v1005
        %v1670 = vunpack.c.h.b16 %v1005
        %v1671 = vunpack.c.l.b16 %v1006
        %v1672 = vunpack.c.h.b16 %v1006
        %v1673 = vunpack.c.l.b16 %v1007
        %v1674 = vunpack.c.h.b16 %v1007
        %v1675 = vunpack.c.l.b16 %v1008
        %v1676 = vunpack.c.h.b16 %v1008
        %v1677 = vunpack.c.l.b16 %v1009
        %v1678 = vunpack.c.h.b16 %v1009
        %v1679 = vunpack.c.l.b16 %v1010
        %v1680 = vunpack.c.h.b16 %v1010
        %v1681 = vunpack.c.l.b16 %v1011
        %v1682 = vunpack.c.h.b16 %v1011
        %v1683 = vunpack.c.l.b16 %v1012
        %v1684 = vunpack.c.h.b16 %v1012
        %v1685 = vunpack.c.l.b16 %v1013
        %v1686 = vunpack.c.h.b16 %v1013
        %v1687 = vunpack.c.l.b16 %v1014
        %v1688 = vunpack.c.h.b16 %v1014
        %v1689 = vunpack.c.l.b16 %v1015
        %v1690 = vunpack.c.h.b16 %v1015
        %v1691 = vunpack.c.l.b16 %v1016
        %v1692 = vunpack.c.h.b16 %v1016
        %v1693 = vunpack.c.l.b16 %v1017
        %v1694 = vunpack.c.h.b16 %v1017
        %v1695 = vunpack.c.l.b16 %v1018
        %v1696 = vunpack.c.h.b16 %v1018
        %v1697 = vunpack.c.l.b16 %v1019
        %v1698 = vunpack.c.h.b16 %v1019
        %v1699 = vunpack.c.l.b16 %v1020
        %v1700 = vunpack.c.h.b16 %v1020
        %v1701 = vunpack.c.l.b16 %v1021
        %v1702 = vunpack.c.h.b16 %v1021
        %v1703 = vunpack.c.l.b16 %v1022
        %v1704 = vunpack.c.h.b16 %v1022
        %v1705 = vunpack.c.l.b16 %v1023
        %v1706 = vunpack.c.h.b16 %v1023
        %v1707 = vunpack.c.l.b16 %v1024
        %v1708 = vunpack.c.h.b16 %v1024
        %v1709 = vunpack.c.l.b16 %v1025
        %v1710 = vunpack.c.h.b16 %v1025
        %v1711 = vunpack.c.l.b16 %v1026
        %v1712 = vunpack.c.h.b16 %v1026
        %v1713 = vunpack.c.l.b16 %v1027
        %v1714 = vunpack.c.h.b16 %v1027
        %v1715 = vunpack.c.l.b16 %v1028
        %v1716 = vunpack.c.h.b16 %v1028
        %v1717 = vunpack.c.l.b16 %v1029
        %v1718 = vunpack.c.h.b16 %v1029
        %v1719 = vunpack.c.l.b16 %v1030
        %v1720 = vunpack.c.h.b16 %v1030
        %v1721 = vunpack.c.l.b16 %v1031
        %v1722 = vunpack.c.h.b16 %v1031
        %v1723 = vunpack.c.l.b16 %v1032
        %v1724 = vunpack.c.h.b16 %v1032
        %v1725 = vunpack.c.l.b16 %v1033
        %v1726 = vunpack.c.h.b16 %v1033
        %v1727 = vunpack.c.l.b16 %v1034
        %v1728 = vunpack.c.h.b16 %v1034
        %v1729 = vunpack.c.l.b16 %v1035
        %v1730 = vunpack.c.h.b16 %v1035
        %v1731 = vunpack.c.l.b16 %v1036
        %v1732 = vunpack.c.h.b16 %v1036
        %v1733 = vunpack.c.l.b16 %v1037
        %v1734 = vunpack.c.h.b16 %v1037
        %v1735 = vunpack.c.l.b16 %v1038
        %v1736 = vunpack.c.h.b16 %v1038
        %v1737 = vunpack.c.l.b16 %v1039
        %v1738 = vunpack.c.h.b16 %v1039
        %v1739 = vunpack.c.l.b16 %v1040
        %v1740 = vunpack.c.h.b16 %v1040
        %v1741 = vunpack.c.l.b16 %v1041
        %v1742 = vunpack.c.h.b16 %v1041
        %v1743 = vunpack.c.l.b16 %v1042
        %v1744 = vunpack.c.h.b16 %v1042
        %v1745 = vunpack.c.l.b16 %v1043
        %v1746 = vunpack.c.h.b16 %v1043
        %v1747 = vunpack.c.l.b16 %v1044
        %v1748 = vunpack.c.h.b16 %v1044
        %v1749 = vunpack.c.l.b16 %v1045
        %v1750 = vunpack.c.h.b16 %v1045
        %v1751 = vunpack.c.l.b16 %v1046
        %v1752 = vunpack.c.h.b16 %v1046
        %v1753 = vunpack.c.l.b16 %v1047
        %v1754 = vunpack.c.h.b16 %v1047
        %v1755 = vunpack.c.l.b16 %v1048
        %v1756 = vunpack.c.h.b16 %v1048
        %v1757 = vunpack.c.l.b16 %v1049
        %v1758 = vunpack.c.h.b16 %v1049
        %v1759 = vunpack.c.l.b16 %v1050
        %v1760 = vunpack.c.h.b16 %v1050
        %v1761 = vunpack.c.l.b16 %v1051
        %v1762 = vunpack.c.h.b16 %v1051
        %v1763 = vunpack.c.l.b16 %v1052
        %v1764 = vunpack.c.h.b16 %v1052
        %v1765 = vunpack.c.l.b16 %v1053
        %v1766 = vunpack.c.h.b16 %v1053
        %v1767 = vunpack.c.l.b16 %v1054
        %v1768 = vunpack.c.h.b16 %v1054
        %v1769 = vunpack.c.l.b16 %v1055
        %v1770 = vunpack.c.h.b16 %v1055
        %v1771 = vunpack.c.l.b16 %v1056
        %v1772 = vunpack.c.h.b16 %v1056
        %v1773 = vunpack.c.l.b16 %v1057
        %v1774 = vunpack.c.h.b16 %v1057
        %v1775 = vunpack.c.l.b16 %v1058
        %v1776 = vunpack.c.h.b16 %v1058
        %v1777 = vunpack.c.l.b16 %v1059
        %v1778 = vunpack.c.h.b16 %v1059
        %v1779 = vunpack.c.l.b16 %v1060
        %v1780 = vunpack.c.h.b16 %v1060
        %v1781 = vunpack.c.l.b16 %v1061
        %v1782 = vunpack.c.h.b16 %v1061
        %v1783 = vunpack.c.l.b16 %v1062
        %v1784 = vunpack.c.h.b16 %v1062
        %v1785 = vunpack.c.l.b16 %v1063
        %v1786 = vunpack.c.h.b16 %v1063
        %v1787 = vunpack.c.l.b16 %v1064
        %v1788 = vunpack.c.h.b16 %v1064
        %v1789 = vunpack.c.l.b16 %v1065
        %v1790 = vunpack.c.h.b16 %v1065
        %v1791 = vunpack.c.l.b16 %v1066
        %v1792 = vunpack.c.h.b16 %v1066
        %v1793 = vunpack.c.l.b16 %v1067
        %v1794 = vunpack.c.h.b16 %v1067
        %v1795 = vunpack.c.l.b16 %v1068
        %v1796 = vunpack.c.h.b16 %v1068
        %v1797 = vunpack.c.l.b16 %v1069
        %v1798 = vunpack.c.h.b16 %v1069
        %v1799 = vunpack.c.l.b16 %v1070
        %v1800 = vunpack.c.h.b16 %v1070
        %v1801 = vunpack.c.l.b16 %v1071
        %v1802 = vunpack.c.h.b16 %v1071
        %v1803 = vunpack.c.l.b16 %v1072
        %v1804 = vunpack.c.h.b16 %v1072
        %v1805 = vunpack.c.l.b16 %v1073
        %v1806 = vunpack.c.h.b16 %v1073
        %v1807 = vunpack.c.l.b16 %v1074
        %v1808 = vunpack.c.h.b16 %v1074
        %v1809 = vunpack.c.l.b16 %v1075
        %v1810 = vunpack.c.h.b16 %v1075
        %v1811 = vunpack.c.l.b16 %v1076
        %v1812 = vunpack.c.h.b16 %v1076
        %v1813 = vunpack.c.l.b16 %v1077
        %v1814 = vunpack.c.h.b16 %v1077
        %v1815 = vunpack.c.l.b16 %v1078
        %v1816 = vunpack.c.h.b16 %v1078
        %v1817 = vunpack.c.l.b16 %v1079
        %v1818 = vunpack.c.h.b16 %v1079
        %v1819 = vunpack.c.l.b16 %v1080
        %v1820 = vunpack.c.h.b16 %v1080
        %v1821 = vunpack.c.l.b16 %v1081
        %v1822 = vunpack.c.h.b16 %v1081
        %v1823 = vunpack.c.l.b16 %v1082
        %v1824 = vunpack.c.h.b16 %v1082
        %v1825 = vunpack.c.l.b16 %v1083
        %v1826 = vunpack.c.h.b16 %v1083
        %v1827 = vunpack.c.l.b16 %v1084
        %v1828 = vunpack.c.h.b16 %v1084
        %v1829 = vunpack.c.l.b16 %v1085
        %v1830 = vunpack.c.h.b16 %v1085
        %v1831 = vunpack.c.l.b16 %v1086
        %v1832 = vunpack.c.h.b16 %v1086
        %v1833 = vunpack.c.l.b16 %v1087
        %v1834 = vunpack.c.h.b16 %v1087
        %v1835 = vunpack.c.l.b16 %v1088
        %v1836 = vunpack.c.h.b16 %v1088
        %v1837 = vunpack.c.l.b16 %v1089
        %v1838 = vunpack.c.h.b16 %v1089
        %v1839 = vunpack.c.l.b16 %v1090
        %v1840 = vunpack.c.h.b16 %v1090
        %v1841 = vunpack.c.l.b16 %v1091
        %v1842 = vunpack.c.h.b16 %v1091
        %v1843 = vunpack.c.l.b16 %v1092
        %v1844 = vunpack.c.h.b16 %v1092
        %v1845 = vunpack.c.l.b16 %v1093
        %v1846 = vunpack.c.h.b16 %v1093
        %v1847 = vunpack.c.l.b16 %v1094
        %v1848 = vunpack.c.h.b16 %v1094
        %v1849 = vunpack.c.l.b16 %v1095
        %v1850 = vunpack.c.h.b16 %v1095
        %v1851 = vunpack.c.l.b16 %v1096
        %v1852 = vunpack.c.h.b16 %v1096
        %v1853 = vunpack.c.l.b16 %v1097
        %v1854 = vunpack.c.h.b16 %v1097
        %v1855 = vunpack.c.l.b16 %v1098
        %v1856 = vunpack.c.h.b16 %v1098
        %v1857 = vunpack.c.l.b16 %v1099
        %v1858 = vunpack.c.h.b16 %v1099
        %v1859 = vunpack.c.l.b16 %v1100
        %v1860 = vunpack.c.h.b16 %v1100
        %v1861 = vunpack.c.l.b16 %v1101
        %v1862 = vunpack.c.h.b16 %v1101
        %v1863 = vunpack.c.l.b16 %v1102
        %v1864 = vunpack.c.h.b16 %v1102
        %v1865 = vunpack.c.l.b16 %v1103
        %v1866 = vunpack.c.h.b16 %v1103
        %v1867 = vunpack.c.l.b16 %v1104
        %v1868 = vunpack.c.h.b16 %v1104
        %v1869 = vunpack.c.l.b16 %v1105
        %v1870 = vunpack.c.h.b16 %v1105
        %v1871 = vunpack.c.l.b16 %v1106
        %v1872 = vunpack.c.h.b16 %v1106
        %v1873 = vunpack.c.l.b16 %v1107
        %v1874 = vunpack.c.h.b16 %v1107
        %v1875 = vunpack.c.l.b16 %v1108
        %v1876 = vunpack.c.h.b16 %v1108
        %v1877 = vunpack.c.l.b16 %v1109
        %v1878 = vunpack.c.h.b16 %v1109
        %v1879 = vunpack.c.l.b16 %v1110
        %v1880 = vunpack.c.h.b16 %v1110
        %v1881 = vunpack.c.l.b16 %v1111
        %v1882 = vunpack.c.h.b16 %v1111
        %v1883 = vunpack.c.l.b16 %v1112
        %v1884 = vunpack.c.h.b16 %v1112
        %v1885 = vunpack.c.l.b16 %v1113
        %v1886 = vunpack.c.h.b16 %v1113
        %v1887 = vunpack.c.l.b16 %v1114
        %v1888 = vunpack.c.h.b16 %v1114
        %v1889 = vunpack.c.l.b16 %v1115
        %v1890 = vunpack.c.h.b16 %v1115
        %v1891 = vunpack.c.l.b16 %v1116
        %v1892 = vunpack.c.h.b16 %v1116
        %v1893 = vunpack.c.l.b16 %v1117
        %v1894 = vunpack.c.h.b16 %v1117
        %v1895 = vunpack.c.l.b16 %v1118
        %v1896 = vunpack.c.h.b16 %v1118
        %v1897 = vunpack.c.l.b16 %v1119
        %v1898 = vunpack.c.h.b16 %v1119
        %v1899 = vunpack.c.l.b16 %v1120
        %v1900 = vunpack.c.h.b16 %v1120
        %v1901 = vunpack.c.l.b16 %v1121
        %v1902 = vunpack.c.h.b16 %v1121
        %v1903 = vunpack.c.l.b16 %v1122
        %v1904 = vunpack.c.h.b16 %v1122
        %v1905 = vunpack.c.l.b16 %v1123
        %v1906 = vunpack.c.h.b16 %v1123
        %v1907 = vunpack.c.l.b16 %v1124
        %v1908 = vunpack.c.h.b16 %v1124
        %v1909 = vunpack.c.l.b16 %v1125
        %v1910 = vunpack.c.h.b16 %v1125
        %v1911 = vunpack.c.l.b16 %v1126
        %v1912 = vunpack.c.h.b16 %v1126
        %v1913 = vunpack.c.l.b16 %v1127
        %v1914 = vunpack.c.h.b16 %v1127
        %v1915 = vunpack.c.l.b16 %v1128
        %v1916 = vunpack.c.h.b16 %v1128
        %v1917 = vunpack.c.l.b16 %v1129
        %v1918 = vunpack.c.h.b16 %v1129
        %v1919 = vunpack.c.l.b16 %v1130
        %v1920 = vunpack.c.h.b16 %v1130
        %v1921 = vunpack.c.l.b16 %v1131
        %v1922 = vunpack.c.h.b16 %v1131
        %v1923 = vunpack.c.l.b16 %v1132
        %v1924 = vunpack.c.h.b16 %v1132
        %v1925 = vunpack.c.l.b16 %v1133
        %v1926 = vunpack.c.h.b16 %v1133
        %v1927 = vunpack.c.l.b16 %v1134
        %v1928 = vunpack.c.h.b16 %v1134
        %v1929 = vunpack.c.l.b16 %v1135
        %v1930 = vunpack.c.h.b16 %v1135
        %v1931 = vunpack.c.l.b16 %v1136
        %v1932 = vunpack.c.h.b16 %v1136
        %v1933 = vunpack.c.l.b16 %v1137
        %v1934 = vunpack.c.h.b16 %v1137
        %v1935 = vunpack.c.l.b16 %v1138
        %v1936 = vunpack.c.h.b16 %v1138
        %v1937 = vunpack.c.l.b16 %v1139
        %v1938 = vunpack.c.h.b16 %v1139
        %v1939 = vunpack.c.l.b16 %v1140
        %v1940 = vunpack.c.h.b16 %v1140
        %v1941 = vunpack.c.l.b16 %v1141
        %v1942 = vunpack.c.h.b16 %v1141
        %v1943 = vunpack.c.l.b16 %v1142
        %v1944 = vunpack.c.h.b16 %v1142
        %v1945 = vunpack.c.l.b16 %v1143
        %v1946 = vunpack.c.h.b16 %v1143
        %v1947 = vunpack.c.l.b16 %v1144
        %v1948 = vunpack.c.h.b16 %v1144
        %v1949 = vunpack.c.l.b16 %v1145
        %v1950 = vunpack.c.h.b16 %v1145
        %v1951 = vunpack.c.l.b16 %v1146
        %v1952 = vunpack.c.h.b16 %v1146
        %v1953 = vunpack.c.l.b16 %v1147
        %v1954 = vunpack.c.h.b16 %v1147
        %v1955 = vunpack.c.l.b16 %v1148
        %v1956 = vunpack.c.h.b16 %v1148
        %v1957 = vunpack.c.l.b16 %v1149
        %v1958 = vunpack.c.h.b16 %v1149
        %v1959 = vunpack.c.l.b16 %v1150
        %v1960 = vunpack.c.h.b16 %v1150
        %v1961 = vunpack.c.l.b16 %v1151
        %v1962 = vunpack.c.h.b16 %v1151
        %v1963 = vunpack.c.l.b16 %v1152
        %v1964 = vunpack.c.h.b16 %v1152
        %v1965 = vunpack.c.l.b16 %v1153
        %v1966 = vunpack.c.h.b16 %v1153
        %v1967 = vunpack.c.l.b16 %v1154
        %v1968 = vunpack.c.h.b16 %v1154
        %v1969 = vunpack.c.l.b16 %v1155
        %v1970 = vunpack.c.h.b16 %v1155
        %v1971 = vunpack.c.l.b16 %v1156
        %v1972 = vunpack.c.h.b16 %v1156
        %v1973 = vunpack.c.l.b16 %v1157
        %v1974 = vunpack.c.h.b16 %v1157
        %v1975 = vunpack.c.l.b16 %v1158
        %v1976 = vunpack.c.h.b16 %v1158
        %v1977 = vunpack.c.l.b16 %v1159
        %v1978 = vunpack.c.h.b16 %v1159
        %v1979 = vunpack.c.l.b16 %v1160
        %v1980 = vunpack.c.h.b16 %v1160
        %v1981 = vunpack.c.l.b16 %v1161
        %v1982 = vunpack.c.h.b16 %v1161
        %v1983 = vunpack.c.l.b16 %v1162
        %v1984 = vunpack.c.h.b16 %v1162
        %v1985 = vunpack.c.l.b16 %v1163
        %v1986 = vunpack.c.h.b16 %v1163
        %v1987 = vunpack.c.l.b16 %v1164
        %v1988 = vunpack.c.h.b16 %v1164
        %v1989 = vunpack.c.l.b16 %v1165
        %v1990 = vunpack.c.h.b16 %v1165
        %v1991 = vunpack.c.l.b16 %v1166
        %v1992 = vunpack.c.h.b16 %v1166
        %v1993 = vunpack.c.l.b16 %v1167
        %v1994 = vunpack.c.h.b16 %v1167
        %v1995 = vunpack.c.l.b16 %v1168
        %v1996 = vunpack.c.h.b16 %v1168
        %v1997 = vunpack.c.l.b16 %v1169
        %v1998 = vunpack.c.h.b16 %v1169
        %v1999 = vunpack.c.l.b16 %v1170
        %v2000 = vunpack.c.h.b16 %v1170
        %v2001 = vunpack.c.l.b16 %v1171
        %v2002 = vunpack.c.h.b16 %v1171
        %v2003 = vunpack.c.l.b16 %v1172
        %v2004 = vunpack.c.h.b16 %v1172
        %v2005 = vunpack.c.l.b16 %v1173
        %v2006 = vunpack.c.h.b16 %v1173
        %v2007 = vunpack.c.l.b16 %v1174
        %v2008 = vunpack.c.h.b16 %v1174
        %v2009 = vunpack.c.l.b16 %v1175
        %v2010 = vunpack.c.h.b16 %v1175
        %v2011 = vunpack.c.l.b16 %v1176
        %v2012 = vunpack.c.h.b16 %v1176
        %v2013 = vunpack.c.l.b16 %v1177
        %v2014 = vunpack.c.h.b16 %v1177
        %v2015 = vunpack.c.l.b16 %v1178
        %v2016 = vunpack.c.h.b16 %v1178
        %v2017 = vunpack.c.l.b16 %v1179
        %v2018 = vunpack.c.h.b16 %v1179
        %v2019 = vunpack.c.l.b16 %v1180
        %v2020 = vunpack.c.h.b16 %v1180
        %v2021 = vunpack.c.l.b16 %v1181
        %v2022 = vunpack.c.h.b16 %v1181
        %v2023 = vunpack.c.l.b16 %v1182
        %v2024 = vunpack.c.h.b16 %v1182
        %v2025 = vunpack.c.l.b16 %v1183
        %v2026 = vunpack.c.h.b16 %v1183
        %v2027 = vunpack.c.l.b16 %v1184
        %v2028 = vunpack.c.h.b16 %v1184
        %v2029 = vunpack.c.l.b16 %v1185
        %v2030 = vunpack.c.h.b16 %v1185
        %v2031 = vunpack.c.l.b16 %v1186
        %v2032 = vunpack.c.h.b16 %v1186
        %v2033 = vunpack.c.l.b16 %v1187
        %v2034 = vunpack.c.h.b16 %v1187
        %v2035 = vunpack.c.l.b16 %v1188
        %v2036 = vunpack.c.h.b16 %v1188
        %v2037 = vunpack.c.l.b16 %v1189
        %v2038 = vunpack.c.h.b16 %v1189
        %v2039 = vunpack.c.l.b16 %v1190
        %v2040 = vunpack.c.h.b16 %v1190
        %v2041 = vunpack.c.l.b16 %v1191
        %v2042 = vunpack.c.h.b16 %v1191
        %v2043 = vunpack.c.l.b16 %v1192
        %v2044 = vunpack.c.h.b16 %v1192
        %v2045 = vunpack.c.l.b16 %v1193
        %v2046 = vunpack.c.h.b16 %v1193
        %v2047 = vunpack.c.l.b16 %v1194
        %v2048 = vunpack.c.h.b16 %v1194
        %v2049 = vunpack.c.l.b16 %v1195
        %v2050 = vunpack.c.h.b16 %v1195
        %v2051 = vunpack.c.l.b16 %v1196
        %v2052 = vunpack.c.h.b16 %v1196
        %v2053 = vunpack.c.l.b16 %v1197
        %v2054 = vunpack.c.h.b16 %v1197
        %v2055 = vunpack.c.l.b16 %v1198
        %v2056 = vunpack.c.h.b16 %v1198
        %v2057 = vunpack.c.l.b16 %v1199
        %v2058 = vunpack.c.h.b16 %v1199
        %v2059 = vunpack.c.l.b16 %v1200
        %v2060 = vunpack.c.h.b16 %v1200
        %v2061 = vunpack.c.l.b16 %v1201
        %v2062 = vunpack.c.h.b16 %v1201
        %v2063 = vunpack.c.l.b16 %v1202
        %v2064 = vunpack.c.h.b16 %v1202
        %v2065 = vunpack.c.l.b16 %v1203
        %v2066 = vunpack.c.h.b16 %v1203
        %v2067 = vunpack.c.l.b16 %v1204
        %v2068 = vunpack.c.h.b16 %v1204
        %v2069 = vunpack.c.l.b16 %v1205
        %v2070 = vunpack.c.h.b16 %v1205
        %v2071 = vunpack.c.l.b16 %v1206
        %v2072 = vunpack.c.h.b16 %v1206
        %v2073 = vunpack.c.l.b16 %v1207
        %v2074 = vunpack.c.h.b16 %v1207
        %v2075 = vunpack.c.l.b16 %v1208
        %v2076 = vunpack.c.h.b16 %v1208
        %v2077 = vunpack.c.l.b16 %v1209
        %v2078 = vunpack.c.h.b16 %v1209
        %v2079 = vunpack.c.l.b16 %v1210
        %v2080 = vunpack.c.h.b16 %v1210
        %v2081 = vunpack.c.l.b16 %v1211
        %v2082 = vunpack.c.h.b16 %v1211
        %v2083 = vunpack.c.l.b16 %v1212
        %v2084 = vunpack.c.h.b16 %v1212
        %v2085 = vunpack.c.l.b16 %v1213
        %v2086 = vunpack.c.h.b16 %v1213
        %v2087 = vunpack.c.l.b16 %v1214
        %v2088 = vunpack.c.h.b16 %v1214
        %v2089 = vunpack.c.l.b16 %v1215
        %v2090 = vunpack.c.h.b16 %v1215
        %v2091 = vunpack.c.l.b16 %v1216
        %v2092 = vunpack.c.h.b16 %v1216
        %v2093 = vunpack.c.l.b16 %v1217
        %v2094 = vunpack.c.h.b16 %v1217
        %v2095 = vunpack.c.l.b16 %v1218
        %v2096 = vunpack.c.h.b16 %v1218
        %v2097 = vunpack.c.l.b16 %v1219
        %v2098 = vunpack.c.h.b16 %v1219
        %v2099 = vunpack.c.l.b16 %v1220
        %v2100 = vunpack.c.h.b16 %v1220
        %v2101 = vunpack.c.l.b16 %v1221
        %v2102 = vunpack.c.h.b16 %v1221
        %v2103 = vunpack.c.l.b16 %v1222
        %v2104 = vunpack.c.h.b16 %v1222
        %v2105 = vunpack.c.l.b16 %v1223
        %v2106 = vunpack.c.h.b16 %v1223
        %v2107 = vunpack.c.l.b16 %v1224
        %v2108 = vunpack.c.h.b16 %v1224
        %v2109 = vunpack.c.l.b16 %v1225
        %v2110 = vunpack.c.h.b16 %v1225
        %v2111 = vunpack.c.l.b16 %v1226
        %v2112 = vunpack.c.h.b16 %v1226
        %v2113 = vunpack.c.l.b16 %v1227
        %v2114 = vunpack.c.h.b16 %v1227
        %v2115 = vunpack.c.l.b16 %v1228
        %v2116 = vunpack.c.h.b16 %v1228
        %v2117 = vunpack.c.l.b16 %v1229
        %v2118 = vunpack.c.h.b16 %v1229
        %v2119 = vunpack.c.l.b16 %v1230
        %v2120 = vunpack.c.h.b16 %v1230
        %v2121 = vunpack.c.l.b16 %v1231
        %v2122 = vunpack.c.h.b16 %v1231
        %v2123 = vunpack.c.l.b16 %v1232
        %v2124 = vunpack.c.h.b16 %v1232
        %v2125 = vunpack.c.l.b16 %v1233
        %v2126 = vunpack.c.h.b16 %v1233
        %v2127 = vunpack.c.l.b16 %v1234
        %v2128 = vunpack.c.h.b16 %v1234
        %v2129 = vunpack.c.l.b16 %v1235
        %v2130 = vunpack.c.h.b16 %v1235
        %v2131 = vunpack.c.l.b16 %v1236
        %v2132 = vunpack.c.h.b16 %v1236
        %v2133 = vunpack.c.l.b16 %v1237
        %v2134 = vunpack.c.h.b16 %v1237
        %v2135 = vunpack.c.l.b16 %v1238
        %v2136 = vunpack.c.h.b16 %v1238
        %v2137 = vunpack.c.l.b16 %v1239
        %v2138 = vunpack.c.h.b16 %v1239
        %v2139 = vunpack.c.l.b16 %v1240
        %v2140 = vunpack.c.h.b16 %v1240
        %v2141 = vunpack.c.l.b16 %v1241
        %v2142 = vunpack.c.h.b16 %v1241
        %v2143 = vunpack.c.l.b16 %v1242
        %v2144 = vunpack.c.h.b16 %v1242
        %v2145 = vpack.c.b16 %v1641, %v1633
        %v2146 = vpack.c.b16 %v1642, %v1634
        %v2147 = vpack.c.b16 %v1643, %v1635
        %v2148 = vpack.c.b16 %v1644, %v1636
        %v2149 = vpack.c.b16 %v1645, %v1637
        %v2150 = vpack.c.b16 %v1646, %v1638
        %v2151 = vpack.c.b16 %v1647, %v1639
        %v2152 = vpack.c.b16 %v1648, %v1640
        %v2153 = vpack.c.b16 %v1657, %v1649
        %v2154 = vpack.c.b16 %v1658, %v1650
        %v2155 = vpack.c.b16 %v1659, %v1651
        %v2156 = vpack.c.b16 %v1660, %v1652
        %v2157 = vpack.c.b16 %v1661, %v1653
        %v2158 = vpack.c.b16 %v1662, %v1654
        %v2159 = vpack.c.b16 %v1663, %v1655
        %v2160 = vpack.c.b16 %v1664, %v1656
        %v2161 = vpack.c.b16 %v1673, %v1665
        %v2162 = vpack.c.b16 %v1674, %v1666
        %v2163 = vpack.c.b16 %v1675, %v1667
        %v2164 = vpack.c.b16 %v1676, %v1668
        %v2165 = vpack.c.b16 %v1677, %v1669
        %v2166 = vpack.c.b16 %v1678, %v1670
        %v2167 = vpack.c.b16 %v1679, %v1671
        %v2168 = vpack.c.b16 %v1680, %v1672
        %v2169 = vpack.c.b16 %v1689, %v1681
        %v2170 = vpack.c.b16 %v1690, %v1682
        %v2171 = vpack.c.b16 %v1691, %v1683
        %v2172 = vpack.c.b16 %v1692, %v1684
        %v2173 = vpack.c.b16 %v1693, %v1685
        %v2174 = vpack.c.b16 %v1694, %v1686
        %v2175 = vpack.c.b16 %v1695, %v1687
        %v2176 = vpack.c.b16 %v1696, %v1688
        %v2177 = vpack.c.b16 %v1705, %v1697
        %v2178 = vpack.c.b16 %v1706, %v1698
        %v2179 = vpack.c.b16 %v1707, %v1699
        %v2180 = vpack.c.b16 %v1708, %v1700
        %v2181 = vpack.c.b16 %v1709, %v1701
        %v2182 = vpack.c.b16 %v1710, %v1702
        %v2183 = vpack.c.b16 %v1711, %v1703
        %v2184 = vpack.c.b16 %v1712, %v1704
        %v2185 = vpack.c.b16 %v1721, %v1713
        %v2186 = vpack.c.b16 %v1722, %v1714
        %v2187 = vpack.c.b16 %v1723, %v1715
        %v2188 = vpack.c.b16 %v1724, %v1716
        %v2189 = vpack.c.b16 %v1725, %v1717
        %v2190 = vpack.c.b16 %v1726, %v1718
        %v2191 = vpack.c.b16 %v1727, %v1719
        %v2192 = vpack.c.b16 %v1728, %v1720
        %v2193 = vpack.c.b16 %v1737, %v1729
        %v2194 = vpack.c.b16 %v1738, %v1730
        %v2195 = vpack.c.b16 %v1739, %v1731
        %v2196 = vpack.c.b16 %v1740, %v1732
        %v2197 = vpack.c.b16 %v1741, %v1733
        %v2198 = vpack.c.b16 %v1742, %v1734
        %v2199 = vpack.c.b16 %v1743, %v1735
        %v2200 = vpack.c.b16 %v1744, %v1736
        %v2201 = vpack.c.b16 %v1753, %v1745
        %v2202 = vpack.c.b16 %v1754, %v1746
        %v2203 = vpack.c.b16 %v1755, %v1747
        %v2204 = vpack.c.b16 %v1756, %v1748
        %v2205 = vpack.c.b16 %v1757, %v1749
        %v2206 = vpack.c.b16 %v1758, %v1750
        %v2207 = vpack.c.b16 %v1759, %v1751
        %v2208 = vpack.c.b16 %v1760, %v1752
        %v2209 = vpack.c.b16 %v1769, %v1761
        %v2210 = vpack.c.b16 %v1770, %v1762
        %v2211 = vpack.c.b16 %v1771, %v1763
        %v2212 = vpack.c.b16 %v1772, %v1764
        %v2213 = vpack.c.b16 %v1773, %v1765
        %v2214 = vpack.c.b16 %v1774, %v1766
        %v2215 = vpack.c.b16 %v1775, %v1767
        %v2216 = vpack.c.b16 %v1776, %v1768
        %v2217 = vpack.c.b16 %v1785, %v1777
        %v2218 = vpack.c.b16 %v1786, %v1778
        %v2219 = vpack.c.b16 %v1787, %v1779
        %v2220 = vpack.c.b16 %v1788, %v1780
        %v2221 = vpack.c.b16 %v1789, %v1781
        %v2222 = vpack.c.b16 %v1790, %v1782
        %v2223 = vpack.c.b16 %v1791, %v1783
        %v2224 = vpack.c.b16 %v1792, %v1784
        %v2225 = vpack.c.b16 %v1801, %v1793
        %v2226 = vpack.c.b16 %v1802, %v1794
        %v2227 = vpack.c.b16 %v1803, %v1795
        %v2228 = vpack.c.b16 %v1804, %v1796
        %v2229 = vpack.c.b16 %v1805, %v1797
        %v2230 = vpack.c.b16 %v1806, %v1798
        %v2231 = vpack.c.b16 %v1807, %v1799
        %v2232 = vpack.c.b16 %v1808, %v1800
        %v2233 = vpack.c.b16 %v1817, %v1809
        %v2234 = vpack.c.b16 %v1818, %v1810
        %v2235 = vpack.c.b16 %v1819, %v1811
        %v2236 = vpack.c.b16 %v1820, %v1812
        %v2237 = vpack.c.b16 %v1821, %v1813
        %v2238 = vpack.c.b16 %v1822, %v1814
        %v2239 = vpack.c.b16 %v1823, %v1815
        %v2240 = vpack.c.b16 %v1824, %v1816
        %v2241 = vpack.c.b16 %v1833, %v1825
        %v2242 = vpack.c.b16 %v1834, %v1826
        %v2243 = vpack.c.b16 %v1835, %v1827
        %v2244 = vpack.c.b16 %v1836, %v1828
        %v2245 = vpack.c.b16 %v1837, %v1829
        %v2246 = vpack.c.b16 %v1838, %v1830
        %v2247 = vpack.c.b16 %v1839, %v1831
        %v2248 = vpack.c.b16 %v1840, %v1832
        %v2249 = vpack.c.b16 %v1849, %v1841
        %v2250 = vpack.c.b16 %v1850, %v1842
        %v2251 = vpack.c.b16 %v1851, %v1843
        %v2252 = vpack.c.b16 %v1852, %v1844
        %v2253 = vpack.c.b16 %v1853, %v1845
        %v2254 = vpack.c.b16 %v1854, %v1846
        %v2255 = vpack.c.b16 %v1855, %v1847
        %v2256 = vpack.c.b16 %v1856, %v1848
        %v2257 = vpack.c.b16 %v1865, %v1857
        %v2258 = vpack.c.b16 %v1866, %v1858
        %v2259 = vpack.c.b16 %v1867, %v1859
        %v2260 = vpack.c.b16 %v1868, %v1860
        %v2261 = vpack.c.b16 %v1869, %v1861
        %v2262 = vpack.c.b16 %v1870, %v1862
        %v2263 = vpack.c.b16 %v1871, %v1863
        %v2264 = vpack.c.b16 %v1872, %v1864
        %v2265 = vpack.c.b16 %v1881, %v1873
        %v2266 = vpack.c.b16 %v1882, %v1874
        %v2267 = vpack.c.b16 %v1883, %v1875
        %v2268 = vpack.c.b16 %v1884, %v1876
        %v2269 = vpack.c.b16 %v1885, %v1877
        %v2270 = vpack.c.b16 %v1886, %v1878
        %v2271 = vpack.c.b16 %v1887, %v1879
        %v2272 = vpack.c.b16 %v1888, %v1880
        %v2273 = vpack.c.b16 %v1897, %v1889
        %v2274 = vpack.c.b16 %v1898, %v1890
        %v2275 = vpack.c.b16 %v1899, %v1891
        %v2276 = vpack.c.b16 %v1900, %v1892
        %v2277 = vpack.c.b16 %v1901, %v1893
        %v2278 = vpack.c.b16 %v1902, %v1894
        %v2279 = vpack.c.b16 %v1903, %v1895
        %v2280 = vpack.c.b16 %v1904, %v1896
        %v2281 = vpack.c.b16 %v1913, %v1905
        %v2282 = vpack.c.b16 %v1914, %v1906
        %v2283 = vpack.c.b16 %v1915, %v1907
        %v2284 = vpack.c.b16 %v1916, %v1908
        %v2285 = vpack.c.b16 %v1917, %v1909
        %v2286 = vpack.c.b16 %v1918, %v1910
        %v2287 = vpack.c.b16 %v1919, %v1911
        %v2288 = vpack.c.b16 %v1920, %v1912
        %v2289 = vpack.c.b16 %v1929, %v1921
        %v2290 = vpack.c.b16 %v1930, %v1922
        %v2291 = vpack.c.b16 %v1931, %v1923
        %v2292 = vpack.c.b16 %v1932, %v1924
        %v2293 = vpack.c.b16 %v1933, %v1925
        %v2294 = vpack.c.b16 %v1934, %v1926
        %v2295 = vpack.c.b16 %v1935, %v1927
        %v2296 = vpack.c.b16 %v1936, %v1928
        %v2297 = vpack.c.b16 %v1945, %v1937
        %v2298 = vpack.c.b16 %v1946, %v1938
        %v2299 = vpack.c.b16 %v1947, %v1939
        %v2300 = vpack.c.b16 %v1948, %v1940
        %v2301 = vpack.c.b16 %v1949, %v1941
        %v2302 = vpack.c.b16 %v1950, %v1942
        %v2303 = vpack.c.b16 %v1951, %v1943
        %v2304 = vpack.c.b16 %v1952, %v1944
        %v2305 = vpack.c.b16 %v1961, %v1953
        %v2306 = vpack.c.b16 %v1962, %v1954
        %v2307 = vpack.c.b16 %v1963, %v1955
        %v2308 = vpack.c.b16 %v1964, %v1956
        %v2309 = vpack.c.b16 %v1965, %v1957
        %v2310 = vpack.c.b16 %v1966, %v1958
        %v2311 = vpack.c.b16 %v1967, %v1959
        %v2312 = vpack.c.b16 %v1968, %v1960
        %v2313 = vpack.c.b16 %v1977, %v1969
        %v2314 = vpack.c.b16 %v1978, %v1970
        %v2315 = vpack.c.b16 %v1979, %v1971
        %v2316 = vpack.c.b16 %v1980, %v1972
        %v2317 = vpack.c.b16 %v1981, %v1973
        %v2318 = vpack.c.b16 %v1982, %v1974
        %v2319 = vpack.c.b16 %v1983, %v1975
        %v2320 = vpack.c.b16 %v1984, %v1976
        %v2321 = vpack.c.b16 %v1993, %v1985
        %v2322 = vpack.c.b16 %v1994, %v1986
        %v2323 = vpack.c.b16 %v1995, %v1987
        %v2324 = vpack.c.b16 %v1996, %v1988
        %v2325 = vpack.c.b16 %v1997, %v1989
        %v2326 = vpack.c.b16 %v1998, %v1990
        %v2327 = vpack.c.b16 %v1999, %v1991
        %v2328 = vpack.c.b16 %v2000, %v1992
        %v2329 = vpack.c.b16 %v2009, %v2001
        %v2330 = vpack.c.b16 %v2010, %v2002
        %v2331 = vpack.c.b16 %v2011, %v2003
        %v2332 = vpack.c.b16 %v2012, %v2004
        %v2333 = vpack.c.b16 %v2013, %v2005
        %v2334 = vpack.c.b16 %v2014, %v2006
        %v2335 = vpack.c.b16 %v2015, %v2007
        %v2336 = vpack.c.b16 %v2016, %v2008
        %v2337 = vpack.c.b16 %v2025, %v2017
        %v2338 = vpack.c.b16 %v2026, %v2018
        %v2339 = vpack.c.b16 %v2027, %v2019
        %v2340 = vpack.c.b16 %v2028, %v2020
        %v2341 = vpack.c.b16 %v2029, %v2021
        %v2342 = vpack.c.b16 %v2030, %v2022
        %v2343 = vpack.c.b16 %v2031, %v2023
        %v2344 = vpack.c.b16 %v2032, %v2024
        %v2345 = vpack.c.b16 %v2041, %v2033
        %v2346 = vpack.c.b16 %v2042, %v2034
        %v2347 = vpack.c.b16 %v2043, %v2035
        %v2348 = vpack.c.b16 %v2044, %v2036
        %v2349 = vpack.c.b16 %v2045, %v2037
        %v2350 = vpack.c.b16 %v2046, %v2038
        %v2351 = vpack.c.b16 %v2047, %v2039
        %v2352 = vpack.c.b16 %v2048, %v2040
        %v2353 = vpack.c.b16 %v2057, %v2049
        %v2354 = vpack.c.b16 %v2058, %v2050
        %v2355 = vpack.c.b16 %v2059, %v2051
        %v2356 = vpack.c.b16 %v2060, %v2052
        %v2357 = vpack.c.b16 %v2061, %v2053
        %v2358 = vpack.c.b16 %v2062, %v2054
        %v2359 = vpack.c.b16 %v2063, %v2055
        %v2360 = vpack.c.b16 %v2064, %v2056
        %v2361 = vpack.c.b16 %v2073, %v2065
        %v2362 = vpack.c.b16 %v2074, %v2066
        %v2363 = vpack.c.b16 %v2075, %v2067
        %v2364 = vpack.c.b16 %v2076, %v2068
        %v2365 = vpack.c.b16 %v2077, %v2069
        %v2366 = vpack.c.b16 %v2078, %v2070
        %v2367 = vpack.c.b16 %v2079, %v2071
        %v2368 = vpack.c.b16 %v2080, %v2072
        %v2369 = vpack.c.b16 %v2089, %v2081
        %v2370 = vpack.c.b16 %v2090, %v2082
        %v2371 = vpack.c.b16 %v2091, %v2083
        %v2372 = vpack.c.b16 %v2092, %v2084
        %v2373 = vpack.c.b16 %v2093, %v2085
        %v2374 = vpack.c.b16 %v2094, %v2086
        %v2375 = vpack.c.b16 %v2095, %v2087
        %v2376 = vpack.c.b16 %v2096, %v2088
        %v2377 = vpack.c.b16 %v2105, %v2097
        %v2378 = vpack.c.b16 %v2106, %v2098
        %v2379 = vpack.c.b16 %v2107, %v2099
        %v2380 = vpack.c.b16 %v2108, %v2100
        %v2381 = vpack.c.b16 %v2109, %v2101
        %v2382 = vpack.c.b16 %v2110, %v2102
        %v2383 = vpack.c.b16 %v2111, %v2103
        %v2384 = vpack.c.b16 %v2112, %v2104
        %v2385 = vpack.c.b16 %v2121, %v2113
        %v2386 = vpack.c.b16 %v2122, %v2114
        %v2387 = vpack.c.b16 %v2123, %v2115
        %v2388 = vpack.c.b16 %v2124, %v2116
        %v2389 = vpack.c.b16 %v2125, %v2117
        %v2390 = vpack.c.b16 %v2126, %v2118
        %v2391 = vpack.c.b16 %v2127, %v2119
        %v2392 = vpack.c.b16 %v2128, %v2120
        %v2393 = vpack.c.b16 %v2137, %v2129
        %v2394 = vpack.c.b16 %v2138, %v2130
        %v2395 = vpack.c.b16 %v2139, %v2131
        %v2396 = vpack.c.b16 %v2140, %v2132
        %v2397 = vpack.c.b16 %v2141, %v2133
        %v2398 = vpack.c.b16 %v2142, %v2134
        %v2399 = vpack.c.b16 %v2143, %v2135
        %v2400 = vpack.c.b16 %v2144, %v2136
        %2657 = vmatprep.subr.bf16.mxu0 %v2202
        %2658 = vmatpush1.bf16.msra.mxu0 %v2201
        %2659 = vmatprep.subr.bf16.mxu0 %v2194
        %2660 = vmatpush1.bf16.msra.mxu0 %v2193
        %2661 = vmatprep.subr.bf16.mxu0 %v2186
        %2662 = vmatpush1.bf16.msra.mxu0 %v2185
        %2663 = vmatprep.subr.bf16.mxu0 %v2178
        %2664 = vmatpush1.bf16.msra.mxu0 %v2177
        %2665 = vmatprep.subr.bf16.mxu0 %v2170
        %2666 = vmatpush1.bf16.msra.mxu0 %v2169
        %2667 = vmatprep.subr.bf16.mxu0 %v2162
        %2668 = vmatpush1.bf16.msra.mxu0 %v2161
        %2669 = vmatprep.subr.bf16.mxu0 %v2154
        %2670 = vmatpush1.bf16.msra.mxu0 %v2153
        %2671 = vmatprep.subr.bf16.mxu0 %v2146
        %2672 = vmatpush1.bf16.msra.mxu0 %v2145
        %2673 = vmatprep.subr.bf16.mxu0 %v2266
        %2674 = vmatpush2.bf16.msra.mxu0 %v2265
        %2675 = vmatprep.subr.bf16.mxu0 %v2258
        %2676 = vmatpush2.bf16.msra.mxu0 %v2257
        %2677 = vmatprep.subr.bf16.mxu0 %v2250
        %2678 = vmatpush2.bf16.msra.mxu0 %v2249
        %2679 = vmatprep.subr.bf16.mxu0 %v2242
        %2680 = vmatpush2.bf16.msra.mxu0 %v2241
        %2681 = vmatprep.subr.bf16.mxu0 %v2234
        %2682 = vmatpush2.bf16.msra.mxu0 %v2233
        %2683 = vmatprep.subr.bf16.mxu0 %v2226
        %2684 = vmatpush2.bf16.msra.mxu0 %v2225
        %2685 = vmatprep.subr.bf16.mxu0 %v2218
        %2686 = vmatpush2.bf16.msra.mxu0 %v2217
        %2687 = vmatprep.subr.bf16.mxu0 %v2210
        %2688 = vmatpush2.bf16.msra.mxu0 %v2209
        %2689 = vmatprep.mubr.bf16.mxu0 %v1322
        %2690 = vmatmul.mubr.bf16.gmra.mxu0 %v1321
        %v2691 = vpop.f32.mrf.mxu0
        %v2692 = vadd.f32 0.0, %v2691
        %v2693 = vpop.f32.mrf.mxu0
        %v2694 = vadd.f32 0.0, %v2693
        %v2695 = vpop.f32.mrf.mxu0
        %v2696 = vadd.f32 0.0, %v2695
        %v2697 = vpop.f32.mrf.mxu0
        %v2698 = vadd.f32 0.0, %v2697
        %2699 = vmatprep.mubr.bf16.mxu0 %v1326
        %2700 = vmatmul.mubr.bf16.gmra.mxu0 %v1325
        %v2701 = vpop.f32.mrf.mxu0
        %v2702 = vadd.f32 0.0, %v2701
        %v2703 = vpop.f32.mrf.mxu0
        %v2704 = vadd.f32 0.0, %v2703
        %v2705 = vpop.f32.mrf.mxu0
        %v2706 = vadd.f32 0.0, %v2705
        %v2707 = vpop.f32.mrf.mxu0
        %v2708 = vadd.f32 0.0, %v2707
        %2709 = vmatprep.mubr.bf16.mxu0 %v1330
        %2710 = vmatmul.mubr.bf16.gmra.mxu0 %v1329
        %v2711 = vpop.f32.mrf.mxu0
        %v2712 = vadd.f32 0.0, %v2711
        %v2713 = vpop.f32.mrf.mxu0
        %v2714 = vadd.f32 0.0, %v2713
        %v2715 = vpop.f32.mrf.mxu0
        %v2716 = vadd.f32 0.0, %v2715
        %v2717 = vpop.f32.mrf.mxu0
        %v2718 = vadd.f32 0.0, %v2717
        %2719 = vmatprep.mubr.bf16.mxu0 %v1334
        %2720 = vmatmul.mubr.bf16.gmra.mxu0 %v1333
        %v2721 = vpop.f32.mrf.mxu0
        %v2722 = vadd.f32 0.0, %v2721
        %v2723 = vpop.f32.mrf.mxu0
        %v2724 = vadd.f32 0.0, %v2723
        %v2725 = vpop.f32.mrf.mxu0
        %v2726 = vadd.f32 0.0, %v2725
        %v2727 = vpop.f32.mrf.mxu0
        %v2728 = vadd.f32 0.0, %v2727
        %2729 = vmatprep.mubr.bf16.mxu0 %v1338
        %2730 = vmatmul.mubr.bf16.gmra.mxu0 %v1337
        %v2731 = vpop.f32.mrf.mxu0
        %v2732 = vadd.f32 0.0, %v2731
        %v2733 = vpop.f32.mrf.mxu0
        %v2734 = vadd.f32 0.0, %v2733
        %v2735 = vpop.f32.mrf.mxu0
        %v2736 = vadd.f32 0.0, %v2735
        %v2737 = vpop.f32.mrf.mxu0
        %v2738 = vadd.f32 0.0, %v2737
        %2739 = vmatprep.mubr.bf16.mxu0 %v1342
        %2740 = vmatmul.mubr.bf16.gmra.mxu0 %v1341
        %v2741 = vpop.f32.mrf.mxu0
        %v2742 = vadd.f32 0.0, %v2741
        %v2743 = vpop.f32.mrf.mxu0
        %v2744 = vadd.f32 0.0, %v2743
        %v2745 = vpop.f32.mrf.mxu0
        %v2746 = vadd.f32 0.0, %v2745
        %v2747 = vpop.f32.mrf.mxu0
        %v2748 = vadd.f32 0.0, %v2747
        %2749 = vmatprep.mubr.bf16.mxu0 %v1346
        %2750 = vmatmul.mubr.bf16.gmra.mxu0 %v1345
        %v2751 = vpop.f32.mrf.mxu0
        %v2752 = vadd.f32 0.0, %v2751
        %v2753 = vpop.f32.mrf.mxu0
        %v2754 = vadd.f32 0.0, %v2753
        %v2755 = vpop.f32.mrf.mxu0
        %v2756 = vpop.f32.mrf.mxu0
        %2757 = vdwg.mxu0
        %2758 = vmatprep.subr.bf16.mxu0 %v2330
        %2759 = vmatpush1.bf16.msra.mxu0 %v2329
        %2760 = vmatprep.subr.bf16.mxu0 %v2322
        %2761 = vmatpush1.bf16.msra.mxu0 %v2321
        %2762 = vmatprep.subr.bf16.mxu0 %v2314
        %2763 = vmatpush1.bf16.msra.mxu0 %v2313
        %2764 = vmatprep.subr.bf16.mxu0 %v2306
        %2765 = vmatpush1.bf16.msra.mxu0 %v2305
        %2766 = vmatprep.subr.bf16.mxu0 %v2298
        %2767 = vmatpush1.bf16.msra.mxu0 %v2297
        %2768 = vmatprep.subr.bf16.mxu0 %v2290
        %2769 = vmatpush1.bf16.msra.mxu0 %v2289
        %2770 = vmatprep.subr.bf16.mxu0 %v2282
        %2771 = vmatpush1.bf16.msra.mxu0 %v2281
        %2772 = vmatprep.subr.bf16.mxu0 %v2274
        %2773 = vmatpush1.bf16.msra.mxu0 %v2273
        %2774 = vmatprep.subr.bf16.mxu0 %v2394
        %2775 = vmatpush2.bf16.msra.mxu0 %v2393
        %2776 = vmatprep.subr.bf16.mxu0 %v2386
        %2777 = vmatpush2.bf16.msra.mxu0 %v2385
        %2778 = vmatprep.subr.bf16.mxu0 %v2378
        %2779 = vmatpush2.bf16.msra.mxu0 %v2377
        %2780 = vmatprep.subr.bf16.mxu0 %v2370
        %2781 = vmatpush2.bf16.msra.mxu0 %v2369
        %2782 = vmatprep.subr.bf16.mxu0 %v2362
        %2783 = vmatpush2.bf16.msra.mxu0 %v2361
        %2784 = vmatprep.subr.bf16.mxu0 %v2354
        %2785 = vmatpush2.bf16.msra.mxu0 %v2353
        %2786 = vmatprep.subr.bf16.mxu0 %v2346
        %2787 = vmatpush2.bf16.msra.mxu0 %v2345
        %2788 = vmatprep.subr.bf16.mxu0 %v2338
        %2789 = vmatpush2.bf16.msra.mxu0 %v2337
        %2790 = vmatprep.mubr.bf16.mxu0 %v1324
        %2791 = vmatmul.mubr.bf16.gmra.mxu0 %v1323
        %v2792 = vpop.f32.mrf.mxu0
        %v2793 = vadd.f32 %v2692, %v2792
        %v2794 = vpop.f32.mrf.mxu0
        %v2795 = vadd.f32 %v2694, %v2794
        %v2796 = vpop.f32.mrf.mxu0
        %v2797 = vadd.f32 %v2696, %v2796
        %v2798 = vpop.f32.mrf.mxu0
        %v2799 = vadd.f32 %v2698, %v2798
        %2800 = vmatprep.mubr.bf16.mxu0 %v1328
        %2801 = vmatmul.mubr.bf16.gmra.mxu0 %v1327
        %v2802 = vpop.f32.mrf.mxu0
        %v2803 = vadd.f32 %v2702, %v2802
        %v2804 = vpop.f32.mrf.mxu0
        %v2805 = vadd.f32 %v2704, %v2804
        %v2806 = vpop.f32.mrf.mxu0
        %v2807 = vadd.f32 %v2706, %v2806
        %v2808 = vpop.f32.mrf.mxu0
        %v2809 = vadd.f32 %v2708, %v2808
        %2810 = vmatprep.mubr.bf16.mxu0 %v1332
        %2811 = vmatmul.mubr.bf16.gmra.mxu0 %v1331
        %v2812 = vpop.f32.mrf.mxu0
        %v2813 = vadd.f32 %v2712, %v2812
        %v2814 = vpop.f32.mrf.mxu0
        %v2815 = vadd.f32 %v2714, %v2814
        %v2816 = vpop.f32.mrf.mxu0
        %v2817 = vadd.f32 %v2716, %v2816
        %v2818 = vpop.f32.mrf.mxu0
        %v2819 = vadd.f32 %v2718, %v2818
        %2820 = vmatprep.mubr.bf16.mxu0 %v1336
        %2821 = vmatmul.mubr.bf16.gmra.mxu0 %v1335
        %v2822 = vpop.f32.mrf.mxu0
        %v2823 = vadd.f32 %v2722, %v2822
        %v2824 = vpop.f32.mrf.mxu0
        %v2825 = vadd.f32 %v2724, %v2824
        %v2826 = vpop.f32.mrf.mxu0
        %v2827 = vadd.f32 %v2726, %v2826
        %v2828 = vpop.f32.mrf.mxu0
        %v2829 = vadd.f32 %v2728, %v2828
        %2830 = vmatprep.mubr.bf16.mxu0 %v1340
        %2831 = vmatmul.mubr.bf16.gmra.mxu0 %v1339
        %v2832 = vpop.f32.mrf.mxu0
        %v2833 = vadd.f32 %v2732, %v2832
        %v2834 = vpop.f32.mrf.mxu0
        %v2835 = vadd.f32 %v2734, %v2834
        %v2836 = vpop.f32.mrf.mxu0
        %v2837 = vadd.f32 %v2736, %v2836
        %v2838 = vpop.f32.mrf.mxu0
        %v2839 = vadd.f32 %v2738, %v2838
        %2840 = vmatprep.mubr.bf16.mxu0 %v1344
        %2841 = vmatmul.mubr.bf16.gmra.mxu0 %v1343
        %v2842 = vpop.f32.mrf.mxu0
        %v2843 = vadd.f32 %v2742, %v2842
        %v2844 = vpop.f32.mrf.mxu0
        %v2845 = vadd.f32 %v2744, %v2844
        %v2846 = vpop.f32.mrf.mxu0
        %v2847 = vadd.f32 %v2746, %v2846
        %v2848 = vpop.f32.mrf.mxu0
        %v2849 = vadd.f32 %v2748, %v2848
        %2850 = vmatprep.mubr.bf16.mxu0 %v1348
        %2851 = vmatmul.mubr.bf16.gmra.mxu0 %v1347
        %v2852 = vpop.f32.mrf.mxu0
        %v2853 = vadd.f32 %v2752, %v2852
        %v2854 = vpop.f32.mrf.mxu0
        %v2855 = vadd.f32 %v2754, %v2854
        %v2856 = vpop.f32.mrf.mxu0
        %v2857 = vpop.f32.mrf.mxu0
        %2858 = vdwg.mxu0
        %2859 = vmatprep.subr.bf16.mxu0 %v2204
        %2860 = vmatpush1.bf16.msra.mxu0 %v2203
        %2861 = vmatprep.subr.bf16.mxu0 %v2196
        %2862 = vmatpush1.bf16.msra.mxu0 %v2195
        %2863 = vmatprep.subr.bf16.mxu0 %v2188
        %2864 = vmatpush1.bf16.msra.mxu0 %v2187
        %2865 = vmatprep.subr.bf16.mxu0 %v2180
        %2866 = vmatpush1.bf16.msra.mxu0 %v2179
        %2867 = vmatprep.subr.bf16.mxu0 %v2172
        %2868 = vmatpush1.bf16.msra.mxu0 %v2171
        %2869 = vmatprep.subr.bf16.mxu0 %v2164
        %2870 = vmatpush1.bf16.msra.mxu0 %v2163
        %2871 = vmatprep.subr.bf16.mxu0 %v2156
        %2872 = vmatpush1.bf16.msra.mxu0 %v2155
        %2873 = vmatprep.subr.bf16.mxu0 %v2148
        %2874 = vmatpush1.bf16.msra.mxu0 %v2147
        %2875 = vmatprep.subr.bf16.mxu0 %v2268
        %2876 = vmatpush2.bf16.msra.mxu0 %v2267
        %2877 = vmatprep.subr.bf16.mxu0 %v2260
        %2878 = vmatpush2.bf16.msra.mxu0 %v2259
        %2879 = vmatprep.subr.bf16.mxu0 %v2252
        %2880 = vmatpush2.bf16.msra.mxu0 %v2251
        %2881 = vmatprep.subr.bf16.mxu0 %v2244
        %2882 = vmatpush2.bf16.msra.mxu0 %v2243
        %2883 = vmatprep.subr.bf16.mxu0 %v2236
        %2884 = vmatpush2.bf16.msra.mxu0 %v2235
        %2885 = vmatprep.subr.bf16.mxu0 %v2228
        %2886 = vmatpush2.bf16.msra.mxu0 %v2227
        %2887 = vmatprep.subr.bf16.mxu0 %v2220
        %2888 = vmatpush2.bf16.msra.mxu0 %v2219
        %2889 = vmatprep.subr.bf16.mxu0 %v2212
        %2890 = vmatpush2.bf16.msra.mxu0 %v2211
        %2891 = vmatprep.mubr.bf16.mxu0 %v1322
        %2892 = vmatmul.mubr.bf16.gmra.mxu0 %v1321
        %v2893 = vpop.f32.mrf.mxu0
        %v2894 = vadd.f32 0.0, %v2893
        %v2895 = vpop.f32.mrf.mxu0
        %v2896 = vadd.f32 0.0, %v2895
        %v2897 = vpop.f32.mrf.mxu0
        %v2898 = vadd.f32 0.0, %v2897
        %v2899 = vpop.f32.mrf.mxu0
        %v2900 = vadd.f32 0.0, %v2899
        %2901 = vmatprep.mubr.bf16.mxu0 %v1326
        %2902 = vmatmul.mubr.bf16.gmra.mxu0 %v1325
        %v2903 = vpop.f32.mrf.mxu0
        %v2904 = vadd.f32 0.0, %v2903
        %v2905 = vpop.f32.mrf.mxu0
        %v2906 = vadd.f32 0.0, %v2905
        %v2907 = vpop.f32.mrf.mxu0
        %v2908 = vadd.f32 0.0, %v2907
        %v2909 = vpop.f32.mrf.mxu0
        %v2910 = vadd.f32 0.0, %v2909
        %2911 = vmatprep.mubr.bf16.mxu0 %v1330
        %2912 = vmatmul.mubr.bf16.gmra.mxu0 %v1329
        %v2913 = vpop.f32.mrf.mxu0
        %v2914 = vadd.f32 0.0, %v2913
        %v2915 = vpop.f32.mrf.mxu0
        %v2916 = vadd.f32 0.0, %v2915
        %v2917 = vpop.f32.mrf.mxu0
        %v2918 = vadd.f32 0.0, %v2917
        %v2919 = vpop.f32.mrf.mxu0
        %v2920 = vadd.f32 0.0, %v2919
        %2921 = vmatprep.mubr.bf16.mxu0 %v1334
        %2922 = vmatmul.mubr.bf16.gmra.mxu0 %v1333
        %v2923 = vpop.f32.mrf.mxu0
        %v2924 = vadd.f32 0.0, %v2923
        %v2925 = vpop.f32.mrf.mxu0
        %v2926 = vadd.f32 0.0, %v2925
        %v2927 = vpop.f32.mrf.mxu0
        %v2928 = vadd.f32 0.0, %v2927
        %v2929 = vpop.f32.mrf.mxu0
        %v2930 = vadd.f32 0.0, %v2929
        %2931 = vmatprep.mubr.bf16.mxu0 %v1338
        %2932 = vmatmul.mubr.bf16.gmra.mxu0 %v1337
        %v2933 = vpop.f32.mrf.mxu0
        %v2934 = vadd.f32 0.0, %v2933
        %v2935 = vpop.f32.mrf.mxu0
        %v2936 = vadd.f32 0.0, %v2935
        %v2937 = vpop.f32.mrf.mxu0
        %v2938 = vadd.f32 0.0, %v2937
        %v2939 = vpop.f32.mrf.mxu0
        %v2940 = vadd.f32 0.0, %v2939
        %2941 = vmatprep.mubr.bf16.mxu0 %v1342
        %2942 = vmatmul.mubr.bf16.gmra.mxu0 %v1341
        %v2943 = vpop.f32.mrf.mxu0
        %v2944 = vadd.f32 0.0, %v2943
        %v2945 = vpop.f32.mrf.mxu0
        %v2946 = vadd.f32 0.0, %v2945
        %v2947 = vpop.f32.mrf.mxu0
        %v2948 = vadd.f32 0.0, %v2947
        %v2949 = vpop.f32.mrf.mxu0
        %v2950 = vadd.f32 0.0, %v2949
        %2951 = vmatprep.mubr.bf16.mxu0 %v1346
        %2952 = vmatmul.mubr.bf16.gmra.mxu0 %v1345
        %v2953 = vpop.f32.mrf.mxu0
        %v2954 = vadd.f32 0.0, %v2953
        %v2955 = vpop.f32.mrf.mxu0
        %v2956 = vadd.f32 0.0, %v2955
        %v2957 = vpop.f32.mrf.mxu0
        %v2958 = vpop.f32.mrf.mxu0
        %2959 = vdwg.mxu0
        %2960 = vmatprep.subr.bf16.mxu0 %v2332
        %2961 = vmatpush1.bf16.msra.mxu0 %v2331
        %2962 = vmatprep.subr.bf16.mxu0 %v2324
        %2963 = vmatpush1.bf16.msra.mxu0 %v2323
        %2964 = vmatprep.subr.bf16.mxu0 %v2316
        %2965 = vmatpush1.bf16.msra.mxu0 %v2315
        %2966 = vmatprep.subr.bf16.mxu0 %v2308
        %2967 = vmatpush1.bf16.msra.mxu0 %v2307
        %2968 = vmatprep.subr.bf16.mxu0 %v2300
        %2969 = vmatpush1.bf16.msra.mxu0 %v2299
        %2970 = vmatprep.subr.bf16.mxu0 %v2292
        %2971 = vmatpush1.bf16.msra.mxu0 %v2291
        %2972 = vmatprep.subr.bf16.mxu0 %v2284
        %2973 = vmatpush1.bf16.msra.mxu0 %v2283
        %2974 = vmatprep.subr.bf16.mxu0 %v2276
        %2975 = vmatpush1.bf16.msra.mxu0 %v2275
        %2976 = vmatprep.subr.bf16.mxu0 %v2396
        %2977 = vmatpush2.bf16.msra.mxu0 %v2395
        %2978 = vmatprep.subr.bf16.mxu0 %v2388
        %2979 = vmatpush2.bf16.msra.mxu0 %v2387
        %2980 = vmatprep.subr.bf16.mxu0 %v2380
        %2981 = vmatpush2.bf16.msra.mxu0 %v2379
        %2982 = vmatprep.subr.bf16.mxu0 %v2372
        %2983 = vmatpush2.bf16.msra.mxu0 %v2371
        %2984 = vmatprep.subr.bf16.mxu0 %v2364
        %2985 = vmatpush2.bf16.msra.mxu0 %v2363
        %2986 = vmatprep.subr.bf16.mxu0 %v2356
        %2987 = vmatpush2.bf16.msra.mxu0 %v2355
        %2988 = vmatprep.subr.bf16.mxu0 %v2348
        %2989 = vmatpush2.bf16.msra.mxu0 %v2347
        %2990 = vmatprep.subr.bf16.mxu0 %v2340
        %2991 = vmatpush2.bf16.msra.mxu0 %v2339
        %2992 = vmatprep.mubr.bf16.mxu0 %v1324
        %2993 = vmatmul.mubr.bf16.gmra.mxu0 %v1323
        %v2994 = vpop.f32.mrf.mxu0
        %v2995 = vadd.f32 %v2894, %v2994
        %v2996 = vpop.f32.mrf.mxu0
        %v2997 = vadd.f32 %v2896, %v2996
        %v2998 = vpop.f32.mrf.mxu0
        %v2999 = vadd.f32 %v2898, %v2998
        %v3000 = vpop.f32.mrf.mxu0
        %v3001 = vadd.f32 %v2900, %v3000
        %3002 = vmatprep.mubr.bf16.mxu0 %v1328
        %3003 = vmatmul.mubr.bf16.gmra.mxu0 %v1327
        %v3004 = vpop.f32.mrf.mxu0
        %v3005 = vadd.f32 %v2904, %v3004
        %v3006 = vpop.f32.mrf.mxu0
        %v3007 = vadd.f32 %v2906, %v3006
        %v3008 = vpop.f32.mrf.mxu0
        %v3009 = vadd.f32 %v2908, %v3008
        %v3010 = vpop.f32.mrf.mxu0
        %v3011 = vadd.f32 %v2910, %v3010
        %3012 = vmatprep.mubr.bf16.mxu0 %v1332
        %3013 = vmatmul.mubr.bf16.gmra.mxu0 %v1331
        %v3014 = vpop.f32.mrf.mxu0
        %v3015 = vadd.f32 %v2914, %v3014
        %v3016 = vpop.f32.mrf.mxu0
        %v3017 = vadd.f32 %v2916, %v3016
        %v3018 = vpop.f32.mrf.mxu0
        %v3019 = vadd.f32 %v2918, %v3018
        %v3020 = vpop.f32.mrf.mxu0
        %v3021 = vadd.f32 %v2920, %v3020
        %3022 = vmatprep.mubr.bf16.mxu0 %v1336
        %3023 = vmatmul.mubr.bf16.gmra.mxu0 %v1335
        %v3024 = vpop.f32.mrf.mxu0
        %v3025 = vadd.f32 %v2924, %v3024
        %v3026 = vpop.f32.mrf.mxu0
        %v3027 = vadd.f32 %v2926, %v3026
        %v3028 = vpop.f32.mrf.mxu0
        %v3029 = vadd.f32 %v2928, %v3028
        %v3030 = vpop.f32.mrf.mxu0
        %v3031 = vadd.f32 %v2930, %v3030
        %3032 = vmatprep.mubr.bf16.mxu0 %v1340
        %3033 = vmatmul.mubr.bf16.gmra.mxu0 %v1339
        %v3034 = vpop.f32.mrf.mxu0
        %v3035 = vadd.f32 %v2934, %v3034
        %v3036 = vpop.f32.mrf.mxu0
        %v3037 = vadd.f32 %v2936, %v3036
        %v3038 = vpop.f32.mrf.mxu0
        %v3039 = vadd.f32 %v2938, %v3038
        %v3040 = vpop.f32.mrf.mxu0
        %v3041 = vadd.f32 %v2940, %v3040
        %3042 = vmatprep.mubr.bf16.mxu0 %v1344
        %3043 = vmatmul.mubr.bf16.gmra.mxu0 %v1343
        %v3044 = vpop.f32.mrf.mxu0
        %v3045 = vadd.f32 %v2944, %v3044
        %v3046 = vpop.f32.mrf.mxu0
        %v3047 = vadd.f32 %v2946, %v3046
        %v3048 = vpop.f32.mrf.mxu0
        %v3049 = vadd.f32 %v2948, %v3048
        %v3050 = vpop.f32.mrf.mxu0
        %v3051 = vadd.f32 %v2950, %v3050
        %3052 = vmatprep.mubr.bf16.mxu0 %v1348
        %3053 = vmatmul.mubr.bf16.gmra.mxu0 %v1347
        %v3054 = vpop.f32.mrf.mxu0
        %v3055 = vadd.f32 %v2954, %v3054
        %v3056 = vpop.f32.mrf.mxu0
        %v3057 = vadd.f32 %v2956, %v3056
        %v3058 = vpop.f32.mrf.mxu0
        %v3059 = vpop.f32.mrf.mxu0
        %3060 = vdwg.mxu0
        %3061 = vmatprep.subr.bf16.mxu0 %v2206
        %3062 = vmatpush1.bf16.msra.mxu0 %v2205
        %3063 = vmatprep.subr.bf16.mxu0 %v2198
        %3064 = vmatpush1.bf16.msra.mxu0 %v2197
        %3065 = vmatprep.subr.bf16.mxu0 %v2190
        %3066 = vmatpush1.bf16.msra.mxu0 %v2189
        %3067 = vmatprep.subr.bf16.mxu0 %v2182
        %3068 = vmatpush1.bf16.msra.mxu0 %v2181
        %3069 = vmatprep.subr.bf16.mxu0 %v2174
        %3070 = vmatpush1.bf16.msra.mxu0 %v2173
        %3071 = vmatprep.subr.bf16.mxu0 %v2166
        %3072 = vmatpush1.bf16.msra.mxu0 %v2165
        %3073 = vmatprep.subr.bf16.mxu0 %v2158
        %3074 = vmatpush1.bf16.msra.mxu0 %v2157
        %3075 = vmatprep.subr.bf16.mxu0 %v2150
        %3076 = vmatpush1.bf16.msra.mxu0 %v2149
        %3077 = vmatprep.subr.bf16.mxu0 %v2270
        %3078 = vmatpush2.bf16.msra.mxu0 %v2269
        %3079 = vmatprep.subr.bf16.mxu0 %v2262
        %3080 = vmatpush2.bf16.msra.mxu0 %v2261
        %3081 = vmatprep.subr.bf16.mxu0 %v2254
        %3082 = vmatpush2.bf16.msra.mxu0 %v2253
        %3083 = vmatprep.subr.bf16.mxu0 %v2246
        %3084 = vmatpush2.bf16.msra.mxu0 %v2245
        %3085 = vmatprep.subr.bf16.mxu0 %v2238
        %3086 = vmatpush2.bf16.msra.mxu0 %v2237
        %3087 = vmatprep.subr.bf16.mxu0 %v2230
        %3088 = vmatpush2.bf16.msra.mxu0 %v2229
        %3089 = vmatprep.subr.bf16.mxu0 %v2222
        %3090 = vmatpush2.bf16.msra.mxu0 %v2221
        %3091 = vmatprep.subr.bf16.mxu0 %v2214
        %3092 = vmatpush2.bf16.msra.mxu0 %v2213
        %3093 = vmatprep.mubr.bf16.mxu0 %v1322
        %3094 = vmatmul.mubr.bf16.gmra.mxu0 %v1321
        %v3095 = vpop.f32.mrf.mxu0
        %v3096 = vadd.f32 0.0, %v3095
        %v3097 = vpop.f32.mrf.mxu0
        %v3098 = vadd.f32 0.0, %v3097
        %v3099 = vpop.f32.mrf.mxu0
        %v3100 = vadd.f32 0.0, %v3099
        %v3101 = vpop.f32.mrf.mxu0
        %v3102 = vadd.f32 0.0, %v3101
        %3103 = vmatprep.mubr.bf16.mxu0 %v1326
        %3104 = vmatmul.mubr.bf16.gmra.mxu0 %v1325
        %v3105 = vpop.f32.mrf.mxu0
        %v3106 = vadd.f32 0.0, %v3105
        %v3107 = vpop.f32.mrf.mxu0
        %v3108 = vadd.f32 0.0, %v3107
        %v3109 = vpop.f32.mrf.mxu0
        %v3110 = vadd.f32 0.0, %v3109
        %v3111 = vpop.f32.mrf.mxu0
        %v3112 = vadd.f32 0.0, %v3111
        %3113 = vmatprep.mubr.bf16.mxu0 %v1330
        %3114 = vmatmul.mubr.bf16.gmra.mxu0 %v1329
        %v3115 = vpop.f32.mrf.mxu0
        %v3116 = vadd.f32 0.0, %v3115
        %v3117 = vpop.f32.mrf.mxu0
        %v3118 = vadd.f32 0.0, %v3117
        %v3119 = vpop.f32.mrf.mxu0
        %v3120 = vadd.f32 0.0, %v3119
        %v3121 = vpop.f32.mrf.mxu0
        %v3122 = vadd.f32 0.0, %v3121
        %3123 = vmatprep.mubr.bf16.mxu0 %v1334
        %3124 = vmatmul.mubr.bf16.gmra.mxu0 %v1333
        %v3125 = vpop.f32.mrf.mxu0
        %v3126 = vadd.f32 0.0, %v3125
        %v3127 = vpop.f32.mrf.mxu0
        %v3128 = vadd.f32 0.0, %v3127
        %v3129 = vpop.f32.mrf.mxu0
        %v3130 = vadd.f32 0.0, %v3129
        %v3131 = vpop.f32.mrf.mxu0
        %v3132 = vadd.f32 0.0, %v3131
        %3133 = vmatprep.mubr.bf16.mxu0 %v1338
        %3134 = vmatmul.mubr.bf16.gmra.mxu0 %v1337
        %v3135 = vpop.f32.mrf.mxu0
        %v3136 = vadd.f32 0.0, %v3135
        %v3137 = vpop.f32.mrf.mxu0
        %v3138 = vadd.f32 0.0, %v3137
        %v3139 = vpop.f32.mrf.mxu0
        %v3140 = vadd.f32 0.0, %v3139
        %v3141 = vpop.f32.mrf.mxu0
        %v3142 = vadd.f32 0.0, %v3141
        %3143 = vmatprep.mubr.bf16.mxu0 %v1342
        %3144 = vmatmul.mubr.bf16.gmra.mxu0 %v1341
        %v3145 = vpop.f32.mrf.mxu0
        %v3146 = vadd.f32 0.0, %v3145
        %v3147 = vpop.f32.mrf.mxu0
        %v3148 = vadd.f32 0.0, %v3147
        %v3149 = vpop.f32.mrf.mxu0
        %v3150 = vadd.f32 0.0, %v3149
        %v3151 = vpop.f32.mrf.mxu0
        %v3152 = vadd.f32 0.0, %v3151
        %3153 = vmatprep.mubr.bf16.mxu0 %v1346
        %3154 = vmatmul.mubr.bf16.gmra.mxu0 %v1345
        %v3155 = vpop.f32.mrf.mxu0
        %v3156 = vadd.f32 0.0, %v3155
        %v3157 = vpop.f32.mrf.mxu0
        %v3158 = vadd.f32 0.0, %v3157
        %v3159 = vpop.f32.mrf.mxu0
        %v3160 = vpop.f32.mrf.mxu0
        %3161 = vdwg.mxu0
        %3162 = vmatprep.subr.bf16.mxu0 %v2334
        %3163 = vmatpush1.bf16.msra.mxu0 %v2333
        %3164 = vmatprep.subr.bf16.mxu0 %v2326
        %3165 = vmatpush1.bf16.msra.mxu0 %v2325
        %3166 = vmatprep.subr.bf16.mxu0 %v2318
        %3167 = vmatpush1.bf16.msra.mxu0 %v2317
        %3168 = vmatprep.subr.bf16.mxu0 %v2310
        %3169 = vmatpush1.bf16.msra.mxu0 %v2309
        %3170 = vmatprep.subr.bf16.mxu0 %v2302
        %3171 = vmatpush1.bf16.msra.mxu0 %v2301
        %3172 = vmatprep.subr.bf16.mxu0 %v2294
        %3173 = vmatpush1.bf16.msra.mxu0 %v2293
        %3174 = vmatprep.subr.bf16.mxu0 %v2286
        %3175 = vmatpush1.bf16.msra.mxu0 %v2285
        %3176 = vmatprep.subr.bf16.mxu0 %v2278
        %3177 = vmatpush1.bf16.msra.mxu0 %v2277
        %3178 = vmatprep.subr.bf16.mxu0 %v2398
        %3179 = vmatpush2.bf16.msra.mxu0 %v2397
        %3180 = vmatprep.subr.bf16.mxu0 %v2390
        %3181 = vmatpush2.bf16.msra.mxu0 %v2389
        %3182 = vmatprep.subr.bf16.mxu0 %v2382
        %3183 = vmatpush2.bf16.msra.mxu0 %v2381
        %3184 = vmatprep.subr.bf16.mxu0 %v2374
        %3185 = vmatpush2.bf16.msra.mxu0 %v2373
        %3186 = vmatprep.subr.bf16.mxu0 %v2366
        %3187 = vmatpush2.bf16.msra.mxu0 %v2365
        %3188 = vmatprep.subr.bf16.mxu0 %v2358
        %3189 = vmatpush2.bf16.msra.mxu0 %v2357
        %3190 = vmatprep.subr.bf16.mxu0 %v2350
        %3191 = vmatpush2.bf16.msra.mxu0 %v2349
        %3192 = vmatprep.subr.bf16.mxu0 %v2342
        %3193 = vmatpush2.bf16.msra.mxu0 %v2341
        %3194 = vmatprep.mubr.bf16.mxu0 %v1324
        %3195 = vmatmul.mubr.bf16.gmra.mxu0 %v1323
        %v3196 = vpop.f32.mrf.mxu0
        %v3197 = vadd.f32 %v3096, %v3196
        %v3198 = vpop.f32.mrf.mxu0
        %v3199 = vadd.f32 %v3098, %v3198
        %v3200 = vpop.f32.mrf.mxu0
        %v3201 = vadd.f32 %v3100, %v3200
        %v3202 = vpop.f32.mrf.mxu0
        %v3203 = vadd.f32 %v3102, %v3202
        %3204 = vmatprep.mubr.bf16.mxu0 %v1328
        %3205 = vmatmul.mubr.bf16.gmra.mxu0 %v1327
        %v3206 = vpop.f32.mrf.mxu0
        %v3207 = vadd.f32 %v3106, %v3206
        %v3208 = vpop.f32.mrf.mxu0
        %v3209 = vadd.f32 %v3108, %v3208
        %v3210 = vpop.f32.mrf.mxu0
        %v3211 = vadd.f32 %v3110, %v3210
        %v3212 = vpop.f32.mrf.mxu0
        %v3213 = vadd.f32 %v3112, %v3212
        %3214 = vmatprep.mubr.bf16.mxu0 %v1332
        %3215 = vmatmul.mubr.bf16.gmra.mxu0 %v1331
        %v3216 = vpop.f32.mrf.mxu0
        %v3217 = vadd.f32 %v3116, %v3216
        %v3218 = vpop.f32.mrf.mxu0
        %v3219 = vadd.f32 %v3118, %v3218
        %v3220 = vpop.f32.mrf.mxu0
        %v3221 = vadd.f32 %v3120, %v3220
        %v3222 = vpop.f32.mrf.mxu0
        %v3223 = vadd.f32 %v3122, %v3222
        %3224 = vmatprep.mubr.bf16.mxu0 %v1336
        %3225 = vmatmul.mubr.bf16.gmra.mxu0 %v1335
        %v3226 = vpop.f32.mrf.mxu0
        %v3227 = vadd.f32 %v3126, %v3226
        %v3228 = vpop.f32.mrf.mxu0
        %v3229 = vadd.f32 %v3128, %v3228
        %v3230 = vpop.f32.mrf.mxu0
        %v3231 = vadd.f32 %v3130, %v3230
        %v3232 = vpop.f32.mrf.mxu0
        %v3233 = vadd.f32 %v3132, %v3232
        %3234 = vmatprep.mubr.bf16.mxu0 %v1340
        %3235 = vmatmul.mubr.bf16.gmra.mxu0 %v1339
        %v3236 = vpop.f32.mrf.mxu0
        %v3237 = vadd.f32 %v3136, %v3236
        %v3238 = vpop.f32.mrf.mxu0
        %v3239 = vadd.f32 %v3138, %v3238
        %v3240 = vpop.f32.mrf.mxu0
        %v3241 = vadd.f32 %v3140, %v3240
        %v3242 = vpop.f32.mrf.mxu0
        %v3243 = vadd.f32 %v3142, %v3242
        %3244 = vmatprep.mubr.bf16.mxu0 %v1344
        %3245 = vmatmul.mubr.bf16.gmra.mxu0 %v1343
        %v3246 = vpop.f32.mrf.mxu0
        %v3247 = vadd.f32 %v3146, %v3246
        %v3248 = vpop.f32.mrf.mxu0
        %v3249 = vadd.f32 %v3148, %v3248
        %v3250 = vpop.f32.mrf.mxu0
        %v3251 = vadd.f32 %v3150, %v3250
        %v3252 = vpop.f32.mrf.mxu0
        %v3253 = vadd.f32 %v3152, %v3252
        %3254 = vmatprep.mubr.bf16.mxu0 %v1348
        %3255 = vmatmul.mubr.bf16.gmra.mxu0 %v1347
        %v3256 = vpop.f32.mrf.mxu0
        %v3257 = vadd.f32 %v3156, %v3256
        %v3258 = vpop.f32.mrf.mxu0
        %v3259 = vadd.f32 %v3158, %v3258
        %v3260 = vpop.f32.mrf.mxu0
        %v3261 = vpop.f32.mrf.mxu0
        %3262 = vdwg.mxu0
        %3263 = vmatprep.subr.bf16.mxu0 %v2208
        %3264 = vmatpush1.bf16.msra.mxu0 %v2207
        %3265 = vmatprep.subr.bf16.mxu0 %v2200
        %3266 = vmatpush1.bf16.msra.mxu0 %v2199
        %3267 = vmatprep.subr.bf16.mxu0 %v2192
        %3268 = vmatpush1.bf16.msra.mxu0 %v2191
        %3269 = vmatprep.subr.bf16.mxu0 %v2184
        %3270 = vmatpush1.bf16.msra.mxu0 %v2183
        %3271 = vmatprep.subr.bf16.mxu0 %v2176
        %3272 = vmatpush1.bf16.msra.mxu0 %v2175
        %3273 = vmatprep.subr.bf16.mxu0 %v2168
        %3274 = vmatpush1.bf16.msra.mxu0 %v2167
        %3275 = vmatprep.subr.bf16.mxu0 %v2160
        %3276 = vmatpush1.bf16.msra.mxu0 %v2159
        %3277 = vmatprep.subr.bf16.mxu0 %v2152
        %3278 = vmatpush1.bf16.msra.mxu0 %v2151
        %3279 = vmatprep.subr.bf16.mxu0 %v2272
        %3280 = vmatpush2.bf16.msra.mxu0 %v2271
        %3281 = vmatprep.subr.bf16.mxu0 %v2264
        %3282 = vmatpush2.bf16.msra.mxu0 %v2263
        %3283 = vmatprep.subr.bf16.mxu0 %v2256
        %3284 = vmatpush2.bf16.msra.mxu0 %v2255
        %3285 = vmatprep.subr.bf16.mxu0 %v2248
        %3286 = vmatpush2.bf16.msra.mxu0 %v2247
        %3287 = vmatprep.subr.bf16.mxu0 %v2240
        %3288 = vmatpush2.bf16.msra.mxu0 %v2239
        %3289 = vmatprep.subr.bf16.mxu0 %v2232
        %3290 = vmatpush2.bf16.msra.mxu0 %v2231
        %3291 = vmatprep.subr.bf16.mxu0 %v2224
        %3292 = vmatpush2.bf16.msra.mxu0 %v2223
        %3293 = vmatprep.subr.bf16.mxu0 %v2216
        %3294 = vmatpush2.bf16.msra.mxu0 %v2215
        %3295 = vmatprep.mubr.bf16.mxu0 %v1322
        %3296 = vmatmul.mubr.bf16.gmra.mxu0 %v1321
        %v3297 = vpop.f32.mrf.mxu0
        %v3298 = vadd.f32 0.0, %v3297
        %v3299 = vpop.f32.mrf.mxu0
        %v3300 = vadd.f32 0.0, %v3299
        %v3301 = vpop.f32.mrf.mxu0
        %v3302 = vadd.f32 0.0, %v3301
        %v3303 = vpop.f32.mrf.mxu0
        %v3304 = vadd.f32 0.0, %v3303
        %3305 = vmatprep.mubr.bf16.mxu0 %v1326
        %3306 = vmatmul.mubr.bf16.gmra.mxu0 %v1325
        %v3307 = vpop.f32.mrf.mxu0
        %v3308 = vadd.f32 0.0, %v3307
        %v3309 = vpop.f32.mrf.mxu0
        %v3310 = vadd.f32 0.0, %v3309
        %v3311 = vpop.f32.mrf.mxu0
        %v3312 = vadd.f32 0.0, %v3311
        %v3313 = vpop.f32.mrf.mxu0
        %v3314 = vadd.f32 0.0, %v3313
        %3315 = vmatprep.mubr.bf16.mxu0 %v1330
        %3316 = vmatmul.mubr.bf16.gmra.mxu0 %v1329
        %v3317 = vpop.f32.mrf.mxu0
        %v3318 = vadd.f32 0.0, %v3317
        %v3319 = vpop.f32.mrf.mxu0
        %v3320 = vadd.f32 0.0, %v3319
        %v3321 = vpop.f32.mrf.mxu0
        %v3322 = vadd.f32 0.0, %v3321
        %v3323 = vpop.f32.mrf.mxu0
        %v3324 = vadd.f32 0.0, %v3323
        %3325 = vmatprep.mubr.bf16.mxu0 %v1334
        %3326 = vmatmul.mubr.bf16.gmra.mxu0 %v1333
        %v3327 = vpop.f32.mrf.mxu0
        %v3328 = vadd.f32 0.0, %v3327
        %v3329 = vpop.f32.mrf.mxu0
        %v3330 = vadd.f32 0.0, %v3329
        %v3331 = vpop.f32.mrf.mxu0
        %v3332 = vadd.f32 0.0, %v3331
        %v3333 = vpop.f32.mrf.mxu0
        %v3334 = vadd.f32 0.0, %v3333
        %3335 = vmatprep.mubr.bf16.mxu0 %v1338
        %3336 = vmatmul.mubr.bf16.gmra.mxu0 %v1337
        %v3337 = vpop.f32.mrf.mxu0
        %v3338 = vadd.f32 0.0, %v3337
        %v3339 = vpop.f32.mrf.mxu0
        %v3340 = vadd.f32 0.0, %v3339
        %v3341 = vpop.f32.mrf.mxu0
        %v3342 = vadd.f32 0.0, %v3341
        %v3343 = vpop.f32.mrf.mxu0
        %v3344 = vadd.f32 0.0, %v3343
        %3345 = vmatprep.mubr.bf16.mxu0 %v1342
        %3346 = vmatmul.mubr.bf16.gmra.mxu0 %v1341
        %v3347 = vpop.f32.mrf.mxu0
        %v3348 = vadd.f32 0.0, %v3347
        %v3349 = vpop.f32.mrf.mxu0
        %v3350 = vadd.f32 0.0, %v3349
        %v3351 = vpop.f32.mrf.mxu0
        %v3352 = vadd.f32 0.0, %v3351
        %v3353 = vpop.f32.mrf.mxu0
        %v3354 = vadd.f32 0.0, %v3353
        %3355 = vmatprep.mubr.bf16.mxu0 %v1346
        %3356 = vmatmul.mubr.bf16.gmra.mxu0 %v1345
        %v3357 = vpop.f32.mrf.mxu0
        %v3358 = vadd.f32 0.0, %v3357
        %v3359 = vpop.f32.mrf.mxu0
        %v3360 = vadd.f32 0.0, %v3359
        %v3361 = vpop.f32.mrf.mxu0
        %v3362 = vpop.f32.mrf.mxu0
        %3363 = vdwg.mxu0
        %3364 = vmatprep.subr.bf16.mxu0 %v2336
        %3365 = vmatpush1.bf16.msra.mxu0 %v2335
        %3366 = vmatprep.subr.bf16.mxu0 %v2328
        %3367 = vmatpush1.bf16.msra.mxu0 %v2327
        %3368 = vmatprep.subr.bf16.mxu0 %v2320
        %3369 = vmatpush1.bf16.msra.mxu0 %v2319
        %3370 = vmatprep.subr.bf16.mxu0 %v2312
        %3371 = vmatpush1.bf16.msra.mxu0 %v2311
        %3372 = vmatprep.subr.bf16.mxu0 %v2304
        %3373 = vmatpush1.bf16.msra.mxu0 %v2303
        %3374 = vmatprep.subr.bf16.mxu0 %v2296
        %3375 = vmatpush1.bf16.msra.mxu0 %v2295
        %3376 = vmatprep.subr.bf16.mxu0 %v2288
        %3377 = vmatpush1.bf16.msra.mxu0 %v2287
        %3378 = vmatprep.subr.bf16.mxu0 %v2280
        %3379 = vmatpush1.bf16.msra.mxu0 %v2279
        %3380 = vmatprep.subr.bf16.mxu0 %v2400
        %3381 = vmatpush2.bf16.msra.mxu0 %v2399
        %3382 = vmatprep.subr.bf16.mxu0 %v2392
        %3383 = vmatpush2.bf16.msra.mxu0 %v2391
        %3384 = vmatprep.subr.bf16.mxu0 %v2384
        %3385 = vmatpush2.bf16.msra.mxu0 %v2383
        %3386 = vmatprep.subr.bf16.mxu0 %v2376
        %3387 = vmatpush2.bf16.msra.mxu0 %v2375
        %3388 = vmatprep.subr.bf16.mxu0 %v2368
        %3389 = vmatpush2.bf16.msra.mxu0 %v2367
        %3390 = vmatprep.subr.bf16.mxu0 %v2360
        %3391 = vmatpush2.bf16.msra.mxu0 %v2359
        %3392 = vmatprep.subr.bf16.mxu0 %v2352
        %3393 = vmatpush2.bf16.msra.mxu0 %v2351
        %3394 = vmatprep.subr.bf16.mxu0 %v2344
        %3395 = vmatpush2.bf16.msra.mxu0 %v2343
        %3396 = vmatprep.mubr.bf16.mxu0 %v1324
        %3397 = vmatmul.mubr.bf16.gmra.mxu0 %v1323
        %v3398 = vpop.f32.mrf.mxu0
        %v3399 = vadd.f32 %v3298, %v3398
        %v3400 = vpop.f32.mrf.mxu0
        %v3401 = vadd.f32 %v3300, %v3400
        %v3402 = vpop.f32.mrf.mxu0
        %v3403 = vadd.f32 %v3302, %v3402
        %v3404 = vpop.f32.mrf.mxu0
        %v3405 = vadd.f32 %v3304, %v3404
        %3406 = vmatprep.mubr.bf16.mxu0 %v1328
        %3407 = vmatmul.mubr.bf16.gmra.mxu0 %v1327
        %v3408 = vpop.f32.mrf.mxu0
        %v3409 = vadd.f32 %v3308, %v3408
        %v3410 = vpop.f32.mrf.mxu0
        %v3411 = vadd.f32 %v3310, %v3410
        %v3412 = vpop.f32.mrf.mxu0
        %v3413 = vadd.f32 %v3312, %v3412
        %v3414 = vpop.f32.mrf.mxu0
        %v3415 = vadd.f32 %v3314, %v3414
        %3416 = vmatprep.mubr.bf16.mxu0 %v1332
        %3417 = vmatmul.mubr.bf16.gmra.mxu0 %v1331
        %v3418 = vpop.f32.mrf.mxu0
        %v3419 = vadd.f32 %v3318, %v3418
        %v3420 = vpop.f32.mrf.mxu0
        %v3421 = vadd.f32 %v3320, %v3420
        %v3422 = vpop.f32.mrf.mxu0
        %v3423 = vadd.f32 %v3322, %v3422
        %v3424 = vpop.f32.mrf.mxu0
        %v3425 = vadd.f32 %v3324, %v3424
        %3426 = vmatprep.mubr.bf16.mxu0 %v1336
        %3427 = vmatmul.mubr.bf16.gmra.mxu0 %v1335
        %v3428 = vpop.f32.mrf.mxu0
        %v3429 = vadd.f32 %v3328, %v3428
        %v3430 = vpop.f32.mrf.mxu0
        %v3431 = vadd.f32 %v3330, %v3430
        %v3432 = vpop.f32.mrf.mxu0
        %v3433 = vadd.f32 %v3332, %v3432
        %v3434 = vpop.f32.mrf.mxu0
        %v3435 = vadd.f32 %v3334, %v3434
        %3436 = vmatprep.mubr.bf16.mxu0 %v1340
        %3437 = vmatmul.mubr.bf16.gmra.mxu0 %v1339
        %v3438 = vpop.f32.mrf.mxu0
        %v3439 = vadd.f32 %v3338, %v3438
        %v3440 = vpop.f32.mrf.mxu0
        %v3441 = vadd.f32 %v3340, %v3440
        %v3442 = vpop.f32.mrf.mxu0
        %v3443 = vadd.f32 %v3342, %v3442
        %v3444 = vpop.f32.mrf.mxu0
        %v3445 = vadd.f32 %v3344, %v3444
        %3446 = vmatprep.mubr.bf16.mxu0 %v1344
        %3447 = vmatmul.mubr.bf16.gmra.mxu0 %v1343
        %v3448 = vpop.f32.mrf.mxu0
        %v3449 = vadd.f32 %v3348, %v3448
        %v3450 = vpop.f32.mrf.mxu0
        %v3451 = vadd.f32 %v3350, %v3450
        %v3452 = vpop.f32.mrf.mxu0
        %v3453 = vadd.f32 %v3352, %v3452
        %v3454 = vpop.f32.mrf.mxu0
        %v3455 = vadd.f32 %v3354, %v3454
        %3456 = vmatprep.mubr.bf16.mxu0 %v1348
        %3457 = vmatmul.mubr.bf16.gmra.mxu0 %v1347
        %v3458 = vpop.f32.mrf.mxu0
        %v3459 = vadd.f32 %v3358, %v3458
        %v3460 = vpop.f32.mrf.mxu0
        %v3461 = vadd.f32 %v3360, %v3460
        %v3462 = vpop.f32.mrf.mxu0
        %v3463 = vpop.f32.mrf.mxu0
        %3464 = vdwg.mxu0
        %v3465 = vadd.f32 %v857, %v2793
        %v3466 = vadd.f32 %v858, %v2795
        %v3467 = vadd.f32 %v859, %v2995
        %v3468 = vadd.f32 %v860, %v2997
        %v3469 = vadd.f32 %v861, %v3197
        %v3470 = vadd.f32 %v862, %v3199
        %v3471 = vadd.f32 %v863, %v3399
        %v3472 = vadd.f32 %v864, %v3401
        %v3473 = vadd.f32 %v865, %v2797
        %v3474 = vadd.f32 %v866, %v2799
        %v3475 = vadd.f32 %v867, %v2999
        %v3476 = vadd.f32 %v868, %v3001
        %v3477 = vadd.f32 %v869, %v3201
        %v3478 = vadd.f32 %v870, %v3203
        %v3479 = vadd.f32 %v871, %v3403
        %v3480 = vadd.f32 %v872, %v3405
        %v3481 = vadd.f32 %v873, %v2803
        %v3482 = vadd.f32 %v874, %v2805
        %v3483 = vadd.f32 %v875, %v3005
        %v3484 = vadd.f32 %v876, %v3007
        %v3485 = vadd.f32 %v877, %v3207
        %v3486 = vadd.f32 %v878, %v3209
        %v3487 = vadd.f32 %v879, %v3409
        %v3488 = vadd.f32 %v880, %v3411
        %v3489 = vadd.f32 %v881, %v2807
        %v3490 = vadd.f32 %v882, %v2809
        %v3491 = vadd.f32 %v883, %v3009
        %v3492 = vadd.f32 %v884, %v3011
        %v3493 = vadd.f32 %v885, %v3211
        %v3494 = vadd.f32 %v886, %v3213
        %v3495 = vadd.f32 %v887, %v3413
        %v3496 = vadd.f32 %v888, %v3415
        %v3497 = vadd.f32 %v889, %v2813
        %v3498 = vadd.f32 %v890, %v2815
        %v3499 = vadd.f32 %v891, %v3015
        %v3500 = vadd.f32 %v892, %v3017
        %v3501 = vadd.f32 %v893, %v3217
        %v3502 = vadd.f32 %v894, %v3219
        %v3503 = vadd.f32 %v895, %v3419
        %v3504 = vadd.f32 %v896, %v3421
        %v3505 = vadd.f32 %v897, %v2817
        %v3506 = vadd.f32 %v898, %v2819
        %v3507 = vadd.f32 %v899, %v3019
        %v3508 = vadd.f32 %v900, %v3021
        %v3509 = vadd.f32 %v901, %v3221
        %v3510 = vadd.f32 %v902, %v3223
        %v3511 = vadd.f32 %v903, %v3423
        %v3512 = vadd.f32 %v904, %v3425
        %v3513 = vadd.f32 %v905, %v2823
        %v3514 = vadd.f32 %v906, %v2825
        %v3515 = vadd.f32 %v907, %v3025
        %v3516 = vadd.f32 %v908, %v3027
        %v3517 = vadd.f32 %v909, %v3227
        %v3518 = vadd.f32 %v910, %v3229
        %v3519 = vadd.f32 %v911, %v3429
        %v3520 = vadd.f32 %v912, %v3431
        %v3521 = vadd.f32 %v913, %v2827
        %v3522 = vadd.f32 %v914, %v2829
        %v3523 = vadd.f32 %v915, %v3029
        %v3524 = vadd.f32 %v916, %v3031
        %v3525 = vadd.f32 %v917, %v3231
        %v3526 = vadd.f32 %v918, %v3233
        %v3527 = vadd.f32 %v919, %v3433
        %v3528 = vadd.f32 %v920, %v3435
        %v3529 = vadd.f32 %v921, %v2833
        %v3530 = vadd.f32 %v922, %v2835
        %v3531 = vadd.f32 %v923, %v3035
        %v3532 = vadd.f32 %v924, %v3037
        %v3533 = vadd.f32 %v925, %v3237
        %v3534 = vadd.f32 %v926, %v3239
        %v3535 = vadd.f32 %v927, %v3439
        %v3536 = vadd.f32 %v928, %v3441
        %v3537 = vadd.f32 %v929, %v2837
        %v3538 = vadd.f32 %v930, %v2839
        %v3539 = vadd.f32 %v931, %v3039
        %v3540 = vadd.f32 %v932, %v3041
        %v3541 = vadd.f32 %v933, %v3241
        %v3542 = vadd.f32 %v934, %v3243
        %v3543 = vadd.f32 %v935, %v3443
        %v3544 = vadd.f32 %v936, %v3445
        %v3545 = vadd.f32 %v937, %v2843
        %v3546 = vadd.f32 %v938, %v2845
        %v3547 = vadd.f32 %v939, %v3045
        %v3548 = vadd.f32 %v940, %v3047
        %v3549 = vadd.f32 %v941, %v3247
        %v3550 = vadd.f32 %v942, %v3249
        %v3551 = vadd.f32 %v943, %v3449
        %v3552 = vadd.f32 %v944, %v3451
        %v3553 = vadd.f32 %v945, %v2847
        %v3554 = vadd.f32 %v946, %v2849
        %v3555 = vadd.f32 %v947, %v3049
        %v3556 = vadd.f32 %v948, %v3051
        %v3557 = vadd.f32 %v949, %v3251
        %v3558 = vadd.f32 %v950, %v3253
        %v3559 = vadd.f32 %v951, %v3453
        %v3560 = vadd.f32 %v952, %v3455
        %v3561 = vadd.f32 %v953, %v2853
        %v3562 = vadd.f32 %v954, %v2855
        %v3563 = vadd.f32 %v955, %v3055
        %v3564 = vadd.f32 %v956, %v3057
        %v3565 = vadd.f32 %v957, %v3257
        %v3566 = vadd.f32 %v958, %v3259
        %v3567 = vadd.f32 %v959, %v3459
        %v3568 = vadd.f32 %v960, %v3461
        %3569 = vst [vmem:[#allocation2] sm:$0xff] %v3465
        %3570 = vst [vmem:[#allocation2 + $0x8] sm:$0xff] %v3466
        %3571 = vst [vmem:[#allocation2 + $0x10] sm:$0xff] %v3467
        %3572 = vst [vmem:[#allocation2 + $0x18] sm:$0xff] %v3468
        %3573 = vst [vmem:[#allocation2 + $0x20] sm:$0xff] %v3469
        %3574 = vst [vmem:[#allocation2 + $0x28] sm:$0xff] %v3470
        %3575 = vst [vmem:[#allocation2 + $0x30] sm:$0xff] %v3471
        %3576 = vst [vmem:[#allocation2 + $0x38] sm:$0xff] %v3472
        %3577 = vst [vmem:[#allocation2 + $0x40] sm:$0xff] %v3473
        %3578 = vst [vmem:[#allocation2 + $0x48] sm:$0xff] %v3474
        %3579 = vst [vmem:[#allocation2 + $0x50] sm:$0xff] %v3475
        %3580 = vst [vmem:[#allocation2 + $0x58] sm:$0xff] %v3476
        %3581 = vst [vmem:[#allocation2 + $0x60] sm:$0xff] %v3477
        %3582 = vst [vmem:[#allocation2 + $0x68] sm:$0xff] %v3478
        %3583 = vst [vmem:[#allocation2 + $0x70] sm:$0xff] %v3479
        %3584 = vst [vmem:[#allocation2 + $0x78] sm:$0xff] %v3480
        %3585 = vst [vmem:[#allocation2 + $0x80] sm:$0xff] %v3481
        %3586 = vst [vmem:[#allocation2 + $0x88] sm:$0xff] %v3482
        %3587 = vst [vmem:[#allocation2 + $0x90] sm:$0xff] %v3483
        %3588 = vst [vmem:[#allocation2 + $0x98] sm:$0xff] %v3484
        %3589 = vst [vmem:[#allocation2 + $0xa0] sm:$0xff] %v3485
        %3590 = vst [vmem:[#allocation2 + $0xa8] sm:$0xff] %v3486
        %3591 = vst [vmem:[#allocation2 + $0xb0] sm:$0xff] %v3487
        %3592 = vst [vmem:[#allocation2 + $0xb8] sm:$0xff] %v3488
        %3593 = vst [vmem:[#allocation2 + $0xc0] sm:$0xff] %v3489
        %3594 = vst [vmem:[#allocation2 + $0xc8] sm:$0xff] %v3490
        %3595 = vst [vmem:[#allocation2 + $0xd0] sm:$0xff] %v3491
        %3596 = vst [vmem:[#allocation2 + $0xd8] sm:$0xff] %v3492
        %3597 = vst [vmem:[#allocation2 + $0xe0] sm:$0xff] %v3493
        %3598 = vst [vmem:[#allocation2 + $0xe8] sm:$0xff] %v3494
        %3599 = vst [vmem:[#allocation2 + $0xf0] sm:$0xff] %v3495
        %3600 = vst [vmem:[#allocation2 + $0xf8] sm:$0xff] %v3496
        %3601 = vst [vmem:[#allocation2 + $0x100] sm:$0xff] %v3497
        %3602 = vst [vmem:[#allocation2 + $0x108] sm:$0xff] %v3498
        %3603 = vst [vmem:[#allocation2 + $0x110] sm:$0xff] %v3499
        %3604 = vst [vmem:[#allocation2 + $0x118] sm:$0xff] %v3500
        %3605 = vst [vmem:[#allocation2 + $0x120] sm:$0xff] %v3501
        %3606 = vst [vmem:[#allocation2 + $0x128] sm:$0xff] %v3502
        %3607 = vst [vmem:[#allocation2 + $0x130] sm:$0xff] %v3503
        %3608 = vst [vmem:[#allocation2 + $0x138] sm:$0xff] %v3504
        %3609 = vst [vmem:[#allocation2 + $0x140] sm:$0xff] %v3505
        %3610 = vst [vmem:[#allocation2 + $0x148] sm:$0xff] %v3506
        %3611 = vst [vmem:[#allocation2 + $0x150] sm:$0xff] %v3507
        %3612 = vst [vmem:[#allocation2 + $0x158] sm:$0xff] %v3508
        %3613 = vst [vmem:[#allocation2 + $0x160] sm:$0xff] %v3509
        %3614 = vst [vmem:[#allocation2 + $0x168] sm:$0xff] %v3510
        %3615 = vst [vmem:[#allocation2 + $0x170] sm:$0xff] %v3511
        %3616 = vst [vmem:[#allocation2 + $0x178] sm:$0xff] %v3512
        %3617 = vst [vmem:[#allocation2 + $0x180] sm:$0xff] %v3513
        %3618 = vst [vmem:[#allocation2 + $0x188] sm:$0xff] %v3514
        %3619 = vst [vmem:[#allocation2 + $0x190] sm:$0xff] %v3515
        %3620 = vst [vmem:[#allocation2 + $0x198] sm:$0xff] %v3516
        %3621 = vst [vmem:[#allocation2 + $0x1a0] sm:$0xff] %v3517
        %3622 = vst [vmem:[#allocation2 + $0x1a8] sm:$0xff] %v3518
        %3623 = vst [vmem:[#allocation2 + $0x1b0] sm:$0xff] %v3519
        %3624 = vst [vmem:[#allocation2 + $0x1b8] sm:$0xff] %v3520
        %3625 = vst [vmem:[#allocation2 + $0x1c0] sm:$0xff] %v3521
        %3626 = vst [vmem:[#allocation2 + $0x1c8] sm:$0xff] %v3522
        %3627 = vst [vmem:[#allocation2 + $0x1d0] sm:$0xff] %v3523
        %3628 = vst [vmem:[#allocation2 + $0x1d8] sm:$0xff] %v3524
        %3629 = vst [vmem:[#allocation2 + $0x1e0] sm:$0xff] %v3525
        %3630 = vst [vmem:[#allocation2 + $0x1e8] sm:$0xff] %v3526
        %3631 = vst [vmem:[#allocation2 + $0x1f0] sm:$0xff] %v3527
        %3632 = vst [vmem:[#allocation2 + $0x1f8] sm:$0xff] %v3528
        %3633 = vst [vmem:[#allocation2 + $0x200] sm:$0xff] %v3529
        %3634 = vst [vmem:[#allocation2 + $0x208] sm:$0xff] %v3530
        %3635 = vst [vmem:[#allocation2 + $0x210] sm:$0xff] %v3531
        %3636 = vst [vmem:[#allocation2 + $0x218] sm:$0xff] %v3532
        %3637 = vst [vmem:[#allocation2 + $0x220] sm:$0xff] %v3533
        %3638 = vst [vmem:[#allocation2 + $0x228] sm:$0xff] %v3534
        %3639 = vst [vmem:[#allocation2 + $0x230] sm:$0xff] %v3535
        %3640 = vst [vmem:[#allocation2 + $0x238] sm:$0xff] %v3536
        %3641 = vst [vmem:[#allocation2 + $0x240] sm:$0xff] %v3537
        %3642 = vst [vmem:[#allocation2 + $0x248] sm:$0xff] %v3538
        %3643 = vst [vmem:[#allocation2 + $0x250] sm:$0xff] %v3539
        %3644 = vst [vmem:[#allocation2 + $0x258] sm:$0xff] %v3540
        %3645 = vst [vmem:[#allocation2 + $0x260] sm:$0xff] %v3541
        %3646 = vst [vmem:[#allocation2 + $0x268] sm:$0xff] %v3542
        %3647 = vst [vmem:[#allocation2 + $0x270] sm:$0xff] %v3543
        %3648 = vst [vmem:[#allocation2 + $0x278] sm:$0xff] %v3544
        %3649 = vst [vmem:[#allocation2 + $0x280] sm:$0xff] %v3545
        %3650 = vst [vmem:[#allocation2 + $0x288] sm:$0xff] %v3546
        %3651 = vst [vmem:[#allocation2 + $0x290] sm:$0xff] %v3547
        %3652 = vst [vmem:[#allocation2 + $0x298] sm:$0xff] %v3548
        %3653 = vst [vmem:[#allocation2 + $0x2a0] sm:$0xff] %v3549
        %3654 = vst [vmem:[#allocation2 + $0x2a8] sm:$0xff] %v3550
        %3655 = vst [vmem:[#allocation2 + $0x2b0] sm:$0xff] %v3551
        %3656 = vst [vmem:[#allocation2 + $0x2b8] sm:$0xff] %v3552
        %3657 = vst [vmem:[#allocation2 + $0x2c0] sm:$0xff] %v3553
        %3658 = vst [vmem:[#allocation2 + $0x2c8] sm:$0xff] %v3554
        %3659 = vst [vmem:[#allocation2 + $0x2d0] sm:$0xff] %v3555
        %3660 = vst [vmem:[#allocation2 + $0x2d8] sm:$0xff] %v3556
        %3661 = vst [vmem:[#allocation2 + $0x2e0] sm:$0xff] %v3557
        %3662 = vst [vmem:[#allocation2 + $0x2e8] sm:$0xff] %v3558
        %3663 = vst [vmem:[#allocation2 + $0x2f0] sm:$0xff] %v3559
        %3664 = vst [vmem:[#allocation2 + $0x2f8] sm:$0xff] %v3560
        %3665 = vst [vmem:[#allocation2 + $0x300] sm:$0x3] %v3561
        %3666 = vst [vmem:[#allocation2 + $0x308] sm:$0x3] %v3562
        %3667 = vst [vmem:[#allocation2 + $0x310] sm:$0x3] %v3563
        %3668 = vst [vmem:[#allocation2 + $0x318] sm:$0x3] %v3564
        %3669 = vst [vmem:[#allocation2 + $0x320] sm:$0x3] %v3565
        %3670 = vst [vmem:[#allocation2 + $0x328] sm:$0x3] %v3566
        %3671 = vst [vmem:[#allocation2 + $0x330] sm:$0x3] %v3567
        %3672 = vst [vmem:[#allocation2 + $0x338] sm:$0x3] %v3568
        %p3673 = scmp.eq.s32.totalorder %s36, 3
        // Predicated region
        $region160: #{resnet50_bridge_forward.1} parent=98 // pred_check
          %p3674 = pneg %p3673
        $region161: #{resnet50_bridge_forward.1} parent=98 // pred_check_branch
          %3676 = sbr.rel (%p3674) target = $region163
        $region162: #{resnet50_bridge_forward.1} parent=98 // pred_region
          %v3677 = vld [vmem:[#allocation2] sm:$0xff]
          %v3678 = vld [vmem:[#allocation2 + $0x8] sm:$0xff]
          %v3679 = vld [vmem:[#allocation2 + $0x10] sm:$0xff]
          %v3680 = vld [vmem:[#allocation2 + $0x18] sm:$0xff]
          %v3681 = vld [vmem:[#allocation2 + $0x20] sm:$0xff]
          %v3682 = vld [vmem:[#allocation2 + $0x28] sm:$0xff]
          %v3683 = vld [vmem:[#allocation2 + $0x30] sm:$0xff]
          %v3684 = vld [vmem:[#allocation2 + $0x38] sm:$0xff]
          %v3685 = vld [vmem:[#allocation2 + $0x40] sm:$0xff]
          %v3686 = vld [vmem:[#allocation2 + $0x48] sm:$0xff]
          %v3687 = vld [vmem:[#allocation2 + $0x50] sm:$0xff]
          %v3688 = vld [vmem:[#allocation2 + $0x58] sm:$0xff]
          %v3689 = vld [vmem:[#allocation2 + $0x60] sm:$0xff]
          %v3690 = vld [vmem:[#allocation2 + $0x68] sm:$0xff]
          %v3691 = vld [vmem:[#allocation2 + $0x70] sm:$0xff]
          %v3692 = vld [vmem:[#allocation2 + $0x78] sm:$0xff]
          %v3693 = vld [vmem:[#allocation2 + $0x80] sm:$0xff]
          %v3694 = vld [vmem:[#allocation2 + $0x88] sm:$0xff]
          %v3695 = vld [vmem:[#allocation2 + $0x90] sm:$0xff]
          %v3696 = vld [vmem:[#allocation2 + $0x98] sm:$0xff]
          %v3697 = vld [vmem:[#allocation2 + $0xa0] sm:$0xff]
          %v3698 = vld [vmem:[#allocation2 + $0xa8] sm:$0xff]
          %v3699 = vld [vmem:[#allocation2 + $0xb0] sm:$0xff]
          %v3700 = vld [vmem:[#allocation2 + $0xb8] sm:$0xff]
          %v3701 = vld [vmem:[#allocation2 + $0xc0] sm:$0xff]
          %v3702 = vld [vmem:[#allocation2 + $0xc8] sm:$0xff]
          %v3703 = vld [vmem:[#allocation2 + $0xd0] sm:$0xff]
          %v3704 = vld [vmem:[#allocation2 + $0xd8] sm:$0xff]
          %v3705 = vld [vmem:[#allocation2 + $0xe0] sm:$0xff]
          %v3706 = vld [vmem:[#allocation2 + $0xe8] sm:$0xff]
          %v3707 = vld [vmem:[#allocation2 + $0xf0] sm:$0xff]
          %v3708 = vld [vmem:[#allocation2 + $0xf8] sm:$0xff]
          %v3709 = vld [vmem:[#allocation2 + $0x100] sm:$0xff]
          %v3710 = vld [vmem:[#allocation2 + $0x108] sm:$0xff]
          %v3711 = vld [vmem:[#allocation2 + $0x110] sm:$0xff]
          %v3712 = vld [vmem:[#allocation2 + $0x118] sm:$0xff]
          %v3713 = vld [vmem:[#allocation2 + $0x120] sm:$0xff]
          %v3714 = vld [vmem:[#allocation2 + $0x128] sm:$0xff]
          %v3715 = vld [vmem:[#allocation2 + $0x130] sm:$0xff]
          %v3716 = vld [vmem:[#allocation2 + $0x138] sm:$0xff]
          %v3717 = vld [vmem:[#allocation2 + $0x140] sm:$0xff]
          %v3718 = vld [vmem:[#allocation2 + $0x148] sm:$0xff]
          %v3719 = vld [vmem:[#allocation2 + $0x150] sm:$0xff]
          %v3720 = vld [vmem:[#allocation2 + $0x158] sm:$0xff]
          %v3721 = vld [vmem:[#allocation2 + $0x160] sm:$0xff]
          %v3722 = vld [vmem:[#allocation2 + $0x168] sm:$0xff]
          %v3723 = vld [vmem:[#allocation2 + $0x170] sm:$0xff]
          %v3724 = vld [vmem:[#allocation2 + $0x178] sm:$0xff]
          %v3725 = vld [vmem:[#allocation2 + $0x180] sm:$0xff]
          %v3726 = vld [vmem:[#allocation2 + $0x188] sm:$0xff]
          %v3727 = vld [vmem:[#allocation2 + $0x190] sm:$0xff]
          %v3728 = vld [vmem:[#allocation2 + $0x198] sm:$0xff]
          %v3729 = vld [vmem:[#allocation2 + $0x1a0] sm:$0xff]
          %v3730 = vld [vmem:[#allocation2 + $0x1a8] sm:$0xff]
          %v3731 = vld [vmem:[#allocation2 + $0x1b0] sm:$0xff]
          %v3732 = vld [vmem:[#allocation2 + $0x1b8] sm:$0xff]
          %v3733 = vld [vmem:[#allocation2 + $0x1c0] sm:$0xff]
          %v3734 = vld [vmem:[#allocation2 + $0x1c8] sm:$0xff]
          %v3735 = vld [vmem:[#allocation2 + $0x1d0] sm:$0xff]
          %v3736 = vld [vmem:[#allocation2 + $0x1d8] sm:$0xff]
          %v3737 = vld [vmem:[#allocation2 + $0x1e0] sm:$0xff]
          %v3738 = vld [vmem:[#allocation2 + $0x1e8] sm:$0xff]
          %v3739 = vld [vmem:[#allocation2 + $0x1f0] sm:$0xff]
          %v3740 = vld [vmem:[#allocation2 + $0x1f8] sm:$0xff]
          %v3741 = vld [vmem:[#allocation2 + $0x200] sm:$0xff]
          %v3742 = vld [vmem:[#allocation2 + $0x208] sm:$0xff]
          %v3743 = vld [vmem:[#allocation2 + $0x210] sm:$0xff]
          %v3744 = vld [vmem:[#allocation2 + $0x218] sm:$0xff]
          %v3745 = vld [vmem:[#allocation2 + $0x220] sm:$0xff]
          %v3746 = vld [vmem:[#allocation2 + $0x228] sm:$0xff]
          %v3747 = vld [vmem:[#allocation2 + $0x230] sm:$0xff]
          %v3748 = vld [vmem:[#allocation2 + $0x238] sm:$0xff]
          %v3749 = vld [vmem:[#allocation2 + $0x240] sm:$0xff]
          %v3750 = vld [vmem:[#allocation2 + $0x248] sm:$0xff]
          %v3751 = vld [vmem:[#allocation2 + $0x250] sm:$0xff]
          %v3752 = vld [vmem:[#allocation2 + $0x258] sm:$0xff]
          %v3753 = vld [vmem:[#allocation2 + $0x260] sm:$0xff]
          %v3754 = vld [vmem:[#allocation2 + $0x268] sm:$0xff]
          %v3755 = vld [vmem:[#allocation2 + $0x270] sm:$0xff]
          %v3756 = vld [vmem:[#allocation2 + $0x278] sm:$0xff]
          %v3757 = vld [vmem:[#allocation2 + $0x280] sm:$0xff]
          %v3758 = vld [vmem:[#allocation2 + $0x288] sm:$0xff]
          %v3759 = vld [vmem:[#allocation2 + $0x290] sm:$0xff]
          %v3760 = vld [vmem:[#allocation2 + $0x298] sm:$0xff]
          %v3761 = vld [vmem:[#allocation2 + $0x2a0] sm:$0xff]
          %v3762 = vld [vmem:[#allocation2 + $0x2a8] sm:$0xff]
          %v3763 = vld [vmem:[#allocation2 + $0x2b0] sm:$0xff]
          %v3764 = vld [vmem:[#allocation2 + $0x2b8] sm:$0xff]
          %v3765 = vld [vmem:[#allocation2 + $0x2c0] sm:$0xff]
          %v3766 = vld [vmem:[#allocation2 + $0x2c8] sm:$0xff]
          %v3767 = vld [vmem:[#allocation2 + $0x2d0] sm:$0xff]
          %v3768 = vld [vmem:[#allocation2 + $0x2d8] sm:$0xff]
          %v3769 = vld [vmem:[#allocation2 + $0x2e0] sm:$0xff]
          %v3770 = vld [vmem:[#allocation2 + $0x2e8] sm:$0xff]
          %v3771 = vld [vmem:[#allocation2 + $0x2f0] sm:$0xff]
          %v3772 = vld [vmem:[#allocation2 + $0x2f8] sm:$0xff]
          %v3773 = vld [vmem:[#allocation2 + $0x300] sm:$0x3]
          %v3774 = vld [vmem:[#allocation2 + $0x308] sm:$0x3]
          %v3775 = vld [vmem:[#allocation2 + $0x310] sm:$0x3]
          %v3776 = vld [vmem:[#allocation2 + $0x318] sm:$0x3]
          %v3777 = vld [vmem:[#allocation2 + $0x320] sm:$0x3]
          %v3778 = vld [vmem:[#allocation2 + $0x328] sm:$0x3]
          %v3779 = vld [vmem:[#allocation2 + $0x330] sm:$0x3]
          %v3780 = vld [vmem:[#allocation2 + $0x338] sm:$0x3]
          %v3781 = vld [vmem:[#allocation8] sm:$0xff]
          %v3783 = vlaneseq
          %v3784 = vshrl.u32 %v3783, 7
          %v3785 = vsub.s32 0, %v3784
          %v3786 = vrot.slane %v3781, %v3785
          %v3787 = vlaneseq
          %v3788 = vshrl.u32 %v3787, 7
          %v3789 = vsub.s32 1, %v3788
          %v3790 = vrot.slane %v3781, %v3789
          %v3791 = vlaneseq
          %v3792 = vshrl.u32 %v3791, 7
          %v3793 = vsub.s32 2, %v3792
          %v3794 = vrot.slane %v3781, %v3793
          %v3795 = vlaneseq
          %v3796 = vshrl.u32 %v3795, 7
          %v3797 = vsub.s32 3, %v3796
          %v3798 = vrot.slane %v3781, %v3797
          %v3799 = vlaneseq
          %v3800 = vshrl.u32 %v3799, 7
          %v3801 = vsub.s32 4, %v3800
          %v3802 = vrot.slane %v3781, %v3801
          %v3803 = vlaneseq
          %v3804 = vshrl.u32 %v3803, 7
          %v3805 = vsub.s32 5, %v3804
          %v3806 = vrot.slane %v3781, %v3805
          %v3807 = vlaneseq
          %v3808 = vshrl.u32 %v3807, 7
          %v3809 = vsub.s32 6, %v3808
          %v3810 = vrot.slane %v3781, %v3809
          %v3811 = vlaneseq
          %v3812 = vshrl.u32 %v3811, 7
          %v3813 = vsub.s32 7, %v3812
          %v3814 = vrot.slane %v3781, %v3813
          %v3823 = vadd.f32 %v3677, %v3786
          %v3824 = vadd.f32 %v3678, %v3790
          %v3825 = vadd.f32 %v3679, %v3794
          %v3826 = vadd.f32 %v3680, %v3798
          %v3827 = vadd.f32 %v3681, %v3802
          %v3828 = vadd.f32 %v3682, %v3806
          %v3829 = vadd.f32 %v3683, %v3810
          %v3830 = vadd.f32 %v3684, %v3814
          %v3831 = vadd.f32 %v3685, %v3786
          %v3832 = vadd.f32 %v3686, %v3790
          %v3833 = vadd.f32 %v3687, %v3794
          %v3834 = vadd.f32 %v3688, %v3798
          %v3835 = vadd.f32 %v3689, %v3802
          %v3836 = vadd.f32 %v3690, %v3806
          %v3837 = vadd.f32 %v3691, %v3810
          %v3838 = vadd.f32 %v3692, %v3814
          %v3839 = vadd.f32 %v3693, %v3786
          %v3840 = vadd.f32 %v3694, %v3790
          %v3841 = vadd.f32 %v3695, %v3794
          %v3842 = vadd.f32 %v3696, %v3798
          %v3843 = vadd.f32 %v3697, %v3802
          %v3844 = vadd.f32 %v3698, %v3806
          %v3845 = vadd.f32 %v3699, %v3810
          %v3846 = vadd.f32 %v3700, %v3814
          %v3847 = vadd.f32 %v3701, %v3786
          %v3848 = vadd.f32 %v3702, %v3790
          %v3849 = vadd.f32 %v3703, %v3794
          %v3850 = vadd.f32 %v3704, %v3798
          %v3851 = vadd.f32 %v3705, %v3802
          %v3852 = vadd.f32 %v3706, %v3806
          %v3853 = vadd.f32 %v3707, %v3810
          %v3854 = vadd.f32 %v3708, %v3814
          %v3855 = vadd.f32 %v3709, %v3786
          %v3856 = vadd.f32 %v3710, %v3790
          %v3857 = vadd.f32 %v3711, %v3794
          %v3858 = vadd.f32 %v3712, %v3798
          %v3859 = vadd.f32 %v3713, %v3802
          %v3860 = vadd.f32 %v3714, %v3806
          %v3861 = vadd.f32 %v3715, %v3810
          %v3862 = vadd.f32 %v3716, %v3814
          %v3863 = vadd.f32 %v3717, %v3786
          %v3864 = vadd.f32 %v3718, %v3790
          %v3865 = vadd.f32 %v3719, %v3794
          %v3866 = vadd.f32 %v3720, %v3798
          %v3867 = vadd.f32 %v3721, %v3802
          %v3868 = vadd.f32 %v3722, %v3806
          %v3869 = vadd.f32 %v3723, %v3810
          %v3870 = vadd.f32 %v3724, %v3814
          %v3871 = vadd.f32 %v3725, %v3786
          %v3872 = vadd.f32 %v3726, %v3790
          %v3873 = vadd.f32 %v3727, %v3794
          %v3874 = vadd.f32 %v3728, %v3798
          %v3875 = vadd.f32 %v3729, %v3802
          %v3876 = vadd.f32 %v3730, %v3806
          %v3877 = vadd.f32 %v3731, %v3810
          %v3878 = vadd.f32 %v3732, %v3814
          %v3879 = vadd.f32 %v3733, %v3786
          %v3880 = vadd.f32 %v3734, %v3790
          %v3881 = vadd.f32 %v3735, %v3794
          %v3882 = vadd.f32 %v3736, %v3798
          %v3883 = vadd.f32 %v3737, %v3802
          %v3884 = vadd.f32 %v3738, %v3806
          %v3885 = vadd.f32 %v3739, %v3810
          %v3886 = vadd.f32 %v3740, %v3814
          %v3887 = vadd.f32 %v3741, %v3786
          %v3888 = vadd.f32 %v3742, %v3790
          %v3889 = vadd.f32 %v3743, %v3794
          %v3890 = vadd.f32 %v3744, %v3798
          %v3891 = vadd.f32 %v3745, %v3802
          %v3892 = vadd.f32 %v3746, %v3806
          %v3893 = vadd.f32 %v3747, %v3810
          %v3894 = vadd.f32 %v3748, %v3814
          %v3895 = vadd.f32 %v3749, %v3786
          %v3896 = vadd.f32 %v3750, %v3790
          %v3897 = vadd.f32 %v3751, %v3794
          %v3898 = vadd.f32 %v3752, %v3798
          %v3899 = vadd.f32 %v3753, %v3802
          %v3900 = vadd.f32 %v3754, %v3806
          %v3901 = vadd.f32 %v3755, %v3810
          %v3902 = vadd.f32 %v3756, %v3814
          %v3903 = vadd.f32 %v3757, %v3786
          %v3904 = vadd.f32 %v3758, %v3790
          %v3905 = vadd.f32 %v3759, %v3794
          %v3906 = vadd.f32 %v3760, %v3798
          %v3907 = vadd.f32 %v3761, %v3802
          %v3908 = vadd.f32 %v3762, %v3806
          %v3909 = vadd.f32 %v3763, %v3810
          %v3910 = vadd.f32 %v3764, %v3814
          %v3911 = vadd.f32 %v3765, %v3786
          %v3912 = vadd.f32 %v3766, %v3790
          %v3913 = vadd.f32 %v3767, %v3794
          %v3914 = vadd.f32 %v3768, %v3798
          %v3915 = vadd.f32 %v3769, %v3802
          %v3916 = vadd.f32 %v3770, %v3806
          %v3917 = vadd.f32 %v3771, %v3810
          %v3918 = vadd.f32 %v3772, %v3814
          %v3919 = vadd.f32 %v3773, %v3786
          %v3920 = vadd.f32 %v3774, %v3790
          %v3921 = vadd.f32 %v3775, %v3794
          %v3922 = vadd.f32 %v3776, %v3798
          %v3923 = vadd.f32 %v3777, %v3802
          %v3924 = vadd.f32 %v3778, %v3806
          %v3925 = vadd.f32 %v3779, %v3810
          %v3926 = vadd.f32 %v3780, %v3814
          %v3927 = vmax.f32 %v3823, 0.0
          %v3928 = vmax.f32 %v3824, 0.0
          %v3929 = vmax.f32 %v3825, 0.0
          %v3930 = vmax.f32 %v3826, 0.0
          %v3931 = vmax.f32 %v3827, 0.0
          %v3932 = vmax.f32 %v3828, 0.0
          %v3933 = vmax.f32 %v3829, 0.0
          %v3934 = vmax.f32 %v3830, 0.0
          %v3935 = vmax.f32 %v3831, 0.0
          %v3936 = vmax.f32 %v3832, 0.0
          %v3937 = vmax.f32 %v3833, 0.0
          %v3938 = vmax.f32 %v3834, 0.0
          %v3939 = vmax.f32 %v3835, 0.0
          %v3940 = vmax.f32 %v3836, 0.0
          %v3941 = vmax.f32 %v3837, 0.0
          %v3942 = vmax.f32 %v3838, 0.0
          %v3943 = vmax.f32 %v3839, 0.0
          %v3944 = vmax.f32 %v3840, 0.0
          %v3945 = vmax.f32 %v3841, 0.0
          %v3946 = vmax.f32 %v3842, 0.0
          %v3947 = vmax.f32 %v3843, 0.0
          %v3948 = vmax.f32 %v3844, 0.0
          %v3949 = vmax.f32 %v3845, 0.0
          %v3950 = vmax.f32 %v3846, 0.0
          %v3951 = vmax.f32 %v3847, 0.0
          %v3952 = vmax.f32 %v3848, 0.0
          %v3953 = vmax.f32 %v3849, 0.0
          %v3954 = vmax.f32 %v3850, 0.0
          %v3955 = vmax.f32 %v3851, 0.0
          %v3956 = vmax.f32 %v3852, 0.0
          %v3957 = vmax.f32 %v3853, 0.0
          %v3958 = vmax.f32 %v3854, 0.0
          %v3959 = vmax.f32 %v3855, 0.0
          %v3960 = vmax.f32 %v3856, 0.0
          %v3961 = vmax.f32 %v3857, 0.0
          %v3962 = vmax.f32 %v3858, 0.0
          %v3963 = vmax.f32 %v3859, 0.0
          %v3964 = vmax.f32 %v3860, 0.0
          %v3965 = vmax.f32 %v3861, 0.0
          %v3966 = vmax.f32 %v3862, 0.0
          %v3967 = vmax.f32 %v3863, 0.0
          %v3968 = vmax.f32 %v3864, 0.0
          %v3969 = vmax.f32 %v3865, 0.0
          %v3970 = vmax.f32 %v3866, 0.0
          %v3971 = vmax.f32 %v3867, 0.0
          %v3972 = vmax.f32 %v3868, 0.0
          %v3973 = vmax.f32 %v3869, 0.0
          %v3974 = vmax.f32 %v3870, 0.0
          %v3975 = vmax.f32 %v3871, 0.0
          %v3976 = vmax.f32 %v3872, 0.0
          %v3977 = vmax.f32 %v3873, 0.0
          %v3978 = vmax.f32 %v3874, 0.0
          %v3979 = vmax.f32 %v3875, 0.0
          %v3980 = vmax.f32 %v3876, 0.0
          %v3981 = vmax.f32 %v3877, 0.0
          %v3982 = vmax.f32 %v3878, 0.0
          %v3983 = vmax.f32 %v3879, 0.0
          %v3984 = vmax.f32 %v3880, 0.0
          %v3985 = vmax.f32 %v3881, 0.0
          %v3986 = vmax.f32 %v3882, 0.0
          %v3987 = vmax.f32 %v3883, 0.0
          %v3988 = vmax.f32 %v3884, 0.0
          %v3989 = vmax.f32 %v3885, 0.0
          %v3990 = vmax.f32 %v3886, 0.0
          %v3991 = vmax.f32 %v3887, 0.0
          %v3992 = vmax.f32 %v3888, 0.0
          %v3993 = vmax.f32 %v3889, 0.0
          %v3994 = vmax.f32 %v3890, 0.0
          %v3995 = vmax.f32 %v3891, 0.0
          %v3996 = vmax.f32 %v3892, 0.0
          %v3997 = vmax.f32 %v3893, 0.0
          %v3998 = vmax.f32 %v3894, 0.0
          %v3999 = vmax.f32 %v3895, 0.0
          %v4000 = vmax.f32 %v3896, 0.0
          %v4001 = vmax.f32 %v3897, 0.0
          %v4002 = vmax.f32 %v3898, 0.0
          %v4003 = vmax.f32 %v3899, 0.0
          %v4004 = vmax.f32 %v3900, 0.0
          %v4005 = vmax.f32 %v3901, 0.0
          %v4006 = vmax.f32 %v3902, 0.0
          %v4007 = vmax.f32 %v3903, 0.0
          %v4008 = vmax.f32 %v3904, 0.0
          %v4009 = vmax.f32 %v3905, 0.0
          %v4010 = vmax.f32 %v3906, 0.0
          %v4011 = vmax.f32 %v3907, 0.0
          %v4012 = vmax.f32 %v3908, 0.0
          %v4013 = vmax.f32 %v3909, 0.0
          %v4014 = vmax.f32 %v3910, 0.0
          %v4015 = vmax.f32 %v3911, 0.0
          %v4016 = vmax.f32 %v3912, 0.0
          %v4017 = vmax.f32 %v3913, 0.0
          %v4018 = vmax.f32 %v3914, 0.0
          %v4019 = vmax.f32 %v3915, 0.0
          %v4020 = vmax.f32 %v3916, 0.0
          %v4021 = vmax.f32 %v3917, 0.0
          %v4022 = vmax.f32 %v3918, 0.0
          %v4023 = vmax.f32 %v3919, 0.0
          %v4024 = vmax.f32 %v3920, 0.0
          %v4025 = vmax.f32 %v3921, 0.0
          %v4026 = vmax.f32 %v3922, 0.0
          %v4027 = vmax.f32 %v3923, 0.0
          %v4028 = vmax.f32 %v3924, 0.0
          %v4029 = vmax.f32 %v3925, 0.0
          %v4030 = vmax.f32 %v3926, 0.0
          %v4031 = vadd.f32 %v3927, %v3935
          %v4032 = vadd.f32 %v4031, %v3943
          %v4033 = vadd.f32 %v4032, %v3951
          %v4034 = vadd.f32 %v4033, %v3959
          %v4035 = vadd.f32 %v4034, %v3967
          %v4036 = vadd.f32 %v4035, %v3975
          %v4037 = vadd.f32 %v4036, %v3983
          %v4038 = vadd.f32 %v4037, %v3991
          %v4039 = vadd.f32 %v4038, %v3999
          %v4040 = vadd.f32 %v4039, %v4007
          %v4041 = vadd.f32 %v4040, %v4015
          %vm4042 = vcmask 1041408
          %v4043 = vsel %vm4042, %v4023, 0.0
          %v4044 = vadd.f32 %v4041, %v4043
          %v4045 = vrot.slane %v4044, 4
          %v4046 = vadd.f32 %v4044, %v4045
          %v4047 = vrot.slane %v4046, 2
          %v4048 = vadd.f32 %v4046, %v4047
          %v4049 = vrot.slane %v4048, 1
          %v4050 = vadd.f32 %v4048, %v4049
          %v4051 = vadd.f32 %v3928, %v3936
          %v4052 = vadd.f32 %v4051, %v3944
          %v4053 = vadd.f32 %v4052, %v3952
          %v4054 = vadd.f32 %v4053, %v3960
          %v4055 = vadd.f32 %v4054, %v3968
          %v4056 = vadd.f32 %v4055, %v3976
          %v4057 = vadd.f32 %v4056, %v3984
          %v4058 = vadd.f32 %v4057, %v3992
          %v4059 = vadd.f32 %v4058, %v4000
          %v4060 = vadd.f32 %v4059, %v4008
          %v4061 = vadd.f32 %v4060, %v4016
          %v4062 = vsel %vm4042, %v4024, 0.0
          %v4063 = vadd.f32 %v4061, %v4062
          %v4064 = vrot.slane %v4063, 4
          %v4065 = vadd.f32 %v4063, %v4064
          %v4066 = vrot.slane %v4065, 2
          %v4067 = vadd.f32 %v4065, %v4066
          %v4068 = vrot.slane %v4067, 1
          %v4069 = vadd.f32 %v4067, %v4068
          %v4070 = vadd.f32 %v3929, %v3937
          %v4071 = vadd.f32 %v4070, %v3945
          %v4072 = vadd.f32 %v4071, %v3953
          %v4073 = vadd.f32 %v4072, %v3961
          %v4074 = vadd.f32 %v4073, %v3969
          %v4075 = vadd.f32 %v4074, %v3977
          %v4076 = vadd.f32 %v4075, %v3985
          %v4077 = vadd.f32 %v4076, %v3993
          %v4078 = vadd.f32 %v4077, %v4001
          %v4079 = vadd.f32 %v4078, %v4009
          %v4080 = vadd.f32 %v4079, %v4017
          %v4081 = vsel %vm4042, %v4025, 0.0
          %v4082 = vadd.f32 %v4080, %v4081
          %v4083 = vrot.slane %v4082, 4
          %v4084 = vadd.f32 %v4082, %v4083
          %v4085 = vrot.slane %v4084, 2
          %v4086 = vadd.f32 %v4084, %v4085
          %v4087 = vrot.slane %v4086, 1
          %v4088 = vadd.f32 %v4086, %v4087
          %v4089 = vadd.f32 %v3930, %v3938
          %v4090 = vadd.f32 %v4089, %v3946
          %v4091 = vadd.f32 %v4090, %v3954
          %v4092 = vadd.f32 %v4091, %v3962
          %v4093 = vadd.f32 %v4092, %v3970
          %v4094 = vadd.f32 %v4093, %v3978
          %v4095 = vadd.f32 %v4094, %v3986
          %v4096 = vadd.f32 %v4095, %v3994
          %v4097 = vadd.f32 %v4096, %v4002
          %v4098 = vadd.f32 %v4097, %v4010
          %v4099 = vadd.f32 %v4098, %v4018
          %v4100 = vsel %vm4042, %v4026, 0.0
          %v4101 = vadd.f32 %v4099, %v4100
          %v4102 = vrot.slane %v4101, 4
          %v4103 = vadd.f32 %v4101, %v4102
          %v4104 = vrot.slane %v4103, 2
          %v4105 = vadd.f32 %v4103, %v4104
          %v4106 = vrot.slane %v4105, 1
          %v4107 = vadd.f32 %v4105, %v4106
          %v4108 = vadd.f32 %v3931, %v3939
          %v4109 = vadd.f32 %v4108, %v3947
          %v4110 = vadd.f32 %v4109, %v3955
          %v4111 = vadd.f32 %v4110, %v3963
          %v4112 = vadd.f32 %v4111, %v3971
          %v4113 = vadd.f32 %v4112, %v3979
          %v4114 = vadd.f32 %v4113, %v3987
          %v4115 = vadd.f32 %v4114, %v3995
          %v4116 = vadd.f32 %v4115, %v4003
          %v4117 = vadd.f32 %v4116, %v4011
          %v4118 = vadd.f32 %v4117, %v4019
          %v4119 = vsel %vm4042, %v4027, 0.0
          %v4120 = vadd.f32 %v4118, %v4119
          %v4121 = vrot.slane %v4120, 4
          %v4122 = vadd.f32 %v4120, %v4121
          %v4123 = vrot.slane %v4122, 2
          %v4124 = vadd.f32 %v4122, %v4123
          %v4125 = vrot.slane %v4124, 1
          %v4126 = vadd.f32 %v4124, %v4125
          %v4127 = vadd.f32 %v3932, %v3940
          %v4128 = vadd.f32 %v4127, %v3948
          %v4129 = vadd.f32 %v4128, %v3956
          %v4130 = vadd.f32 %v4129, %v3964
          %v4131 = vadd.f32 %v4130, %v3972
          %v4132 = vadd.f32 %v4131, %v3980
          %v4133 = vadd.f32 %v4132, %v3988
          %v4134 = vadd.f32 %v4133, %v3996
          %v4135 = vadd.f32 %v4134, %v4004
          %v4136 = vadd.f32 %v4135, %v4012
          %v4137 = vadd.f32 %v4136, %v4020
          %v4138 = vsel %vm4042, %v4028, 0.0
          %v4139 = vadd.f32 %v4137, %v4138
          %v4140 = vrot.slane %v4139, 4
          %v4141 = vadd.f32 %v4139, %v4140
          %v4142 = vrot.slane %v4141, 2
          %v4143 = vadd.f32 %v4141, %v4142
          %v4144 = vrot.slane %v4143, 1
          %v4145 = vadd.f32 %v4143, %v4144
          %v4146 = vadd.f32 %v3933, %v3941
          %v4147 = vadd.f32 %v4146, %v3949
          %v4148 = vadd.f32 %v4147, %v3957
          %v4149 = vadd.f32 %v4148, %v3965
          %v4150 = vadd.f32 %v4149, %v3973
          %v4151 = vadd.f32 %v4150, %v3981
          %v4152 = vadd.f32 %v4151, %v3989
          %v4153 = vadd.f32 %v4152, %v3997
          %v4154 = vadd.f32 %v4153, %v4005
          %v4155 = vadd.f32 %v4154, %v4013
          %v4156 = vadd.f32 %v4155, %v4021
          %v4157 = vsel %vm4042, %v4029, 0.0
          %v4158 = vadd.f32 %v4156, %v4157
          %v4159 = vrot.slane %v4158, 4
          %v4160 = vadd.f32 %v4158, %v4159
          %v4161 = vrot.slane %v4160, 2
          %v4162 = vadd.f32 %v4160, %v4161
          %v4163 = vrot.slane %v4162, 1
          %v4164 = vadd.f32 %v4162, %v4163
          %v4165 = vadd.f32 %v3934, %v3942
          %v4166 = vadd.f32 %v4165, %v3950
          %v4167 = vadd.f32 %v4166, %v3958
          %v4168 = vadd.f32 %v4167, %v3966
          %v4169 = vadd.f32 %v4168, %v3974
          %v4170 = vadd.f32 %v4169, %v3982
          %v4171 = vadd.f32 %v4170, %v3990
          %v4172 = vadd.f32 %v4171, %v3998
          %v4173 = vadd.f32 %v4172, %v4006
          %v4174 = vadd.f32 %v4173, %v4014
          %v4175 = vadd.f32 %v4174, %v4022
          %v4176 = vsel %vm4042, %v4030, 0.0
          %v4177 = vadd.f32 %v4175, %v4176
          %v4178 = vrot.slane %v4177, 4
          %v4179 = vadd.f32 %v4177, %v4178
          %v4180 = vrot.slane %v4179, 2
          %v4181 = vadd.f32 %v4179, %v4180
          %v4182 = vrot.slane %v4181, 1
          %v4183 = vadd.f32 %v4181, %v4182
          %v4184 = vrcp.pop 98.0
          %v4185 = vmul.f32 %v4050, %v4184
          %v4186 = vmul.f32 %v4069, %v4184
          %v4187 = vmul.f32 %v4088, %v4184
          %v4188 = vmul.f32 %v4107, %v4184
          %v4189 = vmul.f32 %v4126, %v4184
          %v4190 = vmul.f32 %v4145, %v4184
          %v4191 = vmul.f32 %v4164, %v4184
          %v4192 = vmul.f32 %v4183, %v4184
          %v4193 = vsub.f32 %v3927, %v4185
          %v4194 = vsub.f32 %v3928, %v4186
          %v4195 = vsub.f32 %v3929, %v4187
          %v4196 = vsub.f32 %v3930, %v4188
          %v4197 = vsub.f32 %v3931, %v4189
          %v4198 = vsub.f32 %v3932, %v4190
          %v4199 = vsub.f32 %v3933, %v4191
          %v4200 = vsub.f32 %v3934, %v4192
          %v4201 = vsub.f32 %v3935, %v4185
          %v4202 = vsub.f32 %v3936, %v4186
          %v4203 = vsub.f32 %v3937, %v4187
          %v4204 = vsub.f32 %v3938, %v4188
          %v4205 = vsub.f32 %v3939, %v4189
          %v4206 = vsub.f32 %v3940, %v4190
          %v4207 = vsub.f32 %v3941, %v4191
          %v4208 = vsub.f32 %v3942, %v4192
          %v4209 = vsub.f32 %v3943, %v4185
          %v4210 = vsub.f32 %v3944, %v4186
          %v4211 = vsub.f32 %v3945, %v4187
          %v4212 = vsub.f32 %v3946, %v4188
          %v4213 = vsub.f32 %v3947, %v4189
          %v4214 = vsub.f32 %v3948, %v4190
          %v4215 = vsub.f32 %v3949, %v4191
          %v4216 = vsub.f32 %v3950, %v4192
          %v4217 = vsub.f32 %v3951, %v4185
          %v4218 = vsub.f32 %v3952, %v4186
          %v4219 = vsub.f32 %v3953, %v4187
          %v4220 = vsub.f32 %v3954, %v4188
          %v4221 = vsub.f32 %v3955, %v4189
          %v4222 = vsub.f32 %v3956, %v4190
          %v4223 = vsub.f32 %v3957, %v4191
          %v4224 = vsub.f32 %v3958, %v4192
          %v4225 = vsub.f32 %v3959, %v4185
          %v4226 = vsub.f32 %v3960, %v4186
          %v4227 = vsub.f32 %v3961, %v4187
          %v4228 = vsub.f32 %v3962, %v4188
          %v4229 = vsub.f32 %v3963, %v4189
          %v4230 = vsub.f32 %v3964, %v4190
          %v4231 = vsub.f32 %v3965, %v4191
          %v4232 = vsub.f32 %v3966, %v4192
          %v4233 = vsub.f32 %v3967, %v4185
          %v4234 = vsub.f32 %v3968, %v4186
          %v4235 = vsub.f32 %v3969, %v4187
          %v4236 = vsub.f32 %v3970, %v4188
          %v4237 = vsub.f32 %v3971, %v4189
          %v4238 = vsub.f32 %v3972, %v4190
          %v4239 = vsub.f32 %v3973, %v4191
          %v4240 = vsub.f32 %v3974, %v4192
          %v4241 = vsub.f32 %v3975, %v4185
          %v4242 = vsub.f32 %v3976, %v4186
          %v4243 = vsub.f32 %v3977, %v4187
          %v4244 = vsub.f32 %v3978, %v4188
          %v4245 = vsub.f32 %v3979, %v4189
          %v4246 = vsub.f32 %v3980, %v4190
          %v4247 = vsub.f32 %v3981, %v4191
          %v4248 = vsub.f32 %v3982, %v4192
          %v4249 = vsub.f32 %v3983, %v4185
          %v4250 = vsub.f32 %v3984, %v4186
          %v4251 = vsub.f32 %v3985, %v4187
          %v4252 = vsub.f32 %v3986, %v4188
          %v4253 = vsub.f32 %v3987, %v4189
          %v4254 = vsub.f32 %v3988, %v4190
          %v4255 = vsub.f32 %v3989, %v4191
          %v4256 = vsub.f32 %v3990, %v4192
          %v4257 = vsub.f32 %v3991, %v4185
          %v4258 = vsub.f32 %v3992, %v4186
          %v4259 = vsub.f32 %v3993, %v4187
          %v4260 = vsub.f32 %v3994, %v4188
          %v4261 = vsub.f32 %v3995, %v4189
          %v4262 = vsub.f32 %v3996, %v4190
          %v4263 = vsub.f32 %v3997, %v4191
          %v4264 = vsub.f32 %v3998, %v4192
          %v4265 = vsub.f32 %v3999, %v4185
          %v4266 = vsub.f32 %v4000, %v4186
          %v4267 = vsub.f32 %v4001, %v4187
          %v4268 = vsub.f32 %v4002, %v4188
          %v4269 = vsub.f32 %v4003, %v4189
          %v4270 = vsub.f32 %v4004, %v4190
          %v4271 = vsub.f32 %v4005, %v4191
          %v4272 = vsub.f32 %v4006, %v4192
          %v4273 = vsub.f32 %v4007, %v4185
          %v4274 = vsub.f32 %v4008, %v4186
          %v4275 = vsub.f32 %v4009, %v4187
          %v4276 = vsub.f32 %v4010, %v4188
          %v4277 = vsub.f32 %v4011, %v4189
          %v4278 = vsub.f32 %v4012, %v4190
          %v4279 = vsub.f32 %v4013, %v4191
          %v4280 = vsub.f32 %v4014, %v4192
          %v4281 = vsub.f32 %v4015, %v4185
          %v4282 = vsub.f32 %v4016, %v4186
          %v4283 = vsub.f32 %v4017, %v4187
          %v4284 = vsub.f32 %v4018, %v4188
          %v4285 = vsub.f32 %v4019, %v4189
          %v4286 = vsub.f32 %v4020, %v4190
          %v4287 = vsub.f32 %v4021, %v4191
          %v4288 = vsub.f32 %v4022, %v4192
          %v4289 = vsub.f32 %v4023, %v4185
          %v4290 = vsub.f32 %v4024, %v4186
          %v4291 = vsub.f32 %v4025, %v4187
          %v4292 = vsub.f32 %v4026, %v4188
          %v4293 = vsub.f32 %v4027, %v4189
          %v4294 = vsub.f32 %v4028, %v4190
          %v4295 = vsub.f32 %v4029, %v4191
          %v4296 = vsub.f32 %v4030, %v4192
          %v4297 = vmul.f32 %v4193, %v4193
          %v4298 = vmul.f32 %v4194, %v4194
          %v4299 = vmul.f32 %v4195, %v4195
          %v4300 = vmul.f32 %v4196, %v4196
          %v4301 = vmul.f32 %v4197, %v4197
          %v4302 = vmul.f32 %v4198, %v4198
          %v4303 = vmul.f32 %v4199, %v4199
          %v4304 = vmul.f32 %v4200, %v4200
          %v4305 = vmul.f32 %v4201, %v4201
          %v4306 = vmul.f32 %v4202, %v4202
          %v4307 = vmul.f32 %v4203, %v4203
          %v4308 = vmul.f32 %v4204, %v4204
          %v4309 = vmul.f32 %v4205, %v4205
          %v4310 = vmul.f32 %v4206, %v4206
          %v4311 = vmul.f32 %v4207, %v4207
          %v4312 = vmul.f32 %v4208, %v4208
          %v4313 = vmul.f32 %v4209, %v4209
          %v4314 = vmul.f32 %v4210, %v4210
          %v4315 = vmul.f32 %v4211, %v4211
          %v4316 = vmul.f32 %v4212, %v4212
          %v4317 = vmul.f32 %v4213, %v4213
          %v4318 = vmul.f32 %v4214, %v4214
          %v4319 = vmul.f32 %v4215, %v4215
          %v4320 = vmul.f32 %v4216, %v4216
          %v4321 = vmul.f32 %v4217, %v4217
          %v4322 = vmul.f32 %v4218, %v4218
          %v4323 = vmul.f32 %v4219, %v4219
          %v4324 = vmul.f32 %v4220, %v4220
          %v4325 = vmul.f32 %v4221, %v4221
          %v4326 = vmul.f32 %v4222, %v4222
          %v4327 = vmul.f32 %v4223, %v4223
          %v4328 = vmul.f32 %v4224, %v4224
          %v4329 = vmul.f32 %v4225, %v4225
          %v4330 = vmul.f32 %v4226, %v4226
          %v4331 = vmul.f32 %v4227, %v4227
          %v4332 = vmul.f32 %v4228, %v4228
          %v4333 = vmul.f32 %v4229, %v4229
          %v4334 = vmul.f32 %v4230, %v4230
          %v4335 = vmul.f32 %v4231, %v4231
          %v4336 = vmul.f32 %v4232, %v4232
          %v4337 = vmul.f32 %v4233, %v4233
          %v4338 = vmul.f32 %v4234, %v4234
          %v4339 = vmul.f32 %v4235, %v4235
          %v4340 = vmul.f32 %v4236, %v4236
          %v4341 = vmul.f32 %v4237, %v4237
          %v4342 = vmul.f32 %v4238, %v4238
          %v4343 = vmul.f32 %v4239, %v4239
          %v4344 = vmul.f32 %v4240, %v4240
          %v4345 = vmul.f32 %v4241, %v4241
          %v4346 = vmul.f32 %v4242, %v4242
          %v4347 = vmul.f32 %v4243, %v4243
          %v4348 = vmul.f32 %v4244, %v4244
          %v4349 = vmul.f32 %v4245, %v4245
          %v4350 = vmul.f32 %v4246, %v4246
          %v4351 = vmul.f32 %v4247, %v4247
          %v4352 = vmul.f32 %v4248, %v4248
          %v4353 = vmul.f32 %v4249, %v4249
          %v4354 = vmul.f32 %v4250, %v4250
          %v4355 = vmul.f32 %v4251, %v4251
          %v4356 = vmul.f32 %v4252, %v4252
          %v4357 = vmul.f32 %v4253, %v4253
          %v4358 = vmul.f32 %v4254, %v4254
          %v4359 = vmul.f32 %v4255, %v4255
          %v4360 = vmul.f32 %v4256, %v4256
          %v4361 = vmul.f32 %v4257, %v4257
          %v4362 = vmul.f32 %v4258, %v4258
          %v4363 = vmul.f32 %v4259, %v4259
          %v4364 = vmul.f32 %v4260, %v4260
          %v4365 = vmul.f32 %v4261, %v4261
          %v4366 = vmul.f32 %v4262, %v4262
          %v4367 = vmul.f32 %v4263, %v4263
          %v4368 = vmul.f32 %v4264, %v4264
          %v4369 = vmul.f32 %v4265, %v4265
          %v4370 = vmul.f32 %v4266, %v4266
          %v4371 = vmul.f32 %v4267, %v4267
          %v4372 = vmul.f32 %v4268, %v4268
          %v4373 = vmul.f32 %v4269, %v4269
          %v4374 = vmul.f32 %v4270, %v4270
          %v4375 = vmul.f32 %v4271, %v4271
          %v4376 = vmul.f32 %v4272, %v4272
          %v4377 = vmul.f32 %v4273, %v4273
          %v4378 = vmul.f32 %v4274, %v4274
          %v4379 = vmul.f32 %v4275, %v4275
          %v4380 = vmul.f32 %v4276, %v4276
          %v4381 = vmul.f32 %v4277, %v4277
          %v4382 = vmul.f32 %v4278, %v4278
          %v4383 = vmul.f32 %v4279, %v4279
          %v4384 = vmul.f32 %v4280, %v4280
          %v4385 = vmul.f32 %v4281, %v4281
          %v4386 = vmul.f32 %v4282, %v4282
          %v4387 = vmul.f32 %v4283, %v4283
          %v4388 = vmul.f32 %v4284, %v4284
          %v4389 = vmul.f32 %v4285, %v4285
          %v4390 = vmul.f32 %v4286, %v4286
          %v4391 = vmul.f32 %v4287, %v4287
          %v4392 = vmul.f32 %v4288, %v4288
          %v4393 = vmul.f32 %v4289, %v4289
          %v4394 = vmul.f32 %v4290, %v4290
          %v4395 = vmul.f32 %v4291, %v4291
          %v4396 = vmul.f32 %v4292, %v4292
          %v4397 = vmul.f32 %v4293, %v4293
          %v4398 = vmul.f32 %v4294, %v4294
          %v4399 = vmul.f32 %v4295, %v4295
          %v4400 = vmul.f32 %v4296, %v4296
          %v4401 = vadd.f32 %v4297, %v4305
          %v4402 = vadd.f32 %v4401, %v4313
          %v4403 = vadd.f32 %v4402, %v4321
          %v4404 = vadd.f32 %v4403, %v4329
          %v4405 = vadd.f32 %v4404, %v4337
          %v4406 = vadd.f32 %v4405, %v4345
          %v4407 = vadd.f32 %v4406, %v4353
          %v4408 = vadd.f32 %v4407, %v4361
          %v4409 = vadd.f32 %v4408, %v4369
          %v4410 = vadd.f32 %v4409, %v4377
          %v4411 = vadd.f32 %v4410, %v4385
          %v4412 = vsel %vm4042, %v4393, 0.0
          %v4413 = vadd.f32 %v4411, %v4412
          %v4414 = vrot.slane %v4413, 4
          %v4415 = vadd.f32 %v4413, %v4414
          %v4416 = vrot.slane %v4415, 2
          %v4417 = vadd.f32 %v4415, %v4416
          %v4418 = vrot.slane %v4417, 1
          %v4419 = vadd.f32 %v4417, %v4418
          %v4420 = vadd.f32 %v4298, %v4306
          %v4421 = vadd.f32 %v4420, %v4314
          %v4422 = vadd.f32 %v4421, %v4322
          %v4423 = vadd.f32 %v4422, %v4330
          %v4424 = vadd.f32 %v4423, %v4338
          %v4425 = vadd.f32 %v4424, %v4346
          %v4426 = vadd.f32 %v4425, %v4354
          %v4427 = vadd.f32 %v4426, %v4362
          %v4428 = vadd.f32 %v4427, %v4370
          %v4429 = vadd.f32 %v4428, %v4378
          %v4430 = vadd.f32 %v4429, %v4386
          %v4431 = vsel %vm4042, %v4394, 0.0
          %v4432 = vadd.f32 %v4430, %v4431
          %v4433 = vrot.slane %v4432, 4
          %v4434 = vadd.f32 %v4432, %v4433
          %v4435 = vrot.slane %v4434, 2
          %v4436 = vadd.f32 %v4434, %v4435
          %v4437 = vrot.slane %v4436, 1
          %v4438 = vadd.f32 %v4436, %v4437
          %v4439 = vadd.f32 %v4299, %v4307
          %v4440 = vadd.f32 %v4439, %v4315
          %v4441 = vadd.f32 %v4440, %v4323
          %v4442 = vadd.f32 %v4441, %v4331
          %v4443 = vadd.f32 %v4442, %v4339
          %v4444 = vadd.f32 %v4443, %v4347
          %v4445 = vadd.f32 %v4444, %v4355
          %v4446 = vadd.f32 %v4445, %v4363
          %v4447 = vadd.f32 %v4446, %v4371
          %v4448 = vadd.f32 %v4447, %v4379
          %v4449 = vadd.f32 %v4448, %v4387
          %v4450 = vsel %vm4042, %v4395, 0.0
          %v4451 = vadd.f32 %v4449, %v4450
          %v4452 = vrot.slane %v4451, 4
          %v4453 = vadd.f32 %v4451, %v4452
          %v4454 = vrot.slane %v4453, 2
          %v4455 = vadd.f32 %v4453, %v4454
          %v4456 = vrot.slane %v4455, 1
          %v4457 = vadd.f32 %v4455, %v4456
          %v4458 = vadd.f32 %v4300, %v4308
          %v4459 = vadd.f32 %v4458, %v4316
          %v4460 = vadd.f32 %v4459, %v4324
          %v4461 = vadd.f32 %v4460, %v4332
          %v4462 = vadd.f32 %v4461, %v4340
          %v4463 = vadd.f32 %v4462, %v4348
          %v4464 = vadd.f32 %v4463, %v4356
          %v4465 = vadd.f32 %v4464, %v4364
          %v4466 = vadd.f32 %v4465, %v4372
          %v4467 = vadd.f32 %v4466, %v4380
          %v4468 = vadd.f32 %v4467, %v4388
          %v4469 = vsel %vm4042, %v4396, 0.0
          %v4470 = vadd.f32 %v4468, %v4469
          %v4471 = vrot.slane %v4470, 4
          %v4472 = vadd.f32 %v4470, %v4471
          %v4473 = vrot.slane %v4472, 2
          %v4474 = vadd.f32 %v4472, %v4473
          %v4475 = vrot.slane %v4474, 1
          %v4476 = vadd.f32 %v4474, %v4475
          %v4477 = vadd.f32 %v4301, %v4309
          %v4478 = vadd.f32 %v4477, %v4317
          %v4479 = vadd.f32 %v4478, %v4325
          %v4480 = vadd.f32 %v4479, %v4333
          %v4481 = vadd.f32 %v4480, %v4341
          %v4482 = vadd.f32 %v4481, %v4349
          %v4483 = vadd.f32 %v4482, %v4357
          %v4484 = vadd.f32 %v4483, %v4365
          %v4485 = vadd.f32 %v4484, %v4373
          %v4486 = vadd.f32 %v4485, %v4381
          %v4487 = vadd.f32 %v4486, %v4389
          %v4488 = vsel %vm4042, %v4397, 0.0
          %v4489 = vadd.f32 %v4487, %v4488
          %v4490 = vrot.slane %v4489, 4
          %v4491 = vadd.f32 %v4489, %v4490
          %v4492 = vrot.slane %v4491, 2
          %v4493 = vadd.f32 %v4491, %v4492
          %v4494 = vrot.slane %v4493, 1
          %v4495 = vadd.f32 %v4493, %v4494
          %v4496 = vadd.f32 %v4302, %v4310
          %v4497 = vadd.f32 %v4496, %v4318
          %v4498 = vadd.f32 %v4497, %v4326
          %v4499 = vadd.f32 %v4498, %v4334
          %v4500 = vadd.f32 %v4499, %v4342
          %v4501 = vadd.f32 %v4500, %v4350
          %v4502 = vadd.f32 %v4501, %v4358
          %v4503 = vadd.f32 %v4502, %v4366
          %v4504 = vadd.f32 %v4503, %v4374
          %v4505 = vadd.f32 %v4504, %v4382
          %v4506 = vadd.f32 %v4505, %v4390
          %v4507 = vsel %vm4042, %v4398, 0.0
          %v4508 = vadd.f32 %v4506, %v4507
          %v4509 = vrot.slane %v4508, 4
          %v4510 = vadd.f32 %v4508, %v4509
          %v4511 = vrot.slane %v4510, 2
          %v4512 = vadd.f32 %v4510, %v4511
          %v4513 = vrot.slane %v4512, 1
          %v4514 = vadd.f32 %v4512, %v4513
          %v4515 = vadd.f32 %v4303, %v4311
          %v4516 = vadd.f32 %v4515, %v4319
          %v4517 = vadd.f32 %v4516, %v4327
          %v4518 = vadd.f32 %v4517, %v4335
          %v4519 = vadd.f32 %v4518, %v4343
          %v4520 = vadd.f32 %v4519, %v4351
          %v4521 = vadd.f32 %v4520, %v4359
          %v4522 = vadd.f32 %v4521, %v4367
          %v4523 = vadd.f32 %v4522, %v4375
          %v4524 = vadd.f32 %v4523, %v4383
          %v4525 = vadd.f32 %v4524, %v4391
          %v4526 = vsel %vm4042, %v4399, 0.0
          %v4527 = vadd.f32 %v4525, %v4526
          %v4528 = vrot.slane %v4527, 4
          %v4529 = vadd.f32 %v4527, %v4528
          %v4530 = vrot.slane %v4529, 2
          %v4531 = vadd.f32 %v4529, %v4530
          %v4532 = vrot.slane %v4531, 1
          %v4533 = vadd.f32 %v4531, %v4532
          %v4534 = vadd.f32 %v4304, %v4312
          %v4535 = vadd.f32 %v4534, %v4320
          %v4536 = vadd.f32 %v4535, %v4328
          %v4537 = vadd.f32 %v4536, %v4336
          %v4538 = vadd.f32 %v4537, %v4344
          %v4539 = vadd.f32 %v4538, %v4352
          %v4540 = vadd.f32 %v4539, %v4360
          %v4541 = vadd.f32 %v4540, %v4368
          %v4542 = vadd.f32 %v4541, %v4376
          %v4543 = vadd.f32 %v4542, %v4384
          %v4544 = vadd.f32 %v4543, %v4392
          %v4545 = vsel %vm4042, %v4400, 0.0
          %v4546 = vadd.f32 %v4544, %v4545
          %v4547 = vrot.slane %v4546, 4
          %v4548 = vadd.f32 %v4546, %v4547
          %v4549 = vrot.slane %v4548, 2
          %v4550 = vadd.f32 %v4548, %v4549
          %v4551 = vrot.slane %v4550, 1
          %v4552 = vadd.f32 %v4550, %v4551
          %v4553 = vmul.f32 %v4419, %v4184
          %v4554 = vmul.f32 %v4438, %v4184
          %v4555 = vmul.f32 %v4457, %v4184
          %v4556 = vmul.f32 %v4476, %v4184
          %v4557 = vmul.f32 %v4495, %v4184
          %v4558 = vmul.f32 %v4514, %v4184
          %v4559 = vmul.f32 %v4533, %v4184
          %v4560 = vmul.f32 %v4552, %v4184
          %v4561 = vadd.f32 %v4553, 1e-05
          %v4562 = vadd.f32 %v4554, 1e-05
          %v4563 = vadd.f32 %v4555, 1e-05
          %v4564 = vadd.f32 %v4556, 1e-05
          %v4565 = vadd.f32 %v4557, 1e-05
          %v4566 = vadd.f32 %v4558, 1e-05
          %v4567 = vadd.f32 %v4559, 1e-05
          %v4568 = vadd.f32 %v4560, 1e-05
          %v4569 = vrsqrt.pop %v4561
          %v4570 = vrsqrt.pop %v4562
          %v4571 = vrsqrt.pop %v4563
          %v4572 = vrsqrt.pop %v4564
          %v4573 = vrsqrt.pop %v4565
          %v4574 = vrsqrt.pop %v4566
          %v4575 = vrsqrt.pop %v4567
          %v4576 = vrsqrt.pop %v4568
          %v4577 = vmul.f32 %v4193, %v4569
          %v4578 = vmul.f32 %v4194, %v4570
          %v4579 = vmul.f32 %v4195, %v4571
          %v4580 = vmul.f32 %v4196, %v4572
          %v4581 = vmul.f32 %v4197, %v4573
          %v4582 = vmul.f32 %v4198, %v4574
          %v4583 = vmul.f32 %v4199, %v4575
          %v4584 = vmul.f32 %v4200, %v4576
          %v4585 = vmul.f32 %v4201, %v4569
          %v4586 = vmul.f32 %v4202, %v4570
          %v4587 = vmul.f32 %v4203, %v4571
          %v4588 = vmul.f32 %v4204, %v4572
          %v4589 = vmul.f32 %v4205, %v4573
          %v4590 = vmul.f32 %v4206, %v4574
          %v4591 = vmul.f32 %v4207, %v4575
          %v4592 = vmul.f32 %v4208, %v4576
          %v4593 = vmul.f32 %v4209, %v4569
          %v4594 = vmul.f32 %v4210, %v4570
          %v4595 = vmul.f32 %v4211, %v4571
          %v4596 = vmul.f32 %v4212, %v4572
          %v4597 = vmul.f32 %v4213, %v4573
          %v4598 = vmul.f32 %v4214, %v4574
          %v4599 = vmul.f32 %v4215, %v4575
          %v4600 = vmul.f32 %v4216, %v4576
          %v4601 = vmul.f32 %v4217, %v4569
          %v4602 = vmul.f32 %v4218, %v4570
          %v4603 = vmul.f32 %v4219, %v4571
          %v4604 = vmul.f32 %v4220, %v4572
          %v4605 = vmul.f32 %v4221, %v4573
          %v4606 = vmul.f32 %v4222, %v4574
          %v4607 = vmul.f32 %v4223, %v4575
          %v4608 = vmul.f32 %v4224, %v4576
          %v4609 = vmul.f32 %v4225, %v4569
          %v4610 = vmul.f32 %v4226, %v4570
          %v4611 = vmul.f32 %v4227, %v4571
          %v4612 = vmul.f32 %v4228, %v4572
          %v4613 = vmul.f32 %v4229, %v4573
          %v4614 = vmul.f32 %v4230, %v4574
          %v4615 = vmul.f32 %v4231, %v4575
          %v4616 = vmul.f32 %v4232, %v4576
          %v4617 = vmul.f32 %v4233, %v4569
          %v4618 = vmul.f32 %v4234, %v4570
          %v4619 = vmul.f32 %v4235, %v4571
          %v4620 = vmul.f32 %v4236, %v4572
          %v4621 = vmul.f32 %v4237, %v4573
          %v4622 = vmul.f32 %v4238, %v4574
          %v4623 = vmul.f32 %v4239, %v4575
          %v4624 = vmul.f32 %v4240, %v4576
          %v4625 = vmul.f32 %v4241, %v4569
          %v4626 = vmul.f32 %v4242, %v4570
          %v4627 = vmul.f32 %v4243, %v4571
          %v4628 = vmul.f32 %v4244, %v4572
          %v4629 = vmul.f32 %v4245, %v4573
          %v4630 = vmul.f32 %v4246, %v4574
          %v4631 = vmul.f32 %v4247, %v4575
          %v4632 = vmul.f32 %v4248, %v4576
          %v4633 = vmul.f32 %v4249, %v4569
          %v4634 = vmul.f32 %v4250, %v4570
          %v4635 = vmul.f32 %v4251, %v4571
          %v4636 = vmul.f32 %v4252, %v4572
          %v4637 = vmul.f32 %v4253, %v4573
          %v4638 = vmul.f32 %v4254, %v4574
          %v4639 = vmul.f32 %v4255, %v4575
          %v4640 = vmul.f32 %v4256, %v4576
          %v4641 = vmul.f32 %v4257, %v4569
          %v4642 = vmul.f32 %v4258, %v4570
          %v4643 = vmul.f32 %v4259, %v4571
          %v4644 = vmul.f32 %v4260, %v4572
          %v4645 = vmul.f32 %v4261, %v4573
          %v4646 = vmul.f32 %v4262, %v4574
          %v4647 = vmul.f32 %v4263, %v4575
          %v4648 = vmul.f32 %v4264, %v4576
          %v4649 = vmul.f32 %v4265, %v4569
          %v4650 = vmul.f32 %v4266, %v4570
          %v4651 = vmul.f32 %v4267, %v4571
          %v4652 = vmul.f32 %v4268, %v4572
          %v4653 = vmul.f32 %v4269, %v4573
          %v4654 = vmul.f32 %v4270, %v4574
          %v4655 = vmul.f32 %v4271, %v4575
          %v4656 = vmul.f32 %v4272, %v4576
          %v4657 = vmul.f32 %v4273, %v4569
          %v4658 = vmul.f32 %v4274, %v4570
          %v4659 = vmul.f32 %v4275, %v4571
          %v4660 = vmul.f32 %v4276, %v4572
          %v4661 = vmul.f32 %v4277, %v4573
          %v4662 = vmul.f32 %v4278, %v4574
          %v4663 = vmul.f32 %v4279, %v4575
          %v4664 = vmul.f32 %v4280, %v4576
          %v4665 = vmul.f32 %v4281, %v4569
          %v4666 = vmul.f32 %v4282, %v4570
          %v4667 = vmul.f32 %v4283, %v4571
          %v4668 = vmul.f32 %v4284, %v4572
          %v4669 = vmul.f32 %v4285, %v4573
          %v4670 = vmul.f32 %v4286, %v4574
          %v4671 = vmul.f32 %v4287, %v4575
          %v4672 = vmul.f32 %v4288, %v4576
          %v4673 = vmul.f32 %v4289, %v4569
          %v4674 = vmul.f32 %v4290, %v4570
          %v4675 = vmul.f32 %v4291, %v4571
          %v4676 = vmul.f32 %v4292, %v4572
          %v4677 = vmul.f32 %v4293, %v4573
          %v4678 = vmul.f32 %v4294, %v4574
          %v4679 = vmul.f32 %v4295, %v4575
          %v4680 = vmul.f32 %v4296, %v4576
          %v4681 = vld [vmem:[#allocation10] sm:$0xff]
          %v4683 = vlaneseq
          %v4684 = vshrl.u32 %v4683, 7
          %v4685 = vsub.s32 0, %v4684
          %v4686 = vrot.slane %v4681, %v4685
          %v4687 = vlaneseq
          %v4688 = vshrl.u32 %v4687, 7
          %v4689 = vsub.s32 1, %v4688
          %v4690 = vrot.slane %v4681, %v4689
          %v4691 = vlaneseq
          %v4692 = vshrl.u32 %v4691, 7
          %v4693 = vsub.s32 2, %v4692
          %v4694 = vrot.slane %v4681, %v4693
          %v4695 = vlaneseq
          %v4696 = vshrl.u32 %v4695, 7
          %v4697 = vsub.s32 3, %v4696
          %v4698 = vrot.slane %v4681, %v4697
          %v4699 = vlaneseq
          %v4700 = vshrl.u32 %v4699, 7
          %v4701 = vsub.s32 4, %v4700
          %v4702 = vrot.slane %v4681, %v4701
          %v4703 = vlaneseq
          %v4704 = vshrl.u32 %v4703, 7
          %v4705 = vsub.s32 5, %v4704
          %v4706 = vrot.slane %v4681, %v4705
          %v4707 = vlaneseq
          %v4708 = vshrl.u32 %v4707, 7
          %v4709 = vsub.s32 6, %v4708
          %v4710 = vrot.slane %v4681, %v4709
          %v4711 = vlaneseq
          %v4712 = vshrl.u32 %v4711, 7
          %v4713 = vsub.s32 7, %v4712
          %v4714 = vrot.slane %v4681, %v4713
          %v4723 = vmul.f32 %v4577, %v4686
          %v4724 = vmul.f32 %v4578, %v4690
          %v4725 = vmul.f32 %v4579, %v4694
          %v4726 = vmul.f32 %v4580, %v4698
          %v4727 = vmul.f32 %v4581, %v4702
          %v4728 = vmul.f32 %v4582, %v4706
          %v4729 = vmul.f32 %v4583, %v4710
          %v4730 = vmul.f32 %v4584, %v4714
          %v4731 = vmul.f32 %v4585, %v4686
          %v4732 = vmul.f32 %v4586, %v4690
          %v4733 = vmul.f32 %v4587, %v4694
          %v4734 = vmul.f32 %v4588, %v4698
          %v4735 = vmul.f32 %v4589, %v4702
          %v4736 = vmul.f32 %v4590, %v4706
          %v4737 = vmul.f32 %v4591, %v4710
          %v4738 = vmul.f32 %v4592, %v4714
          %v4739 = vmul.f32 %v4593, %v4686
          %v4740 = vmul.f32 %v4594, %v4690
          %v4741 = vmul.f32 %v4595, %v4694
          %v4742 = vmul.f32 %v4596, %v4698
          %v4743 = vmul.f32 %v4597, %v4702
          %v4744 = vmul.f32 %v4598, %v4706
          %v4745 = vmul.f32 %v4599, %v4710
          %v4746 = vmul.f32 %v4600, %v4714
          %v4747 = vmul.f32 %v4601, %v4686
          %v4748 = vmul.f32 %v4602, %v4690
          %v4749 = vmul.f32 %v4603, %v4694
          %v4750 = vmul.f32 %v4604, %v4698
          %v4751 = vmul.f32 %v4605, %v4702
          %v4752 = vmul.f32 %v4606, %v4706
          %v4753 = vmul.f32 %v4607, %v4710
          %v4754 = vmul.f32 %v4608, %v4714
          %v4755 = vmul.f32 %v4609, %v4686
          %v4756 = vmul.f32 %v4610, %v4690
          %v4757 = vmul.f32 %v4611, %v4694
          %v4758 = vmul.f32 %v4612, %v4698
          %v4759 = vmul.f32 %v4613, %v4702
          %v4760 = vmul.f32 %v4614, %v4706
          %v4761 = vmul.f32 %v4615, %v4710
          %v4762 = vmul.f32 %v4616, %v4714
          %v4763 = vmul.f32 %v4617, %v4686
          %v4764 = vmul.f32 %v4618, %v4690
          %v4765 = vmul.f32 %v4619, %v4694
          %v4766 = vmul.f32 %v4620, %v4698
          %v4767 = vmul.f32 %v4621, %v4702
          %v4768 = vmul.f32 %v4622, %v4706
          %v4769 = vmul.f32 %v4623, %v4710
          %v4770 = vmul.f32 %v4624, %v4714
          %v4771 = vmul.f32 %v4625, %v4686
          %v4772 = vmul.f32 %v4626, %v4690
          %v4773 = vmul.f32 %v4627, %v4694
          %v4774 = vmul.f32 %v4628, %v4698
          %v4775 = vmul.f32 %v4629, %v4702
          %v4776 = vmul.f32 %v4630, %v4706
          %v4777 = vmul.f32 %v4631, %v4710
          %v4778 = vmul.f32 %v4632, %v4714
          %v4779 = vmul.f32 %v4633, %v4686
          %v4780 = vmul.f32 %v4634, %v4690
          %v4781 = vmul.f32 %v4635, %v4694
          %v4782 = vmul.f32 %v4636, %v4698
          %v4783 = vmul.f32 %v4637, %v4702
          %v4784 = vmul.f32 %v4638, %v4706
          %v4785 = vmul.f32 %v4639, %v4710
          %v4786 = vmul.f32 %v4640, %v4714
          %v4787 = vmul.f32 %v4641, %v4686
          %v4788 = vmul.f32 %v4642, %v4690
          %v4789 = vmul.f32 %v4643, %v4694
          %v4790 = vmul.f32 %v4644, %v4698
          %v4791 = vmul.f32 %v4645, %v4702
          %v4792 = vmul.f32 %v4646, %v4706
          %v4793 = vmul.f32 %v4647, %v4710
          %v4794 = vmul.f32 %v4648, %v4714
          %v4795 = vmul.f32 %v4649, %v4686
          %v4796 = vmul.f32 %v4650, %v4690
          %v4797 = vmul.f32 %v4651, %v4694
          %v4798 = vmul.f32 %v4652, %v4698
          %v4799 = vmul.f32 %v4653, %v4702
          %v4800 = vmul.f32 %v4654, %v4706
          %v4801 = vmul.f32 %v4655, %v4710
          %v4802 = vmul.f32 %v4656, %v4714
          %v4803 = vmul.f32 %v4657, %v4686
          %v4804 = vmul.f32 %v4658, %v4690
          %v4805 = vmul.f32 %v4659, %v4694
          %v4806 = vmul.f32 %v4660, %v4698
          %v4807 = vmul.f32 %v4661, %v4702
          %v4808 = vmul.f32 %v4662, %v4706
          %v4809 = vmul.f32 %v4663, %v4710
          %v4810 = vmul.f32 %v4664, %v4714
          %v4811 = vmul.f32 %v4665, %v4686
          %v4812 = vmul.f32 %v4666, %v4690
          %v4813 = vmul.f32 %v4667, %v4694
          %v4814 = vmul.f32 %v4668, %v4698
          %v4815 = vmul.f32 %v4669, %v4702
          %v4816 = vmul.f32 %v4670, %v4706
          %v4817 = vmul.f32 %v4671, %v4710
          %v4818 = vmul.f32 %v4672, %v4714
          %v4819 = vmul.f32 %v4673, %v4686
          %v4820 = vmul.f32 %v4674, %v4690
          %v4821 = vmul.f32 %v4675, %v4694
          %v4822 = vmul.f32 %v4676, %v4698
          %v4823 = vmul.f32 %v4677, %v4702
          %v4824 = vmul.f32 %v4678, %v4706
          %v4825 = vmul.f32 %v4679, %v4710
          %v4826 = vmul.f32 %v4680, %v4714
          %v4827 = vld [vmem:[#allocation11] sm:$0xff]
          %v4829 = vlaneseq
          %v4830 = vshrl.u32 %v4829, 7
          %v4831 = vsub.s32 0, %v4830
          %v4832 = vrot.slane %v4827, %v4831
          %v4833 = vlaneseq
          %v4834 = vshrl.u32 %v4833, 7
          %v4835 = vsub.s32 1, %v4834
          %v4836 = vrot.slane %v4827, %v4835
          %v4837 = vlaneseq
          %v4838 = vshrl.u32 %v4837, 7
          %v4839 = vsub.s32 2, %v4838
          %v4840 = vrot.slane %v4827, %v4839
          %v4841 = vlaneseq
          %v4842 = vshrl.u32 %v4841, 7
          %v4843 = vsub.s32 3, %v4842
          %v4844 = vrot.slane %v4827, %v4843
          %v4845 = vlaneseq
          %v4846 = vshrl.u32 %v4845, 7
          %v4847 = vsub.s32 4, %v4846
          %v4848 = vrot.slane %v4827, %v4847
          %v4849 = vlaneseq
          %v4850 = vshrl.u32 %v4849, 7
          %v4851 = vsub.s32 5, %v4850
          %v4852 = vrot.slane %v4827, %v4851
          %v4853 = vlaneseq
          %v4854 = vshrl.u32 %v4853, 7
          %v4855 = vsub.s32 6, %v4854
          %v4856 = vrot.slane %v4827, %v4855
          %v4857 = vlaneseq
          %v4858 = vshrl.u32 %v4857, 7
          %v4859 = vsub.s32 7, %v4858
          %v4860 = vrot.slane %v4827, %v4859
          %v4869 = vadd.f32 %v4723, %v4832
          %v4870 = vadd.f32 %v4724, %v4836
          %v4871 = vadd.f32 %v4725, %v4840
          %v4872 = vadd.f32 %v4726, %v4844
          %v4873 = vadd.f32 %v4727, %v4848
          %v4874 = vadd.f32 %v4728, %v4852
          %v4875 = vadd.f32 %v4729, %v4856
          %v4876 = vadd.f32 %v4730, %v4860
          %v4877 = vadd.f32 %v4731, %v4832
          %v4878 = vadd.f32 %v4732, %v4836
          %v4879 = vadd.f32 %v4733, %v4840
          %v4880 = vadd.f32 %v4734, %v4844
          %v4881 = vadd.f32 %v4735, %v4848
          %v4882 = vadd.f32 %v4736, %v4852
          %v4883 = vadd.f32 %v4737, %v4856
          %v4884 = vadd.f32 %v4738, %v4860
          %v4885 = vadd.f32 %v4739, %v4832
          %v4886 = vadd.f32 %v4740, %v4836
          %v4887 = vadd.f32 %v4741, %v4840
          %v4888 = vadd.f32 %v4742, %v4844
          %v4889 = vadd.f32 %v4743, %v4848
          %v4890 = vadd.f32 %v4744, %v4852
          %v4891 = vadd.f32 %v4745, %v4856
          %v4892 = vadd.f32 %v4746, %v4860
          %v4893 = vadd.f32 %v4747, %v4832
          %v4894 = vadd.f32 %v4748, %v4836
          %v4895 = vadd.f32 %v4749, %v4840
          %v4896 = vadd.f32 %v4750, %v4844
          %v4897 = vadd.f32 %v4751, %v4848
          %v4898 = vadd.f32 %v4752, %v4852
          %v4899 = vadd.f32 %v4753, %v4856
          %v4900 = vadd.f32 %v4754, %v4860
          %v4901 = vadd.f32 %v4755, %v4832
          %v4902 = vadd.f32 %v4756, %v4836
          %v4903 = vadd.f32 %v4757, %v4840
          %v4904 = vadd.f32 %v4758, %v4844
          %v4905 = vadd.f32 %v4759, %v4848
          %v4906 = vadd.f32 %v4760, %v4852
          %v4907 = vadd.f32 %v4761, %v4856
          %v4908 = vadd.f32 %v4762, %v4860
          %v4909 = vadd.f32 %v4763, %v4832
          %v4910 = vadd.f32 %v4764, %v4836
          %v4911 = vadd.f32 %v4765, %v4840
          %v4912 = vadd.f32 %v4766, %v4844
          %v4913 = vadd.f32 %v4767, %v4848
          %v4914 = vadd.f32 %v4768, %v4852
          %v4915 = vadd.f32 %v4769, %v4856
          %v4916 = vadd.f32 %v4770, %v4860
          %v4917 = vadd.f32 %v4771, %v4832
          %v4918 = vadd.f32 %v4772, %v4836
          %v4919 = vadd.f32 %v4773, %v4840
          %v4920 = vadd.f32 %v4774, %v4844
          %v4921 = vadd.f32 %v4775, %v4848
          %v4922 = vadd.f32 %v4776, %v4852
          %v4923 = vadd.f32 %v4777, %v4856
          %v4924 = vadd.f32 %v4778, %v4860
          %v4925 = vadd.f32 %v4779, %v4832
          %v4926 = vadd.f32 %v4780, %v4836
          %v4927 = vadd.f32 %v4781, %v4840
          %v4928 = vadd.f32 %v4782, %v4844
          %v4929 = vadd.f32 %v4783, %v4848
          %v4930 = vadd.f32 %v4784, %v4852
          %v4931 = vadd.f32 %v4785, %v4856
          %v4932 = vadd.f32 %v4786, %v4860
          %v4933 = vadd.f32 %v4787, %v4832
          %v4934 = vadd.f32 %v4788, %v4836
          %v4935 = vadd.f32 %v4789, %v4840
          %v4936 = vadd.f32 %v4790, %v4844
          %v4937 = vadd.f32 %v4791, %v4848
          %v4938 = vadd.f32 %v4792, %v4852
          %v4939 = vadd.f32 %v4793, %v4856
          %v4940 = vadd.f32 %v4794, %v4860
          %v4941 = vadd.f32 %v4795, %v4832
          %v4942 = vadd.f32 %v4796, %v4836
          %v4943 = vadd.f32 %v4797, %v4840
          %v4944 = vadd.f32 %v4798, %v4844
          %v4945 = vadd.f32 %v4799, %v4848
          %v4946 = vadd.f32 %v4800, %v4852
          %v4947 = vadd.f32 %v4801, %v4856
          %v4948 = vadd.f32 %v4802, %v4860
          %v4949 = vadd.f32 %v4803, %v4832
          %v4950 = vadd.f32 %v4804, %v4836
          %v4951 = vadd.f32 %v4805, %v4840
          %v4952 = vadd.f32 %v4806, %v4844
          %v4953 = vadd.f32 %v4807, %v4848
          %v4954 = vadd.f32 %v4808, %v4852
          %v4955 = vadd.f32 %v4809, %v4856
          %v4956 = vadd.f32 %v4810, %v4860
          %v4957 = vadd.f32 %v4811, %v4832
          %v4958 = vadd.f32 %v4812, %v4836
          %v4959 = vadd.f32 %v4813, %v4840
          %v4960 = vadd.f32 %v4814, %v4844
          %v4961 = vadd.f32 %v4815, %v4848
          %v4962 = vadd.f32 %v4816, %v4852
          %v4963 = vadd.f32 %v4817, %v4856
          %v4964 = vadd.f32 %v4818, %v4860
          %v4965 = vadd.f32 %v4819, %v4832
          %v4966 = vadd.f32 %v4820, %v4836
          %v4967 = vadd.f32 %v4821, %v4840
          %v4968 = vadd.f32 %v4822, %v4844
          %v4969 = vadd.f32 %v4823, %v4848
          %v4970 = vadd.f32 %v4824, %v4852
          %v4971 = vadd.f32 %v4825, %v4856
          %v4972 = vadd.f32 %v4826, %v4860
          %v4973 = vpack.c.bf16 %v4877, %v4869
          %v4974 = vpack.c.bf16 %v4878, %v4870
          %v4975 = vpack.c.bf16 %v4879, %v4871
          %v4976 = vpack.c.bf16 %v4880, %v4872
          %v4977 = vpack.c.bf16 %v4881, %v4873
          %v4978 = vpack.c.bf16 %v4882, %v4874
          %v4979 = vpack.c.bf16 %v4883, %v4875
          %v4980 = vpack.c.bf16 %v4884, %v4876
          %v4981 = vpack.c.bf16 %v4893, %v4885
          %v4982 = vpack.c.bf16 %v4894, %v4886
          %v4983 = vpack.c.bf16 %v4895, %v4887
          %v4984 = vpack.c.bf16 %v4896, %v4888
          %v4985 = vpack.c.bf16 %v4897, %v4889
          %v4986 = vpack.c.bf16 %v4898, %v4890
          %v4987 = vpack.c.bf16 %v4899, %v4891
          %v4988 = vpack.c.bf16 %v4900, %v4892
          %v4989 = vpack.c.bf16 %v4909, %v4901
          %v4990 = vpack.c.bf16 %v4910, %v4902
          %v4991 = vpack.c.bf16 %v4911, %v4903
          %v4992 = vpack.c.bf16 %v4912, %v4904
          %v4993 = vpack.c.bf16 %v4913, %v4905
          %v4994 = vpack.c.bf16 %v4914, %v4906
          %v4995 = vpack.c.bf16 %v4915, %v4907
          %v4996 = vpack.c.bf16 %v4916, %v4908
          %v4997 = vpack.c.bf16 %v4925, %v4917
          %v4998 = vpack.c.bf16 %v4926, %v4918
          %v4999 = vpack.c.bf16 %v4927, %v4919
          %v5000 = vpack.c.bf16 %v4928, %v4920
          %v5001 = vpack.c.bf16 %v4929, %v4921
          %v5002 = vpack.c.bf16 %v4930, %v4922
          %v5003 = vpack.c.bf16 %v4931, %v4923
          %v5004 = vpack.c.bf16 %v4932, %v4924
          %v5005 = vpack.c.bf16 %v4941, %v4933
          %v5006 = vpack.c.bf16 %v4942, %v4934
          %v5007 = vpack.c.bf16 %v4943, %v4935
          %v5008 = vpack.c.bf16 %v4944, %v4936
          %v5009 = vpack.c.bf16 %v4945, %v4937
          %v5010 = vpack.c.bf16 %v4946, %v4938
          %v5011 = vpack.c.bf16 %v4947, %v4939
          %v5012 = vpack.c.bf16 %v4948, %v4940
          %v5013 = vpack.c.bf16 %v4957, %v4949
          %v5014 = vpack.c.bf16 %v4958, %v4950
          %v5015 = vpack.c.bf16 %v4959, %v4951
          %v5016 = vpack.c.bf16 %v4960, %v4952
          %v5017 = vpack.c.bf16 %v4961, %v4953
          %v5018 = vpack.c.bf16 %v4962, %v4954
          %v5019 = vpack.c.bf16 %v4963, %v4955
          %v5020 = vpack.c.bf16 %v4964, %v4956
          %v5021 = vpack.c.bf16 %v4965, %v4965
          %v5022 = vpack.c.bf16 %v4966, %v4966
          %v5023 = vpack.c.bf16 %v4967, %v4967
          %v5024 = vpack.c.bf16 %v4968, %v4968
          %v5025 = vpack.c.bf16 %v4969, %v4969
          %v5026 = vpack.c.bf16 %v4970, %v4970
          %v5027 = vpack.c.bf16 %v4971, %v4971
          %v5028 = vpack.c.bf16 %v4972, %v4972
          %v5029 = vld [vmem:[#allocation13] sm:$0xf]
          %v5030 = vld [vmem:[#allocation13 + $0x4] sm:$0xf]
          %v5031 = vld [vmem:[#allocation13 + $0x8] sm:$0xf]
          %v5032 = vld [vmem:[#allocation13 + $0xc] sm:$0xf]
          %v5033 = vld [vmem:[#allocation13 + $0x10] sm:$0xf]
          %v5034 = vld [vmem:[#allocation13 + $0x14] sm:$0xf]
          %v5035 = vld [vmem:[#allocation13 + $0x18] sm:$0xf]
          %v5036 = vld [vmem:[#allocation13 + $0x1c] sm:$0xf]
          %v5037 = vld [vmem:[#allocation13 + $0x20] sm:$0xf]
          %v5038 = vld [vmem:[#allocation13 + $0x24] sm:$0xf]
          %v5039 = vld [vmem:[#allocation13 + $0x28] sm:$0xf]
          %v5040 = vld [vmem:[#allocation13 + $0x2c] sm:$0xf]
          %v5041 = vld [vmem:[#allocation13 + $0x30] sm:$0xf]
          %v5042 = vld [vmem:[#allocation13 + $0x34] sm:$0xf]
          %v5043 = vld [vmem:[#allocation13 + $0x38] sm:$0xf]
          %v5044 = vld [vmem:[#allocation13 + $0x3c] sm:$0xf]
          %v5045 = vld [vmem:[#allocation13 + $0x40] sm:$0xf]
          %v5046 = vld [vmem:[#allocation13 + $0x44] sm:$0xf]
          %v5047 = vld [vmem:[#allocation13 + $0x48] sm:$0xf]
          %v5048 = vld [vmem:[#allocation13 + $0x4c] sm:$0xf]
          %v5049 = vld [vmem:[#allocation13 + $0x50] sm:$0xf]
          %v5050 = vld [vmem:[#allocation13 + $0x54] sm:$0xf]
          %v5051 = vld [vmem:[#allocation13 + $0x58] sm:$0xf]
          %v5052 = vld [vmem:[#allocation13 + $0x5c] sm:$0xf]
          %v5053 = vld [vmem:[#allocation13 + $0x60] sm:$0xf]
          %v5054 = vld [vmem:[#allocation13 + $0x64] sm:$0xf]
          %v5055 = vld [vmem:[#allocation13 + $0x68] sm:$0xf]
          %v5056 = vld [vmem:[#allocation13 + $0x6c] sm:$0xf]
          %v5057 = vld [vmem:[#allocation13 + $0x70] sm:$0xf]
          %v5058 = vld [vmem:[#allocation13 + $0x74] sm:$0xf]
          %v5059 = vld [vmem:[#allocation13 + $0x78] sm:$0xf]
          %v5060 = vld [vmem:[#allocation13 + $0x7c] sm:$0xf]
          %v5061 = vld [vmem:[#allocation13 + $0x80] sm:$0xf]
          %v5062 = vld [vmem:[#allocation13 + $0x84] sm:$0xf]
          %v5063 = vld [vmem:[#allocation13 + $0x88] sm:$0xf]
          %v5064 = vld [vmem:[#allocation13 + $0x8c] sm:$0xf]
          %v5065 = vld [vmem:[#allocation13 + $0x90] sm:$0xf]
          %v5066 = vld [vmem:[#allocation13 + $0x94] sm:$0xf]
          %v5067 = vld [vmem:[#allocation13 + $0x98] sm:$0xf]
          %v5068 = vld [vmem:[#allocation13 + $0x9c] sm:$0xf]
          %v5069 = vld [vmem:[#allocation13 + $0xa0] sm:$0xf]
          %v5070 = vld [vmem:[#allocation13 + $0xa4] sm:$0xf]
          %v5071 = vld [vmem:[#allocation13 + $0xa8] sm:$0xf]
          %v5072 = vld [vmem:[#allocation13 + $0xac] sm:$0xf]
          %v5073 = vld [vmem:[#allocation13 + $0xb0] sm:$0xf]
          %v5074 = vld [vmem:[#allocation13 + $0xb4] sm:$0xf]
          %v5075 = vld [vmem:[#allocation13 + $0xb8] sm:$0xf]
          %v5076 = vld [vmem:[#allocation13 + $0xbc] sm:$0xf]
          %v5077 = vld [vmem:[#allocation13 + $0xc0] sm:$0xf]
          %v5078 = vld [vmem:[#allocation13 + $0xc4] sm:$0xf]
          %v5079 = vld [vmem:[#allocation13 + $0xc8] sm:$0xf]
          %v5080 = vld [vmem:[#allocation13 + $0xcc] sm:$0xf]
          %v5081 = vld [vmem:[#allocation13 + $0xd0] sm:$0xf]
          %v5082 = vld [vmem:[#allocation13 + $0xd4] sm:$0xf]
          %v5083 = vld [vmem:[#allocation13 + $0xd8] sm:$0xf]
          %v5084 = vld [vmem:[#allocation13 + $0xdc] sm:$0xf]
          %v5085 = vld [vmem:[#allocation13 + $0xe0] sm:$0xf]
          %v5086 = vld [vmem:[#allocation13 + $0xe4] sm:$0xf]
          %v5087 = vld [vmem:[#allocation13 + $0xe8] sm:$0xf]
          %v5088 = vld [vmem:[#allocation13 + $0xec] sm:$0xf]
          %v5089 = vld [vmem:[#allocation13 + $0xf0] sm:$0xf]
          %v5090 = vld [vmem:[#allocation13 + $0xf4] sm:$0xf]
          %v5091 = vld [vmem:[#allocation13 + $0xf8] sm:$0xf]
          %v5092 = vld [vmem:[#allocation13 + $0xfc] sm:$0xf]
          %v5093 = vld [vmem:[#allocation13 + $0x100] sm:$0xf]
          %v5094 = vld [vmem:[#allocation13 + $0x104] sm:$0xf]
          %v5095 = vld [vmem:[#allocation13 + $0x108] sm:$0xf]
          %v5096 = vld [vmem:[#allocation13 + $0x10c] sm:$0xf]
          %v5097 = vld [vmem:[#allocation13 + $0x110] sm:$0xf]
          %v5098 = vld [vmem:[#allocation13 + $0x114] sm:$0xf]
          %v5099 = vld [vmem:[#allocation13 + $0x118] sm:$0xf]
          %v5100 = vld [vmem:[#allocation13 + $0x11c] sm:$0xf]
          %v5101 = vld [vmem:[#allocation13 + $0x120] sm:$0xf]
          %v5102 = vld [vmem:[#allocation13 + $0x124] sm:$0xf]
          %v5103 = vld [vmem:[#allocation13 + $0x128] sm:$0xf]
          %v5104 = vld [vmem:[#allocation13 + $0x12c] sm:$0xf]
          %v5105 = vld [vmem:[#allocation13 + $0x130] sm:$0xf]
          %v5106 = vld [vmem:[#allocation13 + $0x134] sm:$0xf]
          %v5107 = vld [vmem:[#allocation13 + $0x138] sm:$0xf]
          %v5108 = vld [vmem:[#allocation13 + $0x13c] sm:$0xf]
          %v5109 = vld [vmem:[#allocation13 + $0x140] sm:$0xf]
          %v5110 = vld [vmem:[#allocation13 + $0x144] sm:$0xf]
          %v5111 = vld [vmem:[#allocation13 + $0x148] sm:$0xf]
          %v5112 = vld [vmem:[#allocation13 + $0x14c] sm:$0xf]
          %v5113 = vld [vmem:[#allocation13 + $0x150] sm:$0xf]
          %v5114 = vld [vmem:[#allocation13 + $0x154] sm:$0xf]
          %v5115 = vld [vmem:[#allocation13 + $0x158] sm:$0xf]
          %v5116 = vld [vmem:[#allocation13 + $0x15c] sm:$0xf]
          %v5117 = vld [vmem:[#allocation13 + $0x160] sm:$0xf]
          %v5118 = vld [vmem:[#allocation13 + $0x164] sm:$0xf]
          %v5119 = vld [vmem:[#allocation13 + $0x168] sm:$0xf]
          %v5120 = vld [vmem:[#allocation13 + $0x16c] sm:$0xf]
          %v5121 = vld [vmem:[#allocation13 + $0x170] sm:$0xf]
          %v5122 = vld [vmem:[#allocation13 + $0x174] sm:$0xf]
          %v5123 = vld [vmem:[#allocation13 + $0x178] sm:$0xf]
          %v5124 = vld [vmem:[#allocation13 + $0x17c] sm:$0xf]
          %v5125 = vld [vmem:[#allocation13 + $0x180] sm:$0xf]
          %v5126 = vld [vmem:[#allocation13 + $0x184] sm:$0xf]
          %v5127 = vld [vmem:[#allocation13 + $0x188] sm:$0xf]
          %v5128 = vld [vmem:[#allocation13 + $0x18c] sm:$0xf]
          %v5129 = vld [vmem:[#allocation13 + $0x190] sm:$0xf]
          %v5130 = vld [vmem:[#allocation13 + $0x194] sm:$0xf]
          %v5131 = vld [vmem:[#allocation13 + $0x198] sm:$0xf]
          %v5132 = vld [vmem:[#allocation13 + $0x19c] sm:$0xf]
          %v5133 = vld [vmem:[#allocation13 + $0x1a0] sm:$0xf]
          %v5134 = vld [vmem:[#allocation13 + $0x1a4] sm:$0xf]
          %v5135 = vld [vmem:[#allocation13 + $0x1a8] sm:$0xf]
          %v5136 = vld [vmem:[#allocation13 + $0x1ac] sm:$0xf]
          %v5137 = vld [vmem:[#allocation13 + $0x1b0] sm:$0xf]
          %v5138 = vld [vmem:[#allocation13 + $0x1b4] sm:$0xf]
          %v5139 = vld [vmem:[#allocation13 + $0x1b8] sm:$0xf]
          %v5140 = vld [vmem:[#allocation13 + $0x1bc] sm:$0xf]
          %v5141 = vld [vmem:[#allocation13 + $0x1c0] sm:$0xf]
          %v5142 = vld [vmem:[#allocation13 + $0x1c4] sm:$0xf]
          %v5143 = vld [vmem:[#allocation13 + $0x1c8] sm:$0xf]
          %v5144 = vld [vmem:[#allocation13 + $0x1cc] sm:$0xf]
          %v5145 = vld [vmem:[#allocation13 + $0x1d0] sm:$0xf]
          %v5146 = vld [vmem:[#allocation13 + $0x1d4] sm:$0xf]
          %v5147 = vld [vmem:[#allocation13 + $0x1d8] sm:$0xf]
          %v5148 = vld [vmem:[#allocation13 + $0x1dc] sm:$0xf]
          %v5149 = vld [vmem:[#allocation13 + $0x1e0] sm:$0xf]
          %v5150 = vld [vmem:[#allocation13 + $0x1e4] sm:$0xf]
          %v5151 = vld [vmem:[#allocation13 + $0x1e8] sm:$0xf]
          %v5152 = vld [vmem:[#allocation13 + $0x1ec] sm:$0xf]
          %v5153 = vld [vmem:[#allocation13 + $0x1f0] sm:$0xf]
          %v5154 = vld [vmem:[#allocation13 + $0x1f4] sm:$0xf]
          %v5155 = vld [vmem:[#allocation13 + $0x1f8] sm:$0xf]
          %v5156 = vld [vmem:[#allocation13 + $0x1fc] sm:$0xf]
          %v5157 = vld [vmem:[#allocation14] sm:$0x1]
          %v5159 = vlaneseq
          %v5160 = vshrl.u32 %v5159, 7
          %v5161 = vsub.s32 0, %v5160
          %v5162 = vrot.slane %v5157, %v5161
          %v5292 = vunpack.c.l.b16 %v5029
          %v5293 = vunpack.c.l.b16 %v5030
          %v5294 = vunpack.c.l.b16 %v5031
          %v5295 = vunpack.c.l.b16 %v5032
          %v5296 = vunpack.c.l.b16 %v5033
          %v5297 = vunpack.c.l.b16 %v5034
          %v5298 = vunpack.c.l.b16 %v5035
          %v5299 = vunpack.c.l.b16 %v5036
          %v5300 = vunpack.c.l.b16 %v5037
          %v5301 = vunpack.c.l.b16 %v5038
          %v5302 = vunpack.c.l.b16 %v5039
          %v5303 = vunpack.c.l.b16 %v5040
          %v5304 = vunpack.c.l.b16 %v5041
          %v5305 = vunpack.c.l.b16 %v5042
          %v5306 = vunpack.c.l.b16 %v5043
          %v5307 = vunpack.c.l.b16 %v5044
          %v5308 = vunpack.c.l.b16 %v5045
          %v5309 = vunpack.c.l.b16 %v5046
          %v5310 = vunpack.c.l.b16 %v5047
          %v5311 = vunpack.c.l.b16 %v5048
          %v5312 = vunpack.c.l.b16 %v5049
          %v5313 = vunpack.c.l.b16 %v5050
          %v5314 = vunpack.c.l.b16 %v5051
          %v5315 = vunpack.c.l.b16 %v5052
          %v5316 = vunpack.c.l.b16 %v5053
          %v5317 = vunpack.c.l.b16 %v5054
          %v5318 = vunpack.c.l.b16 %v5055
          %v5319 = vunpack.c.l.b16 %v5056
          %v5320 = vunpack.c.l.b16 %v5057
          %v5321 = vunpack.c.l.b16 %v5058
          %v5322 = vunpack.c.l.b16 %v5059
          %v5323 = vunpack.c.l.b16 %v5060
          %v5324 = vunpack.c.l.b16 %v5061
          %v5325 = vunpack.c.l.b16 %v5062
          %v5326 = vunpack.c.l.b16 %v5063
          %v5327 = vunpack.c.l.b16 %v5064
          %v5328 = vunpack.c.l.b16 %v5065
          %v5329 = vunpack.c.l.b16 %v5066
          %v5330 = vunpack.c.l.b16 %v5067
          %v5331 = vunpack.c.l.b16 %v5068
          %v5332 = vunpack.c.l.b16 %v5069
          %v5333 = vunpack.c.l.b16 %v5070
          %v5334 = vunpack.c.l.b16 %v5071
          %v5335 = vunpack.c.l.b16 %v5072
          %v5336 = vunpack.c.l.b16 %v5073
          %v5337 = vunpack.c.l.b16 %v5074
          %v5338 = vunpack.c.l.b16 %v5075
          %v5339 = vunpack.c.l.b16 %v5076
          %v5340 = vunpack.c.l.b16 %v5077
          %v5341 = vunpack.c.l.b16 %v5078
          %v5342 = vunpack.c.l.b16 %v5079
          %v5343 = vunpack.c.l.b16 %v5080
          %v5344 = vunpack.c.l.b16 %v5081
          %v5345 = vunpack.c.l.b16 %v5082
          %v5346 = vunpack.c.l.b16 %v5083
          %v5347 = vunpack.c.l.b16 %v5084
          %v5348 = vunpack.c.l.b16 %v5085
          %v5349 = vunpack.c.l.b16 %v5086
          %v5350 = vunpack.c.l.b16 %v5087
          %v5351 = vunpack.c.l.b16 %v5088
          %v5352 = vunpack.c.l.b16 %v5089
          %v5353 = vunpack.c.l.b16 %v5090
          %v5354 = vunpack.c.l.b16 %v5091
          %v5355 = vunpack.c.l.b16 %v5092
          %v5356 = vunpack.c.l.b16 %v5093
          %v5357 = vunpack.c.l.b16 %v5094
          %v5358 = vunpack.c.l.b16 %v5095
          %v5359 = vunpack.c.l.b16 %v5096
          %v5360 = vunpack.c.l.b16 %v5097
          %v5361 = vunpack.c.l.b16 %v5098
          %v5362 = vunpack.c.l.b16 %v5099
          %v5363 = vunpack.c.l.b16 %v5100
          %v5364 = vunpack.c.l.b16 %v5101
          %v5365 = vunpack.c.l.b16 %v5102
          %v5366 = vunpack.c.l.b16 %v5103
          %v5367 = vunpack.c.l.b16 %v5104
          %v5368 = vunpack.c.l.b16 %v5105
          %v5369 = vunpack.c.l.b16 %v5106
          %v5370 = vunpack.c.l.b16 %v5107
          %v5371 = vunpack.c.l.b16 %v5108
          %v5372 = vunpack.c.l.b16 %v5109
          %v5373 = vunpack.c.l.b16 %v5110
          %v5374 = vunpack.c.l.b16 %v5111
          %v5375 = vunpack.c.l.b16 %v5112
          %v5376 = vunpack.c.l.b16 %v5113
          %v5377 = vunpack.c.l.b16 %v5114
          %v5378 = vunpack.c.l.b16 %v5115
          %v5379 = vunpack.c.l.b16 %v5116
          %v5380 = vunpack.c.l.b16 %v5117
          %v5381 = vunpack.c.l.b16 %v5118
          %v5382 = vunpack.c.l.b16 %v5119
          %v5383 = vunpack.c.l.b16 %v5120
          %v5384 = vunpack.c.l.b16 %v5121
          %v5385 = vunpack.c.l.b16 %v5122
          %v5386 = vunpack.c.l.b16 %v5123
          %v5387 = vunpack.c.l.b16 %v5124
          %v5388 = vunpack.c.l.b16 %v5125
          %v5389 = vunpack.c.l.b16 %v5126
          %v5390 = vunpack.c.l.b16 %v5127
          %v5391 = vunpack.c.l.b16 %v5128
          %v5392 = vunpack.c.l.b16 %v5129
          %v5393 = vunpack.c.l.b16 %v5130
          %v5394 = vunpack.c.l.b16 %v5131
          %v5395 = vunpack.c.l.b16 %v5132
          %v5396 = vunpack.c.l.b16 %v5133
          %v5397 = vunpack.c.l.b16 %v5134
          %v5398 = vunpack.c.l.b16 %v5135
          %v5399 = vunpack.c.l.b16 %v5136
          %v5400 = vunpack.c.l.b16 %v5137
          %v5401 = vunpack.c.l.b16 %v5138
          %v5402 = vunpack.c.l.b16 %v5139
          %v5403 = vunpack.c.l.b16 %v5140
          %v5404 = vunpack.c.l.b16 %v5141
          %v5405 = vunpack.c.l.b16 %v5142
          %v5406 = vunpack.c.l.b16 %v5143
          %v5407 = vunpack.c.l.b16 %v5144
          %v5408 = vunpack.c.l.b16 %v5145
          %v5409 = vunpack.c.l.b16 %v5146
          %v5410 = vunpack.c.l.b16 %v5147
          %v5411 = vunpack.c.l.b16 %v5148
          %v5412 = vunpack.c.l.b16 %v5149
          %v5413 = vunpack.c.l.b16 %v5150
          %v5414 = vunpack.c.l.b16 %v5151
          %v5415 = vunpack.c.l.b16 %v5152
          %v5416 = vunpack.c.l.b16 %v5153
          %v5417 = vunpack.c.l.b16 %v5154
          %v5418 = vunpack.c.l.b16 %v5155
          %v5419 = vunpack.c.l.b16 %v5156
          %v5420 = vpack.c.b16 %v5293, %v5292
          %v5421 = vpack.c.b16 %v5295, %v5294
          %v5422 = vpack.c.b16 %v5297, %v5296
          %v5423 = vpack.c.b16 %v5299, %v5298
          %v5424 = vpack.c.b16 %v5301, %v5300
          %v5425 = vpack.c.b16 %v5303, %v5302
          %v5426 = vpack.c.b16 %v5305, %v5304
          %v5427 = vpack.c.b16 %v5307, %v5306
          %v5428 = vpack.c.b16 %v5309, %v5308
          %v5429 = vpack.c.b16 %v5311, %v5310
          %v5430 = vpack.c.b16 %v5313, %v5312
          %v5431 = vpack.c.b16 %v5315, %v5314
          %v5432 = vpack.c.b16 %v5317, %v5316
          %v5433 = vpack.c.b16 %v5319, %v5318
          %v5434 = vpack.c.b16 %v5321, %v5320
          %v5435 = vpack.c.b16 %v5323, %v5322
          %v5436 = vpack.c.b16 %v5325, %v5324
          %v5437 = vpack.c.b16 %v5327, %v5326
          %v5438 = vpack.c.b16 %v5329, %v5328
          %v5439 = vpack.c.b16 %v5331, %v5330
          %v5440 = vpack.c.b16 %v5333, %v5332
          %v5441 = vpack.c.b16 %v5335, %v5334
          %v5442 = vpack.c.b16 %v5337, %v5336
          %v5443 = vpack.c.b16 %v5339, %v5338
          %v5444 = vpack.c.b16 %v5341, %v5340
          %v5445 = vpack.c.b16 %v5343, %v5342
          %v5446 = vpack.c.b16 %v5345, %v5344
          %v5447 = vpack.c.b16 %v5347, %v5346
          %v5448 = vpack.c.b16 %v5349, %v5348
          %v5449 = vpack.c.b16 %v5351, %v5350
          %v5450 = vpack.c.b16 %v5353, %v5352
          %v5451 = vpack.c.b16 %v5355, %v5354
          %v5452 = vpack.c.b16 %v5357, %v5356
          %v5453 = vpack.c.b16 %v5359, %v5358
          %v5454 = vpack.c.b16 %v5361, %v5360
          %v5455 = vpack.c.b16 %v5363, %v5362
          %v5456 = vpack.c.b16 %v5365, %v5364
          %v5457 = vpack.c.b16 %v5367, %v5366
          %v5458 = vpack.c.b16 %v5369, %v5368
          %v5459 = vpack.c.b16 %v5371, %v5370
          %v5460 = vpack.c.b16 %v5373, %v5372
          %v5461 = vpack.c.b16 %v5375, %v5374
          %v5462 = vpack.c.b16 %v5377, %v5376
          %v5463 = vpack.c.b16 %v5379, %v5378
          %v5464 = vpack.c.b16 %v5381, %v5380
          %v5465 = vpack.c.b16 %v5383, %v5382
          %v5466 = vpack.c.b16 %v5385, %v5384
          %v5467 = vpack.c.b16 %v5387, %v5386
          %v5468 = vpack.c.b16 %v5389, %v5388
          %v5469 = vpack.c.b16 %v5391, %v5390
          %v5470 = vpack.c.b16 %v5393, %v5392
          %v5471 = vpack.c.b16 %v5395, %v5394
          %v5472 = vpack.c.b16 %v5397, %v5396
          %v5473 = vpack.c.b16 %v5399, %v5398
          %v5474 = vpack.c.b16 %v5401, %v5400
          %v5475 = vpack.c.b16 %v5403, %v5402
          %v5476 = vpack.c.b16 %v5405, %v5404
          %v5477 = vpack.c.b16 %v5407, %v5406
          %v5478 = vpack.c.b16 %v5409, %v5408
          %v5479 = vpack.c.b16 %v5411, %v5410
          %v5480 = vpack.c.b16 %v5413, %v5412
          %v5481 = vpack.c.b16 %v5415, %v5414
          %v5482 = vpack.c.b16 %v5417, %v5416
          %v5483 = vpack.c.b16 %v5419, %v5418
          %5548 = vmatprep.subr.bf16.mxu0 0
          %5549 = vmatpush1.bf16.msra.mxu0 %v5427
          %5550 = vmatprep.subr.bf16.mxu0 0
          %5551 = vmatpush1.bf16.msra.mxu0 %v5426
          %5552 = vmatprep.subr.bf16.mxu0 0
          %5553 = vmatpush1.bf16.msra.mxu0 %v5425
          %5554 = vmatprep.subr.bf16.mxu0 0
          %5555 = vmatpush1.bf16.msra.mxu0 %v5424
          %5556 = vmatprep.subr.bf16.mxu0 0
          %5557 = vmatpush1.bf16.msra.mxu0 %v5423
          %5558 = vmatprep.subr.bf16.mxu0 0
          %5559 = vmatpush1.bf16.msra.mxu0 %v5422
          %5560 = vmatprep.subr.bf16.mxu0 0
          %5561 = vmatpush1.bf16.msra.mxu0 %v5421
          %5562 = vmatprep.subr.bf16.mxu0 0
          %5563 = vmatpush1.bf16.msra.mxu0 %v5420
          %5564 = vmatprep.subr.bf16.mxu0 0
          %5565 = vmatpush2.bf16.msra.mxu0 %v5435
          %5566 = vmatprep.subr.bf16.mxu0 0
          %5567 = vmatpush2.bf16.msra.mxu0 %v5434
          %5568 = vmatprep.subr.bf16.mxu0 0
          %5569 = vmatpush2.bf16.msra.mxu0 %v5433
          %5570 = vmatprep.subr.bf16.mxu0 0
          %5571 = vmatpush2.bf16.msra.mxu0 %v5432
          %5572 = vmatprep.subr.bf16.mxu0 0
          %5573 = vmatpush2.bf16.msra.mxu0 %v5431
          %5574 = vmatprep.subr.bf16.mxu0 0
          %5575 = vmatpush2.bf16.msra.mxu0 %v5430
          %5576 = vmatprep.subr.bf16.mxu0 0
          %5577 = vmatpush2.bf16.msra.mxu0 %v5429
          %5578 = vmatprep.subr.bf16.mxu0 0
          %5579 = vmatpush2.bf16.msra.mxu0 %v5428
          %5580 = vmatprep.mubr.bf16.mxu0 %v4974
          %5581 = vmatmul.mubr.bf16.gmra.mxu0 %v4973
          %v5582 = vpop.f32.mrf.mxu0
          %v5583 = vadd.f32 %v5162, %v5582
          %v5584 = vpop.f32.mrf.mxu0
          %v5585 = vpop.f32.mrf.mxu0
          %v5586 = vadd.f32 %v5162, %v5585
          %v5587 = vpop.f32.mrf.mxu0
          %5588 = vmatprep.mubr.bf16.mxu0 %v4982
          %5589 = vmatmul.mubr.bf16.gmra.mxu0 %v4981
          %v5590 = vpop.f32.mrf.mxu0
          %v5591 = vadd.f32 %v5162, %v5590
          %v5592 = vpop.f32.mrf.mxu0
          %v5593 = vpop.f32.mrf.mxu0
          %v5594 = vadd.f32 %v5162, %v5593
          %v5595 = vpop.f32.mrf.mxu0
          %5596 = vmatprep.mubr.bf16.mxu0 %v4990
          %5597 = vmatmul.mubr.bf16.gmra.mxu0 %v4989
          %v5598 = vpop.f32.mrf.mxu0
          %v5599 = vadd.f32 %v5162, %v5598
          %v5600 = vpop.f32.mrf.mxu0
          %v5601 = vpop.f32.mrf.mxu0
          %v5602 = vadd.f32 %v5162, %v5601
          %v5603 = vpop.f32.mrf.mxu0
          %5604 = vmatprep.mubr.bf16.mxu0 %v4998
          %5605 = vmatmul.mubr.bf16.gmra.mxu0 %v4997
          %v5606 = vpop.f32.mrf.mxu0
          %v5607 = vadd.f32 %v5162, %v5606
          %v5608 = vpop.f32.mrf.mxu0
          %v5609 = vpop.f32.mrf.mxu0
          %v5610 = vadd.f32 %v5162, %v5609
          %v5611 = vpop.f32.mrf.mxu0
          %5612 = vmatprep.mubr.bf16.mxu0 %v5006
          %5613 = vmatmul.mubr.bf16.gmra.mxu0 %v5005
          %v5614 = vpop.f32.mrf.mxu0
          %v5615 = vadd.f32 %v5162, %v5614
          %v5616 = vpop.f32.mrf.mxu0
          %v5617 = vpop.f32.mrf.mxu0
          %v5618 = vadd.f32 %v5162, %v5617
          %v5619 = vpop.f32.mrf.mxu0
          %5620 = vmatprep.mubr.bf16.mxu0 %v5014
          %5621 = vmatmul.mubr.bf16.gmra.mxu0 %v5013
          %v5622 = vpop.f32.mrf.mxu0
          %v5623 = vadd.f32 %v5162, %v5622
          %v5624 = vpop.f32.mrf.mxu0
          %v5625 = vpop.f32.mrf.mxu0
          %v5626 = vadd.f32 %v5162, %v5625
          %v5627 = vpop.f32.mrf.mxu0
          %5628 = vmatprep.mubr.bf16.mxu0 %v5022
          %5629 = vmatmul.mubr.bf16.gmra.mxu0 %v5021
          %v5630 = vpop.f32.mrf.mxu0
          %v5631 = vadd.f32 %v5162, %v5630
          %v5632 = vpop.f32.mrf.mxu0
          %v5633 = vpop.f32.mrf.mxu0
          %v5634 = vpop.f32.mrf.mxu0
          %5635 = vdwg.mxu0
          %5636 = vmatprep.subr.bf16.mxu0 0
          %5637 = vmatpush1.bf16.msra.mxu0 %v5443
          %5638 = vmatprep.subr.bf16.mxu0 0
          %5639 = vmatpush1.bf16.msra.mxu0 %v5442
          %5640 = vmatprep.subr.bf16.mxu0 0
          %5641 = vmatpush1.bf16.msra.mxu0 %v5441
          %5642 = vmatprep.subr.bf16.mxu0 0
          %5643 = vmatpush1.bf16.msra.mxu0 %v5440
          %5644 = vmatprep.subr.bf16.mxu0 0
          %5645 = vmatpush1.bf16.msra.mxu0 %v5439
          %5646 = vmatprep.subr.bf16.mxu0 0
          %5647 = vmatpush1.bf16.msra.mxu0 %v5438
          %5648 = vmatprep.subr.bf16.mxu0 0
          %5649 = vmatpush1.bf16.msra.mxu0 %v5437
          %5650 = vmatprep.subr.bf16.mxu0 0
          %5651 = vmatpush1.bf16.msra.mxu0 %v5436
          %5652 = vmatprep.subr.bf16.mxu0 0
          %5653 = vmatpush2.bf16.msra.mxu0 %v5451
          %5654 = vmatprep.subr.bf16.mxu0 0
          %5655 = vmatpush2.bf16.msra.mxu0 %v5450
          %5656 = vmatprep.subr.bf16.mxu0 0
          %5657 = vmatpush2.bf16.msra.mxu0 %v5449
          %5658 = vmatprep.subr.bf16.mxu0 0
          %5659 = vmatpush2.bf16.msra.mxu0 %v5448
          %5660 = vmatprep.subr.bf16.mxu0 0
          %5661 = vmatpush2.bf16.msra.mxu0 %v5447
          %5662 = vmatprep.subr.bf16.mxu0 0
          %5663 = vmatpush2.bf16.msra.mxu0 %v5446
          %5664 = vmatprep.subr.bf16.mxu0 0
          %5665 = vmatpush2.bf16.msra.mxu0 %v5445
          %5666 = vmatprep.subr.bf16.mxu0 0
          %5667 = vmatpush2.bf16.msra.mxu0 %v5444
          %5668 = vmatprep.mubr.bf16.mxu0 %v4976
          %5669 = vmatmul.mubr.bf16.gmra.mxu0 %v4975
          %v5670 = vpop.f32.mrf.mxu0
          %v5671 = vadd.f32 %v5583, %v5670
          %v5672 = vpop.f32.mrf.mxu0
          %v5673 = vpop.f32.mrf.mxu0
          %v5674 = vadd.f32 %v5586, %v5673
          %v5675 = vpop.f32.mrf.mxu0
          %5676 = vmatprep.mubr.bf16.mxu0 %v4984
          %5677 = vmatmul.mubr.bf16.gmra.mxu0 %v4983
          %v5678 = vpop.f32.mrf.mxu0
          %v5679 = vadd.f32 %v5591, %v5678
          %v5680 = vpop.f32.mrf.mxu0
          %v5681 = vpop.f32.mrf.mxu0
          %v5682 = vadd.f32 %v5594, %v5681
          %v5683 = vpop.f32.mrf.mxu0
          %5684 = vmatprep.mubr.bf16.mxu0 %v4992
          %5685 = vmatmul.mubr.bf16.gmra.mxu0 %v4991
          %v5686 = vpop.f32.mrf.mxu0
          %v5687 = vadd.f32 %v5599, %v5686
          %v5688 = vpop.f32.mrf.mxu0
          %v5689 = vpop.f32.mrf.mxu0
          %v5690 = vadd.f32 %v5602, %v5689
          %v5691 = vpop.f32.mrf.mxu0
          %5692 = vmatprep.mubr.bf16.mxu0 %v5000
          %5693 = vmatmul.mubr.bf16.gmra.mxu0 %v4999
          %v5694 = vpop.f32.mrf.mxu0
          %v5695 = vadd.f32 %v5607, %v5694
          %v5696 = vpop.f32.mrf.mxu0
          %v5697 = vpop.f32.mrf.mxu0
          %v5698 = vadd.f32 %v5610, %v5697
          %v5699 = vpop.f32.mrf.mxu0
          %5700 = vmatprep.mubr.bf16.mxu0 %v5008
          %5701 = vmatmul.mubr.bf16.gmra.mxu0 %v5007
          %v5702 = vpop.f32.mrf.mxu0
          %v5703 = vadd.f32 %v5615, %v5702
          %v5704 = vpop.f32.mrf.mxu0
          %v5705 = vpop.f32.mrf.mxu0
          %v5706 = vadd.f32 %v5618, %v5705
          %v5707 = vpop.f32.mrf.mxu0
          %5708 = vmatprep.mubr.bf16.mxu0 %v5016
          %5709 = vmatmul.mubr.bf16.gmra.mxu0 %v5015
          %v5710 = vpop.f32.mrf.mxu0
          %v5711 = vadd.f32 %v5623, %v5710
          %v5712 = vpop.f32.mrf.mxu0
          %v5713 = vpop.f32.mrf.mxu0
          %v5714 = vadd.f32 %v5626, %v5713
          %v5715 = vpop.f32.mrf.mxu0
          %5716 = vmatprep.mubr.bf16.mxu0 %v5024
          %5717 = vmatmul.mubr.bf16.gmra.mxu0 %v5023
          %v5718 = vpop.f32.mrf.mxu0
          %v5719 = vadd.f32 %v5631, %v5718
          %v5720 = vpop.f32.mrf.mxu0
          %v5721 = vpop.f32.mrf.mxu0
          %v5722 = vpop.f32.mrf.mxu0
          %5723 = vdwg.mxu0
          %5724 = vmatprep.subr.bf16.mxu0 0
          %5725 = vmatpush1.bf16.msra.mxu0 %v5459
          %5726 = vmatprep.subr.bf16.mxu0 0
          %5727 = vmatpush1.bf16.msra.mxu0 %v5458
          %5728 = vmatprep.subr.bf16.mxu0 0
          %5729 = vmatpush1.bf16.msra.mxu0 %v5457
          %5730 = vmatprep.subr.bf16.mxu0 0
          %5731 = vmatpush1.bf16.msra.mxu0 %v5456
          %5732 = vmatprep.subr.bf16.mxu0 0
          %5733 = vmatpush1.bf16.msra.mxu0 %v5455
          %5734 = vmatprep.subr.bf16.mxu0 0
          %5735 = vmatpush1.bf16.msra.mxu0 %v5454
          %5736 = vmatprep.subr.bf16.mxu0 0
          %5737 = vmatpush1.bf16.msra.mxu0 %v5453
          %5738 = vmatprep.subr.bf16.mxu0 0
          %5739 = vmatpush1.bf16.msra.mxu0 %v5452
          %5740 = vmatprep.subr.bf16.mxu0 0
          %5741 = vmatpush2.bf16.msra.mxu0 %v5467
          %5742 = vmatprep.subr.bf16.mxu0 0
          %5743 = vmatpush2.bf16.msra.mxu0 %v5466
          %5744 = vmatprep.subr.bf16.mxu0 0
          %5745 = vmatpush2.bf16.msra.mxu0 %v5465
          %5746 = vmatprep.subr.bf16.mxu0 0
          %5747 = vmatpush2.bf16.msra.mxu0 %v5464
          %5748 = vmatprep.subr.bf16.mxu0 0
          %5749 = vmatpush2.bf16.msra.mxu0 %v5463
          %5750 = vmatprep.subr.bf16.mxu0 0
          %5751 = vmatpush2.bf16.msra.mxu0 %v5462
          %5752 = vmatprep.subr.bf16.mxu0 0
          %5753 = vmatpush2.bf16.msra.mxu0 %v5461
          %5754 = vmatprep.subr.bf16.mxu0 0
          %5755 = vmatpush2.bf16.msra.mxu0 %v5460
          %5756 = vmatprep.mubr.bf16.mxu0 %v4978
          %5757 = vmatmul.mubr.bf16.gmra.mxu0 %v4977
          %v5758 = vpop.f32.mrf.mxu0
          %v5759 = vadd.f32 %v5671, %v5758
          %v5760 = vpop.f32.mrf.mxu0
          %v5761 = vpop.f32.mrf.mxu0
          %v5762 = vadd.f32 %v5674, %v5761
          %v5763 = vpop.f32.mrf.mxu0
          %5764 = vmatprep.mubr.bf16.mxu0 %v4986
          %5765 = vmatmul.mubr.bf16.gmra.mxu0 %v4985
          %v5766 = vpop.f32.mrf.mxu0
          %v5767 = vadd.f32 %v5679, %v5766
          %v5768 = vpop.f32.mrf.mxu0
          %v5769 = vpop.f32.mrf.mxu0
          %v5770 = vadd.f32 %v5682, %v5769
          %v5771 = vpop.f32.mrf.mxu0
          %5772 = vmatprep.mubr.bf16.mxu0 %v4994
          %5773 = vmatmul.mubr.bf16.gmra.mxu0 %v4993
          %v5774 = vpop.f32.mrf.mxu0
          %v5775 = vadd.f32 %v5687, %v5774
          %v5776 = vpop.f32.mrf.mxu0
          %v5777 = vpop.f32.mrf.mxu0
          %v5778 = vadd.f32 %v5690, %v5777
          %v5779 = vpop.f32.mrf.mxu0
          %5780 = vmatprep.mubr.bf16.mxu0 %v5002
          %5781 = vmatmul.mubr.bf16.gmra.mxu0 %v5001
          %v5782 = vpop.f32.mrf.mxu0
          %v5783 = vadd.f32 %v5695, %v5782
          %v5784 = vpop.f32.mrf.mxu0
          %v5785 = vpop.f32.mrf.mxu0
          %v5786 = vadd.f32 %v5698, %v5785
          %v5787 = vpop.f32.mrf.mxu0
          %5788 = vmatprep.mubr.bf16.mxu0 %v5010
          %5789 = vmatmul.mubr.bf16.gmra.mxu0 %v5009
          %v5790 = vpop.f32.mrf.mxu0
          %v5791 = vadd.f32 %v5703, %v5790
          %v5792 = vpop.f32.mrf.mxu0
          %v5793 = vpop.f32.mrf.mxu0
          %v5794 = vadd.f32 %v5706, %v5793
          %v5795 = vpop.f32.mrf.mxu0
          %5796 = vmatprep.mubr.bf16.mxu0 %v5018
          %5797 = vmatmul.mubr.bf16.gmra.mxu0 %v5017
          %v5798 = vpop.f32.mrf.mxu0
          %v5799 = vadd.f32 %v5711, %v5798
          %v5800 = vpop.f32.mrf.mxu0
          %v5801 = vpop.f32.mrf.mxu0
          %v5802 = vadd.f32 %v5714, %v5801
          %v5803 = vpop.f32.mrf.mxu0
          %5804 = vmatprep.mubr.bf16.mxu0 %v5026
          %5805 = vmatmul.mubr.bf16.gmra.mxu0 %v5025
          %v5806 = vpop.f32.mrf.mxu0
          %v5807 = vadd.f32 %v5719, %v5806
          %v5808 = vpop.f32.mrf.mxu0
          %v5809 = vpop.f32.mrf.mxu0
          %v5810 = vpop.f32.mrf.mxu0
          %5811 = vdwg.mxu0
          %5812 = vmatprep.subr.bf16.mxu0 0
          %5813 = vmatpush1.bf16.msra.mxu0 %v5475
          %5814 = vmatprep.subr.bf16.mxu0 0
          %5815 = vmatpush1.bf16.msra.mxu0 %v5474
          %5816 = vmatprep.subr.bf16.mxu0 0
          %5817 = vmatpush1.bf16.msra.mxu0 %v5473
          %5818 = vmatprep.subr.bf16.mxu0 0
          %5819 = vmatpush1.bf16.msra.mxu0 %v5472
          %5820 = vmatprep.subr.bf16.mxu0 0
          %5821 = vmatpush1.bf16.msra.mxu0 %v5471
          %5822 = vmatprep.subr.bf16.mxu0 0
          %5823 = vmatpush1.bf16.msra.mxu0 %v5470
          %5824 = vmatprep.subr.bf16.mxu0 0
          %5825 = vmatpush1.bf16.msra.mxu0 %v5469
          %5826 = vmatprep.subr.bf16.mxu0 0
          %5827 = vmatpush1.bf16.msra.mxu0 %v5468
          %5828 = vmatprep.subr.bf16.mxu0 0
          %5829 = vmatpush2.bf16.msra.mxu0 %v5483
          %5830 = vmatprep.subr.bf16.mxu0 0
          %5831 = vmatpush2.bf16.msra.mxu0 %v5482
          %5832 = vmatprep.subr.bf16.mxu0 0
          %5833 = vmatpush2.bf16.msra.mxu0 %v5481
          %5834 = vmatprep.subr.bf16.mxu0 0
          %5835 = vmatpush2.bf16.msra.mxu0 %v5480
          %5836 = vmatprep.subr.bf16.mxu0 0
          %5837 = vmatpush2.bf16.msra.mxu0 %v5479
          %5838 = vmatprep.subr.bf16.mxu0 0
          %5839 = vmatpush2.bf16.msra.mxu0 %v5478
          %5840 = vmatprep.subr.bf16.mxu0 0
          %5841 = vmatpush2.bf16.msra.mxu0 %v5477
          %5842 = vmatprep.subr.bf16.mxu0 0
          %5843 = vmatpush2.bf16.msra.mxu0 %v5476
          %5844 = vmatprep.mubr.bf16.mxu0 %v4980
          %5845 = vmatmul.mubr.bf16.gmra.mxu0 %v4979
          %v5846 = vpop.f32.mrf.mxu0
          %v5847 = vadd.f32 %v5759, %v5846
          %v5848 = vpop.f32.mrf.mxu0
          %v5849 = vpop.f32.mrf.mxu0
          %v5850 = vadd.f32 %v5762, %v5849
          %v5851 = vpop.f32.mrf.mxu0
          %5852 = vmatprep.mubr.bf16.mxu0 %v4988
          %5853 = vmatmul.mubr.bf16.gmra.mxu0 %v4987
          %v5854 = vpop.f32.mrf.mxu0
          %v5855 = vadd.f32 %v5767, %v5854
          %v5856 = vpop.f32.mrf.mxu0
          %v5857 = vpop.f32.mrf.mxu0
          %v5858 = vadd.f32 %v5770, %v5857
          %v5859 = vpop.f32.mrf.mxu0
          %5860 = vmatprep.mubr.bf16.mxu0 %v4996
          %5861 = vmatmul.mubr.bf16.gmra.mxu0 %v4995
          %v5862 = vpop.f32.mrf.mxu0
          %v5863 = vadd.f32 %v5775, %v5862
          %v5864 = vpop.f32.mrf.mxu0
          %v5865 = vpop.f32.mrf.mxu0
          %v5866 = vadd.f32 %v5778, %v5865
          %v5867 = vpop.f32.mrf.mxu0
          %5868 = vmatprep.mubr.bf16.mxu0 %v5004
          %5869 = vmatmul.mubr.bf16.gmra.mxu0 %v5003
          %v5870 = vpop.f32.mrf.mxu0
          %v5871 = vadd.f32 %v5783, %v5870
          %v5872 = vpop.f32.mrf.mxu0
          %v5873 = vpop.f32.mrf.mxu0
          %v5874 = vadd.f32 %v5786, %v5873
          %v5875 = vpop.f32.mrf.mxu0
          %5876 = vmatprep.mubr.bf16.mxu0 %v5012
          %5877 = vmatmul.mubr.bf16.gmra.mxu0 %v5011
          %v5878 = vpop.f32.mrf.mxu0
          %v5879 = vadd.f32 %v5791, %v5878
          %v5880 = vpop.f32.mrf.mxu0
          %v5881 = vpop.f32.mrf.mxu0
          %v5882 = vadd.f32 %v5794, %v5881
          %v5883 = vpop.f32.mrf.mxu0
          %5884 = vmatprep.mubr.bf16.mxu0 %v5020
          %5885 = vmatmul.mubr.bf16.gmra.mxu0 %v5019
          %v5886 = vpop.f32.mrf.mxu0
          %v5887 = vadd.f32 %v5799, %v5886
          %v5888 = vpop.f32.mrf.mxu0
          %v5889 = vpop.f32.mrf.mxu0
          %v5890 = vadd.f32 %v5802, %v5889
          %v5891 = vpop.f32.mrf.mxu0
          %5892 = vmatprep.mubr.bf16.mxu0 %v5028
          %5893 = vmatmul.mubr.bf16.gmra.mxu0 %v5027
          %v5894 = vpop.f32.mrf.mxu0
          %v5895 = vadd.f32 %v5807, %v5894
          %v5896 = vpop.f32.mrf.mxu0
          %v5897 = vpop.f32.mrf.mxu0
          %v5898 = vpop.f32.mrf.mxu0
          %5899 = vdwg.mxu0
          %v5900 = vmax.f32 %v5847, 0.0
          %v5901 = vmax.f32 %v5850, 0.0
          %v5902 = vmax.f32 %v5855, 0.0
          %v5903 = vmax.f32 %v5858, 0.0
          %v5904 = vmax.f32 %v5863, 0.0
          %v5905 = vmax.f32 %v5866, 0.0
          %v5906 = vmax.f32 %v5871, 0.0
          %v5907 = vmax.f32 %v5874, 0.0
          %v5908 = vmax.f32 %v5879, 0.0
          %v5909 = vmax.f32 %v5882, 0.0
          %v5910 = vmax.f32 %v5887, 0.0
          %v5911 = vmax.f32 %v5890, 0.0
          %v5912 = vmax.f32 %v5895, 0.0
          %v5913 = vadd.f32 %v5900, %v5901
          %v5914 = vadd.f32 %v5913, %v5902
          %v5915 = vadd.f32 %v5914, %v5903
          %v5916 = vadd.f32 %v5915, %v5904
          %v5917 = vadd.f32 %v5916, %v5905
          %v5918 = vadd.f32 %v5917, %v5906
          %v5919 = vadd.f32 %v5918, %v5907
          %v5920 = vadd.f32 %v5919, %v5908
          %v5921 = vadd.f32 %v5920, %v5909
          %v5922 = vadd.f32 %v5921, %v5910
          %v5923 = vadd.f32 %v5922, %v5911
          %v5924 = vsel %vm4042, %v5912, 0.0
          %v5925 = vadd.f32 %v5923, %v5924
          %v5926 = vrot.slane %v5925, 4
          %v5927 = vadd.f32 %v5925, %v5926
          %v5928 = vrot.slane %v5927, 2
          %v5929 = vadd.f32 %v5927, %v5928
          %v5930 = vrot.slane %v5929, 1
          %v5931 = vadd.f32 %v5929, %v5930
          %v5932 = vmul.f32 %v5931, %v4184
          %v5933 = vsub.f32 %v5900, %v5932
          %v5934 = vsub.f32 %v5901, %v5932
          %v5935 = vsub.f32 %v5902, %v5932
          %v5936 = vsub.f32 %v5903, %v5932
          %v5937 = vsub.f32 %v5904, %v5932
          %v5938 = vsub.f32 %v5905, %v5932
          %v5939 = vsub.f32 %v5906, %v5932
          %v5940 = vsub.f32 %v5907, %v5932
          %v5941 = vsub.f32 %v5908, %v5932
          %v5942 = vsub.f32 %v5909, %v5932
          %v5943 = vsub.f32 %v5910, %v5932
          %v5944 = vsub.f32 %v5911, %v5932
          %v5945 = vsub.f32 %v5912, %v5932
          %v5946 = vmul.f32 %v5933, %v5933
          %v5947 = vmul.f32 %v5934, %v5934
          %v5948 = vmul.f32 %v5935, %v5935
          %v5949 = vmul.f32 %v5936, %v5936
          %v5950 = vmul.f32 %v5937, %v5937
          %v5951 = vmul.f32 %v5938, %v5938
          %v5952 = vmul.f32 %v5939, %v5939
          %v5953 = vmul.f32 %v5940, %v5940
          %v5954 = vmul.f32 %v5941, %v5941
          %v5955 = vmul.f32 %v5942, %v5942
          %v5956 = vmul.f32 %v5943, %v5943
          %v5957 = vmul.f32 %v5944, %v5944
          %v5958 = vmul.f32 %v5945, %v5945
          %v5959 = vadd.f32 %v5946, %v5947
          %v5960 = vadd.f32 %v5959, %v5948
          %v5961 = vadd.f32 %v5960, %v5949
          %v5962 = vadd.f32 %v5961, %v5950
          %v5963 = vadd.f32 %v5962, %v5951
          %v5964 = vadd.f32 %v5963, %v5952
          %v5965 = vadd.f32 %v5964, %v5953
          %v5966 = vadd.f32 %v5965, %v5954
          %v5967 = vadd.f32 %v5966, %v5955
          %v5968 = vadd.f32 %v5967, %v5956
          %v5969 = vadd.f32 %v5968, %v5957
          %v5970 = vsel %vm4042, %v5958, 0.0
          %v5971 = vadd.f32 %v5969, %v5970
          %v5972 = vrot.slane %v5971, 4
          %v5973 = vadd.f32 %v5971, %v5972
          %v5974 = vrot.slane %v5973, 2
          %v5975 = vadd.f32 %v5973, %v5974
          %v5976 = vrot.slane %v5975, 1
          %v5977 = vadd.f32 %v5975, %v5976
          %v5978 = vmul.f32 %v5977, %v4184
          %v5979 = vadd.f32 %v5978, 1e-05
          %v5980 = vrsqrt.pop %v5979
          %v5981 = vmul.f32 %v5933, %v5980
          %v5982 = vmul.f32 %v5934, %v5980
          %v5983 = vmul.f32 %v5935, %v5980
          %v5984 = vmul.f32 %v5936, %v5980
          %v5985 = vmul.f32 %v5937, %v5980
          %v5986 = vmul.f32 %v5938, %v5980
          %v5987 = vmul.f32 %v5939, %v5980
          %v5988 = vmul.f32 %v5940, %v5980
          %v5989 = vmul.f32 %v5941, %v5980
          %v5990 = vmul.f32 %v5942, %v5980
          %v5991 = vmul.f32 %v5943, %v5980
          %v5992 = vmul.f32 %v5944, %v5980
          %v5993 = vmul.f32 %v5945, %v5980
          %v5994 = vld [vmem:[#allocation16] sm:$0x1]
          %v5996 = vlaneseq
          %v5997 = vshrl.u32 %v5996, 7
          %v5998 = vsub.s32 0, %v5997
          %v5999 = vrot.slane %v5994, %v5998
          %v6001 = vmul.f32 %v5981, %v5999
          %v6002 = vmul.f32 %v5982, %v5999
          %v6003 = vmul.f32 %v5983, %v5999
          %v6004 = vmul.f32 %v5984, %v5999
          %v6005 = vmul.f32 %v5985, %v5999
          %v6006 = vmul.f32 %v5986, %v5999
          %v6007 = vmul.f32 %v5987, %v5999
          %v6008 = vmul.f32 %v5988, %v5999
          %v6009 = vmul.f32 %v5989, %v5999
          %v6010 = vmul.f32 %v5990, %v5999
          %v6011 = vmul.f32 %v5991, %v5999
          %v6012 = vmul.f32 %v5992, %v5999
          %v6013 = vmul.f32 %v5993, %v5999
          %v6014 = vld [vmem:[#allocation17] sm:$0x1]
          %v6016 = vlaneseq
          %v6017 = vshrl.u32 %v6016, 7
          %v6018 = vsub.s32 0, %v6017
          %v6019 = vrot.slane %v6014, %v6018
          %v6021 = vadd.f32 %v6001, %v6019
          %v6022 = vadd.f32 %v6002, %v6019
          %v6023 = vadd.f32 %v6003, %v6019
          %v6024 = vadd.f32 %v6004, %v6019
          %v6025 = vadd.f32 %v6005, %v6019
          %v6026 = vadd.f32 %v6006, %v6019
          %v6027 = vadd.f32 %v6007, %v6019
          %v6028 = vadd.f32 %v6008, %v6019
          %v6029 = vadd.f32 %v6009, %v6019
          %v6030 = vadd.f32 %v6010, %v6019
          %v6031 = vadd.f32 %v6011, %v6019
          %v6032 = vadd.f32 %v6012, %v6019
          %v6033 = vadd.f32 %v6013, %v6019
          %v6034 = vpack.c.bf16 %v6022, %v6021
          %v6035 = vpack.c.bf16 %v6024, %v6023
          %v6036 = vpack.c.bf16 %v6026, %v6025
          %v6037 = vpack.c.bf16 %v6028, %v6027
          %v6038 = vpack.c.bf16 %v6030, %v6029
          %v6039 = vpack.c.bf16 %v6032, %v6031
          %v6040 = vpack.c.bf16 %v6033, %v6033
          %v6041 = vld [vmem:[%s9] sm:$0xf]
          %v6042 = vld [vmem:[%s9 + $0x4] sm:$0xf]
          %v6043 = vld [vmem:[%s9 + $0x8] sm:$0xf]
          %v6044 = vld [vmem:[%s9 + $0xc] sm:$0xf]
          %v6045 = vld [vmem:[%s9 + $0x10] sm:$0xf]
          %v6046 = vld [vmem:[%s9 + $0x14] sm:$0xf]
          %v6047 = vld [vmem:[%s9 + $0x18] sm:$0xf]
          %v6048 = vld [vmem:[%s9 + $0x1c] sm:$0xf]
          %v6049 = vld [vmem:[%s9 + $0x20] sm:$0xf]
          %v6050 = vld [vmem:[%s9 + $0x24] sm:$0xf]
          %v6051 = vld [vmem:[%s9 + $0x28] sm:$0xf]
          %v6052 = vld [vmem:[%s9 + $0x2c] sm:$0xf]
          %v6053 = vld [vmem:[%s9 + $0x30] sm:$0xf]
          %v6054 = vld [vmem:[%s9 + $0x34] sm:$0xf]
          %v6055 = vld [vmem:[%s9 + $0x38] sm:$0xf]
          %v6056 = vld [vmem:[%s9 + $0x3c] sm:$0xf]
          %v6057 = vld [vmem:[#allocation19] sm:$0x1]
          %v6059 = vlaneseq
          %v6060 = vshrl.u32 %v6059, 7
          %v6061 = vsub.s32 0, %v6060
          %v6062 = vrot.slane %v6057, %v6061
          %v6080 = vunpack.c.l.b16 %v6041
          %v6081 = vunpack.c.l.b16 %v6042
          %v6082 = vunpack.c.l.b16 %v6043
          %v6083 = vunpack.c.l.b16 %v6044
          %v6084 = vunpack.c.l.b16 %v6045
          %v6085 = vunpack.c.l.b16 %v6046
          %v6086 = vunpack.c.l.b16 %v6047
          %v6087 = vunpack.c.l.b16 %v6048
          %v6088 = vunpack.c.l.b16 %v6049
          %v6089 = vunpack.c.l.b16 %v6050
          %v6090 = vunpack.c.l.b16 %v6051
          %v6091 = vunpack.c.l.b16 %v6052
          %v6092 = vunpack.c.l.b16 %v6053
          %v6093 = vunpack.c.l.b16 %v6054
          %v6094 = vunpack.c.l.b16 %v6055
          %v6095 = vunpack.c.l.b16 %v6056
          %v6096 = vpack.c.b16 %v6081, %v6080
          %v6097 = vpack.c.b16 %v6083, %v6082
          %v6098 = vpack.c.b16 %v6085, %v6084
          %v6099 = vpack.c.b16 %v6087, %v6086
          %v6100 = vpack.c.b16 %v6089, %v6088
          %v6101 = vpack.c.b16 %v6091, %v6090
          %v6102 = vpack.c.b16 %v6093, %v6092
          %v6103 = vpack.c.b16 %v6095, %v6094
          %6112 = vmatprep.subr.bf16.mxu0 0
          %6113 = vmatpush1.bf16.msra.mxu0 %v6103
          %6114 = vmatprep.subr.bf16.mxu0 0
          %6115 = vmatpush1.bf16.msra.mxu0 %v6102
          %6116 = vmatprep.subr.bf16.mxu0 0
          %6117 = vmatpush1.bf16.msra.mxu0 %v6101
          %6118 = vmatprep.subr.bf16.mxu0 0
          %6119 = vmatpush1.bf16.msra.mxu0 %v6100
          %6120 = vmatprep.subr.bf16.mxu0 0
          %6121 = vmatpush1.bf16.msra.mxu0 %v6099
          %6122 = vmatprep.subr.bf16.mxu0 0
          %6123 = vmatpush1.bf16.msra.mxu0 %v6098
          %6124 = vmatprep.subr.bf16.mxu0 0
          %6125 = vmatpush1.bf16.msra.mxu0 %v6097
          %6126 = vmatprep.subr.bf16.mxu0 0
          %6127 = vmatpush1.bf16.msra.mxu0 %v6096
          %6128 = vmatprep.subr.bf16.mxu0 0
          %6129 = vmatpush2.bf16.msra.mxu0 0
          %6130 = vmatprep.subr.bf16.mxu0 0
          %6131 = vmatpush2.bf16.msra.mxu0 0
          %6132 = vmatprep.subr.bf16.mxu0 0
          %6133 = vmatpush2.bf16.msra.mxu0 0
          %6134 = vmatprep.subr.bf16.mxu0 0
          %6135 = vmatpush2.bf16.msra.mxu0 0
          %6136 = vmatprep.subr.bf16.mxu0 0
          %6137 = vmatpush2.bf16.msra.mxu0 0
          %6138 = vmatprep.subr.bf16.mxu0 0
          %6139 = vmatpush2.bf16.msra.mxu0 0
          %6140 = vmatprep.subr.bf16.mxu0 0
          %6141 = vmatpush2.bf16.msra.mxu0 0
          %6142 = vmatprep.subr.bf16.mxu0 0
          %6143 = vmatpush2.bf16.msra.mxu0 0
          %6144 = vmatprep.mubr.bf16.mxu0 0
          %6145 = vmatmul.mubr.bf16.gmra.mxu0 %v6034
          %v6146 = vpop.f32.mrf.mxu0
          %v6147 = vadd.f32 %v6062, %v6146
          %v6148 = vpop.f32.mrf.mxu0
          %v6149 = vpop.f32.mrf.mxu0
          %v6150 = vadd.f32 %v6062, %v6149
          %v6151 = vpop.f32.mrf.mxu0
          %6152 = vmatprep.mubr.bf16.mxu0 0
          %6153 = vmatmul.mubr.bf16.gmra.mxu0 %v6035
          %v6154 = vpop.f32.mrf.mxu0
          %v6155 = vadd.f32 %v6062, %v6154
          %v6156 = vpop.f32.mrf.mxu0
          %v6157 = vpop.f32.mrf.mxu0
          %v6158 = vadd.f32 %v6062, %v6157
          %v6159 = vpop.f32.mrf.mxu0
          %6160 = vmatprep.mubr.bf16.mxu0 0
          %6161 = vmatmul.mubr.bf16.gmra.mxu0 %v6036
          %v6162 = vpop.f32.mrf.mxu0
          %v6163 = vadd.f32 %v6062, %v6162
          %v6164 = vpop.f32.mrf.mxu0
          %v6165 = vpop.f32.mrf.mxu0
          %v6166 = vadd.f32 %v6062, %v6165
          %v6167 = vpop.f32.mrf.mxu0
          %6168 = vmatprep.mubr.bf16.mxu0 0
          %6169 = vmatmul.mubr.bf16.gmra.mxu0 %v6037
          %v6170 = vpop.f32.mrf.mxu0
          %v6171 = vadd.f32 %v6062, %v6170
          %v6172 = vpop.f32.mrf.mxu0
          %v6173 = vpop.f32.mrf.mxu0
          %v6174 = vadd.f32 %v6062, %v6173
          %v6175 = vpop.f32.mrf.mxu0
          %6176 = vmatprep.mubr.bf16.mxu0 0
          %6177 = vmatmul.mubr.bf16.gmra.mxu0 %v6038
          %v6178 = vpop.f32.mrf.mxu0
          %v6179 = vadd.f32 %v6062, %v6178
          %v6180 = vpop.f32.mrf.mxu0
          %v6181 = vpop.f32.mrf.mxu0
          %v6182 = vadd.f32 %v6062, %v6181
          %v6183 = vpop.f32.mrf.mxu0
          %6184 = vmatprep.mubr.bf16.mxu0 0
          %6185 = vmatmul.mubr.bf16.gmra.mxu0 %v6039
          %v6186 = vpop.f32.mrf.mxu0
          %v6187 = vadd.f32 %v6062, %v6186
          %v6188 = vpop.f32.mrf.mxu0
          %v6189 = vpop.f32.mrf.mxu0
          %v6190 = vadd.f32 %v6062, %v6189
          %v6191 = vpop.f32.mrf.mxu0
          %6192 = vmatprep.mubr.bf16.mxu0 0
          %6193 = vmatmul.mubr.bf16.gmra.mxu0 %v6040
          %v6194 = vpop.f32.mrf.mxu0
          %v6195 = vadd.f32 %v6062, %v6194
          %v6196 = vpop.f32.mrf.mxu0
          %v6197 = vpop.f32.mrf.mxu0
          %v6198 = vpop.f32.mrf.mxu0
          %6199 = vdwg.mxu0
          %v6200 = vmax.f32 %v6147, 0.0
          %v6201 = vmax.f32 %v6150, 0.0
          %v6202 = vmax.f32 %v6155, 0.0
          %v6203 = vmax.f32 %v6158, 0.0
          %v6204 = vmax.f32 %v6163, 0.0
          %v6205 = vmax.f32 %v6166, 0.0
          %v6206 = vmax.f32 %v6171, 0.0
          %v6207 = vmax.f32 %v6174, 0.0
          %v6208 = vmax.f32 %v6179, 0.0
          %v6209 = vmax.f32 %v6182, 0.0
          %v6210 = vmax.f32 %v6187, 0.0
          %v6211 = vmax.f32 %v6190, 0.0
          %v6212 = vmax.f32 %v6195, 0.0
          %vm6213 = vcmask 261120
          %v6214 = vsel %vm6213, %v6200, 0.0
          %v6215 = vsel %vm6213, %v6201, 0.0
          %v6216 = vadd.f32 %v6214, %v6215
          %v6217 = vsel %vm6213, %v6202, 0.0
          %v6218 = vadd.f32 %v6216, %v6217
          %v6219 = vsel %vm6213, %v6203, 0.0
          %v6220 = vadd.f32 %v6218, %v6219
          %v6221 = vsel %vm6213, %v6204, 0.0
          %v6222 = vadd.f32 %v6220, %v6221
          %v6223 = vsel %vm6213, %v6205, 0.0
          %v6224 = vadd.f32 %v6222, %v6223
          %v6225 = vsel %vm6213, %v6206, 0.0
          %v6226 = vadd.f32 %v6224, %v6225
          %v6227 = vsel %vm6213, %v6207, 0.0
          %v6228 = vadd.f32 %v6226, %v6227
          %v6229 = vsel %vm6213, %v6208, 0.0
          %v6230 = vadd.f32 %v6228, %v6229
          %v6231 = vsel %vm6213, %v6209, 0.0
          %v6232 = vadd.f32 %v6230, %v6231
          %v6233 = vsel %vm6213, %v6210, 0.0
          %v6234 = vadd.f32 %v6232, %v6233
          %v6235 = vsel %vm6213, %v6211, 0.0
          %v6236 = vadd.f32 %v6234, %v6235
          %vm6237 = vcmask 254976
          %v6238 = vsel %vm6237, %v6212, 0.0
          %v6239 = vadd.f32 %v6236, %v6238
          %v6240 = vrot.slane %v6239, 4
          %v6241 = vadd.f32 %v6239, %v6240
          %v6242 = vrot.slane %v6241, 2
          %v6243 = vadd.f32 %v6241, %v6242
          %v6244 = vrot.slane %v6243, 1
          %v6245 = vadd.f32 %v6243, %v6244
          %v6246 = vmul.f32 %v6245, %v4184
          %v6247 = vsub.f32 %v6200, %v6246
          %v6248 = vsub.f32 %v6201, %v6246
          %v6249 = vsub.f32 %v6202, %v6246
          %v6250 = vsub.f32 %v6203, %v6246
          %v6251 = vsub.f32 %v6204, %v6246
          %v6252 = vsub.f32 %v6205, %v6246
          %v6253 = vsub.f32 %v6206, %v6246
          %v6254 = vsub.f32 %v6207, %v6246
          %v6255 = vsub.f32 %v6208, %v6246
          %v6256 = vsub.f32 %v6209, %v6246
          %v6257 = vsub.f32 %v6210, %v6246
          %v6258 = vsub.f32 %v6211, %v6246
          %v6259 = vsub.f32 %v6212, %v6246
          %v6260 = vmul.f32 %v6247, %v6247
          %v6261 = vmul.f32 %v6248, %v6248
          %v6262 = vmul.f32 %v6249, %v6249
          %v6263 = vmul.f32 %v6250, %v6250
          %v6264 = vmul.f32 %v6251, %v6251
          %v6265 = vmul.f32 %v6252, %v6252
          %v6266 = vmul.f32 %v6253, %v6253
          %v6267 = vmul.f32 %v6254, %v6254
          %v6268 = vmul.f32 %v6255, %v6255
          %v6269 = vmul.f32 %v6256, %v6256
          %v6270 = vmul.f32 %v6257, %v6257
          %v6271 = vmul.f32 %v6258, %v6258
          %v6272 = vmul.f32 %v6259, %v6259
          %v6273 = vsel %vm6213, %v6260, 0.0
          %v6274 = vsel %vm6213, %v6261, 0.0
          %v6275 = vadd.f32 %v6273, %v6274
          %v6276 = vsel %vm6213, %v6262, 0.0
          %v6277 = vadd.f32 %v6275, %v6276
          %v6278 = vsel %vm6213, %v6263, 0.0
          %v6279 = vadd.f32 %v6277, %v6278
          %v6280 = vsel %vm6213, %v6264, 0.0
          %v6281 = vadd.f32 %v6279, %v6280
          %v6282 = vsel %vm6213, %v6265, 0.0
          %v6283 = vadd.f32 %v6281, %v6282
          %v6284 = vsel %vm6213, %v6266, 0.0
          %v6285 = vadd.f32 %v6283, %v6284
          %v6286 = vsel %vm6213, %v6267, 0.0
          %v6287 = vadd.f32 %v6285, %v6286
          %v6288 = vsel %vm6213, %v6268, 0.0
          %v6289 = vadd.f32 %v6287, %v6288
          %v6290 = vsel %vm6213, %v6269, 0.0
          %v6291 = vadd.f32 %v6289, %v6290
          %v6292 = vsel %vm6213, %v6270, 0.0
          %v6293 = vadd.f32 %v6291, %v6292
          %v6294 = vsel %vm6213, %v6271, 0.0
          %v6295 = vadd.f32 %v6293, %v6294
          %v6296 = vsel %vm6237, %v6272, 0.0
          %v6297 = vadd.f32 %v6295, %v6296
          %v6298 = vrot.slane %v6297, 4
          %v6299 = vadd.f32 %v6297, %v6298
          %v6300 = vrot.slane %v6299, 2
          %v6301 = vadd.f32 %v6299, %v6300
          %v6302 = vrot.slane %v6301, 1
          %v6303 = vadd.f32 %v6301, %v6302
          %v6304 = vmul.f32 %v6303, %v4184
          %v6305 = vadd.f32 %v6304, 1e-05
          %v6306 = vrsqrt.pop %v6305
          %v6307 = vmul.f32 %v6247, %v6306
          %v6308 = vmul.f32 %v6248, %v6306
          %v6309 = vmul.f32 %v6249, %v6306
          %v6310 = vmul.f32 %v6250, %v6306
          %v6311 = vmul.f32 %v6251, %v6306
          %v6312 = vmul.f32 %v6252, %v6306
          %v6313 = vmul.f32 %v6253, %v6306
          %v6314 = vmul.f32 %v6254, %v6306
          %v6315 = vmul.f32 %v6255, %v6306
          %v6316 = vmul.f32 %v6256, %v6306
          %v6317 = vmul.f32 %v6257, %v6306
          %v6318 = vmul.f32 %v6258, %v6306
          %v6319 = vmul.f32 %v6259, %v6306
          %v6320 = vld [vmem:[#allocation20] sm:$0x1]
          %v6322 = vlaneseq
          %v6323 = vshrl.u32 %v6322, 7
          %v6324 = vsub.s32 0, %v6323
          %v6325 = vrot.slane %v6320, %v6324
          %v6327 = vmul.f32 %v6307, %v6325
          %v6328 = vmul.f32 %v6308, %v6325
          %v6329 = vmul.f32 %v6309, %v6325
          %v6330 = vmul.f32 %v6310, %v6325
          %v6331 = vmul.f32 %v6311, %v6325
          %v6332 = vmul.f32 %v6312, %v6325
          %v6333 = vmul.f32 %v6313, %v6325
          %v6334 = vmul.f32 %v6314, %v6325
          %v6335 = vmul.f32 %v6315, %v6325
          %v6336 = vmul.f32 %v6316, %v6325
          %v6337 = vmul.f32 %v6317, %v6325
          %v6338 = vmul.f32 %v6318, %v6325
          %v6339 = vmul.f32 %v6319, %v6325
          %v6340 = vld [vmem:[#allocation22] sm:$0x1]
          %v6342 = vlaneseq
          %v6343 = vshrl.u32 %v6342, 7
          %v6344 = vsub.s32 0, %v6343
          %v6345 = vrot.slane %v6340, %v6344
          %v6347 = vadd.f32 %v6327, %v6345
          %v6348 = vadd.f32 %v6328, %v6345
          %v6349 = vadd.f32 %v6329, %v6345
          %v6350 = vadd.f32 %v6330, %v6345
          %v6351 = vadd.f32 %v6331, %v6345
          %v6352 = vadd.f32 %v6332, %v6345
          %v6353 = vadd.f32 %v6333, %v6345
          %v6354 = vadd.f32 %v6334, %v6345
          %v6355 = vadd.f32 %v6335, %v6345
          %v6356 = vadd.f32 %v6336, %v6345
          %v6357 = vadd.f32 %v6337, %v6345
          %v6358 = vadd.f32 %v6338, %v6345
          %v6359 = vadd.f32 %v6339, %v6345
          %6360 = vst.msk [vmem:[#allocation3] sm:$0x3] %vm6237, %v6347
          %v6363 = vunpack.c.l.s4 1983009808
          %v6364 = vunpack.c.0.s8 %v6363
          %v6365 = vlaneseq
          %v6366 = vshrl.u32 %v6365, 7
          %v6367 = vsub.s32 %v6364, %v6366
          %v6368 = vrot.slane %v6347, %v6367
          %v6369 = vcombine.high %v6368, %v6368
          %6370 = vrot.lane.b32.xlu0 %v6369, 32
          %v6371 = vpop.permute.xlu0 %6370
          %vm6373 = vcmask 517376
          %6374 = vst.msk [vmem:[#allocation3] sm:$0x3] %vm6373, %v6371
          %v6375 = vcombine.high %v6347, %v6347
          %v6377 = vunpack.c.l.s4 1983009808
          %v6378 = vunpack.c.0.s8 %v6377
          %v6379 = vlaneseq
          %v6380 = vshrl.u32 %v6379, 7
          %v6381 = vsub.s32 %v6378, %v6380
          %v6382 = vrot.slane %v6375, %v6381
          %6383 = vrot.lane.b32.xlu0 %v6382, 64
          %v6384 = vpop.permute.xlu0 %6383
          %vm6386 = vcmask 779776
          %6387 = vst.msk [vmem:[#allocation3] sm:$0x3] %vm6386, %v6384
          %v6388 = vcombine.high %v6382, %v6382
          %6389 = vrot.lane.b32.xlu0 %v6388, 96
          %v6390 = vpop.permute.xlu0 %6389
          %vm6392 = vcmask 1042176
          %6393 = vst.msk [vmem:[#allocation3] sm:$0x3] %vm6392, %v6390
          %6394 = vst.msk [vmem:[#allocation3 + $0x2] sm:$0x3] %vm6237, %v6348
          %v6397 = vunpack.c.l.s4 1983009808
          %v6398 = vunpack.c.0.s8 %v6397
          %v6399 = vlaneseq
          %v6400 = vshrl.u32 %v6399, 7
          %v6401 = vsub.s32 %v6398, %v6400
          %v6402 = vrot.slane %v6348, %v6401
          %v6403 = vcombine.high %v6402, %v6402
          %6404 = vrot.lane.b32.xlu0 %v6403, 32
          %v6405 = vpop.permute.xlu0 %6404
          %6407 = vst.msk [vmem:[#allocation3 + $0x2] sm:$0x3] %vm6373, %v6405
          %v6408 = vcombine.high %v6348, %v6348
          %v6410 = vunpack.c.l.s4 1983009808
          %v6411 = vunpack.c.0.s8 %v6410
          %v6412 = vlaneseq
          %v6413 = vshrl.u32 %v6412, 7
          %v6414 = vsub.s32 %v6411, %v6413
          %v6415 = vrot.slane %v6408, %v6414
          %6416 = vrot.lane.b32.xlu0 %v6415, 64
          %v6417 = vpop.permute.xlu0 %6416
          %6419 = vst.msk [vmem:[#allocation3 + $0x2] sm:$0x3] %vm6386, %v6417
          %v6420 = vcombine.high %v6415, %v6415
          %6421 = vrot.lane.b32.xlu0 %v6420, 96
          %v6422 = vpop.permute.xlu0 %6421
          %6424 = vst.msk [vmem:[#allocation3 + $0x2] sm:$0x3] %vm6392, %v6422
          %6425 = vst.msk [vmem:[#allocation3 + $0x4] sm:$0x3] %vm6237, %v6349
          %v6428 = vunpack.c.l.s4 1983009808
          %v6429 = vunpack.c.0.s8 %v6428
          %v6430 = vlaneseq
          %v6431 = vshrl.u32 %v6430, 7
          %v6432 = vsub.s32 %v6429, %v6431
          %v6433 = vrot.slane %v6349, %v6432
          %v6434 = vcombine.high %v6433, %v6433
          %6435 = vrot.lane.b32.xlu0 %v6434, 32
          %v6436 = vpop.permute.xlu0 %6435
          %6438 = vst.msk [vmem:[#allocation3 + $0x4] sm:$0x3] %vm6373, %v6436
          %v6439 = vcombine.high %v6349, %v6349
          %v6441 = vunpack.c.l.s4 1983009808
          %v6442 = vunpack.c.0.s8 %v6441
          %v6443 = vlaneseq
          %v6444 = vshrl.u32 %v6443, 7
          %v6445 = vsub.s32 %v6442, %v6444
          %v6446 = vrot.slane %v6439, %v6445
          %6447 = vrot.lane.b32.xlu0 %v6446, 64
          %v6448 = vpop.permute.xlu0 %6447
          %6450 = vst.msk [vmem:[#allocation3 + $0x4] sm:$0x3] %vm6386, %v6448
          %v6451 = vcombine.high %v6446, %v6446
          %6452 = vrot.lane.b32.xlu0 %v6451, 96
          %v6453 = vpop.permute.xlu0 %6452
          %6455 = vst.msk [vmem:[#allocation3 + $0x4] sm:$0x3] %vm6392, %v6453
          %6456 = vst.msk [vmem:[#allocation3 + $0x6] sm:$0x3] %vm6237, %v6350
          %v6459 = vunpack.c.l.s4 1983009808
          %v6460 = vunpack.c.0.s8 %v6459
          %v6461 = vlaneseq
          %v6462 = vshrl.u32 %v6461, 7
          %v6463 = vsub.s32 %v6460, %v6462
          %v6464 = vrot.slane %v6350, %v6463
          %v6465 = vcombine.high %v6464, %v6464
          %6466 = vrot.lane.b32.xlu0 %v6465, 32
          %v6467 = vpop.permute.xlu0 %6466
          %6469 = vst.msk [vmem:[#allocation3 + $0x6] sm:$0x3] %vm6373, %v6467
          %v6470 = vcombine.high %v6350, %v6350
          %v6472 = vunpack.c.l.s4 1983009808
          %v6473 = vunpack.c.0.s8 %v6472
          %v6474 = vlaneseq
          %v6475 = vshrl.u32 %v6474, 7
          %v6476 = vsub.s32 %v6473, %v6475
          %v6477 = vrot.slane %v6470, %v6476
          %6478 = vrot.lane.b32.xlu0 %v6477, 64
          %v6479 = vpop.permute.xlu0 %6478
          %6481 = vst.msk [vmem:[#allocation3 + $0x6] sm:$0x3] %vm6386, %v6479
          %v6482 = vcombine.high %v6477, %v6477
          %6483 = vrot.lane.b32.xlu0 %v6482, 96
          %v6484 = vpop.permute.xlu0 %6483
          %6486 = vst.msk [vmem:[#allocation3 + $0x6] sm:$0x3] %vm6392, %v6484
          %6487 = vst.msk [vmem:[#allocation3 + $0x8] sm:$0x3] %vm6237, %v6351
          %v6490 = vunpack.c.l.s4 1983009808
          %v6491 = vunpack.c.0.s8 %v6490
          %v6492 = vlaneseq
          %v6493 = vshrl.u32 %v6492, 7
          %v6494 = vsub.s32 %v6491, %v6493
          %v6495 = vrot.slane %v6351, %v6494
          %v6496 = vcombine.high %v6495, %v6495
          %6497 = vrot.lane.b32.xlu0 %v6496, 32
          %v6498 = vpop.permute.xlu0 %6497
          %6500 = vst.msk [vmem:[#allocation3 + $0x8] sm:$0x3] %vm6373, %v6498
          %v6501 = vcombine.high %v6351, %v6351
          %v6503 = vunpack.c.l.s4 1983009808
          %v6504 = vunpack.c.0.s8 %v6503
          %v6505 = vlaneseq
          %v6506 = vshrl.u32 %v6505, 7
          %v6507 = vsub.s32 %v6504, %v6506
          %v6508 = vrot.slane %v6501, %v6507
          %6509 = vrot.lane.b32.xlu0 %v6508, 64
          %v6510 = vpop.permute.xlu0 %6509
          %6512 = vst.msk [vmem:[#allocation3 + $0x8] sm:$0x3] %vm6386, %v6510
          %v6513 = vcombine.high %v6508, %v6508
          %6514 = vrot.lane.b32.xlu0 %v6513, 96
          %v6515 = vpop.permute.xlu0 %6514
          %6517 = vst.msk [vmem:[#allocation3 + $0x8] sm:$0x3] %vm6392, %v6515
          %6518 = vst.msk [vmem:[#allocation3 + $0xa] sm:$0x3] %vm6237, %v6352
          %v6521 = vunpack.c.l.s4 1983009808
          %v6522 = vunpack.c.0.s8 %v6521
          %v6523 = vlaneseq
          %v6524 = vshrl.u32 %v6523, 7
          %v6525 = vsub.s32 %v6522, %v6524
          %v6526 = vrot.slane %v6352, %v6525
          %v6527 = vcombine.high %v6526, %v6526
          %6528 = vrot.lane.b32.xlu0 %v6527, 32
          %v6529 = vpop.permute.xlu0 %6528
          %6531 = vst.msk [vmem:[#allocation3 + $0xa] sm:$0x3] %vm6373, %v6529
          %v6532 = vcombine.high %v6352, %v6352
          %v6534 = vunpack.c.l.s4 1983009808
          %v6535 = vunpack.c.0.s8 %v6534
          %v6536 = vlaneseq
          %v6537 = vshrl.u32 %v6536, 7
          %v6538 = vsub.s32 %v6535, %v6537
          %v6539 = vrot.slane %v6532, %v6538
          %6540 = vrot.lane.b32.xlu0 %v6539, 64
          %v6541 = vpop.permute.xlu0 %6540
          %6543 = vst.msk [vmem:[#allocation3 + $0xa] sm:$0x3] %vm6386, %v6541
          %v6544 = vcombine.high %v6539, %v6539
          %6545 = vrot.lane.b32.xlu0 %v6544, 96
          %v6546 = vpop.permute.xlu0 %6545
          %6548 = vst.msk [vmem:[#allocation3 + $0xa] sm:$0x3] %vm6392, %v6546
          %6549 = vst.msk [vmem:[#allocation3 + $0xc] sm:$0x3] %vm6237, %v6353
          %v6552 = vunpack.c.l.s4 1983009808
          %v6553 = vunpack.c.0.s8 %v6552
          %v6554 = vlaneseq
          %v6555 = vshrl.u32 %v6554, 7
          %v6556 = vsub.s32 %v6553, %v6555
          %v6557 = vrot.slane %v6353, %v6556
          %v6558 = vcombine.high %v6557, %v6557
          %6559 = vrot.lane.b32.xlu0 %v6558, 32
          %v6560 = vpop.permute.xlu0 %6559
          %6562 = vst.msk [vmem:[#allocation3 + $0xc] sm:$0x3] %vm6373, %v6560
          %v6563 = vcombine.high %v6353, %v6353
          %v6565 = vunpack.c.l.s4 1983009808
          %v6566 = vunpack.c.0.s8 %v6565
          %v6567 = vlaneseq
          %v6568 = vshrl.u32 %v6567, 7
          %v6569 = vsub.s32 %v6566, %v6568
          %v6570 = vrot.slane %v6563, %v6569
          %6571 = vrot.lane.b32.xlu0 %v6570, 64
          %v6572 = vpop.permute.xlu0 %6571
          %6574 = vst.msk [vmem:[#allocation3 + $0xc] sm:$0x3] %vm6386, %v6572
          %v6575 = vcombine.high %v6570, %v6570
          %6576 = vrot.lane.b32.xlu0 %v6575, 96
          %v6577 = vpop.permute.xlu0 %6576
          %6579 = vst.msk [vmem:[#allocation3 + $0xc] sm:$0x3] %vm6392, %v6577
          %6580 = vst.msk [vmem:[#allocation3 + $0xe] sm:$0x3] %vm6237, %v6354
          %v6583 = vunpack.c.l.s4 1983009808
          %v6584 = vunpack.c.0.s8 %v6583
          %v6585 = vlaneseq
          %v6586 = vshrl.u32 %v6585, 7
          %v6587 = vsub.s32 %v6584, %v6586
          %v6588 = vrot.slane %v6354, %v6587
          %v6589 = vcombine.high %v6588, %v6588
          %6590 = vrot.lane.b32.xlu0 %v6589, 32
          %v6591 = vpop.permute.xlu0 %6590
          %6593 = vst.msk [vmem:[#allocation3 + $0xe] sm:$0x3] %vm6373, %v6591
          %v6594 = vcombine.high %v6354, %v6354
          %v6596 = vunpack.c.l.s4 1983009808
          %v6597 = vunpack.c.0.s8 %v6596
          %v6598 = vlaneseq
          %v6599 = vshrl.u32 %v6598, 7
          %v6600 = vsub.s32 %v6597, %v6599
          %v6601 = vrot.slane %v6594, %v6600
          %6602 = vrot.lane.b32.xlu0 %v6601, 64
          %v6603 = vpop.permute.xlu0 %6602
          %6605 = vst.msk [vmem:[#allocation3 + $0xe] sm:$0x3] %vm6386, %v6603
          %v6606 = vcombine.high %v6601, %v6601
          %6607 = vrot.lane.b32.xlu0 %v6606, 96
          %v6608 = vpop.permute.xlu0 %6607
          %6610 = vst.msk [vmem:[#allocation3 + $0xe] sm:$0x3] %vm6392, %v6608
          %6611 = vst.msk [vmem:[#allocation3 + $0x10] sm:$0x3] %vm6237, %v6355
          %v6614 = vunpack.c.l.s4 1983009808
          %v6615 = vunpack.c.0.s8 %v6614
          %v6616 = vlaneseq
          %v6617 = vshrl.u32 %v6616, 7
          %v6618 = vsub.s32 %v6615, %v6617
          %v6619 = vrot.slane %v6355, %v6618
          %v6620 = vcombine.high %v6619, %v6619
          %6621 = vrot.lane.b32.xlu0 %v6620, 32
          %v6622 = vpop.permute.xlu0 %6621
          %6624 = vst.msk [vmem:[#allocation3 + $0x10] sm:$0x3] %vm6373, %v6622
          %v6625 = vcombine.high %v6355, %v6355
          %v6627 = vunpack.c.l.s4 1983009808
          %v6628 = vunpack.c.0.s8 %v6627
          %v6629 = vlaneseq
          %v6630 = vshrl.u32 %v6629, 7
          %v6631 = vsub.s32 %v6628, %v6630
          %v6632 = vrot.slane %v6625, %v6631
          %6633 = vrot.lane.b32.xlu0 %v6632, 64
          %v6634 = vpop.permute.xlu0 %6633
          %6636 = vst.msk [vmem:[#allocation3 + $0x10] sm:$0x3] %vm6386, %v6634
          %v6637 = vcombine.high %v6632, %v6632
          %6638 = vrot.lane.b32.xlu0 %v6637, 96
          %v6639 = vpop.permute.xlu0 %6638
          %6641 = vst.msk [vmem:[#allocation3 + $0x10] sm:$0x3] %vm6392, %v6639
          %6642 = vst.msk [vmem:[#allocation3 + $0x12] sm:$0x3] %vm6237, %v6356
          %v6645 = vunpack.c.l.s4 1983009808
          %v6646 = vunpack.c.0.s8 %v6645
          %v6647 = vlaneseq
          %v6648 = vshrl.u32 %v6647, 7
          %v6649 = vsub.s32 %v6646, %v6648
          %v6650 = vrot.slane %v6356, %v6649
          %v6651 = vcombine.high %v6650, %v6650
          %6652 = vrot.lane.b32.xlu0 %v6651, 32
          %v6653 = vpop.permute.xlu0 %6652
          %6655 = vst.msk [vmem:[#allocation3 + $0x12] sm:$0x3] %vm6373, %v6653
          %v6656 = vcombine.high %v6356, %v6356
          %v6658 = vunpack.c.l.s4 1983009808
          %v6659 = vunpack.c.0.s8 %v6658
          %v6660 = vlaneseq
          %v6661 = vshrl.u32 %v6660, 7
          %v6662 = vsub.s32 %v6659, %v6661
          %v6663 = vrot.slane %v6656, %v6662
          %6664 = vrot.lane.b32.xlu0 %v6663, 64
          %v6665 = vpop.permute.xlu0 %6664
          %6667 = vst.msk [vmem:[#allocation3 + $0x12] sm:$0x3] %vm6386, %v6665
          %v6668 = vcombine.high %v6663, %v6663
          %6669 = vrot.lane.b32.xlu0 %v6668, 96
          %v6670 = vpop.permute.xlu0 %6669
          %6672 = vst.msk [vmem:[#allocation3 + $0x12] sm:$0x3] %vm6392, %v6670
          %6673 = vst.msk [vmem:[#allocation3 + $0x14] sm:$0x3] %vm6237, %v6357
          %v6676 = vunpack.c.l.s4 1983009808
          %v6677 = vunpack.c.0.s8 %v6676
          %v6678 = vlaneseq
          %v6679 = vshrl.u32 %v6678, 7
          %v6680 = vsub.s32 %v6677, %v6679
          %v6681 = vrot.slane %v6357, %v6680
          %v6682 = vcombine.high %v6681, %v6681
          %6683 = vrot.lane.b32.xlu0 %v6682, 32
          %v6684 = vpop.permute.xlu0 %6683
          %6686 = vst.msk [vmem:[#allocation3 + $0x14] sm:$0x3] %vm6373, %v6684
          %v6687 = vcombine.high %v6357, %v6357
          %v6689 = vunpack.c.l.s4 1983009808
          %v6690 = vunpack.c.0.s8 %v6689
          %v6691 = vlaneseq
          %v6692 = vshrl.u32 %v6691, 7
          %v6693 = vsub.s32 %v6690, %v6692
          %v6694 = vrot.slane %v6687, %v6693
          %6695 = vrot.lane.b32.xlu0 %v6694, 64
          %v6696 = vpop.permute.xlu0 %6695
          %6698 = vst.msk [vmem:[#allocation3 + $0x14] sm:$0x3] %vm6386, %v6696
          %v6699 = vcombine.high %v6694, %v6694
          %6700 = vrot.lane.b32.xlu0 %v6699, 96
          %v6701 = vpop.permute.xlu0 %6700
          %6703 = vst.msk [vmem:[#allocation3 + $0x14] sm:$0x3] %vm6392, %v6701
          %6704 = vst.msk [vmem:[#allocation3 + $0x16] sm:$0x3] %vm6237, %v6358
          %v6707 = vunpack.c.l.s4 1983009808
          %v6708 = vunpack.c.0.s8 %v6707
          %v6709 = vlaneseq
          %v6710 = vshrl.u32 %v6709, 7
          %v6711 = vsub.s32 %v6708, %v6710
          %v6712 = vrot.slane %v6358, %v6711
          %v6713 = vcombine.high %v6712, %v6712
          %6714 = vrot.lane.b32.xlu0 %v6713, 32
          %v6715 = vpop.permute.xlu0 %6714
          %6717 = vst.msk [vmem:[#allocation3 + $0x16] sm:$0x3] %vm6373, %v6715
          %v6718 = vcombine.high %v6358, %v6358
          %v6720 = vunpack.c.l.s4 1983009808
          %v6721 = vunpack.c.0.s8 %v6720
          %v6722 = vlaneseq
          %v6723 = vshrl.u32 %v6722, 7
          %v6724 = vsub.s32 %v6721, %v6723
          %v6725 = vrot.slane %v6718, %v6724
          %6726 = vrot.lane.b32.xlu0 %v6725, 64
          %v6727 = vpop.permute.xlu0 %6726
          %6729 = vst.msk [vmem:[#allocation3 + $0x16] sm:$0x3] %vm6386, %v6727
          %v6730 = vcombine.high %v6725, %v6725
          %6731 = vrot.lane.b32.xlu0 %v6730, 96
          %v6732 = vpop.permute.xlu0 %6731
          %6734 = vst.msk [vmem:[#allocation3 + $0x16] sm:$0x3] %vm6392, %v6732
          %6735 = vst.msk [vmem:[#allocation3 + $0x18] sm:$0x3] %vm6237, %v6359
          %v6736 = vld [vmem:[#allocation3] sm:$0xff]
          %v6737 = vld [vmem:[#allocation3 + $0x8] sm:$0xff]
          %v6738 = vld [vmem:[#allocation3 + $0x10] sm:$0xff]
          %v6739 = vld [vmem:[#allocation3 + $0x18] sm:$0x3]
          %v6744 = vcombine.high %v6736, %v6736
          %v6746 = vunpack.c.l.s4 1983009808
          %v6747 = vunpack.c.0.s8 %v6746
          %v6748 = vlaneseq
          %v6749 = vshrl.u32 %v6748, 7
          %v6750 = vsub.s32 %v6747, %v6749
          %v6751 = vrot.slane %v6736, %v6750
          %v6753 = vunpack.c.l.s4 1983009808
          %v6754 = vunpack.c.0.s8 %v6753
          %v6755 = vlaneseq
          %v6756 = vshrl.u32 %v6755, 7
          %v6757 = vsub.s32 %v6754, %v6756
          %v6758 = vrot.slane %v6744, %v6757
          %v6759 = vcombine.high %v6751, %v6751
          %v6760 = vcombine.high %v6758, %v6758
          %v6761 = vcombine.high %v6737, %v6737
          %v6763 = vunpack.c.l.s4 1983009808
          %v6764 = vunpack.c.0.s8 %v6763
          %v6765 = vlaneseq
          %v6766 = vshrl.u32 %v6765, 7
          %v6767 = vsub.s32 %v6764, %v6766
          %v6768 = vrot.slane %v6737, %v6767
          %v6770 = vunpack.c.l.s4 1983009808
          %v6771 = vunpack.c.0.s8 %v6770
          %v6772 = vlaneseq
          %v6773 = vshrl.u32 %v6772, 7
          %v6774 = vsub.s32 %v6771, %v6773
          %v6775 = vrot.slane %v6761, %v6774
          %v6776 = vcombine.high %v6768, %v6768
          %v6777 = vcombine.high %v6775, %v6775
          %v6778 = vcombine.high %v6738, %v6738
          %v6780 = vunpack.c.l.s4 1983009808
          %v6781 = vunpack.c.0.s8 %v6780
          %v6782 = vlaneseq
          %v6783 = vshrl.u32 %v6782, 7
          %v6784 = vsub.s32 %v6781, %v6783
          %v6785 = vrot.slane %v6738, %v6784
          %v6787 = vunpack.c.l.s4 1983009808
          %v6788 = vunpack.c.0.s8 %v6787
          %v6789 = vlaneseq
          %v6790 = vshrl.u32 %v6789, 7
          %v6791 = vsub.s32 %v6788, %v6790
          %v6792 = vrot.slane %v6778, %v6791
          %v6793 = vcombine.high %v6785, %v6785
          %v6794 = vcombine.high %v6792, %v6792
          %v6796 = vunpack.c.l.s4 1983009808
          %v6797 = vunpack.c.0.s8 %v6796
          %v6798 = vlaneseq
          %v6799 = vshrl.u32 %v6798, 7
          %v6800 = vsub.s32 %v6797, %v6799
          %v6801 = vrot.slane %v6739, %v6800
          %v6815 = vpack.c.bf16 %v6751, %v6751
          %v6816 = vpack.c.bf16 %v6759, %v6759
          %v6817 = vpack.c.bf16 %v6758, %v6758
          %v6818 = vpack.c.bf16 %v6760, %v6760
          %v6819 = vpack.c.bf16 %v6768, %v6768
          %v6820 = vpack.c.bf16 %v6776, %v6776
          %v6821 = vpack.c.bf16 %v6775, %v6775
          %v6822 = vpack.c.bf16 %v6777, %v6777
          %v6823 = vpack.c.bf16 %v6785, %v6785
          %v6824 = vpack.c.bf16 %v6793, %v6793
          %v6825 = vpack.c.bf16 %v6792, %v6792
          %v6826 = vpack.c.bf16 %v6794, %v6794
          %v6827 = vpack.c.bf16 %v6801, %v6801
          %v6828 = vld [vmem:[#allocation23] sm:$0xff]
          %v6829 = vld [vmem:[#allocation23 + $0x8] sm:$0xff]
          %v6830 = vld [vmem:[#allocation23 + $0x10] sm:$0xff]
          %v6831 = vld [vmem:[#allocation23 + $0x18] sm:$0xff]
          %v6832 = vld [vmem:[#allocation23 + $0x20] sm:$0xff]
          %v6833 = vld [vmem:[#allocation23 + $0x28] sm:$0xff]
          %v6834 = vld [vmem:[#allocation23 + $0x30] sm:$0xff]
          %v6835 = vld [vmem:[#allocation23 + $0x38] sm:$0xff]
          %v6836 = vld [vmem:[#allocation23 + $0x40] sm:$0xff]
          %v6837 = vld [vmem:[#allocation23 + $0x48] sm:$0xff]
          %v6838 = vld [vmem:[#allocation23 + $0x50] sm:$0xff]
          %v6839 = vld [vmem:[#allocation23 + $0x58] sm:$0xff]
          %v6840 = vld [vmem:[#allocation23 + $0x60] sm:$0xff]
          %v6841 = vld [vmem:[#allocation23 + $0x68] sm:$0xff]
          %v6842 = vld [vmem:[#allocation23 + $0x70] sm:$0xff]
          %v6843 = vld [vmem:[#allocation23 + $0x78] sm:$0xff]
          %v6844 = vld [vmem:[#allocation23 + $0x80] sm:$0xff]
          %v6845 = vld [vmem:[#allocation23 + $0x88] sm:$0xff]
          %v6846 = vld [vmem:[#allocation23 + $0x90] sm:$0xff]
          %v6847 = vld [vmem:[#allocation23 + $0x98] sm:$0xff]
          %v6848 = vld [vmem:[#allocation23 + $0xa0] sm:$0xff]
          %v6849 = vld [vmem:[#allocation23 + $0xa8] sm:$0xff]
          %v6850 = vld [vmem:[#allocation23 + $0xb0] sm:$0xff]
          %v6851 = vld [vmem:[#allocation23 + $0xb8] sm:$0xff]
          %v6852 = vld [vmem:[#allocation23 + $0xc0] sm:$0xff]
          %v6853 = vld [vmem:[#allocation23 + $0xc8] sm:$0xff]
          %v6854 = vld [vmem:[#allocation23 + $0xd0] sm:$0xff]
          %v6855 = vld [vmem:[#allocation23 + $0xd8] sm:$0xff]
          %v6856 = vld [vmem:[#allocation23 + $0xe0] sm:$0xff]
          %v6857 = vld [vmem:[#allocation23 + $0xe8] sm:$0xff]
          %v6858 = vld [vmem:[#allocation23 + $0xf0] sm:$0xff]
          %v6859 = vld [vmem:[#allocation23 + $0xf8] sm:$0xff]
          %v6860 = vld [vmem:[#allocation23 + $0x100] sm:$0xff]
          %v6861 = vld [vmem:[#allocation23 + $0x108] sm:$0xff]
          %v6862 = vld [vmem:[#allocation23 + $0x110] sm:$0xff]
          %v6863 = vld [vmem:[#allocation23 + $0x118] sm:$0xff]
          %v6864 = vld [vmem:[#allocation23 + $0x120] sm:$0xff]
          %v6865 = vld [vmem:[#allocation23 + $0x128] sm:$0xff]
          %v6866 = vld [vmem:[#allocation23 + $0x130] sm:$0xff]
          %v6867 = vld [vmem:[#allocation23 + $0x138] sm:$0xff]
          %v6868 = vld [vmem:[#allocation23 + $0x140] sm:$0xff]
          %v6869 = vld [vmem:[#allocation23 + $0x148] sm:$0xff]
          %v6870 = vld [vmem:[#allocation23 + $0x150] sm:$0xff]
          %v6871 = vld [vmem:[#allocation23 + $0x158] sm:$0xff]
          %v6872 = vld [vmem:[#allocation23 + $0x160] sm:$0xff]
          %v6873 = vld [vmem:[#allocation23 + $0x168] sm:$0xff]
          %v6874 = vld [vmem:[#allocation23 + $0x170] sm:$0xff]
          %v6875 = vld [vmem:[#allocation23 + $0x178] sm:$0xff]
          %v6876 = vld [vmem:[#allocation23 + $0x180] sm:$0xff]
          %v6877 = vld [vmem:[#allocation23 + $0x188] sm:$0xff]
          %v6878 = vld [vmem:[#allocation23 + $0x190] sm:$0xff]
          %v6879 = vld [vmem:[#allocation23 + $0x198] sm:$0xff]
          %v6880 = vld [vmem:[#allocation23 + $0x1a0] sm:$0xff]
          %v6881 = vld [vmem:[#allocation23 + $0x1a8] sm:$0xff]
          %v6882 = vld [vmem:[#allocation23 + $0x1b0] sm:$0xff]
          %v6883 = vld [vmem:[#allocation23 + $0x1b8] sm:$0xff]
          %v6884 = vld [vmem:[#allocation23 + $0x1c0] sm:$0xff]
          %v6885 = vld [vmem:[#allocation23 + $0x1c8] sm:$0xff]
          %v6886 = vld [vmem:[#allocation23 + $0x1d0] sm:$0xff]
          %v6887 = vld [vmem:[#allocation23 + $0x1d8] sm:$0xff]
          %v6888 = vld [vmem:[#allocation23 + $0x1e0] sm:$0xff]
          %v6889 = vld [vmem:[#allocation23 + $0x1e8] sm:$0xff]
          %v6890 = vld [vmem:[#allocation23 + $0x1f0] sm:$0xff]
          %v6891 = vld [vmem:[#allocation23 + $0x1f8] sm:$0xff]
          %v6892 = vld [vmem:[#allocation23 + $0x200] sm:$0xff]
          %v6893 = vld [vmem:[#allocation23 + $0x208] sm:$0xff]
          %v6894 = vld [vmem:[#allocation23 + $0x210] sm:$0xff]
          %v6895 = vld [vmem:[#allocation23 + $0x218] sm:$0xff]
          %v6896 = vld [vmem:[#allocation23 + $0x220] sm:$0xff]
          %v6897 = vld [vmem:[#allocation23 + $0x228] sm:$0xff]
          %v6898 = vld [vmem:[#allocation23 + $0x230] sm:$0xff]
          %v6899 = vld [vmem:[#allocation23 + $0x238] sm:$0xff]
          %v6900 = vld [vmem:[#allocation23 + $0x240] sm:$0xff]
          %v6901 = vld [vmem:[#allocation23 + $0x248] sm:$0xff]
          %v6902 = vld [vmem:[#allocation23 + $0x250] sm:$0xff]
          %v6903 = vld [vmem:[#allocation23 + $0x258] sm:$0xff]
          %v6904 = vld [vmem:[#allocation23 + $0x260] sm:$0xff]
          %v6905 = vld [vmem:[#allocation23 + $0x268] sm:$0xff]
          %v6906 = vld [vmem:[#allocation23 + $0x270] sm:$0xff]
          %v6907 = vld [vmem:[#allocation23 + $0x278] sm:$0xff]
          %v6908 = vld [vmem:[#allocation23 + $0x280] sm:$0xff]
          %v6909 = vld [vmem:[#allocation23 + $0x288] sm:$0xff]
          %v6910 = vld [vmem:[#allocation23 + $0x290] sm:$0xff]
          %v6911 = vld [vmem:[#allocation23 + $0x298] sm:$0xff]
          %v6912 = vld [vmem:[#allocation23 + $0x2a0] sm:$0xff]
          %v6913 = vld [vmem:[#allocation23 + $0x2a8] sm:$0xff]
          %v6914 = vld [vmem:[#allocation23 + $0x2b0] sm:$0xff]
          %v6915 = vld [vmem:[#allocation23 + $0x2b8] sm:$0xff]
          %v6916 = vld [vmem:[#allocation23 + $0x2c0] sm:$0xff]
          %v6917 = vld [vmem:[#allocation23 + $0x2c8] sm:$0xff]
          %v6918 = vld [vmem:[#allocation23 + $0x2d0] sm:$0xff]
          %v6919 = vld [vmem:[#allocation23 + $0x2d8] sm:$0xff]
          %v6920 = vld [vmem:[#allocation23 + $0x2e0] sm:$0xff]
          %v6921 = vld [vmem:[#allocation23 + $0x2e8] sm:$0xff]
          %v6922 = vld [vmem:[#allocation23 + $0x2f0] sm:$0xff]
          %v6923 = vld [vmem:[#allocation23 + $0x2f8] sm:$0xff]
          %v6924 = vld [vmem:[#allocation23 + $0x300] sm:$0xff]
          %v6925 = vld [vmem:[#allocation23 + $0x308] sm:$0xff]
          %v6926 = vld [vmem:[#allocation23 + $0x310] sm:$0xff]
          %v6927 = vld [vmem:[#allocation23 + $0x318] sm:$0xff]
          %v6928 = vld [vmem:[#allocation23 + $0x320] sm:$0xff]
          %v6929 = vld [vmem:[#allocation23 + $0x328] sm:$0xff]
          %v6930 = vld [vmem:[#allocation23 + $0x330] sm:$0xff]
          %v6931 = vld [vmem:[#allocation23 + $0x338] sm:$0xff]
          %v6932 = vld [vmem:[#allocation23 + $0x340] sm:$0xff]
          %v6933 = vld [vmem:[#allocation23 + $0x348] sm:$0xff]
          %v6934 = vld [vmem:[#allocation23 + $0x350] sm:$0xff]
          %v6935 = vld [vmem:[#allocation23 + $0x358] sm:$0xff]
          %v6936 = vld [vmem:[#allocation23 + $0x360] sm:$0xff]
          %v6937 = vld [vmem:[#allocation23 + $0x368] sm:$0xff]
          %v6938 = vld [vmem:[#allocation23 + $0x370] sm:$0xff]
          %v6939 = vld [vmem:[#allocation23 + $0x378] sm:$0xff]
          %v6940 = vld [vmem:[#allocation23 + $0x380] sm:$0xff]
          %v6941 = vld [vmem:[#allocation23 + $0x388] sm:$0xff]
          %v6942 = vld [vmem:[#allocation23 + $0x390] sm:$0xff]
          %v6943 = vld [vmem:[#allocation23 + $0x398] sm:$0xff]
          %v6944 = vld [vmem:[#allocation23 + $0x3a0] sm:$0xff]
          %v6945 = vld [vmem:[#allocation23 + $0x3a8] sm:$0xff]
          %v6946 = vld [vmem:[#allocation23 + $0x3b0] sm:$0xff]
          %v6947 = vld [vmem:[#allocation23 + $0x3b8] sm:$0xff]
          %v6948 = vld [vmem:[#allocation23 + $0x3c0] sm:$0xff]
          %v6949 = vld [vmem:[#allocation23 + $0x3c8] sm:$0xff]
          %v6950 = vld [vmem:[#allocation23 + $0x3d0] sm:$0xff]
          %v6951 = vld [vmem:[#allocation23 + $0x3d8] sm:$0xff]
          %v6952 = vld [vmem:[#allocation23 + $0x3e0] sm:$0xff]
          %v6953 = vld [vmem:[#allocation23 + $0x3e8] sm:$0xff]
          %v6954 = vld [vmem:[#allocation23 + $0x3f0] sm:$0xff]
          %v6955 = vld [vmem:[#allocation23 + $0x3f8] sm:$0xff]
          %v6956 = vld [vmem:[#allocation23 + $0x400] sm:$0xff]
          %v6957 = vld [vmem:[#allocation23 + $0x408] sm:$0xff]
          %v6958 = vld [vmem:[#allocation23 + $0x410] sm:$0xff]
          %v6959 = vld [vmem:[#allocation23 + $0x418] sm:$0xff]
          %v6960 = vld [vmem:[#allocation23 + $0x420] sm:$0xff]
          %v6961 = vld [vmem:[#allocation23 + $0x428] sm:$0xff]
          %v6962 = vld [vmem:[#allocation23 + $0x430] sm:$0xff]
          %v6963 = vld [vmem:[#allocation23 + $0x438] sm:$0xff]
          %v6964 = vld [vmem:[#allocation23 + $0x440] sm:$0xff]
          %v6965 = vld [vmem:[#allocation23 + $0x448] sm:$0xff]
          %v6966 = vld [vmem:[#allocation23 + $0x450] sm:$0xff]
          %v6967 = vld [vmem:[#allocation23 + $0x458] sm:$0xff]
          %v6968 = vld [vmem:[#allocation23 + $0x460] sm:$0xff]
          %v6969 = vld [vmem:[#allocation23 + $0x468] sm:$0xff]
          %v6970 = vld [vmem:[#allocation23 + $0x470] sm:$0xff]
          %v6971 = vld [vmem:[#allocation23 + $0x478] sm:$0xff]
          %v6972 = vld [vmem:[#allocation23 + $0x480] sm:$0xff]
          %v6973 = vld [vmem:[#allocation23 + $0x488] sm:$0xff]
          %v6974 = vld [vmem:[#allocation23 + $0x490] sm:$0xff]
          %v6975 = vld [vmem:[#allocation23 + $0x498] sm:$0xff]
          %v6976 = vld [vmem:[#allocation23 + $0x4a0] sm:$0xff]
          %v6977 = vld [vmem:[#allocation23 + $0x4a8] sm:$0xff]
          %v6978 = vld [vmem:[#allocation23 + $0x4b0] sm:$0xff]
          %v6979 = vld [vmem:[#allocation23 + $0x4b8] sm:$0xff]
          %v6980 = vld [vmem:[#allocation23 + $0x4c0] sm:$0xff]
          %v6981 = vld [vmem:[#allocation23 + $0x4c8] sm:$0xff]
          %v6982 = vld [vmem:[#allocation23 + $0x4d0] sm:$0xff]
          %v6983 = vld [vmem:[#allocation23 + $0x4d8] sm:$0xff]
          %v6984 = vld [vmem:[#allocation23 + $0x4e0] sm:$0xff]
          %v6985 = vld [vmem:[#allocation23 + $0x4e8] sm:$0xff]
          %v6986 = vld [vmem:[#allocation23 + $0x4f0] sm:$0xff]
          %v6987 = vld [vmem:[#allocation23 + $0x4f8] sm:$0xff]
          %v6988 = vld [vmem:[#allocation23 + $0x500] sm:$0xff]
          %v6989 = vld [vmem:[#allocation23 + $0x508] sm:$0xff]
          %v6990 = vld [vmem:[#allocation23 + $0x510] sm:$0xff]
          %v6991 = vld [vmem:[#allocation23 + $0x518] sm:$0xff]
          %v6992 = vld [vmem:[#allocation23 + $0x520] sm:$0xff]
          %v6993 = vld [vmem:[#allocation23 + $0x528] sm:$0xff]
          %v6994 = vld [vmem:[#allocation23 + $0x530] sm:$0xff]
          %v6995 = vld [vmem:[#allocation23 + $0x538] sm:$0xff]
          %v6996 = vld [vmem:[#allocation23 + $0x540] sm:$0xff]
          %v6997 = vld [vmem:[#allocation23 + $0x548] sm:$0xff]
          %v6998 = vld [vmem:[#allocation23 + $0x550] sm:$0xff]
          %v6999 = vld [vmem:[#allocation23 + $0x558] sm:$0xff]
          %v7000 = vld [vmem:[#allocation23 + $0x560] sm:$0xff]
          %v7001 = vld [vmem:[#allocation23 + $0x568] sm:$0xff]
          %v7002 = vld [vmem:[#allocation23 + $0x570] sm:$0xff]
          %v7003 = vld [vmem:[#allocation23 + $0x578] sm:$0xff]
          %v7004 = vld [vmem:[#allocation23 + $0x580] sm:$0xff]
          %v7005 = vld [vmem:[#allocation23 + $0x588] sm:$0xff]
          %v7006 = vld [vmem:[#allocation23 + $0x590] sm:$0xff]
          %v7007 = vld [vmem:[#allocation23 + $0x598] sm:$0xff]
          %v7008 = vld [vmem:[#allocation23 + $0x5a0] sm:$0xff]
          %v7009 = vld [vmem:[#allocation23 + $0x5a8] sm:$0xff]
          %v7010 = vld [vmem:[#allocation23 + $0x5b0] sm:$0xff]
          %v7011 = vld [vmem:[#allocation23 + $0x5b8] sm:$0xff]
          %v7012 = vld [vmem:[#allocation23 + $0x5c0] sm:$0xff]
          %v7013 = vld [vmem:[#allocation23 + $0x5c8] sm:$0xff]
          %v7014 = vld [vmem:[#allocation23 + $0x5d0] sm:$0xff]
          %v7015 = vld [vmem:[#allocation23 + $0x5d8] sm:$0xff]
          %v7016 = vld [vmem:[#allocation23 + $0x5e0] sm:$0xff]
          %v7017 = vld [vmem:[#allocation23 + $0x5e8] sm:$0xff]
          %v7018 = vld [vmem:[#allocation23 + $0x5f0] sm:$0xff]
          %v7019 = vld [vmem:[#allocation23 + $0x5f8] sm:$0xff]
          %v7020 = vld [vmem:[#allocation23 + $0x600] sm:$0xff]
          %v7021 = vld [vmem:[#allocation23 + $0x608] sm:$0xff]
          %v7022 = vld [vmem:[#allocation23 + $0x610] sm:$0xff]
          %v7023 = vld [vmem:[#allocation23 + $0x618] sm:$0xff]
          %v7024 = vld [vmem:[#allocation23 + $0x620] sm:$0xff]
          %v7025 = vld [vmem:[#allocation23 + $0x628] sm:$0xff]
          %v7026 = vld [vmem:[#allocation23 + $0x630] sm:$0xff]
          %v7027 = vld [vmem:[#allocation23 + $0x638] sm:$0xff]
          %v7028 = vld [vmem:[#allocation23 + $0x640] sm:$0xff]
          %v7029 = vld [vmem:[#allocation23 + $0x648] sm:$0xff]
          %v7030 = vld [vmem:[#allocation23 + $0x650] sm:$0xff]
          %v7031 = vld [vmem:[#allocation23 + $0x658] sm:$0xff]
          %v7032 = vld [vmem:[#allocation23 + $0x660] sm:$0xff]
          %v7033 = vld [vmem:[#allocation23 + $0x668] sm:$0xff]
          %v7034 = vld [vmem:[#allocation23 + $0x670] sm:$0xff]
          %v7035 = vld [vmem:[#allocation23 + $0x678] sm:$0xff]
          %v7036 = vld [vmem:[#allocation23 + $0x680] sm:$0xff]
          %v7037 = vld [vmem:[#allocation23 + $0x688] sm:$0xff]
          %v7038 = vld [vmem:[#allocation23 + $0x690] sm:$0xff]
          %v7039 = vld [vmem:[#allocation23 + $0x698] sm:$0xff]
          %v7040 = vld [vmem:[#allocation23 + $0x6a0] sm:$0xff]
          %v7041 = vld [vmem:[#allocation23 + $0x6a8] sm:$0xff]
          %v7042 = vld [vmem:[#allocation23 + $0x6b0] sm:$0xff]
          %v7043 = vld [vmem:[#allocation23 + $0x6b8] sm:$0xff]
          %v7044 = vld [vmem:[#allocation23 + $0x6c0] sm:$0xff]
          %v7045 = vld [vmem:[#allocation23 + $0x6c8] sm:$0xff]
          %v7046 = vld [vmem:[#allocation23 + $0x6d0] sm:$0xff]
          %v7047 = vld [vmem:[#allocation23 + $0x6d8] sm:$0xff]
          %v7048 = vld [vmem:[#allocation23 + $0x6e0] sm:$0xff]
          %v7049 = vld [vmem:[#allocation23 + $0x6e8] sm:$0xff]
          %v7050 = vld [vmem:[#allocation23 + $0x6f0] sm:$0xff]
          %v7051 = vld [vmem:[#allocation23 + $0x6f8] sm:$0xff]
          %v7052 = vld [vmem:[#allocation23 + $0x700] sm:$0xff]
          %v7053 = vld [vmem:[#allocation23 + $0x708] sm:$0xff]
          %v7054 = vld [vmem:[#allocation23 + $0x710] sm:$0xff]
          %v7055 = vld [vmem:[#allocation23 + $0x718] sm:$0xff]
          %v7056 = vld [vmem:[#allocation23 + $0x720] sm:$0xff]
          %v7057 = vld [vmem:[#allocation23 + $0x728] sm:$0xff]
          %v7058 = vld [vmem:[#allocation23 + $0x730] sm:$0xff]
          %v7059 = vld [vmem:[#allocation23 + $0x738] sm:$0xff]
          %v7060 = vld [vmem:[#allocation23 + $0x740] sm:$0xff]
          %v7061 = vld [vmem:[#allocation23 + $0x748] sm:$0xff]
          %v7062 = vld [vmem:[#allocation23 + $0x750] sm:$0xff]
          %v7063 = vld [vmem:[#allocation23 + $0x758] sm:$0xff]
          %v7064 = vld [vmem:[#allocation23 + $0x760] sm:$0xff]
          %v7065 = vld [vmem:[#allocation23 + $0x768] sm:$0xff]
          %v7066 = vld [vmem:[#allocation23 + $0x770] sm:$0xff]
          %v7067 = vld [vmem:[#allocation23 + $0x778] sm:$0xff]
          %v7068 = vld [vmem:[#allocation23 + $0x780] sm:$0xff]
          %v7069 = vld [vmem:[#allocation23 + $0x788] sm:$0xff]
          %v7070 = vld [vmem:[#allocation23 + $0x790] sm:$0xff]
          %v7071 = vld [vmem:[#allocation23 + $0x798] sm:$0xff]
          %v7072 = vld [vmem:[#allocation23 + $0x7a0] sm:$0xff]
          %v7073 = vld [vmem:[#allocation23 + $0x7a8] sm:$0xff]
          %v7074 = vld [vmem:[#allocation23 + $0x7b0] sm:$0xff]
          %v7075 = vld [vmem:[#allocation23 + $0x7b8] sm:$0xff]
          %v7076 = vld [vmem:[#allocation23 + $0x7c0] sm:$0xff]
          %v7077 = vld [vmem:[#allocation23 + $0x7c8] sm:$0xff]
          %v7078 = vld [vmem:[#allocation23 + $0x7d0] sm:$0xff]
          %v7079 = vld [vmem:[#allocation23 + $0x7d8] sm:$0xff]
          %v7080 = vld [vmem:[#allocation23 + $0x7e0] sm:$0xff]
          %v7081 = vld [vmem:[#allocation23 + $0x7e8] sm:$0xff]
          %v7082 = vld [vmem:[#allocation23 + $0x7f0] sm:$0xff]
          %v7083 = vld [vmem:[#allocation23 + $0x7f8] sm:$0xff]
          %v7084 = vld [vmem:[#allocation23 + $0x800] sm:$0xff]
          %v7085 = vld [vmem:[#allocation23 + $0x808] sm:$0xff]
          %v7086 = vld [vmem:[#allocation23 + $0x810] sm:$0xff]
          %v7087 = vld [vmem:[#allocation23 + $0x818] sm:$0xff]
          %v7088 = vld [vmem:[#allocation23 + $0x820] sm:$0xff]
          %v7089 = vld [vmem:[#allocation23 + $0x828] sm:$0xff]
          %v7090 = vld [vmem:[#allocation23 + $0x830] sm:$0xff]
          %v7091 = vld [vmem:[#allocation23 + $0x838] sm:$0xff]
          %v7092 = vld [vmem:[#allocation23 + $0x840] sm:$0xff]
          %v7093 = vld [vmem:[#allocation23 + $0x848] sm:$0xff]
          %v7094 = vld [vmem:[#allocation23 + $0x850] sm:$0xff]
          %v7095 = vld [vmem:[#allocation23 + $0x858] sm:$0xff]
          %v7096 = vld [vmem:[#allocation23 + $0x860] sm:$0xff]
          %v7097 = vld [vmem:[#allocation23 + $0x868] sm:$0xff]
          %v7098 = vld [vmem:[#allocation23 + $0x870] sm:$0xff]
          %v7099 = vld [vmem:[#allocation23 + $0x878] sm:$0xff]
          %v7100 = vld [vmem:[#allocation23 + $0x880] sm:$0xff]
          %v7101 = vld [vmem:[#allocation23 + $0x888] sm:$0xff]
          %v7102 = vld [vmem:[#allocation23 + $0x890] sm:$0xff]
          %v7103 = vld [vmem:[#allocation23 + $0x898] sm:$0xff]
          %v7104 = vld [vmem:[#allocation23 + $0x8a0] sm:$0xff]
          %v7105 = vld [vmem:[#allocation23 + $0x8a8] sm:$0xff]
          %v7106 = vld [vmem:[#allocation23 + $0x8b0] sm:$0xff]
          %v7107 = vld [vmem:[#allocation23 + $0x8b8] sm:$0xff]
          %v7108 = vld [vmem:[#allocation23 + $0x8c0] sm:$0xff]
          %v7109 = vld [vmem:[#allocation23 + $0x8c8] sm:$0xff]
          %v7110 = vld [vmem:[#allocation23 + $0x8d0] sm:$0xff]
          %v7111 = vld [vmem:[#allocation23 + $0x8d8] sm:$0xff]
          %v7112 = vld [vmem:[#allocation23 + $0x8e0] sm:$0xff]
          %v7113 = vld [vmem:[#allocation23 + $0x8e8] sm:$0xff]
          %v7114 = vld [vmem:[#allocation23 + $0x8f0] sm:$0xff]
          %v7115 = vld [vmem:[#allocation23 + $0x8f8] sm:$0xff]
          %v7116 = vld [vmem:[#allocation23 + $0x900] sm:$0xff]
          %v7117 = vld [vmem:[#allocation23 + $0x908] sm:$0xff]
          %v7118 = vld [vmem:[#allocation23 + $0x910] sm:$0xff]
          %v7119 = vld [vmem:[#allocation23 + $0x918] sm:$0xff]
          %v7120 = vld [vmem:[#allocation23 + $0x920] sm:$0xff]
          %v7121 = vld [vmem:[#allocation23 + $0x928] sm:$0xff]
          %v7122 = vld [vmem:[#allocation23 + $0x930] sm:$0xff]
          %v7123 = vld [vmem:[#allocation23 + $0x938] sm:$0xff]
          %v7124 = vld [vmem:[#allocation23 + $0x940] sm:$0xff]
          %v7125 = vld [vmem:[#allocation23 + $0x948] sm:$0xff]
          %v7126 = vld [vmem:[#allocation23 + $0x950] sm:$0xff]
          %v7127 = vld [vmem:[#allocation23 + $0x958] sm:$0xff]
          %v7128 = vld [vmem:[#allocation23 + $0x960] sm:$0xff]
          %v7129 = vld [vmem:[#allocation23 + $0x968] sm:$0xff]
          %v7130 = vld [vmem:[#allocation23 + $0x970] sm:$0xff]
          %v7131 = vld [vmem:[#allocation23 + $0x978] sm:$0xff]
          %v7132 = vld [vmem:[#allocation23 + $0x980] sm:$0xff]
          %v7133 = vld [vmem:[#allocation23 + $0x988] sm:$0xff]
          %v7134 = vld [vmem:[#allocation23 + $0x990] sm:$0xff]
          %v7135 = vld [vmem:[#allocation23 + $0x998] sm:$0xff]
          %v7136 = vld [vmem:[#allocation23 + $0x9a0] sm:$0xff]
          %v7137 = vld [vmem:[#allocation23 + $0x9a8] sm:$0xff]
          %v7138 = vld [vmem:[#allocation23 + $0x9b0] sm:$0xff]
          %v7139 = vld [vmem:[#allocation23 + $0x9b8] sm:$0xff]
          %v7140 = vld [vmem:[#allocation23 + $0x9c0] sm:$0xff]
          %v7141 = vld [vmem:[#allocation23 + $0x9c8] sm:$0xff]
          %v7142 = vld [vmem:[#allocation23 + $0x9d0] sm:$0xff]
          %v7143 = vld [vmem:[#allocation23 + $0x9d8] sm:$0xff]
          %v7144 = vld [vmem:[#allocation23 + $0x9e0] sm:$0xff]
          %v7145 = vld [vmem:[#allocation23 + $0x9e8] sm:$0xff]
          %v7146 = vld [vmem:[#allocation23 + $0x9f0] sm:$0xff]
          %v7147 = vld [vmem:[#allocation23 + $0x9f8] sm:$0xff]
          %v7148 = vld [vmem:[#allocation23 + $0xa00] sm:$0xff]
          %v7149 = vld [vmem:[#allocation23 + $0xa08] sm:$0xff]
          %v7150 = vld [vmem:[#allocation23 + $0xa10] sm:$0xff]
          %v7151 = vld [vmem:[#allocation23 + $0xa18] sm:$0xff]
          %v7152 = vld [vmem:[#allocation23 + $0xa20] sm:$0xff]
          %v7153 = vld [vmem:[#allocation23 + $0xa28] sm:$0xff]
          %v7154 = vld [vmem:[#allocation23 + $0xa30] sm:$0xff]
          %v7155 = vld [vmem:[#allocation23 + $0xa38] sm:$0xff]
          %v7156 = vld [vmem:[#allocation23 + $0xa40] sm:$0xff]
          %v7157 = vld [vmem:[#allocation23 + $0xa48] sm:$0xff]
          %v7158 = vld [vmem:[#allocation23 + $0xa50] sm:$0xff]
          %v7159 = vld [vmem:[#allocation23 + $0xa58] sm:$0xff]
          %v7160 = vld [vmem:[#allocation23 + $0xa60] sm:$0xff]
          %v7161 = vld [vmem:[#allocation23 + $0xa68] sm:$0xff]
          %v7162 = vld [vmem:[#allocation23 + $0xa70] sm:$0xff]
          %v7163 = vld [vmem:[#allocation23 + $0xa78] sm:$0xff]
          %v7164 = vld [vmem:[#allocation23 + $0xa80] sm:$0xff]
          %v7165 = vld [vmem:[#allocation23 + $0xa88] sm:$0xff]
          %v7166 = vld [vmem:[#allocation23 + $0xa90] sm:$0xff]
          %v7167 = vld [vmem:[#allocation23 + $0xa98] sm:$0xff]
          %v7168 = vld [vmem:[#allocation23 + $0xaa0] sm:$0xff]
          %v7169 = vld [vmem:[#allocation23 + $0xaa8] sm:$0xff]
          %v7170 = vld [vmem:[#allocation23 + $0xab0] sm:$0xff]
          %v7171 = vld [vmem:[#allocation23 + $0xab8] sm:$0xff]
          %v7172 = vld [vmem:[#allocation23 + $0xac0] sm:$0xff]
          %v7173 = vld [vmem:[#allocation23 + $0xac8] sm:$0xff]
          %v7174 = vld [vmem:[#allocation23 + $0xad0] sm:$0xff]
          %v7175 = vld [vmem:[#allocation23 + $0xad8] sm:$0xff]
          %v7176 = vld [vmem:[#allocation23 + $0xae0] sm:$0xff]
          %v7177 = vld [vmem:[#allocation23 + $0xae8] sm:$0xff]
          %v7178 = vld [vmem:[#allocation23 + $0xaf0] sm:$0xff]
          %v7179 = vld [vmem:[#allocation23 + $0xaf8] sm:$0xff]
          %v7180 = vld [vmem:[#allocation23 + $0xb00] sm:$0xff]
          %v7181 = vld [vmem:[#allocation23 + $0xb08] sm:$0xff]
          %v7182 = vld [vmem:[#allocation23 + $0xb10] sm:$0xff]
          %v7183 = vld [vmem:[#allocation23 + $0xb18] sm:$0xff]
          %v7184 = vld [vmem:[#allocation23 + $0xb20] sm:$0xff]
          %v7185 = vld [vmem:[#allocation23 + $0xb28] sm:$0xff]
          %v7186 = vld [vmem:[#allocation23 + $0xb30] sm:$0xff]
          %v7187 = vld [vmem:[#allocation23 + $0xb38] sm:$0xff]
          %v7188 = vld [vmem:[#allocation23 + $0xb40] sm:$0xff]
          %v7189 = vld [vmem:[#allocation23 + $0xb48] sm:$0xff]
          %v7190 = vld [vmem:[#allocation23 + $0xb50] sm:$0xff]
          %v7191 = vld [vmem:[#allocation23 + $0xb58] sm:$0xff]
          %v7192 = vld [vmem:[#allocation23 + $0xb60] sm:$0xff]
          %v7193 = vld [vmem:[#allocation23 + $0xb68] sm:$0xff]
          %v7194 = vld [vmem:[#allocation23 + $0xb70] sm:$0xff]
          %v7195 = vld [vmem:[#allocation23 + $0xb78] sm:$0xff]
          %v7196 = vld [vmem:[#allocation23 + $0xb80] sm:$0xff]
          %v7197 = vld [vmem:[#allocation23 + $0xb88] sm:$0xff]
          %v7198 = vld [vmem:[#allocation23 + $0xb90] sm:$0xff]
          %v7199 = vld [vmem:[#allocation23 + $0xb98] sm:$0xff]
          %v7200 = vld [vmem:[#allocation23 + $0xba0] sm:$0xff]
          %v7201 = vld [vmem:[#allocation23 + $0xba8] sm:$0xff]
          %v7202 = vld [vmem:[#allocation23 + $0xbb0] sm:$0xff]
          %v7203 = vld [vmem:[#allocation23 + $0xbb8] sm:$0xff]
          %v7204 = vld [vmem:[#allocation23 + $0xbc0] sm:$0xff]
          %v7205 = vld [vmem:[#allocation23 + $0xbc8] sm:$0xff]
          %v7206 = vld [vmem:[#allocation23 + $0xbd0] sm:$0xff]
          %v7207 = vld [vmem:[#allocation23 + $0xbd8] sm:$0xff]
          %v7208 = vld [vmem:[#allocation23 + $0xbe0] sm:$0xff]
          %v7209 = vld [vmem:[#allocation23 + $0xbe8] sm:$0xff]
          %v7210 = vld [vmem:[#allocation23 + $0xbf0] sm:$0xff]
          %v7211 = vld [vmem:[#allocation23 + $0xbf8] sm:$0xff]
          %v7212 = vld [vmem:[#allocation23 + $0xc00] sm:$0xff]
          %v7213 = vld [vmem:[#allocation23 + $0xc08] sm:$0xff]
          %v7214 = vld [vmem:[#allocation23 + $0xc10] sm:$0xff]
          %v7215 = vld [vmem:[#allocation23 + $0xc18] sm:$0xff]
          %v7216 = vld [vmem:[#allocation23 + $0xc20] sm:$0xff]
          %v7217 = vld [vmem:[#allocation23 + $0xc28] sm:$0xff]
          %v7218 = vld [vmem:[#allocation23 + $0xc30] sm:$0xff]
          %v7219 = vld [vmem:[#allocation23 + $0xc38] sm:$0xff]
          %v7220 = vld [vmem:[#allocation23 + $0xc40] sm:$0xff]
          %v7221 = vld [vmem:[#allocation23 + $0xc48] sm:$0xff]
          %v7222 = vld [vmem:[#allocation23 + $0xc50] sm:$0xff]
          %v7223 = vld [vmem:[#allocation23 + $0xc58] sm:$0xff]
          %v7224 = vld [vmem:[#allocation23 + $0xc60] sm:$0xff]
          %v7225 = vld [vmem:[#allocation23 + $0xc68] sm:$0xff]
          %v7226 = vld [vmem:[#allocation23 + $0xc70] sm:$0xff]
          %v7227 = vld [vmem:[#allocation23 + $0xc78] sm:$0xff]
          %v7228 = vld [vmem:[#allocation23 + $0xc80] sm:$0xff]
          %v7229 = vld [vmem:[#allocation23 + $0xc88] sm:$0xff]
          %v7230 = vld [vmem:[#allocation23 + $0xc90] sm:$0xff]
          %v7231 = vld [vmem:[#allocation23 + $0xc98] sm:$0xff]
          %v7232 = vld [vmem:[#allocation23 + $0xca0] sm:$0xff]
          %v7233 = vld [vmem:[#allocation23 + $0xca8] sm:$0xff]
          %v7234 = vld [vmem:[#allocation23 + $0xcb0] sm:$0xff]
          %v7235 = vld [vmem:[#allocation23 + $0xcb8] sm:$0xff]
          %v7236 = vld [vmem:[#allocation23 + $0xcc0] sm:$0xff]
          %v7237 = vld [vmem:[#allocation23 + $0xcc8] sm:$0xff]
          %v7238 = vld [vmem:[#allocation23 + $0xcd0] sm:$0xff]
          %v7239 = vld [vmem:[#allocation23 + $0xcd8] sm:$0xff]
          %v7240 = vld [vmem:[#allocation23 + $0xce0] sm:$0xff]
          %v7241 = vld [vmem:[#allocation23 + $0xce8] sm:$0xff]
          %v7242 = vld [vmem:[#allocation23 + $0xcf0] sm:$0xff]
          %v7243 = vld [vmem:[#allocation23 + $0xcf8] sm:$0xff]
          %v7244 = vld [vmem:[#allocation23 + $0xd00] sm:$0xff]
          %v7245 = vld [vmem:[#allocation23 + $0xd08] sm:$0xff]
          %v7246 = vld [vmem:[#allocation23 + $0xd10] sm:$0xff]
          %v7247 = vld [vmem:[#allocation23 + $0xd18] sm:$0xff]
          %v7248 = vld [vmem:[#allocation23 + $0xd20] sm:$0xff]
          %v7249 = vld [vmem:[#allocation23 + $0xd28] sm:$0xff]
          %v7250 = vld [vmem:[#allocation23 + $0xd30] sm:$0xff]
          %v7251 = vld [vmem:[#allocation23 + $0xd38] sm:$0xff]
          %v7252 = vld [vmem:[#allocation23 + $0xd40] sm:$0xff]
          %v7253 = vld [vmem:[#allocation23 + $0xd48] sm:$0xff]
          %v7254 = vld [vmem:[#allocation23 + $0xd50] sm:$0xff]
          %v7255 = vld [vmem:[#allocation23 + $0xd58] sm:$0xff]
          %v7256 = vld [vmem:[#allocation23 + $0xd60] sm:$0xff]
          %v7257 = vld [vmem:[#allocation23 + $0xd68] sm:$0xff]
          %v7258 = vld [vmem:[#allocation23 + $0xd70] sm:$0xff]
          %v7259 = vld [vmem:[#allocation23 + $0xd78] sm:$0xff]
          %v7260 = vld [vmem:[#allocation23 + $0xd80] sm:$0xff]
          %v7261 = vld [vmem:[#allocation23 + $0xd88] sm:$0xff]
          %v7262 = vld [vmem:[#allocation23 + $0xd90] sm:$0xff]
          %v7263 = vld [vmem:[#allocation23 + $0xd98] sm:$0xff]
          %v7264 = vld [vmem:[#allocation23 + $0xda0] sm:$0xff]
          %v7265 = vld [vmem:[#allocation23 + $0xda8] sm:$0xff]
          %v7266 = vld [vmem:[#allocation23 + $0xdb0] sm:$0xff]
          %v7267 = vld [vmem:[#allocation23 + $0xdb8] sm:$0xff]
          %v7268 = vld [vmem:[#allocation23 + $0xdc0] sm:$0xff]
          %v7269 = vld [vmem:[#allocation23 + $0xdc8] sm:$0xff]
          %v7270 = vld [vmem:[#allocation23 + $0xdd0] sm:$0xff]
          %v7271 = vld [vmem:[#allocation23 + $0xdd8] sm:$0xff]
          %v7272 = vld [vmem:[#allocation23 + $0xde0] sm:$0xff]
          %v7273 = vld [vmem:[#allocation23 + $0xde8] sm:$0xff]
          %v7274 = vld [vmem:[#allocation23 + $0xdf0] sm:$0xff]
          %v7275 = vld [vmem:[#allocation23 + $0xdf8] sm:$0xff]
          %v7276 = vld [vmem:[#allocation23 + $0xe00] sm:$0xff]
          %v7277 = vld [vmem:[#allocation23 + $0xe08] sm:$0xff]
          %v7278 = vld [vmem:[#allocation23 + $0xe10] sm:$0xff]
          %v7279 = vld [vmem:[#allocation23 + $0xe18] sm:$0xff]
          %v7280 = vld [vmem:[#allocation23 + $0xe20] sm:$0xff]
          %v7281 = vld [vmem:[#allocation23 + $0xe28] sm:$0xff]
          %v7282 = vld [vmem:[#allocation23 + $0xe30] sm:$0xff]
          %v7283 = vld [vmem:[#allocation23 + $0xe38] sm:$0xff]
          %v7284 = vld [vmem:[#allocation23 + $0xe40] sm:$0xff]
          %v7285 = vld [vmem:[#allocation23 + $0xe48] sm:$0xff]
          %v7286 = vld [vmem:[#allocation23 + $0xe50] sm:$0xff]
          %v7287 = vld [vmem:[#allocation23 + $0xe58] sm:$0xff]
          %v7288 = vld [vmem:[#allocation23 + $0xe60] sm:$0xff]
          %v7289 = vld [vmem:[#allocation23 + $0xe68] sm:$0xff]
          %v7290 = vld [vmem:[#allocation23 + $0xe70] sm:$0xff]
          %v7291 = vld [vmem:[#allocation23 + $0xe78] sm:$0xff]
          %v7292 = vld [vmem:[#allocation23 + $0xe80] sm:$0xff]
          %v7293 = vld [vmem:[#allocation23 + $0xe88] sm:$0xff]
          %v7294 = vld [vmem:[#allocation23 + $0xe90] sm:$0xff]
          %v7295 = vld [vmem:[#allocation23 + $0xe98] sm:$0xff]
          %v7296 = vld [vmem:[#allocation23 + $0xea0] sm:$0xff]
          %v7297 = vld [vmem:[#allocation23 + $0xea8] sm:$0xff]
          %v7298 = vld [vmem:[#allocation23 + $0xeb0] sm:$0xff]
          %v7299 = vld [vmem:[#allocation23 + $0xeb8] sm:$0xff]
          %v7300 = vld [vmem:[#allocation23 + $0xec0] sm:$0xff]
          %v7301 = vld [vmem:[#allocation23 + $0xec8] sm:$0xff]
          %v7302 = vld [vmem:[#allocation23 + $0xed0] sm:$0xff]
          %v7303 = vld [vmem:[#allocation23 + $0xed8] sm:$0xff]
          %v7304 = vld [vmem:[#allocation23 + $0xee0] sm:$0xff]
          %v7305 = vld [vmem:[#allocation23 + $0xee8] sm:$0xff]
          %v7306 = vld [vmem:[#allocation23 + $0xef0] sm:$0xff]
          %v7307 = vld [vmem:[#allocation23 + $0xef8] sm:$0xff]
          %v7308 = vld [vmem:[#allocation23 + $0xf00] sm:$0xff]
          %v7309 = vld [vmem:[#allocation23 + $0xf08] sm:$0xff]
          %v7310 = vld [vmem:[#allocation23 + $0xf10] sm:$0xff]
          %v7311 = vld [vmem:[#allocation23 + $0xf18] sm:$0xff]
          %v7312 = vld [vmem:[#allocation23 + $0xf20] sm:$0xff]
          %v7313 = vld [vmem:[#allocation23 + $0xf28] sm:$0xff]
          %v7314 = vld [vmem:[#allocation23 + $0xf30] sm:$0xff]
          %v7315 = vld [vmem:[#allocation23 + $0xf38] sm:$0xff]
          %v7316 = vld [vmem:[#allocation23 + $0xf40] sm:$0xff]
          %v7317 = vld [vmem:[#allocation23 + $0xf48] sm:$0xff]
          %v7318 = vld [vmem:[#allocation23 + $0xf50] sm:$0xff]
          %v7319 = vld [vmem:[#allocation23 + $0xf58] sm:$0xff]
          %v7320 = vld [vmem:[#allocation23 + $0xf60] sm:$0xff]
          %v7321 = vld [vmem:[#allocation23 + $0xf68] sm:$0xff]
          %v7322 = vld [vmem:[#allocation23 + $0xf70] sm:$0xff]
          %v7323 = vld [vmem:[#allocation23 + $0xf78] sm:$0xff]
          %v7324 = vld [vmem:[#allocation23 + $0xf80] sm:$0xff]
          %v7325 = vld [vmem:[#allocation23 + $0xf88] sm:$0xff]
          %v7326 = vld [vmem:[#allocation23 + $0xf90] sm:$0xff]
          %v7327 = vld [vmem:[#allocation23 + $0xf98] sm:$0xff]
          %v7328 = vld [vmem:[#allocation23 + $0xfa0] sm:$0xff]
          %v7329 = vld [vmem:[#allocation23 + $0xfa8] sm:$0xff]
          %v7330 = vld [vmem:[#allocation23 + $0xfb0] sm:$0xff]
          %v7331 = vld [vmem:[#allocation23 + $0xfb8] sm:$0xff]
          %v7332 = vld [vmem:[#allocation23 + $0xfc0] sm:$0xff]
          %v7333 = vld [vmem:[#allocation23 + $0xfc8] sm:$0xff]
          %v7334 = vld [vmem:[#allocation23 + $0xfd0] sm:$0xff]
          %v7335 = vld [vmem:[#allocation23 + $0xfd8] sm:$0xff]
          %v7336 = vld [vmem:[#allocation23 + $0xfe0] sm:$0xff]
          %v7337 = vld [vmem:[#allocation23 + $0xfe8] sm:$0xff]
          %v7338 = vld [vmem:[#allocation23 + $0xff0] sm:$0xff]
          %v7339 = vld [vmem:[#allocation23 + $0xff8] sm:$0xff]
          %v7340 = vld [vmem:[#allocation23 + $0x1000] sm:$0xff]
          %v7341 = vld [vmem:[#allocation23 + $0x1008] sm:$0xff]
          %v7342 = vld [vmem:[#allocation23 + $0x1010] sm:$0xff]
          %v7343 = vld [vmem:[#allocation23 + $0x1018] sm:$0xff]
          %v7344 = vld [vmem:[#allocation23 + $0x1020] sm:$0xff]
          %v7345 = vld [vmem:[#allocation23 + $0x1028] sm:$0xff]
          %v7346 = vld [vmem:[#allocation23 + $0x1030] sm:$0xff]
          %v7347 = vld [vmem:[#allocation23 + $0x1038] sm:$0xff]
          %v7348 = vld [vmem:[#allocation23 + $0x1040] sm:$0xff]
          %v7349 = vld [vmem:[#allocation23 + $0x1048] sm:$0xff]
          %v7350 = vld [vmem:[#allocation23 + $0x1050] sm:$0xff]
          %v7351 = vld [vmem:[#allocation23 + $0x1058] sm:$0xff]
          %v7352 = vld [vmem:[#allocation23 + $0x1060] sm:$0xff]
          %v7353 = vld [vmem:[#allocation23 + $0x1068] sm:$0xff]
          %v7354 = vld [vmem:[#allocation23 + $0x1070] sm:$0xff]
          %v7355 = vld [vmem:[#allocation23 + $0x1078] sm:$0xff]
          %v7356 = vld [vmem:[#allocation23 + $0x1080] sm:$0xff]
          %v7357 = vld [vmem:[#allocation23 + $0x1088] sm:$0xff]
          %v7358 = vld [vmem:[#allocation23 + $0x1090] sm:$0xff]
          %v7359 = vld [vmem:[#allocation23 + $0x1098] sm:$0xff]
          %v7360 = vld [vmem:[#allocation23 + $0x10a0] sm:$0xff]
          %v7361 = vld [vmem:[#allocation23 + $0x10a8] sm:$0xff]
          %v7362 = vld [vmem:[#allocation23 + $0x10b0] sm:$0xff]
          %v7363 = vld [vmem:[#allocation23 + $0x10b8] sm:$0xff]
          %v7364 = vld [vmem:[#allocation23 + $0x10c0] sm:$0xff]
          %v7365 = vld [vmem:[#allocation23 + $0x10c8] sm:$0xff]
          %v7366 = vld [vmem:[#allocation23 + $0x10d0] sm:$0xff]
          %v7367 = vld [vmem:[#allocation23 + $0x10d8] sm:$0xff]
          %v7368 = vld [vmem:[#allocation23 + $0x10e0] sm:$0xff]
          %v7369 = vld [vmem:[#allocation23 + $0x10e8] sm:$0xff]
          %v7370 = vld [vmem:[#allocation23 + $0x10f0] sm:$0xff]
          %v7371 = vld [vmem:[#allocation23 + $0x10f8] sm:$0xff]
          %v7372 = vld [vmem:[#allocation23 + $0x1100] sm:$0xff]
          %v7373 = vld [vmem:[#allocation23 + $0x1108] sm:$0xff]
          %v7374 = vld [vmem:[#allocation23 + $0x1110] sm:$0xff]
          %v7375 = vld [vmem:[#allocation23 + $0x1118] sm:$0xff]
          %v7376 = vld [vmem:[#allocation23 + $0x1120] sm:$0xff]
          %v7377 = vld [vmem:[#allocation23 + $0x1128] sm:$0xff]
          %v7378 = vld [vmem:[#allocation23 + $0x1130] sm:$0xff]
          %v7379 = vld [vmem:[#allocation23 + $0x1138] sm:$0xff]
          %v7380 = vld [vmem:[#allocation23 + $0x1140] sm:$0xff]
          %v7381 = vld [vmem:[#allocation23 + $0x1148] sm:$0xff]
          %v7382 = vld [vmem:[#allocation23 + $0x1150] sm:$0xff]
          %v7383 = vld [vmem:[#allocation23 + $0x1158] sm:$0xff]
          %v7384 = vld [vmem:[#allocation23 + $0x1160] sm:$0xff]
          %v7385 = vld [vmem:[#allocation23 + $0x1168] sm:$0xff]
          %v7386 = vld [vmem:[#allocation23 + $0x1170] sm:$0xff]
          %v7387 = vld [vmem:[#allocation23 + $0x1178] sm:$0xff]
          %v7388 = vld [vmem:[#allocation23 + $0x1180] sm:$0xff]
          %v7389 = vld [vmem:[#allocation23 + $0x1188] sm:$0xff]
          %v7390 = vld [vmem:[#allocation23 + $0x1190] sm:$0xff]
          %v7391 = vld [vmem:[#allocation23 + $0x1198] sm:$0xff]
          %v7392 = vld [vmem:[#allocation23 + $0x11a0] sm:$0xff]
          %v7393 = vld [vmem:[#allocation23 + $0x11a8] sm:$0xff]
          %v7394 = vld [vmem:[#allocation23 + $0x11b0] sm:$0xff]
          %v7395 = vld [vmem:[#allocation23 + $0x11b8] sm:$0xff]
          %v7396 = vld [vmem:[#allocation23 + $0x11c0] sm:$0xff]
          %v7397 = vld [vmem:[#allocation23 + $0x11c8] sm:$0xff]
          %v7398 = vld [vmem:[#allocation23 + $0x11d0] sm:$0xff]
          %v7399 = vld [vmem:[#allocation23 + $0x11d8] sm:$0xff]
          %v7400 = vld [vmem:[#allocation23 + $0x11e0] sm:$0xff]
          %v7401 = vld [vmem:[#allocation23 + $0x11e8] sm:$0xff]
          %v7402 = vld [vmem:[#allocation23 + $0x11f0] sm:$0xff]
          %v7403 = vld [vmem:[#allocation23 + $0x11f8] sm:$0xff]
          %v7404 = vld [vmem:[#allocation23 + $0x1200] sm:$0xff]
          %v7405 = vld [vmem:[#allocation23 + $0x1208] sm:$0xff]
          %v7406 = vld [vmem:[#allocation23 + $0x1210] sm:$0xff]
          %v7407 = vld [vmem:[#allocation23 + $0x1218] sm:$0xff]
          %v7408 = vld [vmem:[#allocation23 + $0x1220] sm:$0xff]
          %v7409 = vld [vmem:[#allocation23 + $0x1228] sm:$0xff]
          %v7410 = vld [vmem:[#allocation23 + $0x1230] sm:$0xff]
          %v7411 = vld [vmem:[#allocation23 + $0x1238] sm:$0xff]
          %v7412 = vld [vmem:[#allocation23 + $0x1240] sm:$0xff]
          %v7413 = vld [vmem:[#allocation23 + $0x1248] sm:$0xff]
          %v7414 = vld [vmem:[#allocation23 + $0x1250] sm:$0xff]
          %v7415 = vld [vmem:[#allocation23 + $0x1258] sm:$0xff]
          %v7416 = vld [vmem:[#allocation25] sm:$0x3f]
          %v7418 = vlaneseq
          %v7419 = vshrl.u32 %v7418, 7
          %v7420 = vsub.s32 0, %v7419
          %v7421 = vrot.slane %v7416, %v7420
          %v7422 = vlaneseq
          %v7423 = vshrl.u32 %v7422, 7
          %v7424 = vsub.s32 1, %v7423
          %v7425 = vrot.slane %v7416, %v7424
          %v7426 = vlaneseq
          %v7427 = vshrl.u32 %v7426, 7
          %v7428 = vsub.s32 2, %v7427
          %v7429 = vrot.slane %v7416, %v7428
          %v7430 = vlaneseq
          %v7431 = vshrl.u32 %v7430, 7
          %v7432 = vsub.s32 3, %v7431
          %v7433 = vrot.slane %v7416, %v7432
          %v7434 = vlaneseq
          %v7435 = vshrl.u32 %v7434, 7
          %v7436 = vsub.s32 4, %v7435
          %v7437 = vrot.slane %v7416, %v7436
          %v7438 = vlaneseq
          %v7439 = vshrl.u32 %v7438, 7
          %v7440 = vsub.s32 5, %v7439
          %v7441 = vrot.slane %v7416, %v7440
          %v8036 = vunpack.c.l.b16 %v6828
          %v8037 = vunpack.c.h.b16 %v6828
          %v8038 = vunpack.c.l.b16 %v6829
          %v8039 = vunpack.c.h.b16 %v6829
          %v8040 = vunpack.c.l.b16 %v6830
          %v8041 = vunpack.c.h.b16 %v6830
          %v8042 = vunpack.c.l.b16 %v6831
          %v8043 = vunpack.c.h.b16 %v6831
          %v8044 = vunpack.c.l.b16 %v6832
          %v8045 = vunpack.c.h.b16 %v6832
          %v8046 = vunpack.c.l.b16 %v6833
          %v8047 = vunpack.c.h.b16 %v6833
          %v8048 = vunpack.c.l.b16 %v6834
          %v8049 = vunpack.c.h.b16 %v6834
          %v8050 = vunpack.c.l.b16 %v6835
          %v8051 = vunpack.c.h.b16 %v6835
          %v8052 = vunpack.c.l.b16 %v6836
          %v8053 = vunpack.c.h.b16 %v6836
          %v8054 = vunpack.c.l.b16 %v6837
          %v8055 = vunpack.c.h.b16 %v6837
          %v8056 = vunpack.c.l.b16 %v6838
          %v8057 = vunpack.c.h.b16 %v6838
          %v8058 = vunpack.c.l.b16 %v6839
          %v8059 = vunpack.c.h.b16 %v6839
          %v8060 = vunpack.c.l.b16 %v6840
          %v8061 = vunpack.c.h.b16 %v6840
          %v8062 = vunpack.c.l.b16 %v6841
          %v8063 = vunpack.c.h.b16 %v6841
          %v8064 = vunpack.c.l.b16 %v6842
          %v8065 = vunpack.c.h.b16 %v6842
          %v8066 = vunpack.c.l.b16 %v6843
          %v8067 = vunpack.c.h.b16 %v6843
          %v8068 = vunpack.c.l.b16 %v6844
          %v8069 = vunpack.c.h.b16 %v6844
          %v8070 = vunpack.c.l.b16 %v6845
          %v8071 = vunpack.c.h.b16 %v6845
          %v8072 = vunpack.c.l.b16 %v6846
          %v8073 = vunpack.c.h.b16 %v6846
          %v8074 = vunpack.c.l.b16 %v6847
          %v8075 = vunpack.c.h.b16 %v6847
          %v8076 = vunpack.c.l.b16 %v6848
          %v8077 = vunpack.c.h.b16 %v6848
          %v8078 = vunpack.c.l.b16 %v6849
          %v8079 = vunpack.c.h.b16 %v6849
          %v8080 = vunpack.c.l.b16 %v6850
          %v8081 = vunpack.c.h.b16 %v6850
          %v8082 = vunpack.c.l.b16 %v6851
          %v8083 = vunpack.c.h.b16 %v6851
          %v8084 = vunpack.c.l.b16 %v6852
          %v8085 = vunpack.c.h.b16 %v6852
          %v8086 = vunpack.c.l.b16 %v6853
          %v8087 = vunpack.c.h.b16 %v6853
          %v8088 = vunpack.c.l.b16 %v6854
          %v8089 = vunpack.c.h.b16 %v6854
          %v8090 = vunpack.c.l.b16 %v6855
          %v8091 = vunpack.c.h.b16 %v6855
          %v8092 = vunpack.c.l.b16 %v6856
          %v8093 = vunpack.c.h.b16 %v6856
          %v8094 = vunpack.c.l.b16 %v6857
          %v8095 = vunpack.c.h.b16 %v6857
          %v8096 = vunpack.c.l.b16 %v6858
          %v8097 = vunpack.c.h.b16 %v6858
          %v8098 = vunpack.c.l.b16 %v6859
          %v8099 = vunpack.c.h.b16 %v6859
          %v8100 = vunpack.c.l.b16 %v6860
          %v8101 = vunpack.c.h.b16 %v6860
          %v8102 = vunpack.c.l.b16 %v6861
          %v8103 = vunpack.c.h.b16 %v6861
          %v8104 = vunpack.c.l.b16 %v6862
          %v8105 = vunpack.c.h.b16 %v6862
          %v8106 = vunpack.c.l.b16 %v6863
          %v8107 = vunpack.c.h.b16 %v6863
          %v8108 = vunpack.c.l.b16 %v6864
          %v8109 = vunpack.c.h.b16 %v6864
          %v8110 = vunpack.c.l.b16 %v6865
          %v8111 = vunpack.c.h.b16 %v6865
          %v8112 = vunpack.c.l.b16 %v6866
          %v8113 = vunpack.c.h.b16 %v6866
          %v8114 = vunpack.c.l.b16 %v6867
          %v8115 = vunpack.c.h.b16 %v6867
          %v8116 = vunpack.c.l.b16 %v6868
          %v8117 = vunpack.c.h.b16 %v6868
          %v8118 = vunpack.c.l.b16 %v6869
          %v8119 = vunpack.c.h.b16 %v6869
          %v8120 = vunpack.c.l.b16 %v6870
          %v8121 = vunpack.c.h.b16 %v6870
          %v8122 = vunpack.c.l.b16 %v6871
          %v8123 = vunpack.c.h.b16 %v6871
          %v8124 = vunpack.c.l.b16 %v6872
          %v8125 = vunpack.c.h.b16 %v6872
          %v8126 = vunpack.c.l.b16 %v6873
          %v8127 = vunpack.c.h.b16 %v6873
          %v8128 = vunpack.c.l.b16 %v6874
          %v8129 = vunpack.c.h.b16 %v6874
          %v8130 = vunpack.c.l.b16 %v6875
          %v8131 = vunpack.c.h.b16 %v6875
          %v8132 = vunpack.c.l.b16 %v6876
          %v8133 = vunpack.c.h.b16 %v6876
          %v8134 = vunpack.c.l.b16 %v6877
          %v8135 = vunpack.c.h.b16 %v6877
          %v8136 = vunpack.c.l.b16 %v6878
          %v8137 = vunpack.c.h.b16 %v6878
          %v8138 = vunpack.c.l.b16 %v6879
          %v8139 = vunpack.c.h.b16 %v6879
          %v8140 = vunpack.c.l.b16 %v6880
          %v8141 = vunpack.c.h.b16 %v6880
          %v8142 = vunpack.c.l.b16 %v6881
          %v8143 = vunpack.c.h.b16 %v6881
          %v8144 = vunpack.c.l.b16 %v6882
          %v8145 = vunpack.c.h.b16 %v6882
          %v8146 = vunpack.c.l.b16 %v6883
          %v8147 = vunpack.c.h.b16 %v6883
          %v8148 = vunpack.c.l.b16 %v6884
          %v8149 = vunpack.c.h.b16 %v6884
          %v8150 = vunpack.c.l.b16 %v6885
          %v8151 = vunpack.c.h.b16 %v6885
          %v8152 = vunpack.c.l.b16 %v6886
          %v8153 = vunpack.c.h.b16 %v6886
          %v8154 = vunpack.c.l.b16 %v6887
          %v8155 = vunpack.c.h.b16 %v6887
          %v8156 = vunpack.c.l.b16 %v6888
          %v8157 = vunpack.c.h.b16 %v6888
          %v8158 = vunpack.c.l.b16 %v6889
          %v8159 = vunpack.c.h.b16 %v6889
          %v8160 = vunpack.c.l.b16 %v6890
          %v8161 = vunpack.c.h.b16 %v6890
          %v8162 = vunpack.c.l.b16 %v6891
          %v8163 = vunpack.c.h.b16 %v6891
          %v8164 = vunpack.c.l.b16 %v6892
          %v8165 = vunpack.c.h.b16 %v6892
          %v8166 = vunpack.c.l.b16 %v6893
          %v8167 = vunpack.c.h.b16 %v6893
          %v8168 = vunpack.c.l.b16 %v6894
          %v8169 = vunpack.c.h.b16 %v6894
          %v8170 = vunpack.c.l.b16 %v6895
          %v8171 = vunpack.c.h.b16 %v6895
          %v8172 = vunpack.c.l.b16 %v6896
          %v8173 = vunpack.c.h.b16 %v6896
          %v8174 = vunpack.c.l.b16 %v6897
          %v8175 = vunpack.c.h.b16 %v6897
          %v8176 = vunpack.c.l.b16 %v6898
          %v8177 = vunpack.c.h.b16 %v6898
          %v8178 = vunpack.c.l.b16 %v6899
          %v8179 = vunpack.c.h.b16 %v6899
          %v8180 = vunpack.c.l.b16 %v6900
          %v8181 = vunpack.c.h.b16 %v6900
          %v8182 = vunpack.c.l.b16 %v6901
          %v8183 = vunpack.c.h.b16 %v6901
          %v8184 = vunpack.c.l.b16 %v6902
          %v8185 = vunpack.c.h.b16 %v6902
          %v8186 = vunpack.c.l.b16 %v6903
          %v8187 = vunpack.c.h.b16 %v6903
          %v8188 = vunpack.c.l.b16 %v6904
          %v8189 = vunpack.c.h.b16 %v6904
          %v8190 = vunpack.c.l.b16 %v6905
          %v8191 = vunpack.c.h.b16 %v6905
          %v8192 = vunpack.c.l.b16 %v6906
          %v8193 = vunpack.c.h.b16 %v6906
          %v8194 = vunpack.c.l.b16 %v6907
          %v8195 = vunpack.c.h.b16 %v6907
          %v8196 = vunpack.c.l.b16 %v6908
          %v8197 = vunpack.c.h.b16 %v6908
          %v8198 = vunpack.c.l.b16 %v6909
          %v8199 = vunpack.c.h.b16 %v6909
          %v8200 = vunpack.c.l.b16 %v6910
          %v8201 = vunpack.c.h.b16 %v6910
          %v8202 = vunpack.c.l.b16 %v6911
          %v8203 = vunpack.c.h.b16 %v6911
          %v8204 = vunpack.c.l.b16 %v6912
          %v8205 = vunpack.c.h.b16 %v6912
          %v8206 = vunpack.c.l.b16 %v6913
          %v8207 = vunpack.c.h.b16 %v6913
          %v8208 = vunpack.c.l.b16 %v6914
          %v8209 = vunpack.c.h.b16 %v6914
          %v8210 = vunpack.c.l.b16 %v6915
          %v8211 = vunpack.c.h.b16 %v6915
          %v8212 = vunpack.c.l.b16 %v6916
          %v8213 = vunpack.c.h.b16 %v6916
          %v8214 = vunpack.c.l.b16 %v6917
          %v8215 = vunpack.c.h.b16 %v6917
          %v8216 = vunpack.c.l.b16 %v6918
          %v8217 = vunpack.c.h.b16 %v6918
          %v8218 = vunpack.c.l.b16 %v6919
          %v8219 = vunpack.c.h.b16 %v6919
          %v8220 = vunpack.c.l.b16 %v6920
          %v8221 = vunpack.c.h.b16 %v6920
          %v8222 = vunpack.c.l.b16 %v6921
          %v8223 = vunpack.c.h.b16 %v6921
          %v8224 = vunpack.c.l.b16 %v6922
          %v8225 = vunpack.c.h.b16 %v6922
          %v8226 = vunpack.c.l.b16 %v6923
          %v8227 = vunpack.c.h.b16 %v6923
          %v8228 = vunpack.c.l.b16 %v6924
          %v8229 = vunpack.c.h.b16 %v6924
          %v8230 = vunpack.c.l.b16 %v6925
          %v8231 = vunpack.c.h.b16 %v6925
          %v8232 = vunpack.c.l.b16 %v6926
          %v8233 = vunpack.c.h.b16 %v6926
          %v8234 = vunpack.c.l.b16 %v6927
          %v8235 = vunpack.c.h.b16 %v6927
          %v8236 = vunpack.c.l.b16 %v6928
          %v8237 = vunpack.c.h.b16 %v6928
          %v8238 = vunpack.c.l.b16 %v6929
          %v8239 = vunpack.c.h.b16 %v6929
          %v8240 = vunpack.c.l.b16 %v6930
          %v8241 = vunpack.c.h.b16 %v6930
          %v8242 = vunpack.c.l.b16 %v6931
          %v8243 = vunpack.c.h.b16 %v6931
          %v8244 = vunpack.c.l.b16 %v6932
          %v8245 = vunpack.c.h.b16 %v6932
          %v8246 = vunpack.c.l.b16 %v6933
          %v8247 = vunpack.c.h.b16 %v6933
          %v8248 = vunpack.c.l.b16 %v6934
          %v8249 = vunpack.c.h.b16 %v6934
          %v8250 = vunpack.c.l.b16 %v6935
          %v8251 = vunpack.c.h.b16 %v6935
          %v8252 = vunpack.c.l.b16 %v6936
          %v8253 = vunpack.c.h.b16 %v6936
          %v8254 = vunpack.c.l.b16 %v6937
          %v8255 = vunpack.c.h.b16 %v6937
          %v8256 = vunpack.c.l.b16 %v6938
          %v8257 = vunpack.c.h.b16 %v6938
          %v8258 = vunpack.c.l.b16 %v6939
          %v8259 = vunpack.c.h.b16 %v6939
          %v8260 = vunpack.c.l.b16 %v6940
          %v8261 = vunpack.c.h.b16 %v6940
          %v8262 = vunpack.c.l.b16 %v6941
          %v8263 = vunpack.c.h.b16 %v6941
          %v8264 = vunpack.c.l.b16 %v6942
          %v8265 = vunpack.c.h.b16 %v6942
          %v8266 = vunpack.c.l.b16 %v6943
          %v8267 = vunpack.c.h.b16 %v6943
          %v8268 = vunpack.c.l.b16 %v6944
          %v8269 = vunpack.c.h.b16 %v6944
          %v8270 = vunpack.c.l.b16 %v6945
          %v8271 = vunpack.c.h.b16 %v6945
          %v8272 = vunpack.c.l.b16 %v6946
          %v8273 = vunpack.c.h.b16 %v6946
          %v8274 = vunpack.c.l.b16 %v6947
          %v8275 = vunpack.c.h.b16 %v6947
          %v8276 = vunpack.c.l.b16 %v6948
          %v8277 = vunpack.c.h.b16 %v6948
          %v8278 = vunpack.c.l.b16 %v6949
          %v8279 = vunpack.c.h.b16 %v6949
          %v8280 = vunpack.c.l.b16 %v6950
          %v8281 = vunpack.c.h.b16 %v6950
          %v8282 = vunpack.c.l.b16 %v6951
          %v8283 = vunpack.c.h.b16 %v6951
          %v8284 = vunpack.c.l.b16 %v6952
          %v8285 = vunpack.c.h.b16 %v6952
          %v8286 = vunpack.c.l.b16 %v6953
          %v8287 = vunpack.c.h.b16 %v6953
          %v8288 = vunpack.c.l.b16 %v6954
          %v8289 = vunpack.c.h.b16 %v6954
          %v8290 = vunpack.c.l.b16 %v6955
          %v8291 = vunpack.c.h.b16 %v6955
          %v8292 = vunpack.c.l.b16 %v6956
          %v8293 = vunpack.c.h.b16 %v6956
          %v8294 = vunpack.c.l.b16 %v6957
          %v8295 = vunpack.c.h.b16 %v6957
          %v8296 = vunpack.c.l.b16 %v6958
          %v8297 = vunpack.c.h.b16 %v6958
          %v8298 = vunpack.c.l.b16 %v6959
          %v8299 = vunpack.c.h.b16 %v6959
          %v8300 = vunpack.c.l.b16 %v6960
          %v8301 = vunpack.c.h.b16 %v6960
          %v8302 = vunpack.c.l.b16 %v6961
          %v8303 = vunpack.c.h.b16 %v6961
          %v8304 = vunpack.c.l.b16 %v6962
          %v8305 = vunpack.c.h.b16 %v6962
          %v8306 = vunpack.c.l.b16 %v6963
          %v8307 = vunpack.c.h.b16 %v6963
          %v8308 = vunpack.c.l.b16 %v6964
          %v8309 = vunpack.c.h.b16 %v6964
          %v8310 = vunpack.c.l.b16 %v6965
          %v8311 = vunpack.c.h.b16 %v6965
          %v8312 = vunpack.c.l.b16 %v6966
          %v8313 = vunpack.c.h.b16 %v6966
          %v8314 = vunpack.c.l.b16 %v6967
          %v8315 = vunpack.c.h.b16 %v6967
          %v8316 = vunpack.c.l.b16 %v6968
          %v8317 = vunpack.c.h.b16 %v6968
          %v8318 = vunpack.c.l.b16 %v6969
          %v8319 = vunpack.c.h.b16 %v6969
          %v8320 = vunpack.c.l.b16 %v6970
          %v8321 = vunpack.c.h.b16 %v6970
          %v8322 = vunpack.c.l.b16 %v6971
          %v8323 = vunpack.c.h.b16 %v6971
          %v8324 = vunpack.c.l.b16 %v6972
          %v8325 = vunpack.c.h.b16 %v6972
          %v8326 = vunpack.c.l.b16 %v6973
          %v8327 = vunpack.c.h.b16 %v6973
          %v8328 = vunpack.c.l.b16 %v6974
          %v8329 = vunpack.c.h.b16 %v6974
          %v8330 = vunpack.c.l.b16 %v6975
          %v8331 = vunpack.c.h.b16 %v6975
          %v8332 = vunpack.c.l.b16 %v6976
          %v8333 = vunpack.c.h.b16 %v6976
          %v8334 = vunpack.c.l.b16 %v6977
          %v8335 = vunpack.c.h.b16 %v6977
          %v8336 = vunpack.c.l.b16 %v6978
          %v8337 = vunpack.c.h.b16 %v6978
          %v8338 = vunpack.c.l.b16 %v6979
          %v8339 = vunpack.c.h.b16 %v6979
          %v8340 = vunpack.c.l.b16 %v6980
          %v8341 = vunpack.c.h.b16 %v6980
          %v8342 = vunpack.c.l.b16 %v6981
          %v8343 = vunpack.c.h.b16 %v6981
          %v8344 = vunpack.c.l.b16 %v6982
          %v8345 = vunpack.c.h.b16 %v6982
          %v8346 = vunpack.c.l.b16 %v6983
          %v8347 = vunpack.c.h.b16 %v6983
          %v8348 = vunpack.c.l.b16 %v6984
          %v8349 = vunpack.c.h.b16 %v6984
          %v8350 = vunpack.c.l.b16 %v6985
          %v8351 = vunpack.c.h.b16 %v6985
          %v8352 = vunpack.c.l.b16 %v6986
          %v8353 = vunpack.c.h.b16 %v6986
          %v8354 = vunpack.c.l.b16 %v6987
          %v8355 = vunpack.c.h.b16 %v6987
          %v8356 = vunpack.c.l.b16 %v6988
          %v8357 = vunpack.c.h.b16 %v6988
          %v8358 = vunpack.c.l.b16 %v6989
          %v8359 = vunpack.c.h.b16 %v6989
          %v8360 = vunpack.c.l.b16 %v6990
          %v8361 = vunpack.c.h.b16 %v6990
          %v8362 = vunpack.c.l.b16 %v6991
          %v8363 = vunpack.c.h.b16 %v6991
          %v8364 = vunpack.c.l.b16 %v6992
          %v8365 = vunpack.c.h.b16 %v6992
          %v8366 = vunpack.c.l.b16 %v6993
          %v8367 = vunpack.c.h.b16 %v6993
          %v8368 = vunpack.c.l.b16 %v6994
          %v8369 = vunpack.c.h.b16 %v6994
          %v8370 = vunpack.c.l.b16 %v6995
          %v8371 = vunpack.c.h.b16 %v6995
          %v8372 = vunpack.c.l.b16 %v6996
          %v8373 = vunpack.c.h.b16 %v6996
          %v8374 = vunpack.c.l.b16 %v6997
          %v8375 = vunpack.c.h.b16 %v6997
          %v8376 = vunpack.c.l.b16 %v6998
          %v8377 = vunpack.c.h.b16 %v6998
          %v8378 = vunpack.c.l.b16 %v6999
          %v8379 = vunpack.c.h.b16 %v6999
          %v8380 = vunpack.c.l.b16 %v7000
          %v8381 = vunpack.c.h.b16 %v7000
          %v8382 = vunpack.c.l.b16 %v7001
          %v8383 = vunpack.c.h.b16 %v7001
          %v8384 = vunpack.c.l.b16 %v7002
          %v8385 = vunpack.c.h.b16 %v7002
          %v8386 = vunpack.c.l.b16 %v7003
          %v8387 = vunpack.c.h.b16 %v7003
          %v8388 = vunpack.c.l.b16 %v7004
          %v8389 = vunpack.c.h.b16 %v7004
          %v8390 = vunpack.c.l.b16 %v7005
          %v8391 = vunpack.c.h.b16 %v7005
          %v8392 = vunpack.c.l.b16 %v7006
          %v8393 = vunpack.c.h.b16 %v7006
          %v8394 = vunpack.c.l.b16 %v7007
          %v8395 = vunpack.c.h.b16 %v7007
          %v8396 = vunpack.c.l.b16 %v7008
          %v8397 = vunpack.c.h.b16 %v7008
          %v8398 = vunpack.c.l.b16 %v7009
          %v8399 = vunpack.c.h.b16 %v7009
          %v8400 = vunpack.c.l.b16 %v7010
          %v8401 = vunpack.c.h.b16 %v7010
          %v8402 = vunpack.c.l.b16 %v7011
          %v8403 = vunpack.c.h.b16 %v7011
          %v8404 = vunpack.c.l.b16 %v7012
          %v8405 = vunpack.c.h.b16 %v7012
          %v8406 = vunpack.c.l.b16 %v7013
          %v8407 = vunpack.c.h.b16 %v7013
          %v8408 = vunpack.c.l.b16 %v7014
          %v8409 = vunpack.c.h.b16 %v7014
          %v8410 = vunpack.c.l.b16 %v7015
          %v8411 = vunpack.c.h.b16 %v7015
          %v8412 = vunpack.c.l.b16 %v7016
          %v8413 = vunpack.c.h.b16 %v7016
          %v8414 = vunpack.c.l.b16 %v7017
          %v8415 = vunpack.c.h.b16 %v7017
          %v8416 = vunpack.c.l.b16 %v7018
          %v8417 = vunpack.c.h.b16 %v7018
          %v8418 = vunpack.c.l.b16 %v7019
          %v8419 = vunpack.c.h.b16 %v7019
          %v8420 = vunpack.c.l.b16 %v7020
          %v8421 = vunpack.c.h.b16 %v7020
          %v8422 = vunpack.c.l.b16 %v7021
          %v8423 = vunpack.c.h.b16 %v7021
          %v8424 = vunpack.c.l.b16 %v7022
          %v8425 = vunpack.c.h.b16 %v7022
          %v8426 = vunpack.c.l.b16 %v7023
          %v8427 = vunpack.c.h.b16 %v7023
          %v8428 = vunpack.c.l.b16 %v7024
          %v8429 = vunpack.c.h.b16 %v7024
          %v8430 = vunpack.c.l.b16 %v7025
          %v8431 = vunpack.c.h.b16 %v7025
          %v8432 = vunpack.c.l.b16 %v7026
          %v8433 = vunpack.c.h.b16 %v7026
          %v8434 = vunpack.c.l.b16 %v7027
          %v8435 = vunpack.c.h.b16 %v7027
          %v8436 = vunpack.c.l.b16 %v7028
          %v8437 = vunpack.c.h.b16 %v7028
          %v8438 = vunpack.c.l.b16 %v7029
          %v8439 = vunpack.c.h.b16 %v7029
          %v8440 = vunpack.c.l.b16 %v7030
          %v8441 = vunpack.c.h.b16 %v7030
          %v8442 = vunpack.c.l.b16 %v7031
          %v8443 = vunpack.c.h.b16 %v7031
          %v8444 = vunpack.c.l.b16 %v7032
          %v8445 = vunpack.c.h.b16 %v7032
          %v8446 = vunpack.c.l.b16 %v7033
          %v8447 = vunpack.c.h.b16 %v7033
          %v8448 = vunpack.c.l.b16 %v7034
          %v8449 = vunpack.c.h.b16 %v7034
          %v8450 = vunpack.c.l.b16 %v7035
          %v8451 = vunpack.c.h.b16 %v7035
          %v8452 = vunpack.c.l.b16 %v7036
          %v8453 = vunpack.c.h.b16 %v7036
          %v8454 = vunpack.c.l.b16 %v7037
          %v8455 = vunpack.c.h.b16 %v7037
          %v8456 = vunpack.c.l.b16 %v7038
          %v8457 = vunpack.c.h.b16 %v7038
          %v8458 = vunpack.c.l.b16 %v7039
          %v8459 = vunpack.c.h.b16 %v7039
          %v8460 = vunpack.c.l.b16 %v7040
          %v8461 = vunpack.c.h.b16 %v7040
          %v8462 = vunpack.c.l.b16 %v7041
          %v8463 = vunpack.c.h.b16 %v7041
          %v8464 = vunpack.c.l.b16 %v7042
          %v8465 = vunpack.c.h.b16 %v7042
          %v8466 = vunpack.c.l.b16 %v7043
          %v8467 = vunpack.c.h.b16 %v7043
          %v8468 = vunpack.c.l.b16 %v7044
          %v8469 = vunpack.c.h.b16 %v7044
          %v8470 = vunpack.c.l.b16 %v7045
          %v8471 = vunpack.c.h.b16 %v7045
          %v8472 = vunpack.c.l.b16 %v7046
          %v8473 = vunpack.c.h.b16 %v7046
          %v8474 = vunpack.c.l.b16 %v7047
          %v8475 = vunpack.c.h.b16 %v7047
          %v8476 = vunpack.c.l.b16 %v7048
          %v8477 = vunpack.c.h.b16 %v7048
          %v8478 = vunpack.c.l.b16 %v7049
          %v8479 = vunpack.c.h.b16 %v7049
          %v8480 = vunpack.c.l.b16 %v7050
          %v8481 = vunpack.c.h.b16 %v7050
          %v8482 = vunpack.c.l.b16 %v7051
          %v8483 = vunpack.c.h.b16 %v7051
          %v8484 = vunpack.c.l.b16 %v7052
          %v8485 = vunpack.c.h.b16 %v7052
          %v8486 = vunpack.c.l.b16 %v7053
          %v8487 = vunpack.c.h.b16 %v7053
          %v8488 = vunpack.c.l.b16 %v7054
          %v8489 = vunpack.c.h.b16 %v7054
          %v8490 = vunpack.c.l.b16 %v7055
          %v8491 = vunpack.c.h.b16 %v7055
          %v8492 = vunpack.c.l.b16 %v7056
          %v8493 = vunpack.c.h.b16 %v7056
          %v8494 = vunpack.c.l.b16 %v7057
          %v8495 = vunpack.c.h.b16 %v7057
          %v8496 = vunpack.c.l.b16 %v7058
          %v8497 = vunpack.c.h.b16 %v7058
          %v8498 = vunpack.c.l.b16 %v7059
          %v8499 = vunpack.c.h.b16 %v7059
          %v8500 = vunpack.c.l.b16 %v7060
          %v8501 = vunpack.c.h.b16 %v7060
          %v8502 = vunpack.c.l.b16 %v7061
          %v8503 = vunpack.c.h.b16 %v7061
          %v8504 = vunpack.c.l.b16 %v7062
          %v8505 = vunpack.c.h.b16 %v7062
          %v8506 = vunpack.c.l.b16 %v7063
          %v8507 = vunpack.c.h.b16 %v7063
          %v8508 = vunpack.c.l.b16 %v7064
          %v8509 = vunpack.c.h.b16 %v7064
          %v8510 = vunpack.c.l.b16 %v7065
          %v8511 = vunpack.c.h.b16 %v7065
          %v8512 = vunpack.c.l.b16 %v7066
          %v8513 = vunpack.c.h.b16 %v7066
          %v8514 = vunpack.c.l.b16 %v7067
          %v8515 = vunpack.c.h.b16 %v7067
          %v8516 = vunpack.c.l.b16 %v7068
          %v8517 = vunpack.c.h.b16 %v7068
          %v8518 = vunpack.c.l.b16 %v7069
          %v8519 = vunpack.c.h.b16 %v7069
          %v8520 = vunpack.c.l.b16 %v7070
          %v8521 = vunpack.c.h.b16 %v7070
          %v8522 = vunpack.c.l.b16 %v7071
          %v8523 = vunpack.c.h.b16 %v7071
          %v8524 = vunpack.c.l.b16 %v7072
          %v8525 = vunpack.c.h.b16 %v7072
          %v8526 = vunpack.c.l.b16 %v7073
          %v8527 = vunpack.c.h.b16 %v7073
          %v8528 = vunpack.c.l.b16 %v7074
          %v8529 = vunpack.c.h.b16 %v7074
          %v8530 = vunpack.c.l.b16 %v7075
          %v8531 = vunpack.c.h.b16 %v7075
          %v8532 = vunpack.c.l.b16 %v7076
          %v8533 = vunpack.c.h.b16 %v7076
          %v8534 = vunpack.c.l.b16 %v7077
          %v8535 = vunpack.c.h.b16 %v7077
          %v8536 = vunpack.c.l.b16 %v7078
          %v8537 = vunpack.c.h.b16 %v7078
          %v8538 = vunpack.c.l.b16 %v7079
          %v8539 = vunpack.c.h.b16 %v7079
          %v8540 = vunpack.c.l.b16 %v7080
          %v8541 = vunpack.c.h.b16 %v7080
          %v8542 = vunpack.c.l.b16 %v7081
          %v8543 = vunpack.c.h.b16 %v7081
          %v8544 = vunpack.c.l.b16 %v7082
          %v8545 = vunpack.c.h.b16 %v7082
          %v8546 = vunpack.c.l.b16 %v7083
          %v8547 = vunpack.c.h.b16 %v7083
          %v8548 = vunpack.c.l.b16 %v7084
          %v8549 = vunpack.c.h.b16 %v7084
          %v8550 = vunpack.c.l.b16 %v7085
          %v8551 = vunpack.c.h.b16 %v7085
          %v8552 = vunpack.c.l.b16 %v7086
          %v8553 = vunpack.c.h.b16 %v7086
          %v8554 = vunpack.c.l.b16 %v7087
          %v8555 = vunpack.c.h.b16 %v7087
          %v8556 = vunpack.c.l.b16 %v7088
          %v8557 = vunpack.c.h.b16 %v7088
          %v8558 = vunpack.c.l.b16 %v7089
          %v8559 = vunpack.c.h.b16 %v7089
          %v8560 = vunpack.c.l.b16 %v7090
          %v8561 = vunpack.c.h.b16 %v7090
          %v8562 = vunpack.c.l.b16 %v7091
          %v8563 = vunpack.c.h.b16 %v7091
          %v8564 = vunpack.c.l.b16 %v7092
          %v8565 = vunpack.c.h.b16 %v7092
          %v8566 = vunpack.c.l.b16 %v7093
          %v8567 = vunpack.c.h.b16 %v7093
          %v8568 = vunpack.c.l.b16 %v7094
          %v8569 = vunpack.c.h.b16 %v7094
          %v8570 = vunpack.c.l.b16 %v7095
          %v8571 = vunpack.c.h.b16 %v7095
          %v8572 = vunpack.c.l.b16 %v7096
          %v8573 = vunpack.c.h.b16 %v7096
          %v8574 = vunpack.c.l.b16 %v7097
          %v8575 = vunpack.c.h.b16 %v7097
          %v8576 = vunpack.c.l.b16 %v7098
          %v8577 = vunpack.c.h.b16 %v7098
          %v8578 = vunpack.c.l.b16 %v7099
          %v8579 = vunpack.c.h.b16 %v7099
          %v8580 = vunpack.c.l.b16 %v7100
          %v8581 = vunpack.c.h.b16 %v7100
          %v8582 = vunpack.c.l.b16 %v7101
          %v8583 = vunpack.c.h.b16 %v7101
          %v8584 = vunpack.c.l.b16 %v7102
          %v8585 = vunpack.c.h.b16 %v7102
          %v8586 = vunpack.c.l.b16 %v7103
          %v8587 = vunpack.c.h.b16 %v7103
          %v8588 = vunpack.c.l.b16 %v7104
          %v8589 = vunpack.c.h.b16 %v7104
          %v8590 = vunpack.c.l.b16 %v7105
          %v8591 = vunpack.c.h.b16 %v7105
          %v8592 = vunpack.c.l.b16 %v7106
          %v8593 = vunpack.c.h.b16 %v7106
          %v8594 = vunpack.c.l.b16 %v7107
          %v8595 = vunpack.c.h.b16 %v7107
          %v8596 = vunpack.c.l.b16 %v7108
          %v8597 = vunpack.c.h.b16 %v7108
          %v8598 = vunpack.c.l.b16 %v7109
          %v8599 = vunpack.c.h.b16 %v7109
          %v8600 = vunpack.c.l.b16 %v7110
          %v8601 = vunpack.c.h.b16 %v7110
          %v8602 = vunpack.c.l.b16 %v7111
          %v8603 = vunpack.c.h.b16 %v7111
          %v8604 = vunpack.c.l.b16 %v7112
          %v8605 = vunpack.c.h.b16 %v7112
          %v8606 = vunpack.c.l.b16 %v7113
          %v8607 = vunpack.c.h.b16 %v7113
          %v8608 = vunpack.c.l.b16 %v7114
          %v8609 = vunpack.c.h.b16 %v7114
          %v8610 = vunpack.c.l.b16 %v7115
          %v8611 = vunpack.c.h.b16 %v7115
          %v8612 = vunpack.c.l.b16 %v7116
          %v8613 = vunpack.c.h.b16 %v7116
          %v8614 = vunpack.c.l.b16 %v7117
          %v8615 = vunpack.c.h.b16 %v7117
          %v8616 = vunpack.c.l.b16 %v7118
          %v8617 = vunpack.c.h.b16 %v7118
          %v8618 = vunpack.c.l.b16 %v7119
          %v8619 = vunpack.c.h.b16 %v7119
          %v8620 = vunpack.c.l.b16 %v7120
          %v8621 = vunpack.c.h.b16 %v7120
          %v8622 = vunpack.c.l.b16 %v7121
          %v8623 = vunpack.c.h.b16 %v7121
          %v8624 = vunpack.c.l.b16 %v7122
          %v8625 = vunpack.c.h.b16 %v7122
          %v8626 = vunpack.c.l.b16 %v7123
          %v8627 = vunpack.c.h.b16 %v7123
          %v8628 = vunpack.c.l.b16 %v7124
          %v8629 = vunpack.c.h.b16 %v7124
          %v8630 = vunpack.c.l.b16 %v7125
          %v8631 = vunpack.c.h.b16 %v7125
          %v8632 = vunpack.c.l.b16 %v7126
          %v8633 = vunpack.c.h.b16 %v7126
          %v8634 = vunpack.c.l.b16 %v7127
          %v8635 = vunpack.c.h.b16 %v7127
          %v8636 = vunpack.c.l.b16 %v7128
          %v8637 = vunpack.c.h.b16 %v7128
          %v8638 = vunpack.c.l.b16 %v7129
          %v8639 = vunpack.c.h.b16 %v7129
          %v8640 = vunpack.c.l.b16 %v7130
          %v8641 = vunpack.c.h.b16 %v7130
          %v8642 = vunpack.c.l.b16 %v7131
          %v8643 = vunpack.c.h.b16 %v7131
          %v8644 = vunpack.c.l.b16 %v7132
          %v8645 = vunpack.c.h.b16 %v7132
          %v8646 = vunpack.c.l.b16 %v7133
          %v8647 = vunpack.c.h.b16 %v7133
          %v8648 = vunpack.c.l.b16 %v7134
          %v8649 = vunpack.c.h.b16 %v7134
          %v8650 = vunpack.c.l.b16 %v7135
          %v8651 = vunpack.c.h.b16 %v7135
          %v8652 = vunpack.c.l.b16 %v7136
          %v8653 = vunpack.c.h.b16 %v7136
          %v8654 = vunpack.c.l.b16 %v7137
          %v8655 = vunpack.c.h.b16 %v7137
          %v8656 = vunpack.c.l.b16 %v7138
          %v8657 = vunpack.c.h.b16 %v7138
          %v8658 = vunpack.c.l.b16 %v7139
          %v8659 = vunpack.c.h.b16 %v7139
          %v8660 = vunpack.c.l.b16 %v7140
          %v8661 = vunpack.c.h.b16 %v7140
          %v8662 = vunpack.c.l.b16 %v7141
          %v8663 = vunpack.c.h.b16 %v7141
          %v8664 = vunpack.c.l.b16 %v7142
          %v8665 = vunpack.c.h.b16 %v7142
          %v8666 = vunpack.c.l.b16 %v7143
          %v8667 = vunpack.c.h.b16 %v7143
          %v8668 = vunpack.c.l.b16 %v7144
          %v8669 = vunpack.c.h.b16 %v7144
          %v8670 = vunpack.c.l.b16 %v7145
          %v8671 = vunpack.c.h.b16 %v7145
          %v8672 = vunpack.c.l.b16 %v7146
          %v8673 = vunpack.c.h.b16 %v7146
          %v8674 = vunpack.c.l.b16 %v7147
          %v8675 = vunpack.c.h.b16 %v7147
          %v8676 = vunpack.c.l.b16 %v7148
          %v8677 = vunpack.c.h.b16 %v7148
          %v8678 = vunpack.c.l.b16 %v7149
          %v8679 = vunpack.c.h.b16 %v7149
          %v8680 = vunpack.c.l.b16 %v7150
          %v8681 = vunpack.c.h.b16 %v7150
          %v8682 = vunpack.c.l.b16 %v7151
          %v8683 = vunpack.c.h.b16 %v7151
          %v8684 = vunpack.c.l.b16 %v7152
          %v8685 = vunpack.c.h.b16 %v7152
          %v8686 = vunpack.c.l.b16 %v7153
          %v8687 = vunpack.c.h.b16 %v7153
          %v8688 = vunpack.c.l.b16 %v7154
          %v8689 = vunpack.c.h.b16 %v7154
          %v8690 = vunpack.c.l.b16 %v7155
          %v8691 = vunpack.c.h.b16 %v7155
          %v8692 = vunpack.c.l.b16 %v7156
          %v8693 = vunpack.c.h.b16 %v7156
          %v8694 = vunpack.c.l.b16 %v7157
          %v8695 = vunpack.c.h.b16 %v7157
          %v8696 = vunpack.c.l.b16 %v7158
          %v8697 = vunpack.c.h.b16 %v7158
          %v8698 = vunpack.c.l.b16 %v7159
          %v8699 = vunpack.c.h.b16 %v7159
          %v8700 = vunpack.c.l.b16 %v7160
          %v8701 = vunpack.c.h.b16 %v7160
          %v8702 = vunpack.c.l.b16 %v7161
          %v8703 = vunpack.c.h.b16 %v7161
          %v8704 = vunpack.c.l.b16 %v7162
          %v8705 = vunpack.c.h.b16 %v7162
          %v8706 = vunpack.c.l.b16 %v7163
          %v8707 = vunpack.c.h.b16 %v7163
          %v8708 = vunpack.c.l.b16 %v7164
          %v8709 = vunpack.c.h.b16 %v7164
          %v8710 = vunpack.c.l.b16 %v7165
          %v8711 = vunpack.c.h.b16 %v7165
          %v8712 = vunpack.c.l.b16 %v7166
          %v8713 = vunpack.c.h.b16 %v7166
          %v8714 = vunpack.c.l.b16 %v7167
          %v8715 = vunpack.c.h.b16 %v7167
          %v8716 = vunpack.c.l.b16 %v7168
          %v8717 = vunpack.c.h.b16 %v7168
          %v8718 = vunpack.c.l.b16 %v7169
          %v8719 = vunpack.c.h.b16 %v7169
          %v8720 = vunpack.c.l.b16 %v7170
          %v8721 = vunpack.c.h.b16 %v7170
          %v8722 = vunpack.c.l.b16 %v7171
          %v8723 = vunpack.c.h.b16 %v7171
          %v8724 = vunpack.c.l.b16 %v7172
          %v8725 = vunpack.c.h.b16 %v7172
          %v8726 = vunpack.c.l.b16 %v7173
          %v8727 = vunpack.c.h.b16 %v7173
          %v8728 = vunpack.c.l.b16 %v7174
          %v8729 = vunpack.c.h.b16 %v7174
          %v8730 = vunpack.c.l.b16 %v7175
          %v8731 = vunpack.c.h.b16 %v7175
          %v8732 = vunpack.c.l.b16 %v7176
          %v8733 = vunpack.c.h.b16 %v7176
          %v8734 = vunpack.c.l.b16 %v7177
          %v8735 = vunpack.c.h.b16 %v7177
          %v8736 = vunpack.c.l.b16 %v7178
          %v8737 = vunpack.c.h.b16 %v7178
          %v8738 = vunpack.c.l.b16 %v7179
          %v8739 = vunpack.c.h.b16 %v7179
          %v8740 = vunpack.c.l.b16 %v7180
          %v8741 = vunpack.c.h.b16 %v7180
          %v8742 = vunpack.c.l.b16 %v7181
          %v8743 = vunpack.c.h.b16 %v7181
          %v8744 = vunpack.c.l.b16 %v7182
          %v8745 = vunpack.c.h.b16 %v7182
          %v8746 = vunpack.c.l.b16 %v7183
          %v8747 = vunpack.c.h.b16 %v7183
          %v8748 = vunpack.c.l.b16 %v7184
          %v8749 = vunpack.c.h.b16 %v7184
          %v8750 = vunpack.c.l.b16 %v7185
          %v8751 = vunpack.c.h.b16 %v7185
          %v8752 = vunpack.c.l.b16 %v7186
          %v8753 = vunpack.c.h.b16 %v7186
          %v8754 = vunpack.c.l.b16 %v7187
          %v8755 = vunpack.c.h.b16 %v7187
          %v8756 = vunpack.c.l.b16 %v7188
          %v8757 = vunpack.c.h.b16 %v7188
          %v8758 = vunpack.c.l.b16 %v7189
          %v8759 = vunpack.c.h.b16 %v7189
          %v8760 = vunpack.c.l.b16 %v7190
          %v8761 = vunpack.c.h.b16 %v7190
          %v8762 = vunpack.c.l.b16 %v7191
          %v8763 = vunpack.c.h.b16 %v7191
          %v8764 = vunpack.c.l.b16 %v7192
          %v8765 = vunpack.c.h.b16 %v7192
          %v8766 = vunpack.c.l.b16 %v7193
          %v8767 = vunpack.c.h.b16 %v7193
          %v8768 = vunpack.c.l.b16 %v7194
          %v8769 = vunpack.c.h.b16 %v7194
          %v8770 = vunpack.c.l.b16 %v7195
          %v8771 = vunpack.c.h.b16 %v7195
          %v8772 = vunpack.c.l.b16 %v7196
          %v8773 = vunpack.c.h.b16 %v7196
          %v8774 = vunpack.c.l.b16 %v7197
          %v8775 = vunpack.c.h.b16 %v7197
          %v8776 = vunpack.c.l.b16 %v7198
          %v8777 = vunpack.c.h.b16 %v7198
          %v8778 = vunpack.c.l.b16 %v7199
          %v8779 = vunpack.c.h.b16 %v7199
          %v8780 = vunpack.c.l.b16 %v7200
          %v8781 = vunpack.c.h.b16 %v7200
          %v8782 = vunpack.c.l.b16 %v7201
          %v8783 = vunpack.c.h.b16 %v7201
          %v8784 = vunpack.c.l.b16 %v7202
          %v8785 = vunpack.c.h.b16 %v7202
          %v8786 = vunpack.c.l.b16 %v7203
          %v8787 = vunpack.c.h.b16 %v7203
          %v8788 = vunpack.c.l.b16 %v7204
          %v8789 = vunpack.c.h.b16 %v7204
          %v8790 = vunpack.c.l.b16 %v7205
          %v8791 = vunpack.c.h.b16 %v7205
          %v8792 = vunpack.c.l.b16 %v7206
          %v8793 = vunpack.c.h.b16 %v7206
          %v8794 = vunpack.c.l.b16 %v7207
          %v8795 = vunpack.c.h.b16 %v7207
          %v8796 = vunpack.c.l.b16 %v7208
          %v8797 = vunpack.c.h.b16 %v7208
          %v8798 = vunpack.c.l.b16 %v7209
          %v8799 = vunpack.c.h.b16 %v7209
          %v8800 = vunpack.c.l.b16 %v7210
          %v8801 = vunpack.c.h.b16 %v7210
          %v8802 = vunpack.c.l.b16 %v7211
          %v8803 = vunpack.c.h.b16 %v7211
          %v8804 = vunpack.c.l.b16 %v7212
          %v8805 = vunpack.c.h.b16 %v7212
          %v8806 = vunpack.c.l.b16 %v7213
          %v8807 = vunpack.c.h.b16 %v7213
          %v8808 = vunpack.c.l.b16 %v7214
          %v8809 = vunpack.c.h.b16 %v7214
          %v8810 = vunpack.c.l.b16 %v7215
          %v8811 = vunpack.c.h.b16 %v7215
          %v8812 = vunpack.c.l.b16 %v7216
          %v8813 = vunpack.c.h.b16 %v7216
          %v8814 = vunpack.c.l.b16 %v7217
          %v8815 = vunpack.c.h.b16 %v7217
          %v8816 = vunpack.c.l.b16 %v7218
          %v8817 = vunpack.c.h.b16 %v7218
          %v8818 = vunpack.c.l.b16 %v7219
          %v8819 = vunpack.c.h.b16 %v7219
          %v8820 = vunpack.c.l.b16 %v7220
          %v8821 = vunpack.c.h.b16 %v7220
          %v8822 = vunpack.c.l.b16 %v7221
          %v8823 = vunpack.c.h.b16 %v7221
          %v8824 = vunpack.c.l.b16 %v7222
          %v8825 = vunpack.c.h.b16 %v7222
          %v8826 = vunpack.c.l.b16 %v7223
          %v8827 = vunpack.c.h.b16 %v7223
          %v8828 = vunpack.c.l.b16 %v7224
          %v8829 = vunpack.c.h.b16 %v7224
          %v8830 = vunpack.c.l.b16 %v7225
          %v8831 = vunpack.c.h.b16 %v7225
          %v8832 = vunpack.c.l.b16 %v7226
          %v8833 = vunpack.c.h.b16 %v7226
          %v8834 = vunpack.c.l.b16 %v7227
          %v8835 = vunpack.c.h.b16 %v7227
          %v8836 = vunpack.c.l.b16 %v7228
          %v8837 = vunpack.c.h.b16 %v7228
          %v8838 = vunpack.c.l.b16 %v7229
          %v8839 = vunpack.c.h.b16 %v7229
          %v8840 = vunpack.c.l.b16 %v7230
          %v8841 = vunpack.c.h.b16 %v7230
          %v8842 = vunpack.c.l.b16 %v7231
          %v8843 = vunpack.c.h.b16 %v7231
          %v8844 = vunpack.c.l.b16 %v7232
          %v8845 = vunpack.c.h.b16 %v7232
          %v8846 = vunpack.c.l.b16 %v7233
          %v8847 = vunpack.c.h.b16 %v7233
          %v8848 = vunpack.c.l.b16 %v7234
          %v8849 = vunpack.c.h.b16 %v7234
          %v8850 = vunpack.c.l.b16 %v7235
          %v8851 = vunpack.c.h.b16 %v7235
          %v8852 = vunpack.c.l.b16 %v7236
          %v8853 = vunpack.c.h.b16 %v7236
          %v8854 = vunpack.c.l.b16 %v7237
          %v8855 = vunpack.c.h.b16 %v7237
          %v8856 = vunpack.c.l.b16 %v7238
          %v8857 = vunpack.c.h.b16 %v7238
          %v8858 = vunpack.c.l.b16 %v7239
          %v8859 = vunpack.c.h.b16 %v7239
          %v8860 = vunpack.c.l.b16 %v7240
          %v8861 = vunpack.c.h.b16 %v7240
          %v8862 = vunpack.c.l.b16 %v7241
          %v8863 = vunpack.c.h.b16 %v7241
          %v8864 = vunpack.c.l.b16 %v7242
          %v8865 = vunpack.c.h.b16 %v7242
          %v8866 = vunpack.c.l.b16 %v7243
          %v8867 = vunpack.c.h.b16 %v7243
          %v8868 = vunpack.c.l.b16 %v7244
          %v8869 = vunpack.c.h.b16 %v7244
          %v8870 = vunpack.c.l.b16 %v7245
          %v8871 = vunpack.c.h.b16 %v7245
          %v8872 = vunpack.c.l.b16 %v7246
          %v8873 = vunpack.c.h.b16 %v7246
          %v8874 = vunpack.c.l.b16 %v7247
          %v8875 = vunpack.c.h.b16 %v7247
          %v8876 = vunpack.c.l.b16 %v7248
          %v8877 = vunpack.c.h.b16 %v7248
          %v8878 = vunpack.c.l.b16 %v7249
          %v8879 = vunpack.c.h.b16 %v7249
          %v8880 = vunpack.c.l.b16 %v7250
          %v8881 = vunpack.c.h.b16 %v7250
          %v8882 = vunpack.c.l.b16 %v7251
          %v8883 = vunpack.c.h.b16 %v7251
          %v8884 = vunpack.c.l.b16 %v7252
          %v8885 = vunpack.c.h.b16 %v7252
          %v8886 = vunpack.c.l.b16 %v7253
          %v8887 = vunpack.c.h.b16 %v7253
          %v8888 = vunpack.c.l.b16 %v7254
          %v8889 = vunpack.c.h.b16 %v7254
          %v8890 = vunpack.c.l.b16 %v7255
          %v8891 = vunpack.c.h.b16 %v7255
          %v8892 = vunpack.c.l.b16 %v7256
          %v8893 = vunpack.c.h.b16 %v7256
          %v8894 = vunpack.c.l.b16 %v7257
          %v8895 = vunpack.c.h.b16 %v7257
          %v8896 = vunpack.c.l.b16 %v7258
          %v8897 = vunpack.c.h.b16 %v7258
          %v8898 = vunpack.c.l.b16 %v7259
          %v8899 = vunpack.c.h.b16 %v7259
          %v8900 = vunpack.c.l.b16 %v7260
          %v8901 = vunpack.c.h.b16 %v7260
          %v8902 = vunpack.c.l.b16 %v7261
          %v8903 = vunpack.c.h.b16 %v7261
          %v8904 = vunpack.c.l.b16 %v7262
          %v8905 = vunpack.c.h.b16 %v7262
          %v8906 = vunpack.c.l.b16 %v7263
          %v8907 = vunpack.c.h.b16 %v7263
          %v8908 = vunpack.c.l.b16 %v7264
          %v8909 = vunpack.c.h.b16 %v7264
          %v8910 = vunpack.c.l.b16 %v7265
          %v8911 = vunpack.c.h.b16 %v7265
          %v8912 = vunpack.c.l.b16 %v7266
          %v8913 = vunpack.c.h.b16 %v7266
          %v8914 = vunpack.c.l.b16 %v7267
          %v8915 = vunpack.c.h.b16 %v7267
          %v8916 = vunpack.c.l.b16 %v7268
          %v8917 = vunpack.c.h.b16 %v7268
          %v8918 = vunpack.c.l.b16 %v7269
          %v8919 = vunpack.c.h.b16 %v7269
          %v8920 = vunpack.c.l.b16 %v7270
          %v8921 = vunpack.c.h.b16 %v7270
          %v8922 = vunpack.c.l.b16 %v7271
          %v8923 = vunpack.c.h.b16 %v7271
          %v8924 = vunpack.c.l.b16 %v7272
          %v8925 = vunpack.c.h.b16 %v7272
          %v8926 = vunpack.c.l.b16 %v7273
          %v8927 = vunpack.c.h.b16 %v7273
          %v8928 = vunpack.c.l.b16 %v7274
          %v8929 = vunpack.c.h.b16 %v7274
          %v8930 = vunpack.c.l.b16 %v7275
          %v8931 = vunpack.c.h.b16 %v7275
          %v8932 = vunpack.c.l.b16 %v7276
          %v8933 = vunpack.c.h.b16 %v7276
          %v8934 = vunpack.c.l.b16 %v7277
          %v8935 = vunpack.c.h.b16 %v7277
          %v8936 = vunpack.c.l.b16 %v7278
          %v8937 = vunpack.c.h.b16 %v7278
          %v8938 = vunpack.c.l.b16 %v7279
          %v8939 = vunpack.c.h.b16 %v7279
          %v8940 = vunpack.c.l.b16 %v7280
          %v8941 = vunpack.c.h.b16 %v7280
          %v8942 = vunpack.c.l.b16 %v7281
          %v8943 = vunpack.c.h.b16 %v7281
          %v8944 = vunpack.c.l.b16 %v7282
          %v8945 = vunpack.c.h.b16 %v7282
          %v8946 = vunpack.c.l.b16 %v7283
          %v8947 = vunpack.c.h.b16 %v7283
          %v8948 = vunpack.c.l.b16 %v7284
          %v8949 = vunpack.c.h.b16 %v7284
          %v8950 = vunpack.c.l.b16 %v7285
          %v8951 = vunpack.c.h.b16 %v7285
          %v8952 = vunpack.c.l.b16 %v7286
          %v8953 = vunpack.c.h.b16 %v7286
          %v8954 = vunpack.c.l.b16 %v7287
          %v8955 = vunpack.c.h.b16 %v7287
          %v8956 = vunpack.c.l.b16 %v7288
          %v8957 = vunpack.c.h.b16 %v7288
          %v8958 = vunpack.c.l.b16 %v7289
          %v8959 = vunpack.c.h.b16 %v7289
          %v8960 = vunpack.c.l.b16 %v7290
          %v8961 = vunpack.c.h.b16 %v7290
          %v8962 = vunpack.c.l.b16 %v7291
          %v8963 = vunpack.c.h.b16 %v7291
          %v8964 = vunpack.c.l.b16 %v7292
          %v8965 = vunpack.c.h.b16 %v7292
          %v8966 = vunpack.c.l.b16 %v7293
          %v8967 = vunpack.c.h.b16 %v7293
          %v8968 = vunpack.c.l.b16 %v7294
          %v8969 = vunpack.c.h.b16 %v7294
          %v8970 = vunpack.c.l.b16 %v7295
          %v8971 = vunpack.c.h.b16 %v7295
          %v8972 = vunpack.c.l.b16 %v7296
          %v8973 = vunpack.c.h.b16 %v7296
          %v8974 = vunpack.c.l.b16 %v7297
          %v8975 = vunpack.c.h.b16 %v7297
          %v8976 = vunpack.c.l.b16 %v7298
          %v8977 = vunpack.c.h.b16 %v7298
          %v8978 = vunpack.c.l.b16 %v7299
          %v8979 = vunpack.c.h.b16 %v7299
          %v8980 = vunpack.c.l.b16 %v7300
          %v8981 = vunpack.c.h.b16 %v7300
          %v8982 = vunpack.c.l.b16 %v7301
          %v8983 = vunpack.c.h.b16 %v7301
          %v8984 = vunpack.c.l.b16 %v7302
          %v8985 = vunpack.c.h.b16 %v7302
          %v8986 = vunpack.c.l.b16 %v7303
          %v8987 = vunpack.c.h.b16 %v7303
          %v8988 = vunpack.c.l.b16 %v7304
          %v8989 = vunpack.c.h.b16 %v7304
          %v8990 = vunpack.c.l.b16 %v7305
          %v8991 = vunpack.c.h.b16 %v7305
          %v8992 = vunpack.c.l.b16 %v7306
          %v8993 = vunpack.c.h.b16 %v7306
          %v8994 = vunpack.c.l.b16 %v7307
          %v8995 = vunpack.c.h.b16 %v7307
          %v8996 = vunpack.c.l.b16 %v7308
          %v8997 = vunpack.c.h.b16 %v7308
          %v8998 = vunpack.c.l.b16 %v7309
          %v8999 = vunpack.c.h.b16 %v7309
          %v9000 = vunpack.c.l.b16 %v7310
          %v9001 = vunpack.c.h.b16 %v7310
          %v9002 = vunpack.c.l.b16 %v7311
          %v9003 = vunpack.c.h.b16 %v7311
          %v9004 = vunpack.c.l.b16 %v7312
          %v9005 = vunpack.c.h.b16 %v7312
          %v9006 = vunpack.c.l.b16 %v7313
          %v9007 = vunpack.c.h.b16 %v7313
          %v9008 = vunpack.c.l.b16 %v7314
          %v9009 = vunpack.c.h.b16 %v7314
          %v9010 = vunpack.c.l.b16 %v7315
          %v9011 = vunpack.c.h.b16 %v7315
          %v9012 = vunpack.c.l.b16 %v7316
          %v9013 = vunpack.c.h.b16 %v7316
          %v9014 = vunpack.c.l.b16 %v7317
          %v9015 = vunpack.c.h.b16 %v7317
          %v9016 = vunpack.c.l.b16 %v7318
          %v9017 = vunpack.c.h.b16 %v7318
          %v9018 = vunpack.c.l.b16 %v7319
          %v9019 = vunpack.c.h.b16 %v7319
          %v9020 = vunpack.c.l.b16 %v7320
          %v9021 = vunpack.c.h.b16 %v7320
          %v9022 = vunpack.c.l.b16 %v7321
          %v9023 = vunpack.c.h.b16 %v7321
          %v9024 = vunpack.c.l.b16 %v7322
          %v9025 = vunpack.c.h.b16 %v7322
          %v9026 = vunpack.c.l.b16 %v7323
          %v9027 = vunpack.c.h.b16 %v7323
          %v9028 = vunpack.c.l.b16 %v7324
          %v9029 = vunpack.c.h.b16 %v7324
          %v9030 = vunpack.c.l.b16 %v7325
          %v9031 = vunpack.c.h.b16 %v7325
          %v9032 = vunpack.c.l.b16 %v7326
          %v9033 = vunpack.c.h.b16 %v7326
          %v9034 = vunpack.c.l.b16 %v7327
          %v9035 = vunpack.c.h.b16 %v7327
          %v9036 = vunpack.c.l.b16 %v7328
          %v9037 = vunpack.c.h.b16 %v7328
          %v9038 = vunpack.c.l.b16 %v7329
          %v9039 = vunpack.c.h.b16 %v7329
          %v9040 = vunpack.c.l.b16 %v7330
          %v9041 = vunpack.c.h.b16 %v7330
          %v9042 = vunpack.c.l.b16 %v7331
          %v9043 = vunpack.c.h.b16 %v7331
          %v9044 = vunpack.c.l.b16 %v7332
          %v9045 = vunpack.c.h.b16 %v7332
          %v9046 = vunpack.c.l.b16 %v7333
          %v9047 = vunpack.c.h.b16 %v7333
          %v9048 = vunpack.c.l.b16 %v7334
          %v9049 = vunpack.c.h.b16 %v7334
          %v9050 = vunpack.c.l.b16 %v7335
          %v9051 = vunpack.c.h.b16 %v7335
          %v9052 = vunpack.c.l.b16 %v7336
          %v9053 = vunpack.c.h.b16 %v7336
          %v9054 = vunpack.c.l.b16 %v7337
          %v9055 = vunpack.c.h.b16 %v7337
          %v9056 = vunpack.c.l.b16 %v7338
          %v9057 = vunpack.c.h.b16 %v7338
          %v9058 = vunpack.c.l.b16 %v7339
          %v9059 = vunpack.c.h.b16 %v7339
          %v9060 = vunpack.c.l.b16 %v7340
          %v9061 = vunpack.c.h.b16 %v7340
          %v9062 = vunpack.c.l.b16 %v7341
          %v9063 = vunpack.c.h.b16 %v7341
          %v9064 = vunpack.c.l.b16 %v7342
          %v9065 = vunpack.c.h.b16 %v7342
          %v9066 = vunpack.c.l.b16 %v7343
          %v9067 = vunpack.c.h.b16 %v7343
          %v9068 = vunpack.c.l.b16 %v7344
          %v9069 = vunpack.c.h.b16 %v7344
          %v9070 = vunpack.c.l.b16 %v7345
          %v9071 = vunpack.c.h.b16 %v7345
          %v9072 = vunpack.c.l.b16 %v7346
          %v9073 = vunpack.c.h.b16 %v7346
          %v9074 = vunpack.c.l.b16 %v7347
          %v9075 = vunpack.c.h.b16 %v7347
          %v9076 = vunpack.c.l.b16 %v7348
          %v9077 = vunpack.c.h.b16 %v7348
          %v9078 = vunpack.c.l.b16 %v7349
          %v9079 = vunpack.c.h.b16 %v7349
          %v9080 = vunpack.c.l.b16 %v7350
          %v9081 = vunpack.c.h.b16 %v7350
          %v9082 = vunpack.c.l.b16 %v7351
          %v9083 = vunpack.c.h.b16 %v7351
          %v9084 = vunpack.c.l.b16 %v7352
          %v9085 = vunpack.c.h.b16 %v7352
          %v9086 = vunpack.c.l.b16 %v7353
          %v9087 = vunpack.c.h.b16 %v7353
          %v9088 = vunpack.c.l.b16 %v7354
          %v9089 = vunpack.c.h.b16 %v7354
          %v9090 = vunpack.c.l.b16 %v7355
          %v9091 = vunpack.c.h.b16 %v7355
          %v9092 = vunpack.c.l.b16 %v7356
          %v9093 = vunpack.c.h.b16 %v7356
          %v9094 = vunpack.c.l.b16 %v7357
          %v9095 = vunpack.c.h.b16 %v7357
          %v9096 = vunpack.c.l.b16 %v7358
          %v9097 = vunpack.c.h.b16 %v7358
          %v9098 = vunpack.c.l.b16 %v7359
          %v9099 = vunpack.c.h.b16 %v7359
          %v9100 = vunpack.c.l.b16 %v7360
          %v9101 = vunpack.c.h.b16 %v7360
          %v9102 = vunpack.c.l.b16 %v7361
          %v9103 = vunpack.c.h.b16 %v7361
          %v9104 = vunpack.c.l.b16 %v7362
          %v9105 = vunpack.c.h.b16 %v7362
          %v9106 = vunpack.c.l.b16 %v7363
          %v9107 = vunpack.c.h.b16 %v7363
          %v9108 = vunpack.c.l.b16 %v7364
          %v9109 = vunpack.c.h.b16 %v7364
          %v9110 = vunpack.c.l.b16 %v7365
          %v9111 = vunpack.c.h.b16 %v7365
          %v9112 = vunpack.c.l.b16 %v7366
          %v9113 = vunpack.c.h.b16 %v7366
          %v9114 = vunpack.c.l.b16 %v7367
          %v9115 = vunpack.c.h.b16 %v7367
          %v9116 = vunpack.c.l.b16 %v7368
          %v9117 = vunpack.c.h.b16 %v7368
          %v9118 = vunpack.c.l.b16 %v7369
          %v9119 = vunpack.c.h.b16 %v7369
          %v9120 = vunpack.c.l.b16 %v7370
          %v9121 = vunpack.c.h.b16 %v7370
          %v9122 = vunpack.c.l.b16 %v7371
          %v9123 = vunpack.c.h.b16 %v7371
          %v9124 = vunpack.c.l.b16 %v7372
          %v9125 = vunpack.c.h.b16 %v7372
          %v9126 = vunpack.c.l.b16 %v7373
          %v9127 = vunpack.c.h.b16 %v7373
          %v9128 = vunpack.c.l.b16 %v7374
          %v9129 = vunpack.c.h.b16 %v7374
          %v9130 = vunpack.c.l.b16 %v7375
          %v9131 = vunpack.c.h.b16 %v7375
          %v9132 = vunpack.c.l.b16 %v7376
          %v9133 = vunpack.c.h.b16 %v7376
          %v9134 = vunpack.c.l.b16 %v7377
          %v9135 = vunpack.c.h.b16 %v7377
          %v9136 = vunpack.c.l.b16 %v7378
          %v9137 = vunpack.c.h.b16 %v7378
          %v9138 = vunpack.c.l.b16 %v7379
          %v9139 = vunpack.c.h.b16 %v7379
          %v9140 = vunpack.c.l.b16 %v7380
          %v9141 = vunpack.c.h.b16 %v7380
          %v9142 = vunpack.c.l.b16 %v7381
          %v9143 = vunpack.c.h.b16 %v7381
          %v9144 = vunpack.c.l.b16 %v7382
          %v9145 = vunpack.c.h.b16 %v7382
          %v9146 = vunpack.c.l.b16 %v7383
          %v9147 = vunpack.c.h.b16 %v7383
          %v9148 = vunpack.c.l.b16 %v7384
          %v9149 = vunpack.c.h.b16 %v7384
          %v9150 = vunpack.c.l.b16 %v7385
          %v9151 = vunpack.c.h.b16 %v7385
          %v9152 = vunpack.c.l.b16 %v7386
          %v9153 = vunpack.c.h.b16 %v7386
          %v9154 = vunpack.c.l.b16 %v7387
          %v9155 = vunpack.c.h.b16 %v7387
          %v9156 = vunpack.c.l.b16 %v7388
          %v9157 = vunpack.c.h.b16 %v7388
          %v9158 = vunpack.c.l.b16 %v7389
          %v9159 = vunpack.c.h.b16 %v7389
          %v9160 = vunpack.c.l.b16 %v7390
          %v9161 = vunpack.c.h.b16 %v7390
          %v9162 = vunpack.c.l.b16 %v7391
          %v9163 = vunpack.c.h.b16 %v7391
          %v9164 = vunpack.c.l.b16 %v7392
          %v9165 = vunpack.c.h.b16 %v7392
          %v9166 = vunpack.c.l.b16 %v7393
          %v9167 = vunpack.c.h.b16 %v7393
          %v9168 = vunpack.c.l.b16 %v7394
          %v9169 = vunpack.c.h.b16 %v7394
          %v9170 = vunpack.c.l.b16 %v7395
          %v9171 = vunpack.c.h.b16 %v7395
          %v9172 = vunpack.c.l.b16 %v7396
          %v9173 = vunpack.c.h.b16 %v7396
          %v9174 = vunpack.c.l.b16 %v7397
          %v9175 = vunpack.c.h.b16 %v7397
          %v9176 = vunpack.c.l.b16 %v7398
          %v9177 = vunpack.c.h.b16 %v7398
          %v9178 = vunpack.c.l.b16 %v7399
          %v9179 = vunpack.c.h.b16 %v7399
          %v9180 = vunpack.c.l.b16 %v7400
          %v9181 = vunpack.c.h.b16 %v7400
          %v9182 = vunpack.c.l.b16 %v7401
          %v9183 = vunpack.c.h.b16 %v7401
          %v9184 = vunpack.c.l.b16 %v7402
          %v9185 = vunpack.c.h.b16 %v7402
          %v9186 = vunpack.c.l.b16 %v7403
          %v9187 = vunpack.c.h.b16 %v7403
          %v9188 = vunpack.c.l.b16 %v7404
          %v9189 = vunpack.c.h.b16 %v7404
          %v9190 = vunpack.c.l.b16 %v7405
          %v9191 = vunpack.c.h.b16 %v7405
          %v9192 = vunpack.c.l.b16 %v7406
          %v9193 = vunpack.c.h.b16 %v7406
          %v9194 = vunpack.c.l.b16 %v7407
          %v9195 = vunpack.c.h.b16 %v7407
          %v9196 = vunpack.c.l.b16 %v7408
          %v9197 = vunpack.c.h.b16 %v7408
          %v9198 = vunpack.c.l.b16 %v7409
          %v9199 = vunpack.c.h.b16 %v7409
          %v9200 = vunpack.c.l.b16 %v7410
          %v9201 = vunpack.c.h.b16 %v7410
          %v9202 = vunpack.c.l.b16 %v7411
          %v9203 = vunpack.c.h.b16 %v7411
          %v9204 = vunpack.c.l.b16 %v7412
          %v9205 = vunpack.c.h.b16 %v7412
          %v9206 = vunpack.c.l.b16 %v7413
          %v9207 = vunpack.c.h.b16 %v7413
          %v9208 = vunpack.c.l.b16 %v7414
          %v9209 = vunpack.c.h.b16 %v7414
          %v9210 = vunpack.c.l.b16 %v7415
          %v9211 = vunpack.c.h.b16 %v7415
          %v9212 = vpack.c.b16 %v8042, %v8036
          %v9213 = vpack.c.b16 %v8043, %v8037
          %v9214 = vpack.c.b16 %v8044, %v8038
          %v9215 = vpack.c.b16 %v8045, %v8039
          %v9216 = vpack.c.b16 %v8046, %v8040
          %v9217 = vpack.c.b16 %v8047, %v8041
          %v9218 = vpack.c.b16 %v8054, %v8048
          %v9219 = vpack.c.b16 %v8055, %v8049
          %v9220 = vpack.c.b16 %v8056, %v8050
          %v9221 = vpack.c.b16 %v8057, %v8051
          %v9222 = vpack.c.b16 %v8058, %v8052
          %v9223 = vpack.c.b16 %v8059, %v8053
          %v9224 = vpack.c.b16 %v8066, %v8060
          %v9225 = vpack.c.b16 %v8067, %v8061
          %v9226 = vpack.c.b16 %v8068, %v8062
          %v9227 = vpack.c.b16 %v8069, %v8063
          %v9228 = vpack.c.b16 %v8070, %v8064
          %v9229 = vpack.c.b16 %v8071, %v8065
          %v9230 = vpack.c.b16 %v8078, %v8072
          %v9231 = vpack.c.b16 %v8079, %v8073
          %v9232 = vpack.c.b16 %v8080, %v8074
          %v9233 = vpack.c.b16 %v8081, %v8075
          %v9234 = vpack.c.b16 %v8082, %v8076
          %v9235 = vpack.c.b16 %v8083, %v8077
          %v9236 = vpack.c.b16 %v8090, %v8084
          %v9237 = vpack.c.b16 %v8091, %v8085
          %v9238 = vpack.c.b16 %v8092, %v8086
          %v9239 = vpack.c.b16 %v8093, %v8087
          %v9240 = vpack.c.b16 %v8094, %v8088
          %v9241 = vpack.c.b16 %v8095, %v8089
          %v9242 = vpack.c.b16 %v8102, %v8096
          %v9243 = vpack.c.b16 %v8103, %v8097
          %v9244 = vpack.c.b16 %v8104, %v8098
          %v9245 = vpack.c.b16 %v8105, %v8099
          %v9246 = vpack.c.b16 %v8106, %v8100
          %v9247 = vpack.c.b16 %v8107, %v8101
          %v9248 = vpack.c.b16 %v8114, %v8108
          %v9249 = vpack.c.b16 %v8115, %v8109
          %v9250 = vpack.c.b16 %v8116, %v8110
          %v9251 = vpack.c.b16 %v8117, %v8111
          %v9252 = vpack.c.b16 %v8118, %v8112
          %v9253 = vpack.c.b16 %v8119, %v8113
          %v9254 = vpack.c.b16 %v8126, %v8120
          %v9255 = vpack.c.b16 %v8127, %v8121
          %v9256 = vpack.c.b16 %v8128, %v8122
          %v9257 = vpack.c.b16 %v8129, %v8123
          %v9258 = vpack.c.b16 %v8130, %v8124
          %v9259 = vpack.c.b16 %v8131, %v8125
          %v9260 = vpack.c.b16 %v8138, %v8132
          %v9261 = vpack.c.b16 %v8139, %v8133
          %v9262 = vpack.c.b16 %v8140, %v8134
          %v9263 = vpack.c.b16 %v8141, %v8135
          %v9264 = vpack.c.b16 %v8142, %v8136
          %v9265 = vpack.c.b16 %v8143, %v8137
          %v9266 = vpack.c.b16 %v8150, %v8144
          %v9267 = vpack.c.b16 %v8151, %v8145
          %v9268 = vpack.c.b16 %v8152, %v8146
          %v9269 = vpack.c.b16 %v8153, %v8147
          %v9270 = vpack.c.b16 %v8154, %v8148
          %v9271 = vpack.c.b16 %v8155, %v8149
          %v9272 = vpack.c.b16 %v8162, %v8156
          %v9273 = vpack.c.b16 %v8163, %v8157
          %v9274 = vpack.c.b16 %v8164, %v8158
          %v9275 = vpack.c.b16 %v8165, %v8159
          %v9276 = vpack.c.b16 %v8166, %v8160
          %v9277 = vpack.c.b16 %v8167, %v8161
          %v9278 = vpack.c.b16 %v8174, %v8168
          %v9279 = vpack.c.b16 %v8175, %v8169
          %v9280 = vpack.c.b16 %v8176, %v8170
          %v9281 = vpack.c.b16 %v8177, %v8171
          %v9282 = vpack.c.b16 %v8178, %v8172
          %v9283 = vpack.c.b16 %v8179, %v8173
          %v9284 = vpack.c.b16 %v8186, %v8180
          %v9285 = vpack.c.b16 %v8187, %v8181
          %v9286 = vpack.c.b16 %v8188, %v8182
          %v9287 = vpack.c.b16 %v8189, %v8183
          %v9288 = vpack.c.b16 %v8190, %v8184
          %v9289 = vpack.c.b16 %v8191, %v8185
          %v9290 = vpack.c.b16 %v8198, %v8192
          %v9291 = vpack.c.b16 %v8199, %v8193
          %v9292 = vpack.c.b16 %v8200, %v8194
          %v9293 = vpack.c.b16 %v8201, %v8195
          %v9294 = vpack.c.b16 %v8202, %v8196
          %v9295 = vpack.c.b16 %v8203, %v8197
          %v9296 = vpack.c.b16 %v8210, %v8204
          %v9297 = vpack.c.b16 %v8211, %v8205
          %v9298 = vpack.c.b16 %v8212, %v8206
          %v9299 = vpack.c.b16 %v8213, %v8207
          %v9300 = vpack.c.b16 %v8214, %v8208
          %v9301 = vpack.c.b16 %v8215, %v8209
          %v9302 = vpack.c.b16 %v8222, %v8216
          %v9303 = vpack.c.b16 %v8223, %v8217
          %v9304 = vpack.c.b16 %v8224, %v8218
          %v9305 = vpack.c.b16 %v8225, %v8219
          %v9306 = vpack.c.b16 %v8226, %v8220
          %v9307 = vpack.c.b16 %v8227, %v8221
          %v9308 = vpack.c.b16 %v8234, %v8228
          %v9309 = vpack.c.b16 %v8235, %v8229
          %v9310 = vpack.c.b16 %v8236, %v8230
          %v9311 = vpack.c.b16 %v8237, %v8231
          %v9312 = vpack.c.b16 %v8238, %v8232
          %v9313 = vpack.c.b16 %v8239, %v8233
          %v9314 = vpack.c.b16 %v8246, %v8240
          %v9315 = vpack.c.b16 %v8247, %v8241
          %v9316 = vpack.c.b16 %v8248, %v8242
          %v9317 = vpack.c.b16 %v8249, %v8243
          %v9318 = vpack.c.b16 %v8250, %v8244
          %v9319 = vpack.c.b16 %v8251, %v8245
          %v9320 = vpack.c.b16 %v8258, %v8252
          %v9321 = vpack.c.b16 %v8259, %v8253
          %v9322 = vpack.c.b16 %v8260, %v8254
          %v9323 = vpack.c.b16 %v8261, %v8255
          %v9324 = vpack.c.b16 %v8262, %v8256
          %v9325 = vpack.c.b16 %v8263, %v8257
          %v9326 = vpack.c.b16 %v8270, %v8264
          %v9327 = vpack.c.b16 %v8271, %v8265
          %v9328 = vpack.c.b16 %v8272, %v8266
          %v9329 = vpack.c.b16 %v8273, %v8267
          %v9330 = vpack.c.b16 %v8274, %v8268
          %v9331 = vpack.c.b16 %v8275, %v8269
          %v9332 = vpack.c.b16 %v8282, %v8276
          %v9333 = vpack.c.b16 %v8283, %v8277
          %v9334 = vpack.c.b16 %v8284, %v8278
          %v9335 = vpack.c.b16 %v8285, %v8279
          %v9336 = vpack.c.b16 %v8286, %v8280
          %v9337 = vpack.c.b16 %v8287, %v8281
          %v9338 = vpack.c.b16 %v8294, %v8288
          %v9339 = vpack.c.b16 %v8295, %v8289
          %v9340 = vpack.c.b16 %v8296, %v8290
          %v9341 = vpack.c.b16 %v8297, %v8291
          %v9342 = vpack.c.b16 %v8298, %v8292
          %v9343 = vpack.c.b16 %v8299, %v8293
          %v9344 = vpack.c.b16 %v8306, %v8300
          %v9345 = vpack.c.b16 %v8307, %v8301
          %v9346 = vpack.c.b16 %v8308, %v8302
          %v9347 = vpack.c.b16 %v8309, %v8303
          %v9348 = vpack.c.b16 %v8310, %v8304
          %v9349 = vpack.c.b16 %v8311, %v8305
          %v9350 = vpack.c.b16 %v8318, %v8312
          %v9351 = vpack.c.b16 %v8319, %v8313
          %v9352 = vpack.c.b16 %v8320, %v8314
          %v9353 = vpack.c.b16 %v8321, %v8315
          %v9354 = vpack.c.b16 %v8322, %v8316
          %v9355 = vpack.c.b16 %v8323, %v8317
          %v9356 = vpack.c.b16 %v8330, %v8324
          %v9357 = vpack.c.b16 %v8331, %v8325
          %v9358 = vpack.c.b16 %v8332, %v8326
          %v9359 = vpack.c.b16 %v8333, %v8327
          %v9360 = vpack.c.b16 %v8334, %v8328
          %v9361 = vpack.c.b16 %v8335, %v8329
          %v9362 = vpack.c.b16 %v8342, %v8336
          %v9363 = vpack.c.b16 %v8343, %v8337
          %v9364 = vpack.c.b16 %v8344, %v8338
          %v9365 = vpack.c.b16 %v8345, %v8339
          %v9366 = vpack.c.b16 %v8346, %v8340
          %v9367 = vpack.c.b16 %v8347, %v8341
          %v9368 = vpack.c.b16 %v8354, %v8348
          %v9369 = vpack.c.b16 %v8355, %v8349
          %v9370 = vpack.c.b16 %v8356, %v8350
          %v9371 = vpack.c.b16 %v8357, %v8351
          %v9372 = vpack.c.b16 %v8358, %v8352
          %v9373 = vpack.c.b16 %v8359, %v8353
          %v9374 = vpack.c.b16 %v8366, %v8360
          %v9375 = vpack.c.b16 %v8367, %v8361
          %v9376 = vpack.c.b16 %v8368, %v8362
          %v9377 = vpack.c.b16 %v8369, %v8363
          %v9378 = vpack.c.b16 %v8370, %v8364
          %v9379 = vpack.c.b16 %v8371, %v8365
          %v9380 = vpack.c.b16 %v8378, %v8372
          %v9381 = vpack.c.b16 %v8379, %v8373
          %v9382 = vpack.c.b16 %v8380, %v8374
          %v9383 = vpack.c.b16 %v8381, %v8375
          %v9384 = vpack.c.b16 %v8382, %v8376
          %v9385 = vpack.c.b16 %v8383, %v8377
          %v9386 = vpack.c.b16 %v8390, %v8384
          %v9387 = vpack.c.b16 %v8391, %v8385
          %v9388 = vpack.c.b16 %v8392, %v8386
          %v9389 = vpack.c.b16 %v8393, %v8387
          %v9390 = vpack.c.b16 %v8394, %v8388
          %v9391 = vpack.c.b16 %v8395, %v8389
          %v9392 = vpack.c.b16 %v8402, %v8396
          %v9393 = vpack.c.b16 %v8403, %v8397
          %v9394 = vpack.c.b16 %v8404, %v8398
          %v9395 = vpack.c.b16 %v8405, %v8399
          %v9396 = vpack.c.b16 %v8406, %v8400
          %v9397 = vpack.c.b16 %v8407, %v8401
          %v9398 = vpack.c.b16 %v8414, %v8408
          %v9399 = vpack.c.b16 %v8415, %v8409
          %v9400 = vpack.c.b16 %v8416, %v8410
          %v9401 = vpack.c.b16 %v8417, %v8411
          %v9402 = vpack.c.b16 %v8418, %v8412
          %v9403 = vpack.c.b16 %v8419, %v8413
          %v9404 = vpack.c.b16 %v8426, %v8420
          %v9405 = vpack.c.b16 %v8427, %v8421
          %v9406 = vpack.c.b16 %v8428, %v8422
          %v9407 = vpack.c.b16 %v8429, %v8423
          %v9408 = vpack.c.b16 %v8430, %v8424
          %v9409 = vpack.c.b16 %v8431, %v8425
          %v9410 = vpack.c.b16 %v8438, %v8432
          %v9411 = vpack.c.b16 %v8439, %v8433
          %v9412 = vpack.c.b16 %v8440, %v8434
          %v9413 = vpack.c.b16 %v8441, %v8435
          %v9414 = vpack.c.b16 %v8442, %v8436
          %v9415 = vpack.c.b16 %v8443, %v8437
          %v9416 = vpack.c.b16 %v8450, %v8444
          %v9417 = vpack.c.b16 %v8451, %v8445
          %v9418 = vpack.c.b16 %v8452, %v8446
          %v9419 = vpack.c.b16 %v8453, %v8447
          %v9420 = vpack.c.b16 %v8454, %v8448
          %v9421 = vpack.c.b16 %v8455, %v8449
          %v9422 = vpack.c.b16 %v8462, %v8456
          %v9423 = vpack.c.b16 %v8463, %v8457
          %v9424 = vpack.c.b16 %v8464, %v8458
          %v9425 = vpack.c.b16 %v8465, %v8459
          %v9426 = vpack.c.b16 %v8466, %v8460
          %v9427 = vpack.c.b16 %v8467, %v8461
          %v9428 = vpack.c.b16 %v8474, %v8468
          %v9429 = vpack.c.b16 %v8475, %v8469
          %v9430 = vpack.c.b16 %v8476, %v8470
          %v9431 = vpack.c.b16 %v8477, %v8471
          %v9432 = vpack.c.b16 %v8478, %v8472
          %v9433 = vpack.c.b16 %v8479, %v8473
          %v9434 = vpack.c.b16 %v8486, %v8480
          %v9435 = vpack.c.b16 %v8487, %v8481
          %v9436 = vpack.c.b16 %v8488, %v8482
          %v9437 = vpack.c.b16 %v8489, %v8483
          %v9438 = vpack.c.b16 %v8490, %v8484
          %v9439 = vpack.c.b16 %v8491, %v8485
          %v9440 = vpack.c.b16 %v8498, %v8492
          %v9441 = vpack.c.b16 %v8499, %v8493
          %v9442 = vpack.c.b16 %v8500, %v8494
          %v9443 = vpack.c.b16 %v8501, %v8495
          %v9444 = vpack.c.b16 %v8502, %v8496
          %v9445 = vpack.c.b16 %v8503, %v8497
          %v9446 = vpack.c.b16 %v8510, %v8504
          %v9447 = vpack.c.b16 %v8511, %v8505
          %v9448 = vpack.c.b16 %v8512, %v8506
          %v9449 = vpack.c.b16 %v8513, %v8507
          %v9450 = vpack.c.b16 %v8514, %v8508
          %v9451 = vpack.c.b16 %v8515, %v8509
          %v9452 = vpack.c.b16 %v8522, %v8516
          %v9453 = vpack.c.b16 %v8523, %v8517
          %v9454 = vpack.c.b16 %v8524, %v8518
          %v9455 = vpack.c.b16 %v8525, %v8519
          %v9456 = vpack.c.b16 %v8526, %v8520
          %v9457 = vpack.c.b16 %v8527, %v8521
          %v9458 = vpack.c.b16 %v8534, %v8528
          %v9459 = vpack.c.b16 %v8535, %v8529
          %v9460 = vpack.c.b16 %v8536, %v8530
          %v9461 = vpack.c.b16 %v8537, %v8531
          %v9462 = vpack.c.b16 %v8538, %v8532
          %v9463 = vpack.c.b16 %v8539, %v8533
          %v9464 = vpack.c.b16 %v8546, %v8540
          %v9465 = vpack.c.b16 %v8547, %v8541
          %v9466 = vpack.c.b16 %v8548, %v8542
          %v9467 = vpack.c.b16 %v8549, %v8543
          %v9468 = vpack.c.b16 %v8550, %v8544
          %v9469 = vpack.c.b16 %v8551, %v8545
          %v9470 = vpack.c.b16 %v8558, %v8552
          %v9471 = vpack.c.b16 %v8559, %v8553
          %v9472 = vpack.c.b16 %v8560, %v8554
          %v9473 = vpack.c.b16 %v8561, %v8555
          %v9474 = vpack.c.b16 %v8562, %v8556
          %v9475 = vpack.c.b16 %v8563, %v8557
          %v9476 = vpack.c.b16 %v8570, %v8564
          %v9477 = vpack.c.b16 %v8571, %v8565
          %v9478 = vpack.c.b16 %v8572, %v8566
          %v9479 = vpack.c.b16 %v8573, %v8567
          %v9480 = vpack.c.b16 %v8574, %v8568
          %v9481 = vpack.c.b16 %v8575, %v8569
          %v9482 = vpack.c.b16 %v8582, %v8576
          %v9483 = vpack.c.b16 %v8583, %v8577
          %v9484 = vpack.c.b16 %v8584, %v8578
          %v9485 = vpack.c.b16 %v8585, %v8579
          %v9486 = vpack.c.b16 %v8586, %v8580
          %v9487 = vpack.c.b16 %v8587, %v8581
          %v9488 = vpack.c.b16 %v8594, %v8588
          %v9489 = vpack.c.b16 %v8595, %v8589
          %v9490 = vpack.c.b16 %v8596, %v8590
          %v9491 = vpack.c.b16 %v8597, %v8591
          %v9492 = vpack.c.b16 %v8598, %v8592
          %v9493 = vpack.c.b16 %v8599, %v8593
          %v9494 = vpack.c.b16 %v8606, %v8600
          %v9495 = vpack.c.b16 %v8607, %v8601
          %v9496 = vpack.c.b16 %v8608, %v8602
          %v9497 = vpack.c.b16 %v8609, %v8603
          %v9498 = vpack.c.b16 %v8610, %v8604
          %v9499 = vpack.c.b16 %v8611, %v8605
          %v9500 = vpack.c.b16 %v8618, %v8612
          %v9501 = vpack.c.b16 %v8619, %v8613
          %v9502 = vpack.c.b16 %v8620, %v8614
          %v9503 = vpack.c.b16 %v8621, %v8615
          %v9504 = vpack.c.b16 %v8622, %v8616
          %v9505 = vpack.c.b16 %v8623, %v8617
          %v9506 = vpack.c.b16 %v8630, %v8624
          %v9507 = vpack.c.b16 %v8631, %v8625
          %v9508 = vpack.c.b16 %v8632, %v8626
          %v9509 = vpack.c.b16 %v8633, %v8627
          %v9510 = vpack.c.b16 %v8634, %v8628
          %v9511 = vpack.c.b16 %v8635, %v8629
          %v9512 = vpack.c.b16 %v8642, %v8636
          %v9513 = vpack.c.b16 %v8643, %v8637
          %v9514 = vpack.c.b16 %v8644, %v8638
          %v9515 = vpack.c.b16 %v8645, %v8639
          %v9516 = vpack.c.b16 %v8646, %v8640
          %v9517 = vpack.c.b16 %v8647, %v8641
          %v9518 = vpack.c.b16 %v8654, %v8648
          %v9519 = vpack.c.b16 %v8655, %v8649
          %v9520 = vpack.c.b16 %v8656, %v8650
          %v9521 = vpack.c.b16 %v8657, %v8651
          %v9522 = vpack.c.b16 %v8658, %v8652
          %v9523 = vpack.c.b16 %v8659, %v8653
          %v9524 = vpack.c.b16 %v8666, %v8660
          %v9525 = vpack.c.b16 %v8667, %v8661
          %v9526 = vpack.c.b16 %v8668, %v8662
          %v9527 = vpack.c.b16 %v8669, %v8663
          %v9528 = vpack.c.b16 %v8670, %v8664
          %v9529 = vpack.c.b16 %v8671, %v8665
          %v9530 = vpack.c.b16 %v8678, %v8672
          %v9531 = vpack.c.b16 %v8679, %v8673
          %v9532 = vpack.c.b16 %v8680, %v8674
          %v9533 = vpack.c.b16 %v8681, %v8675
          %v9534 = vpack.c.b16 %v8682, %v8676
          %v9535 = vpack.c.b16 %v8683, %v8677
          %v9536 = vpack.c.b16 %v8690, %v8684
          %v9537 = vpack.c.b16 %v8691, %v8685
          %v9538 = vpack.c.b16 %v8692, %v8686
          %v9539 = vpack.c.b16 %v8693, %v8687
          %v9540 = vpack.c.b16 %v8694, %v8688
          %v9541 = vpack.c.b16 %v8695, %v8689
          %v9542 = vpack.c.b16 %v8702, %v8696
          %v9543 = vpack.c.b16 %v8703, %v8697
          %v9544 = vpack.c.b16 %v8704, %v8698
          %v9545 = vpack.c.b16 %v8705, %v8699
          %v9546 = vpack.c.b16 %v8706, %v8700
          %v9547 = vpack.c.b16 %v8707, %v8701
          %v9548 = vpack.c.b16 %v8714, %v8708
          %v9549 = vpack.c.b16 %v8715, %v8709
          %v9550 = vpack.c.b16 %v8716, %v8710
          %v9551 = vpack.c.b16 %v8717, %v8711
          %v9552 = vpack.c.b16 %v8718, %v8712
          %v9553 = vpack.c.b16 %v8719, %v8713
          %v9554 = vpack.c.b16 %v8726, %v8720
          %v9555 = vpack.c.b16 %v8727, %v8721
          %v9556 = vpack.c.b16 %v8728, %v8722
          %v9557 = vpack.c.b16 %v8729, %v8723
          %v9558 = vpack.c.b16 %v8730, %v8724
          %v9559 = vpack.c.b16 %v8731, %v8725
          %v9560 = vpack.c.b16 %v8738, %v8732
          %v9561 = vpack.c.b16 %v8739, %v8733
          %v9562 = vpack.c.b16 %v8740, %v8734
          %v9563 = vpack.c.b16 %v8741, %v8735
          %v9564 = vpack.c.b16 %v8742, %v8736
          %v9565 = vpack.c.b16 %v8743, %v8737
          %v9566 = vpack.c.b16 %v8750, %v8744
          %v9567 = vpack.c.b16 %v8751, %v8745
          %v9568 = vpack.c.b16 %v8752, %v8746
          %v9569 = vpack.c.b16 %v8753, %v8747
          %v9570 = vpack.c.b16 %v8754, %v8748
          %v9571 = vpack.c.b16 %v8755, %v8749
          %v9572 = vpack.c.b16 %v8762, %v8756
          %v9573 = vpack.c.b16 %v8763, %v8757
          %v9574 = vpack.c.b16 %v8764, %v8758
          %v9575 = vpack.c.b16 %v8765, %v8759
          %v9576 = vpack.c.b16 %v8766, %v8760
          %v9577 = vpack.c.b16 %v8767, %v8761
          %v9578 = vpack.c.b16 %v8774, %v8768
          %v9579 = vpack.c.b16 %v8775, %v8769
          %v9580 = vpack.c.b16 %v8776, %v8770
          %v9581 = vpack.c.b16 %v8777, %v8771
          %v9582 = vpack.c.b16 %v8778, %v8772
          %v9583 = vpack.c.b16 %v8779, %v8773
          %v9584 = vpack.c.b16 %v8786, %v8780
          %v9585 = vpack.c.b16 %v8787, %v8781
          %v9586 = vpack.c.b16 %v8788, %v8782
          %v9587 = vpack.c.b16 %v8789, %v8783
          %v9588 = vpack.c.b16 %v8790, %v8784
          %v9589 = vpack.c.b16 %v8791, %v8785
          %v9590 = vpack.c.b16 %v8798, %v8792
          %v9591 = vpack.c.b16 %v8799, %v8793
          %v9592 = vpack.c.b16 %v8800, %v8794
          %v9593 = vpack.c.b16 %v8801, %v8795
          %v9594 = vpack.c.b16 %v8802, %v8796
          %v9595 = vpack.c.b16 %v8803, %v8797
          %v9596 = vpack.c.b16 %v8810, %v8804
          %v9597 = vpack.c.b16 %v8811, %v8805
          %v9598 = vpack.c.b16 %v8812, %v8806
          %v9599 = vpack.c.b16 %v8813, %v8807
          %v9600 = vpack.c.b16 %v8814, %v8808
          %v9601 = vpack.c.b16 %v8815, %v8809
          %v9602 = vpack.c.b16 %v8822, %v8816
          %v9603 = vpack.c.b16 %v8823, %v8817
          %v9604 = vpack.c.b16 %v8824, %v8818
          %v9605 = vpack.c.b16 %v8825, %v8819
          %v9606 = vpack.c.b16 %v8826, %v8820
          %v9607 = vpack.c.b16 %v8827, %v8821
          %v9608 = vpack.c.b16 %v8834, %v8828
          %v9609 = vpack.c.b16 %v8835, %v8829
          %v9610 = vpack.c.b16 %v8836, %v8830
          %v9611 = vpack.c.b16 %v8837, %v8831
          %v9612 = vpack.c.b16 %v8838, %v8832
          %v9613 = vpack.c.b16 %v8839, %v8833
          %v9614 = vpack.c.b16 %v8846, %v8840
          %v9615 = vpack.c.b16 %v8847, %v8841
          %v9616 = vpack.c.b16 %v8848, %v8842
          %v9617 = vpack.c.b16 %v8849, %v8843
          %v9618 = vpack.c.b16 %v8850, %v8844
          %v9619 = vpack.c.b16 %v8851, %v8845
          %v9620 = vpack.c.b16 %v8858, %v8852
          %v9621 = vpack.c.b16 %v8859, %v8853
          %v9622 = vpack.c.b16 %v8860, %v8854
          %v9623 = vpack.c.b16 %v8861, %v8855
          %v9624 = vpack.c.b16 %v8862, %v8856
          %v9625 = vpack.c.b16 %v8863, %v8857
          %v9626 = vpack.c.b16 %v8870, %v8864
          %v9627 = vpack.c.b16 %v8871, %v8865
          %v9628 = vpack.c.b16 %v8872, %v8866
          %v9629 = vpack.c.b16 %v8873, %v8867
          %v9630 = vpack.c.b16 %v8874, %v8868
          %v9631 = vpack.c.b16 %v8875, %v8869
          %v9632 = vpack.c.b16 %v8882, %v8876
          %v9633 = vpack.c.b16 %v8883, %v8877
          %v9634 = vpack.c.b16 %v8884, %v8878
          %v9635 = vpack.c.b16 %v8885, %v8879
          %v9636 = vpack.c.b16 %v8886, %v8880
          %v9637 = vpack.c.b16 %v8887, %v8881
          %v9638 = vpack.c.b16 %v8894, %v8888
          %v9639 = vpack.c.b16 %v8895, %v8889
          %v9640 = vpack.c.b16 %v8896, %v8890
          %v9641 = vpack.c.b16 %v8897, %v8891
          %v9642 = vpack.c.b16 %v8898, %v8892
          %v9643 = vpack.c.b16 %v8899, %v8893
          %v9644 = vpack.c.b16 %v8906, %v8900
          %v9645 = vpack.c.b16 %v8907, %v8901
          %v9646 = vpack.c.b16 %v8908, %v8902
          %v9647 = vpack.c.b16 %v8909, %v8903
          %v9648 = vpack.c.b16 %v8910, %v8904
          %v9649 = vpack.c.b16 %v8911, %v8905
          %v9650 = vpack.c.b16 %v8918, %v8912
          %v9651 = vpack.c.b16 %v8919, %v8913
          %v9652 = vpack.c.b16 %v8920, %v8914
          %v9653 = vpack.c.b16 %v8921, %v8915
          %v9654 = vpack.c.b16 %v8922, %v8916
          %v9655 = vpack.c.b16 %v8923, %v8917
          %v9656 = vpack.c.b16 %v8930, %v8924
          %v9657 = vpack.c.b16 %v8931, %v8925
          %v9658 = vpack.c.b16 %v8932, %v8926
          %v9659 = vpack.c.b16 %v8933, %v8927
          %v9660 = vpack.c.b16 %v8934, %v8928
          %v9661 = vpack.c.b16 %v8935, %v8929
          %v9662 = vpack.c.b16 %v8942, %v8936
          %v9663 = vpack.c.b16 %v8943, %v8937
          %v9664 = vpack.c.b16 %v8944, %v8938
          %v9665 = vpack.c.b16 %v8945, %v8939
          %v9666 = vpack.c.b16 %v8946, %v8940
          %v9667 = vpack.c.b16 %v8947, %v8941
          %v9668 = vpack.c.b16 %v8954, %v8948
          %v9669 = vpack.c.b16 %v8955, %v8949
          %v9670 = vpack.c.b16 %v8956, %v8950
          %v9671 = vpack.c.b16 %v8957, %v8951
          %v9672 = vpack.c.b16 %v8958, %v8952
          %v9673 = vpack.c.b16 %v8959, %v8953
          %v9674 = vpack.c.b16 %v8966, %v8960
          %v9675 = vpack.c.b16 %v8967, %v8961
          %v9676 = vpack.c.b16 %v8968, %v8962
          %v9677 = vpack.c.b16 %v8969, %v8963
          %v9678 = vpack.c.b16 %v8970, %v8964
          %v9679 = vpack.c.b16 %v8971, %v8965
          %v9680 = vpack.c.b16 %v8978, %v8972
          %v9681 = vpack.c.b16 %v8979, %v8973
          %v9682 = vpack.c.b16 %v8980, %v8974
          %v9683 = vpack.c.b16 %v8981, %v8975
          %v9684 = vpack.c.b16 %v8982, %v8976
          %v9685 = vpack.c.b16 %v8983, %v8977
          %v9686 = vpack.c.b16 %v8990, %v8984
          %v9687 = vpack.c.b16 %v8991, %v8985
          %v9688 = vpack.c.b16 %v8992, %v8986
          %v9689 = vpack.c.b16 %v8993, %v8987
          %v9690 = vpack.c.b16 %v8994, %v8988
          %v9691 = vpack.c.b16 %v8995, %v8989
          %v9692 = vpack.c.b16 %v9002, %v8996
          %v9693 = vpack.c.b16 %v9003, %v8997
          %v9694 = vpack.c.b16 %v9004, %v8998
          %v9695 = vpack.c.b16 %v9005, %v8999
          %v9696 = vpack.c.b16 %v9006, %v9000
          %v9697 = vpack.c.b16 %v9007, %v9001
          %v9698 = vpack.c.b16 %v9014, %v9008
          %v9699 = vpack.c.b16 %v9015, %v9009
          %v9700 = vpack.c.b16 %v9016, %v9010
          %v9701 = vpack.c.b16 %v9017, %v9011
          %v9702 = vpack.c.b16 %v9018, %v9012
          %v9703 = vpack.c.b16 %v9019, %v9013
          %v9704 = vpack.c.b16 %v9026, %v9020
          %v9705 = vpack.c.b16 %v9027, %v9021
          %v9706 = vpack.c.b16 %v9028, %v9022
          %v9707 = vpack.c.b16 %v9029, %v9023
          %v9708 = vpack.c.b16 %v9030, %v9024
          %v9709 = vpack.c.b16 %v9031, %v9025
          %v9710 = vpack.c.b16 %v9038, %v9032
          %v9711 = vpack.c.b16 %v9039, %v9033
          %v9712 = vpack.c.b16 %v9040, %v9034
          %v9713 = vpack.c.b16 %v9041, %v9035
          %v9714 = vpack.c.b16 %v9042, %v9036
          %v9715 = vpack.c.b16 %v9043, %v9037
          %v9716 = vpack.c.b16 %v9050, %v9044
          %v9717 = vpack.c.b16 %v9051, %v9045
          %v9718 = vpack.c.b16 %v9052, %v9046
          %v9719 = vpack.c.b16 %v9053, %v9047
          %v9720 = vpack.c.b16 %v9054, %v9048
          %v9721 = vpack.c.b16 %v9055, %v9049
          %v9722 = vpack.c.b16 %v9062, %v9056
          %v9723 = vpack.c.b16 %v9063, %v9057
          %v9724 = vpack.c.b16 %v9064, %v9058
          %v9725 = vpack.c.b16 %v9065, %v9059
          %v9726 = vpack.c.b16 %v9066, %v9060
          %v9727 = vpack.c.b16 %v9067, %v9061
          %v9728 = vpack.c.b16 %v9074, %v9068
          %v9729 = vpack.c.b16 %v9075, %v9069
          %v9730 = vpack.c.b16 %v9076, %v9070
          %v9731 = vpack.c.b16 %v9077, %v9071
          %v9732 = vpack.c.b16 %v9078, %v9072
          %v9733 = vpack.c.b16 %v9079, %v9073
          %v9734 = vpack.c.b16 %v9086, %v9080
          %v9735 = vpack.c.b16 %v9087, %v9081
          %v9736 = vpack.c.b16 %v9088, %v9082
          %v9737 = vpack.c.b16 %v9089, %v9083
          %v9738 = vpack.c.b16 %v9090, %v9084
          %v9739 = vpack.c.b16 %v9091, %v9085
          %v9740 = vpack.c.b16 %v9098, %v9092
          %v9741 = vpack.c.b16 %v9099, %v9093
          %v9742 = vpack.c.b16 %v9100, %v9094
          %v9743 = vpack.c.b16 %v9101, %v9095
          %v9744 = vpack.c.b16 %v9102, %v9096
          %v9745 = vpack.c.b16 %v9103, %v9097
          %v9746 = vpack.c.b16 %v9110, %v9104
          %v9747 = vpack.c.b16 %v9111, %v9105
          %v9748 = vpack.c.b16 %v9112, %v9106
          %v9749 = vpack.c.b16 %v9113, %v9107
          %v9750 = vpack.c.b16 %v9114, %v9108
          %v9751 = vpack.c.b16 %v9115, %v9109
          %v9752 = vpack.c.b16 %v9122, %v9116
          %v9753 = vpack.c.b16 %v9123, %v9117
          %v9754 = vpack.c.b16 %v9124, %v9118
          %v9755 = vpack.c.b16 %v9125, %v9119
          %v9756 = vpack.c.b16 %v9126, %v9120
          %v9757 = vpack.c.b16 %v9127, %v9121
          %v9758 = vpack.c.b16 %v9134, %v9128
          %v9759 = vpack.c.b16 %v9135, %v9129
          %v9760 = vpack.c.b16 %v9136, %v9130
          %v9761 = vpack.c.b16 %v9137, %v9131
          %v9762 = vpack.c.b16 %v9138, %v9132
          %v9763 = vpack.c.b16 %v9139, %v9133
          %v9764 = vpack.c.b16 %v9146, %v9140
          %v9765 = vpack.c.b16 %v9147, %v9141
          %v9766 = vpack.c.b16 %v9148, %v9142
          %v9767 = vpack.c.b16 %v9149, %v9143
          %v9768 = vpack.c.b16 %v9150, %v9144
          %v9769 = vpack.c.b16 %v9151, %v9145
          %v9770 = vpack.c.b16 %v9158, %v9152
          %v9771 = vpack.c.b16 %v9159, %v9153
          %v9772 = vpack.c.b16 %v9160, %v9154
          %v9773 = vpack.c.b16 %v9161, %v9155
          %v9774 = vpack.c.b16 %v9162, %v9156
          %v9775 = vpack.c.b16 %v9163, %v9157
          %v9776 = vpack.c.b16 %v9170, %v9164
          %v9777 = vpack.c.b16 %v9171, %v9165
          %v9778 = vpack.c.b16 %v9172, %v9166
          %v9779 = vpack.c.b16 %v9173, %v9167
          %v9780 = vpack.c.b16 %v9174, %v9168
          %v9781 = vpack.c.b16 %v9175, %v9169
          %v9782 = vpack.c.b16 %v9182, %v9176
          %v9783 = vpack.c.b16 %v9183, %v9177
          %v9784 = vpack.c.b16 %v9184, %v9178
          %v9785 = vpack.c.b16 %v9185, %v9179
          %v9786 = vpack.c.b16 %v9186, %v9180
          %v9787 = vpack.c.b16 %v9187, %v9181
          %v9788 = vpack.c.b16 %v9194, %v9188
          %v9789 = vpack.c.b16 %v9195, %v9189
          %v9790 = vpack.c.b16 %v9196, %v9190
          %v9791 = vpack.c.b16 %v9197, %v9191
          %v9792 = vpack.c.b16 %v9198, %v9192
          %v9793 = vpack.c.b16 %v9199, %v9193
          %v9794 = vpack.c.b16 %v9206, %v9200
          %v9795 = vpack.c.b16 %v9207, %v9201
          %v9796 = vpack.c.b16 %v9208, %v9202
          %v9797 = vpack.c.b16 %v9209, %v9203
          %v9798 = vpack.c.b16 %v9210, %v9204
          %v9799 = vpack.c.b16 %v9211, %v9205
          %v10389 = vsel %vm6213, %v6827, 0
          %10391 = vmatprep.subr.bf16.mxu0 %v9255
          %10392 = vmatpush1.bf16.msra.mxu0 %v9254
          %10393 = vmatprep.subr.bf16.mxu0 %v9249
          %10394 = vmatpush1.bf16.msra.mxu0 %v9248
          %10395 = vmatprep.subr.bf16.mxu0 %v9243
          %10396 = vmatpush1.bf16.msra.mxu0 %v9242
          %10397 = vmatprep.subr.bf16.mxu0 %v9237
          %10398 = vmatpush1.bf16.msra.mxu0 %v9236
          %10399 = vmatprep.subr.bf16.mxu0 %v9231
          %10400 = vmatpush1.bf16.msra.mxu0 %v9230
          %10401 = vmatprep.subr.bf16.mxu0 %v9225
          %10402 = vmatpush1.bf16.msra.mxu0 %v9224
          %10403 = vmatprep.subr.bf16.mxu0 %v9219
          %10404 = vmatpush1.bf16.msra.mxu0 %v9218
          %10405 = vmatprep.subr.bf16.mxu0 %v9213
          %10406 = vmatpush1.bf16.msra.mxu0 %v9212
          %10407 = vmatprep.subr.bf16.mxu0 %v9303
          %10408 = vmatpush2.bf16.msra.mxu0 %v9302
          %10409 = vmatprep.subr.bf16.mxu0 %v9297
          %10410 = vmatpush2.bf16.msra.mxu0 %v9296
          %10411 = vmatprep.subr.bf16.mxu0 %v9291
          %10412 = vmatpush2.bf16.msra.mxu0 %v9290
          %10413 = vmatprep.subr.bf16.mxu0 %v9285
          %10414 = vmatpush2.bf16.msra.mxu0 %v9284
          %10415 = vmatprep.subr.bf16.mxu0 %v9279
          %10416 = vmatpush2.bf16.msra.mxu0 %v9278
          %10417 = vmatprep.subr.bf16.mxu0 %v9273
          %10418 = vmatpush2.bf16.msra.mxu0 %v9272
          %10419 = vmatprep.subr.bf16.mxu0 %v9267
          %10420 = vmatpush2.bf16.msra.mxu0 %v9266
          %10421 = vmatprep.subr.bf16.mxu0 %v9261
          %10422 = vmatpush2.bf16.msra.mxu0 %v9260
          %10423 = vmatprep.mubr.bf16.mxu0 %v6816
          %10424 = vmatmul.mubr.bf16.gmra.mxu0 %v6815
          %v10425 = vpop.f32.mrf.mxu0
          %v10426 = vadd.f32 %v7421, %v10425
          %v10427 = vpop.f32.mrf.mxu0
          %v10428 = vadd.f32 %v7425, %v10427
          %v10429 = vpop.f32.mrf.mxu0
          %v10430 = vpop.f32.mrf.mxu0
          %10431 = vdwg.mxu0
          %10432 = vmatprep.subr.bf16.mxu0 %v9351
          %10433 = vmatpush1.bf16.msra.mxu0 %v9350
          %10434 = vmatprep.subr.bf16.mxu0 %v9345
          %10435 = vmatpush1.bf16.msra.mxu0 %v9344
          %10436 = vmatprep.subr.bf16.mxu0 %v9339
          %10437 = vmatpush1.bf16.msra.mxu0 %v9338
          %10438 = vmatprep.subr.bf16.mxu0 %v9333
          %10439 = vmatpush1.bf16.msra.mxu0 %v9332
          %10440 = vmatprep.subr.bf16.mxu0 %v9327
          %10441 = vmatpush1.bf16.msra.mxu0 %v9326
          %10442 = vmatprep.subr.bf16.mxu0 %v9321
          %10443 = vmatpush1.bf16.msra.mxu0 %v9320
          %10444 = vmatprep.subr.bf16.mxu0 %v9315
          %10445 = vmatpush1.bf16.msra.mxu0 %v9314
          %10446 = vmatprep.subr.bf16.mxu0 %v9309
          %10447 = vmatpush1.bf16.msra.mxu0 %v9308
          %10448 = vmatprep.subr.bf16.mxu0 %v9399
          %10449 = vmatpush2.bf16.msra.mxu0 %v9398
          %10450 = vmatprep.subr.bf16.mxu0 %v9393
          %10451 = vmatpush2.bf16.msra.mxu0 %v9392
          %10452 = vmatprep.subr.bf16.mxu0 %v9387
          %10453 = vmatpush2.bf16.msra.mxu0 %v9386
          %10454 = vmatprep.subr.bf16.mxu0 %v9381
          %10455 = vmatpush2.bf16.msra.mxu0 %v9380
          %10456 = vmatprep.subr.bf16.mxu0 %v9375
          %10457 = vmatpush2.bf16.msra.mxu0 %v9374
          %10458 = vmatprep.subr.bf16.mxu0 %v9369
          %10459 = vmatpush2.bf16.msra.mxu0 %v9368
          %10460 = vmatprep.subr.bf16.mxu0 %v9363
          %10461 = vmatpush2.bf16.msra.mxu0 %v9362
          %10462 = vmatprep.subr.bf16.mxu0 %v9357
          %10463 = vmatpush2.bf16.msra.mxu0 %v9356
          %10464 = vmatprep.mubr.bf16.mxu0 %v6818
          %10465 = vmatmul.mubr.bf16.gmra.mxu0 %v6817
          %v10466 = vpop.f32.mrf.mxu0
          %v10467 = vadd.f32 %v10426, %v10466
          %v10468 = vpop.f32.mrf.mxu0
          %v10469 = vadd.f32 %v10428, %v10468
          %v10470 = vpop.f32.mrf.mxu0
          %v10471 = vpop.f32.mrf.mxu0
          %10472 = vdwg.mxu0
          %10473 = vmatprep.subr.bf16.mxu0 %v9447
          %10474 = vmatpush1.bf16.msra.mxu0 %v9446
          %10475 = vmatprep.subr.bf16.mxu0 %v9441
          %10476 = vmatpush1.bf16.msra.mxu0 %v9440
          %10477 = vmatprep.subr.bf16.mxu0 %v9435
          %10478 = vmatpush1.bf16.msra.mxu0 %v9434
          %10479 = vmatprep.subr.bf16.mxu0 %v9429
          %10480 = vmatpush1.bf16.msra.mxu0 %v9428
          %10481 = vmatprep.subr.bf16.mxu0 %v9423
          %10482 = vmatpush1.bf16.msra.mxu0 %v9422
          %10483 = vmatprep.subr.bf16.mxu0 %v9417
          %10484 = vmatpush1.bf16.msra.mxu0 %v9416
          %10485 = vmatprep.subr.bf16.mxu0 %v9411
          %10486 = vmatpush1.bf16.msra.mxu0 %v9410
          %10487 = vmatprep.subr.bf16.mxu0 %v9405
          %10488 = vmatpush1.bf16.msra.mxu0 %v9404
          %10489 = vmatprep.subr.bf16.mxu0 %v9495
          %10490 = vmatpush2.bf16.msra.mxu0 %v9494
          %10491 = vmatprep.subr.bf16.mxu0 %v9489
          %10492 = vmatpush2.bf16.msra.mxu0 %v9488
          %10493 = vmatprep.subr.bf16.mxu0 %v9483
          %10494 = vmatpush2.bf16.msra.mxu0 %v9482
          %10495 = vmatprep.subr.bf16.mxu0 %v9477
          %10496 = vmatpush2.bf16.msra.mxu0 %v9476
          %10497 = vmatprep.subr.bf16.mxu0 %v9471
          %10498 = vmatpush2.bf16.msra.mxu0 %v9470
          %10499 = vmatprep.subr.bf16.mxu0 %v9465
          %10500 = vmatpush2.bf16.msra.mxu0 %v9464
          %10501 = vmatprep.subr.bf16.mxu0 %v9459
          %10502 = vmatpush2.bf16.msra.mxu0 %v9458
          %10503 = vmatprep.subr.bf16.mxu0 %v9453
          %10504 = vmatpush2.bf16.msra.mxu0 %v9452
          %10505 = vmatprep.mubr.bf16.mxu0 %v6820
          %10506 = vmatmul.mubr.bf16.gmra.mxu0 %v6819
          %v10507 = vpop.f32.mrf.mxu0
          %v10508 = vadd.f32 %v10467, %v10507
          %v10509 = vpop.f32.mrf.mxu0
          %v10510 = vadd.f32 %v10469, %v10509
          %v10511 = vpop.f32.mrf.mxu0
          %v10512 = vpop.f32.mrf.mxu0
          %10513 = vdwg.mxu0
          %10514 = vmatprep.subr.bf16.mxu0 %v9543
          %10515 = vmatpush1.bf16.msra.mxu0 %v9542
          %10516 = vmatprep.subr.bf16.mxu0 %v9537
          %10517 = vmatpush1.bf16.msra.mxu0 %v9536
          %10518 = vmatprep.subr.bf16.mxu0 %v9531
          %10519 = vmatpush1.bf16.msra.mxu0 %v9530
          %10520 = vmatprep.subr.bf16.mxu0 %v9525
          %10521 = vmatpush1.bf16.msra.mxu0 %v9524
          %10522 = vmatprep.subr.bf16.mxu0 %v9519
          %10523 = vmatpush1.bf16.msra.mxu0 %v9518
          %10524 = vmatprep.subr.bf16.mxu0 %v9513
          %10525 = vmatpush1.bf16.msra.mxu0 %v9512
          %10526 = vmatprep.subr.bf16.mxu0 %v9507
          %10527 = vmatpush1.bf16.msra.mxu0 %v9506
          %10528 = vmatprep.subr.bf16.mxu0 %v9501
          %10529 = vmatpush1.bf16.msra.mxu0 %v9500
          %10530 = vmatprep.subr.bf16.mxu0 %v9591
          %10531 = vmatpush2.bf16.msra.mxu0 %v9590
          %10532 = vmatprep.subr.bf16.mxu0 %v9585
          %10533 = vmatpush2.bf16.msra.mxu0 %v9584
          %10534 = vmatprep.subr.bf16.mxu0 %v9579
          %10535 = vmatpush2.bf16.msra.mxu0 %v9578
          %10536 = vmatprep.subr.bf16.mxu0 %v9573
          %10537 = vmatpush2.bf16.msra.mxu0 %v9572
          %10538 = vmatprep.subr.bf16.mxu0 %v9567
          %10539 = vmatpush2.bf16.msra.mxu0 %v9566
          %10540 = vmatprep.subr.bf16.mxu0 %v9561
          %10541 = vmatpush2.bf16.msra.mxu0 %v9560
          %10542 = vmatprep.subr.bf16.mxu0 %v9555
          %10543 = vmatpush2.bf16.msra.mxu0 %v9554
          %10544 = vmatprep.subr.bf16.mxu0 %v9549
          %10545 = vmatpush2.bf16.msra.mxu0 %v9548
          %10546 = vmatprep.mubr.bf16.mxu0 %v6822
          %10547 = vmatmul.mubr.bf16.gmra.mxu0 %v6821
          %v10548 = vpop.f32.mrf.mxu0
          %v10549 = vadd.f32 %v10508, %v10548
          %v10550 = vpop.f32.mrf.mxu0
          %v10551 = vadd.f32 %v10510, %v10550
          %v10552 = vpop.f32.mrf.mxu0
          %v10553 = vpop.f32.mrf.mxu0
          %10554 = vdwg.mxu0
          %10555 = vmatprep.subr.bf16.mxu0 %v9639
          %10556 = vmatpush1.bf16.msra.mxu0 %v9638
          %10557 = vmatprep.subr.bf16.mxu0 %v9633
          %10558 = vmatpush1.bf16.msra.mxu0 %v9632
          %10559 = vmatprep.subr.bf16.mxu0 %v9627
          %10560 = vmatpush1.bf16.msra.mxu0 %v9626
          %10561 = vmatprep.subr.bf16.mxu0 %v9621
          %10562 = vmatpush1.bf16.msra.mxu0 %v9620
          %10563 = vmatprep.subr.bf16.mxu0 %v9615
          %10564 = vmatpush1.bf16.msra.mxu0 %v9614
          %10565 = vmatprep.subr.bf16.mxu0 %v9609
          %10566 = vmatpush1.bf16.msra.mxu0 %v9608
          %10567 = vmatprep.subr.bf16.mxu0 %v9603
          %10568 = vmatpush1.bf16.msra.mxu0 %v9602
          %10569 = vmatprep.subr.bf16.mxu0 %v9597
          %10570 = vmatpush1.bf16.msra.mxu0 %v9596
          %10571 = vmatprep.subr.bf16.mxu0 %v9687
          %10572 = vmatpush2.bf16.msra.mxu0 %v9686
          %10573 = vmatprep.subr.bf16.mxu0 %v9681
          %10574 = vmatpush2.bf16.msra.mxu0 %v9680
          %10575 = vmatprep.subr.bf16.mxu0 %v9675
          %10576 = vmatpush2.bf16.msra.mxu0 %v9674
          %10577 = vmatprep.subr.bf16.mxu0 %v9669
          %10578 = vmatpush2.bf16.msra.mxu0 %v9668
          %10579 = vmatprep.subr.bf16.mxu0 %v9663
          %10580 = vmatpush2.bf16.msra.mxu0 %v9662
          %10581 = vmatprep.subr.bf16.mxu0 %v9657
          %10582 = vmatpush2.bf16.msra.mxu0 %v9656
          %10583 = vmatprep.subr.bf16.mxu0 %v9651
          %10584 = vmatpush2.bf16.msra.mxu0 %v9650
          %10585 = vmatprep.subr.bf16.mxu0 %v9645
          %10586 = vmatpush2.bf16.msra.mxu0 %v9644
          %10587 = vmatprep.mubr.bf16.mxu0 %v6824
          %10588 = vmatmul.mubr.bf16.gmra.mxu0 %v6823
          %v10589 = vpop.f32.mrf.mxu0
          %v10590 = vadd.f32 %v10549, %v10589
          %v10591 = vpop.f32.mrf.mxu0
          %v10592 = vadd.f32 %v10551, %v10591
          %v10593 = vpop.f32.mrf.mxu0
          %v10594 = vpop.f32.mrf.mxu0
          %10595 = vdwg.mxu0
          %10596 = vmatprep.subr.bf16.mxu0 %v9735
          %10597 = vmatpush1.bf16.msra.mxu0 %v9734
          %10598 = vmatprep.subr.bf16.mxu0 %v9729
          %10599 = vmatpush1.bf16.msra.mxu0 %v9728
          %10600 = vmatprep.subr.bf16.mxu0 %v9723
          %10601 = vmatpush1.bf16.msra.mxu0 %v9722
          %10602 = vmatprep.subr.bf16.mxu0 %v9717
          %10603 = vmatpush1.bf16.msra.mxu0 %v9716
          %10604 = vmatprep.subr.bf16.mxu0 %v9711
          %10605 = vmatpush1.bf16.msra.mxu0 %v9710
          %10606 = vmatprep.subr.bf16.mxu0 %v9705
          %10607 = vmatpush1.bf16.msra.mxu0 %v9704
          %10608 = vmatprep.subr.bf16.mxu0 %v9699
          %10609 = vmatpush1.bf16.msra.mxu0 %v9698
          %10610 = vmatprep.subr.bf16.mxu0 %v9693
          %10611 = vmatpush1.bf16.msra.mxu0 %v9692
          %10612 = vmatprep.subr.bf16.mxu0 %v9783
          %10613 = vmatpush2.bf16.msra.mxu0 %v9782
          %10614 = vmatprep.subr.bf16.mxu0 %v9777
          %10615 = vmatpush2.bf16.msra.mxu0 %v9776
          %10616 = vmatprep.subr.bf16.mxu0 %v9771
          %10617 = vmatpush2.bf16.msra.mxu0 %v9770
          %10618 = vmatprep.subr.bf16.mxu0 %v9765
          %10619 = vmatpush2.bf16.msra.mxu0 %v9764
          %10620 = vmatprep.subr.bf16.mxu0 %v9759
          %10621 = vmatpush2.bf16.msra.mxu0 %v9758
          %10622 = vmatprep.subr.bf16.mxu0 %v9753
          %10623 = vmatpush2.bf16.msra.mxu0 %v9752
          %10624 = vmatprep.subr.bf16.mxu0 %v9747
          %10625 = vmatpush2.bf16.msra.mxu0 %v9746
          %10626 = vmatprep.subr.bf16.mxu0 %v9741
          %10627 = vmatpush2.bf16.msra.mxu0 %v9740
          %10628 = vmatprep.mubr.bf16.mxu0 %v6826
          %10629 = vmatmul.mubr.bf16.gmra.mxu0 %v6825
          %v10630 = vpop.f32.mrf.mxu0
          %v10631 = vadd.f32 %v10590, %v10630
          %v10632 = vpop.f32.mrf.mxu0
          %v10633 = vadd.f32 %v10592, %v10632
          %v10634 = vpop.f32.mrf.mxu0
          %v10635 = vpop.f32.mrf.mxu0
          %10636 = vdwg.mxu0
          %10637 = vmatprep.subr.bf16.mxu0 0
          %10638 = vmatpush1.bf16.msra.mxu0 0
          %10639 = vmatprep.subr.bf16.mxu0 0
          %10640 = vmatpush1.bf16.msra.mxu0 0
          %10641 = vmatprep.subr.bf16.mxu0 0
          %10642 = vmatpush1.bf16.msra.mxu0 0
          %10643 = vmatprep.subr.bf16.mxu0 0
          %10644 = vmatpush1.bf16.msra.mxu0 0
          %10645 = vmatprep.subr.bf16.mxu0 0
          %10646 = vmatpush1.bf16.msra.mxu0 0
          %10647 = vmatprep.subr.bf16.mxu0 0
          %10648 = vmatpush1.bf16.msra.mxu0 0
          %10649 = vmatprep.subr.bf16.mxu0 %v9795
          %10650 = vmatpush1.bf16.msra.mxu0 %v9794
          %10651 = vmatprep.subr.bf16.mxu0 %v9789
          %10652 = vmatpush1.bf16.msra.mxu0 %v9788
          %10653 = vmatprep.subr.bf16.mxu0 0
          %10654 = vmatpush2.bf16.msra.mxu0 0
          %10655 = vmatprep.subr.bf16.mxu0 0
          %10656 = vmatpush2.bf16.msra.mxu0 0
          %10657 = vmatprep.subr.bf16.mxu0 0
          %10658 = vmatpush2.bf16.msra.mxu0 0
          %10659 = vmatprep.subr.bf16.mxu0 0
          %10660 = vmatpush2.bf16.msra.mxu0 0
          %10661 = vmatprep.subr.bf16.mxu0 0
          %10662 = vmatpush2.bf16.msra.mxu0 0
          %10663 = vmatprep.subr.bf16.mxu0 0
          %10664 = vmatpush2.bf16.msra.mxu0 0
          %10665 = vmatprep.subr.bf16.mxu0 0
          %10666 = vmatpush2.bf16.msra.mxu0 0
          %10667 = vmatprep.subr.bf16.mxu0 0
          %10668 = vmatpush2.bf16.msra.mxu0 0
          %10669 = vmatprep.mubr.bf16.mxu0 0
          %10670 = vmatmul.mubr.bf16.gmra.mxu0 %v10389
          %v10671 = vpop.f32.mrf.mxu0
          %v10672 = vadd.f32 %v10631, %v10671
          %v10673 = vpop.f32.mrf.mxu0
          %v10674 = vadd.f32 %v10633, %v10673
          %v10675 = vpop.f32.mrf.mxu0
          %v10676 = vpop.f32.mrf.mxu0
          %10677 = vdwg.mxu0
          %10678 = vmatprep.subr.bf16.mxu0 %v9257
          %10679 = vmatpush1.bf16.msra.mxu0 %v9256
          %10680 = vmatprep.subr.bf16.mxu0 %v9251
          %10681 = vmatpush1.bf16.msra.mxu0 %v9250
          %10682 = vmatprep.subr.bf16.mxu0 %v9245
          %10683 = vmatpush1.bf16.msra.mxu0 %v9244
          %10684 = vmatprep.subr.bf16.mxu0 %v9239
          %10685 = vmatpush1.bf16.msra.mxu0 %v9238
          %10686 = vmatprep.subr.bf16.mxu0 %v9233
          %10687 = vmatpush1.bf16.msra.mxu0 %v9232
          %10688 = vmatprep.subr.bf16.mxu0 %v9227
          %10689 = vmatpush1.bf16.msra.mxu0 %v9226
          %10690 = vmatprep.subr.bf16.mxu0 %v9221
          %10691 = vmatpush1.bf16.msra.mxu0 %v9220
          %10692 = vmatprep.subr.bf16.mxu0 %v9215
          %10693 = vmatpush1.bf16.msra.mxu0 %v9214
          %10694 = vmatprep.subr.bf16.mxu0 %v9305
          %10695 = vmatpush2.bf16.msra.mxu0 %v9304
          %10696 = vmatprep.subr.bf16.mxu0 %v9299
          %10697 = vmatpush2.bf16.msra.mxu0 %v9298
          %10698 = vmatprep.subr.bf16.mxu0 %v9293
          %10699 = vmatpush2.bf16.msra.mxu0 %v9292
          %10700 = vmatprep.subr.bf16.mxu0 %v9287
          %10701 = vmatpush2.bf16.msra.mxu0 %v9286
          %10702 = vmatprep.subr.bf16.mxu0 %v9281
          %10703 = vmatpush2.bf16.msra.mxu0 %v9280
          %10704 = vmatprep.subr.bf16.mxu0 %v9275
          %10705 = vmatpush2.bf16.msra.mxu0 %v9274
          %10706 = vmatprep.subr.bf16.mxu0 %v9269
          %10707 = vmatpush2.bf16.msra.mxu0 %v9268
          %10708 = vmatprep.subr.bf16.mxu0 %v9263
          %10709 = vmatpush2.bf16.msra.mxu0 %v9262
          %10710 = vmatprep.mubr.bf16.mxu0 %v6816
          %10711 = vmatmul.mubr.bf16.gmra.mxu0 %v6815
          %v10712 = vpop.f32.mrf.mxu0
          %v10713 = vadd.f32 %v7429, %v10712
          %v10714 = vpop.f32.mrf.mxu0
          %v10715 = vadd.f32 %v7433, %v10714
          %v10716 = vpop.f32.mrf.mxu0
          %v10717 = vpop.f32.mrf.mxu0
          %10718 = vdwg.mxu0
          %10719 = vmatprep.subr.bf16.mxu0 %v9353
          %10720 = vmatpush1.bf16.msra.mxu0 %v9352
          %10721 = vmatprep.subr.bf16.mxu0 %v9347
          %10722 = vmatpush1.bf16.msra.mxu0 %v9346
          %10723 = vmatprep.subr.bf16.mxu0 %v9341
          %10724 = vmatpush1.bf16.msra.mxu0 %v9340
          %10725 = vmatprep.subr.bf16.mxu0 %v9335
          %10726 = vmatpush1.bf16.msra.mxu0 %v9334
          %10727 = vmatprep.subr.bf16.mxu0 %v9329
          %10728 = vmatpush1.bf16.msra.mxu0 %v9328
          %10729 = vmatprep.subr.bf16.mxu0 %v9323
          %10730 = vmatpush1.bf16.msra.mxu0 %v9322
          %10731 = vmatprep.subr.bf16.mxu0 %v9317
          %10732 = vmatpush1.bf16.msra.mxu0 %v9316
          %10733 = vmatprep.subr.bf16.mxu0 %v9311
          %10734 = vmatpush1.bf16.msra.mxu0 %v9310
          %10735 = vmatprep.subr.bf16.mxu0 %v9401
          %10736 = vmatpush2.bf16.msra.mxu0 %v9400
          %10737 = vmatprep.subr.bf16.mxu0 %v9395
          %10738 = vmatpush2.bf16.msra.mxu0 %v9394
          %10739 = vmatprep.subr.bf16.mxu0 %v9389
          %10740 = vmatpush2.bf16.msra.mxu0 %v9388
          %10741 = vmatprep.subr.bf16.mxu0 %v9383
          %10742 = vmatpush2.bf16.msra.mxu0 %v9382
          %10743 = vmatprep.subr.bf16.mxu0 %v9377
          %10744 = vmatpush2.bf16.msra.mxu0 %v9376
          %10745 = vmatprep.subr.bf16.mxu0 %v9371
          %10746 = vmatpush2.bf16.msra.mxu0 %v9370
          %10747 = vmatprep.subr.bf16.mxu0 %v9365
          %10748 = vmatpush2.bf16.msra.mxu0 %v9364
          %10749 = vmatprep.subr.bf16.mxu0 %v9359
          %10750 = vmatpush2.bf16.msra.mxu0 %v9358
          %10751 = vmatprep.mubr.bf16.mxu0 %v6818
          %10752 = vmatmul.mubr.bf16.gmra.mxu0 %v6817
          %v10753 = vpop.f32.mrf.mxu0
          %v10754 = vadd.f32 %v10713, %v10753
          %v10755 = vpop.f32.mrf.mxu0
          %v10756 = vadd.f32 %v10715, %v10755
          %v10757 = vpop.f32.mrf.mxu0
          %v10758 = vpop.f32.mrf.mxu0
          %10759 = vdwg.mxu0
          %10760 = vmatprep.subr.bf16.mxu0 %v9449
          %10761 = vmatpush1.bf16.msra.mxu0 %v9448
          %10762 = vmatprep.subr.bf16.mxu0 %v9443
          %10763 = vmatpush1.bf16.msra.mxu0 %v9442
          %10764 = vmatprep.subr.bf16.mxu0 %v9437
          %10765 = vmatpush1.bf16.msra.mxu0 %v9436
          %10766 = vmatprep.subr.bf16.mxu0 %v9431
          %10767 = vmatpush1.bf16.msra.mxu0 %v9430
          %10768 = vmatprep.subr.bf16.mxu0 %v9425
          %10769 = vmatpush1.bf16.msra.mxu0 %v9424
          %10770 = vmatprep.subr.bf16.mxu0 %v9419
          %10771 = vmatpush1.bf16.msra.mxu0 %v9418
          %10772 = vmatprep.subr.bf16.mxu0 %v9413
          %10773 = vmatpush1.bf16.msra.mxu0 %v9412
          %10774 = vmatprep.subr.bf16.mxu0 %v9407
          %10775 = vmatpush1.bf16.msra.mxu0 %v9406
          %10776 = vmatprep.subr.bf16.mxu0 %v9497
          %10777 = vmatpush2.bf16.msra.mxu0 %v9496
          %10778 = vmatprep.subr.bf16.mxu0 %v9491
          %10779 = vmatpush2.bf16.msra.mxu0 %v9490
          %10780 = vmatprep.subr.bf16.mxu0 %v9485
          %10781 = vmatpush2.bf16.msra.mxu0 %v9484
          %10782 = vmatprep.subr.bf16.mxu0 %v9479
          %10783 = vmatpush2.bf16.msra.mxu0 %v9478
          %10784 = vmatprep.subr.bf16.mxu0 %v9473
          %10785 = vmatpush2.bf16.msra.mxu0 %v9472
          %10786 = vmatprep.subr.bf16.mxu0 %v9467
          %10787 = vmatpush2.bf16.msra.mxu0 %v9466
          %10788 = vmatprep.subr.bf16.mxu0 %v9461
          %10789 = vmatpush2.bf16.msra.mxu0 %v9460
          %10790 = vmatprep.subr.bf16.mxu0 %v9455
          %10791 = vmatpush2.bf16.msra.mxu0 %v9454
          %10792 = vmatprep.mubr.bf16.mxu0 %v6820
          %10793 = vmatmul.mubr.bf16.gmra.mxu0 %v6819
          %v10794 = vpop.f32.mrf.mxu0
          %v10795 = vadd.f32 %v10754, %v10794
          %v10796 = vpop.f32.mrf.mxu0
          %v10797 = vadd.f32 %v10756, %v10796
          %v10798 = vpop.f32.mrf.mxu0
          %v10799 = vpop.f32.mrf.mxu0
          %10800 = vdwg.mxu0
          %10801 = vmatprep.subr.bf16.mxu0 %v9545
          %10802 = vmatpush1.bf16.msra.mxu0 %v9544
          %10803 = vmatprep.subr.bf16.mxu0 %v9539
          %10804 = vmatpush1.bf16.msra.mxu0 %v9538
          %10805 = vmatprep.subr.bf16.mxu0 %v9533
          %10806 = vmatpush1.bf16.msra.mxu0 %v9532
          %10807 = vmatprep.subr.bf16.mxu0 %v9527
          %10808 = vmatpush1.bf16.msra.mxu0 %v9526
          %10809 = vmatprep.subr.bf16.mxu0 %v9521
          %10810 = vmatpush1.bf16.msra.mxu0 %v9520
          %10811 = vmatprep.subr.bf16.mxu0 %v9515
          %10812 = vmatpush1.bf16.msra.mxu0 %v9514
          %10813 = vmatprep.subr.bf16.mxu0 %v9509
          %10814 = vmatpush1.bf16.msra.mxu0 %v9508
          %10815 = vmatprep.subr.bf16.mxu0 %v9503
          %10816 = vmatpush1.bf16.msra.mxu0 %v9502
          %10817 = vmatprep.subr.bf16.mxu0 %v9593
          %10818 = vmatpush2.bf16.msra.mxu0 %v9592
          %10819 = vmatprep.subr.bf16.mxu0 %v9587
          %10820 = vmatpush2.bf16.msra.mxu0 %v9586
          %10821 = vmatprep.subr.bf16.mxu0 %v9581
          %10822 = vmatpush2.bf16.msra.mxu0 %v9580
          %10823 = vmatprep.subr.bf16.mxu0 %v9575
          %10824 = vmatpush2.bf16.msra.mxu0 %v9574
          %10825 = vmatprep.subr.bf16.mxu0 %v9569
          %10826 = vmatpush2.bf16.msra.mxu0 %v9568
          %10827 = vmatprep.subr.bf16.mxu0 %v9563
          %10828 = vmatpush2.bf16.msra.mxu0 %v9562
          %10829 = vmatprep.subr.bf16.mxu0 %v9557
          %10830 = vmatpush2.bf16.msra.mxu0 %v9556
          %10831 = vmatprep.subr.bf16.mxu0 %v9551
          %10832 = vmatpush2.bf16.msra.mxu0 %v9550
          %10833 = vmatprep.mubr.bf16.mxu0 %v6822
          %10834 = vmatmul.mubr.bf16.gmra.mxu0 %v6821
          %v10835 = vpop.f32.mrf.mxu0
          %v10836 = vadd.f32 %v10795, %v10835
          %v10837 = vpop.f32.mrf.mxu0
          %v10838 = vadd.f32 %v10797, %v10837
          %v10839 = vpop.f32.mrf.mxu0
          %v10840 = vpop.f32.mrf.mxu0
          %10841 = vdwg.mxu0
          %10842 = vmatprep.subr.bf16.mxu0 %v9641
          %10843 = vmatpush1.bf16.msra.mxu0 %v9640
          %10844 = vmatprep.subr.bf16.mxu0 %v9635
          %10845 = vmatpush1.bf16.msra.mxu0 %v9634
          %10846 = vmatprep.subr.bf16.mxu0 %v9629
          %10847 = vmatpush1.bf16.msra.mxu0 %v9628
          %10848 = vmatprep.subr.bf16.mxu0 %v9623
          %10849 = vmatpush1.bf16.msra.mxu0 %v9622
          %10850 = vmatprep.subr.bf16.mxu0 %v9617
          %10851 = vmatpush1.bf16.msra.mxu0 %v9616
          %10852 = vmatprep.subr.bf16.mxu0 %v9611
          %10853 = vmatpush1.bf16.msra.mxu0 %v9610
          %10854 = vmatprep.subr.bf16.mxu0 %v9605
          %10855 = vmatpush1.bf16.msra.mxu0 %v9604
          %10856 = vmatprep.subr.bf16.mxu0 %v9599
          %10857 = vmatpush1.bf16.msra.mxu0 %v9598
          %10858 = vmatprep.subr.bf16.mxu0 %v9689
          %10859 = vmatpush2.bf16.msra.mxu0 %v9688
          %10860 = vmatprep.subr.bf16.mxu0 %v9683
          %10861 = vmatpush2.bf16.msra.mxu0 %v9682
          %10862 = vmatprep.subr.bf16.mxu0 %v9677
          %10863 = vmatpush2.bf16.msra.mxu0 %v9676
          %10864 = vmatprep.subr.bf16.mxu0 %v9671
          %10865 = vmatpush2.bf16.msra.mxu0 %v9670
          %10866 = vmatprep.subr.bf16.mxu0 %v9665
          %10867 = vmatpush2.bf16.msra.mxu0 %v9664
          %10868 = vmatprep.subr.bf16.mxu0 %v9659
          %10869 = vmatpush2.bf16.msra.mxu0 %v9658
          %10870 = vmatprep.subr.bf16.mxu0 %v9653
          %10871 = vmatpush2.bf16.msra.mxu0 %v9652
          %10872 = vmatprep.subr.bf16.mxu0 %v9647
          %10873 = vmatpush2.bf16.msra.mxu0 %v9646
          %10874 = vmatprep.mubr.bf16.mxu0 %v6824
          %10875 = vmatmul.mubr.bf16.gmra.mxu0 %v6823
          %v10876 = vpop.f32.mrf.mxu0
          %v10877 = vadd.f32 %v10836, %v10876
          %v10878 = vpop.f32.mrf.mxu0
          %v10879 = vadd.f32 %v10838, %v10878
          %v10880 = vpop.f32.mrf.mxu0
          %v10881 = vpop.f32.mrf.mxu0
          %10882 = vdwg.mxu0
          %10883 = vmatprep.subr.bf16.mxu0 %v9737
          %10884 = vmatpush1.bf16.msra.mxu0 %v9736
          %10885 = vmatprep.subr.bf16.mxu0 %v9731
          %10886 = vmatpush1.bf16.msra.mxu0 %v9730
          %10887 = vmatprep.subr.bf16.mxu0 %v9725
          %10888 = vmatpush1.bf16.msra.mxu0 %v9724
          %10889 = vmatprep.subr.bf16.mxu0 %v9719
          %10890 = vmatpush1.bf16.msra.mxu0 %v9718
          %10891 = vmatprep.subr.bf16.mxu0 %v9713
          %10892 = vmatpush1.bf16.msra.mxu0 %v9712
          %10893 = vmatprep.subr.bf16.mxu0 %v9707
          %10894 = vmatpush1.bf16.msra.mxu0 %v9706
          %10895 = vmatprep.subr.bf16.mxu0 %v9701
          %10896 = vmatpush1.bf16.msra.mxu0 %v9700
          %10897 = vmatprep.subr.bf16.mxu0 %v9695
          %10898 = vmatpush1.bf16.msra.mxu0 %v9694
          %10899 = vmatprep.subr.bf16.mxu0 %v9785
          %10900 = vmatpush2.bf16.msra.mxu0 %v9784
          %10901 = vmatprep.subr.bf16.mxu0 %v9779
          %10902 = vmatpush2.bf16.msra.mxu0 %v9778
          %10903 = vmatprep.subr.bf16.mxu0 %v9773
          %10904 = vmatpush2.bf16.msra.mxu0 %v9772
          %10905 = vmatprep.subr.bf16.mxu0 %v9767
          %10906 = vmatpush2.bf16.msra.mxu0 %v9766
          %10907 = vmatprep.subr.bf16.mxu0 %v9761
          %10908 = vmatpush2.bf16.msra.mxu0 %v9760
          %10909 = vmatprep.subr.bf16.mxu0 %v9755
          %10910 = vmatpush2.bf16.msra.mxu0 %v9754
          %10911 = vmatprep.subr.bf16.mxu0 %v9749
          %10912 = vmatpush2.bf16.msra.mxu0 %v9748
          %10913 = vmatprep.subr.bf16.mxu0 %v9743
          %10914 = vmatpush2.bf16.msra.mxu0 %v9742
          %10915 = vmatprep.mubr.bf16.mxu0 %v6826
          %10916 = vmatmul.mubr.bf16.gmra.mxu0 %v6825
          %v10917 = vpop.f32.mrf.mxu0
          %v10918 = vadd.f32 %v10877, %v10917
          %v10919 = vpop.f32.mrf.mxu0
          %v10920 = vadd.f32 %v10879, %v10919
          %v10921 = vpop.f32.mrf.mxu0
          %v10922 = vpop.f32.mrf.mxu0
          %10923 = vdwg.mxu0
          %10924 = vmatprep.subr.bf16.mxu0 0
          %10925 = vmatpush1.bf16.msra.mxu0 0
          %10926 = vmatprep.subr.bf16.mxu0 0
          %10927 = vmatpush1.bf16.msra.mxu0 0
          %10928 = vmatprep.subr.bf16.mxu0 0
          %10929 = vmatpush1.bf16.msra.mxu0 0
          %10930 = vmatprep.subr.bf16.mxu0 0
          %10931 = vmatpush1.bf16.msra.mxu0 0
          %10932 = vmatprep.subr.bf16.mxu0 0
          %10933 = vmatpush1.bf16.msra.mxu0 0
          %10934 = vmatprep.subr.bf16.mxu0 0
          %10935 = vmatpush1.bf16.msra.mxu0 0
          %10936 = vmatprep.subr.bf16.mxu0 %v9797
          %10937 = vmatpush1.bf16.msra.mxu0 %v9796
          %10938 = vmatprep.subr.bf16.mxu0 %v9791
          %10939 = vmatpush1.bf16.msra.mxu0 %v9790
          %10940 = vmatprep.subr.bf16.mxu0 0
          %10941 = vmatpush2.bf16.msra.mxu0 0
          %10942 = vmatprep.subr.bf16.mxu0 0
          %10943 = vmatpush2.bf16.msra.mxu0 0
          %10944 = vmatprep.subr.bf16.mxu0 0
          %10945 = vmatpush2.bf16.msra.mxu0 0
          %10946 = vmatprep.subr.bf16.mxu0 0
          %10947 = vmatpush2.bf16.msra.mxu0 0
          %10948 = vmatprep.subr.bf16.mxu0 0
          %10949 = vmatpush2.bf16.msra.mxu0 0
          %10950 = vmatprep.subr.bf16.mxu0 0
          %10951 = vmatpush2.bf16.msra.mxu0 0
          %10952 = vmatprep.subr.bf16.mxu0 0
          %10953 = vmatpush2.bf16.msra.mxu0 0
          %10954 = vmatprep.subr.bf16.mxu0 0
          %10955 = vmatpush2.bf16.msra.mxu0 0
          %10956 = vmatprep.mubr.bf16.mxu0 0
          %10957 = vmatmul.mubr.bf16.gmra.mxu0 %v10389
          %v10958 = vpop.f32.mrf.mxu0
          %v10959 = vadd.f32 %v10918, %v10958
          %v10960 = vpop.f32.mrf.mxu0
          %v10961 = vadd.f32 %v10920, %v10960
          %v10962 = vpop.f32.mrf.mxu0
          %v10963 = vpop.f32.mrf.mxu0
          %10964 = vdwg.mxu0
          %10965 = vmatprep.subr.bf16.mxu0 %v9259
          %10966 = vmatpush1.bf16.msra.mxu0 %v9258
          %10967 = vmatprep.subr.bf16.mxu0 %v9253
          %10968 = vmatpush1.bf16.msra.mxu0 %v9252
          %10969 = vmatprep.subr.bf16.mxu0 %v9247
          %10970 = vmatpush1.bf16.msra.mxu0 %v9246
          %10971 = vmatprep.subr.bf16.mxu0 %v9241
          %10972 = vmatpush1.bf16.msra.mxu0 %v9240
          %10973 = vmatprep.subr.bf16.mxu0 %v9235
          %10974 = vmatpush1.bf16.msra.mxu0 %v9234
          %10975 = vmatprep.subr.bf16.mxu0 %v9229
          %10976 = vmatpush1.bf16.msra.mxu0 %v9228
          %10977 = vmatprep.subr.bf16.mxu0 %v9223
          %10978 = vmatpush1.bf16.msra.mxu0 %v9222
          %10979 = vmatprep.subr.bf16.mxu0 %v9217
          %10980 = vmatpush1.bf16.msra.mxu0 %v9216
          %10981 = vmatprep.subr.bf16.mxu0 %v9307
          %10982 = vmatpush2.bf16.msra.mxu0 %v9306
          %10983 = vmatprep.subr.bf16.mxu0 %v9301
          %10984 = vmatpush2.bf16.msra.mxu0 %v9300
          %10985 = vmatprep.subr.bf16.mxu0 %v9295
          %10986 = vmatpush2.bf16.msra.mxu0 %v9294
          %10987 = vmatprep.subr.bf16.mxu0 %v9289
          %10988 = vmatpush2.bf16.msra.mxu0 %v9288
          %10989 = vmatprep.subr.bf16.mxu0 %v9283
          %10990 = vmatpush2.bf16.msra.mxu0 %v9282
          %10991 = vmatprep.subr.bf16.mxu0 %v9277
          %10992 = vmatpush2.bf16.msra.mxu0 %v9276
          %10993 = vmatprep.subr.bf16.mxu0 %v9271
          %10994 = vmatpush2.bf16.msra.mxu0 %v9270
          %10995 = vmatprep.subr.bf16.mxu0 %v9265
          %10996 = vmatpush2.bf16.msra.mxu0 %v9264
          %10997 = vmatprep.mubr.bf16.mxu0 %v6816
          %10998 = vmatmul.mubr.bf16.gmra.mxu0 %v6815
          %v10999 = vpop.f32.mrf.mxu0
          %v11000 = vadd.f32 %v7437, %v10999
          %v11001 = vpop.f32.mrf.mxu0
          %v11002 = vadd.f32 %v7441, %v11001
          %v11003 = vpop.f32.mrf.mxu0
          %v11004 = vpop.f32.mrf.mxu0
          %11005 = vdwg.mxu0
          %11006 = vmatprep.subr.bf16.mxu0 %v9355
          %11007 = vmatpush1.bf16.msra.mxu0 %v9354
          %11008 = vmatprep.subr.bf16.mxu0 %v9349
          %11009 = vmatpush1.bf16.msra.mxu0 %v9348
          %11010 = vmatprep.subr.bf16.mxu0 %v9343
          %11011 = vmatpush1.bf16.msra.mxu0 %v9342
          %11012 = vmatprep.subr.bf16.mxu0 %v9337
          %11013 = vmatpush1.bf16.msra.mxu0 %v9336
          %11014 = vmatprep.subr.bf16.mxu0 %v9331
          %11015 = vmatpush1.bf16.msra.mxu0 %v9330
          %11016 = vmatprep.subr.bf16.mxu0 %v9325
          %11017 = vmatpush1.bf16.msra.mxu0 %v9324
          %11018 = vmatprep.subr.bf16.mxu0 %v9319
          %11019 = vmatpush1.bf16.msra.mxu0 %v9318
          %11020 = vmatprep.subr.bf16.mxu0 %v9313
          %11021 = vmatpush1.bf16.msra.mxu0 %v9312
          %11022 = vmatprep.subr.bf16.mxu0 %v9403
          %11023 = vmatpush2.bf16.msra.mxu0 %v9402
          %11024 = vmatprep.subr.bf16.mxu0 %v9397
          %11025 = vmatpush2.bf16.msra.mxu0 %v9396
          %11026 = vmatprep.subr.bf16.mxu0 %v9391
          %11027 = vmatpush2.bf16.msra.mxu0 %v9390
          %11028 = vmatprep.subr.bf16.mxu0 %v9385
          %11029 = vmatpush2.bf16.msra.mxu0 %v9384
          %11030 = vmatprep.subr.bf16.mxu0 %v9379
          %11031 = vmatpush2.bf16.msra.mxu0 %v9378
          %11032 = vmatprep.subr.bf16.mxu0 %v9373
          %11033 = vmatpush2.bf16.msra.mxu0 %v9372
          %11034 = vmatprep.subr.bf16.mxu0 %v9367
          %11035 = vmatpush2.bf16.msra.mxu0 %v9366
          %11036 = vmatprep.subr.bf16.mxu0 %v9361
          %11037 = vmatpush2.bf16.msra.mxu0 %v9360
          %11038 = vmatprep.mubr.bf16.mxu0 %v6818
          %11039 = vmatmul.mubr.bf16.gmra.mxu0 %v6817
          %v11040 = vpop.f32.mrf.mxu0
          %v11041 = vadd.f32 %v11000, %v11040
          %v11042 = vpop.f32.mrf.mxu0
          %v11043 = vadd.f32 %v11002, %v11042
          %v11044 = vpop.f32.mrf.mxu0
          %v11045 = vpop.f32.mrf.mxu0
          %11046 = vdwg.mxu0
          %11047 = vmatprep.subr.bf16.mxu0 %v9451
          %11048 = vmatpush1.bf16.msra.mxu0 %v9450
          %11049 = vmatprep.subr.bf16.mxu0 %v9445
          %11050 = vmatpush1.bf16.msra.mxu0 %v9444
          %11051 = vmatprep.subr.bf16.mxu0 %v9439
          %11052 = vmatpush1.bf16.msra.mxu0 %v9438
          %11053 = vmatprep.subr.bf16.mxu0 %v9433
          %11054 = vmatpush1.bf16.msra.mxu0 %v9432
          %11055 = vmatprep.subr.bf16.mxu0 %v9427
          %11056 = vmatpush1.bf16.msra.mxu0 %v9426
          %11057 = vmatprep.subr.bf16.mxu0 %v9421
          %11058 = vmatpush1.bf16.msra.mxu0 %v9420
          %11059 = vmatprep.subr.bf16.mxu0 %v9415
          %11060 = vmatpush1.bf16.msra.mxu0 %v9414
          %11061 = vmatprep.subr.bf16.mxu0 %v9409
          %11062 = vmatpush1.bf16.msra.mxu0 %v9408
          %11063 = vmatprep.subr.bf16.mxu0 %v9499
          %11064 = vmatpush2.bf16.msra.mxu0 %v9498
          %11065 = vmatprep.subr.bf16.mxu0 %v9493
          %11066 = vmatpush2.bf16.msra.mxu0 %v9492
          %11067 = vmatprep.subr.bf16.mxu0 %v9487
          %11068 = vmatpush2.bf16.msra.mxu0 %v9486
          %11069 = vmatprep.subr.bf16.mxu0 %v9481
          %11070 = vmatpush2.bf16.msra.mxu0 %v9480
          %11071 = vmatprep.subr.bf16.mxu0 %v9475
          %11072 = vmatpush2.bf16.msra.mxu0 %v9474
          %11073 = vmatprep.subr.bf16.mxu0 %v9469
          %11074 = vmatpush2.bf16.msra.mxu0 %v9468
          %11075 = vmatprep.subr.bf16.mxu0 %v9463
          %11076 = vmatpush2.bf16.msra.mxu0 %v9462
          %11077 = vmatprep.subr.bf16.mxu0 %v9457
          %11078 = vmatpush2.bf16.msra.mxu0 %v9456
          %11079 = vmatprep.mubr.bf16.mxu0 %v6820
          %11080 = vmatmul.mubr.bf16.gmra.mxu0 %v6819
          %v11081 = vpop.f32.mrf.mxu0
          %v11082 = vadd.f32 %v11041, %v11081
          %v11083 = vpop.f32.mrf.mxu0
          %v11084 = vadd.f32 %v11043, %v11083
          %v11085 = vpop.f32.mrf.mxu0
          %v11086 = vpop.f32.mrf.mxu0
          %11087 = vdwg.mxu0
          %11088 = vmatprep.subr.bf16.mxu0 %v9547
          %11089 = vmatpush1.bf16.msra.mxu0 %v9546
          %11090 = vmatprep.subr.bf16.mxu0 %v9541
          %11091 = vmatpush1.bf16.msra.mxu0 %v9540
          %11092 = vmatprep.subr.bf16.mxu0 %v9535
          %11093 = vmatpush1.bf16.msra.mxu0 %v9534
          %11094 = vmatprep.subr.bf16.mxu0 %v9529
          %11095 = vmatpush1.bf16.msra.mxu0 %v9528
          %11096 = vmatprep.subr.bf16.mxu0 %v9523
          %11097 = vmatpush1.bf16.msra.mxu0 %v9522
          %11098 = vmatprep.subr.bf16.mxu0 %v9517
          %11099 = vmatpush1.bf16.msra.mxu0 %v9516
          %11100 = vmatprep.subr.bf16.mxu0 %v9511
          %11101 = vmatpush1.bf16.msra.mxu0 %v9510
          %11102 = vmatprep.subr.bf16.mxu0 %v9505
          %11103 = vmatpush1.bf16.msra.mxu0 %v9504
          %11104 = vmatprep.subr.bf16.mxu0 %v9595
          %11105 = vmatpush2.bf16.msra.mxu0 %v9594
          %11106 = vmatprep.subr.bf16.mxu0 %v9589
          %11107 = vmatpush2.bf16.msra.mxu0 %v9588
          %11108 = vmatprep.subr.bf16.mxu0 %v9583
          %11109 = vmatpush2.bf16.msra.mxu0 %v9582
          %11110 = vmatprep.subr.bf16.mxu0 %v9577
          %11111 = vmatpush2.bf16.msra.mxu0 %v9576
          %11112 = vmatprep.subr.bf16.mxu0 %v9571
          %11113 = vmatpush2.bf16.msra.mxu0 %v9570
          %11114 = vmatprep.subr.bf16.mxu0 %v9565
          %11115 = vmatpush2.bf16.msra.mxu0 %v9564
          %11116 = vmatprep.subr.bf16.mxu0 %v9559
          %11117 = vmatpush2.bf16.msra.mxu0 %v9558
          %11118 = vmatprep.subr.bf16.mxu0 %v9553
          %11119 = vmatpush2.bf16.msra.mxu0 %v9552
          %11120 = vmatprep.mubr.bf16.mxu0 %v6822
          %11121 = vmatmul.mubr.bf16.gmra.mxu0 %v6821
          %v11122 = vpop.f32.mrf.mxu0
          %v11123 = vadd.f32 %v11082, %v11122
          %v11124 = vpop.f32.mrf.mxu0
          %v11125 = vadd.f32 %v11084, %v11124
          %v11126 = vpop.f32.mrf.mxu0
          %v11127 = vpop.f32.mrf.mxu0
          %11128 = vdwg.mxu0
          %11129 = vmatprep.subr.bf16.mxu0 %v9643
          %11130 = vmatpush1.bf16.msra.mxu0 %v9642
          %11131 = vmatprep.subr.bf16.mxu0 %v9637
          %11132 = vmatpush1.bf16.msra.mxu0 %v9636
          %11133 = vmatprep.subr.bf16.mxu0 %v9631
          %11134 = vmatpush1.bf16.msra.mxu0 %v9630
          %11135 = vmatprep.subr.bf16.mxu0 %v9625
          %11136 = vmatpush1.bf16.msra.mxu0 %v9624
          %11137 = vmatprep.subr.bf16.mxu0 %v9619
          %11138 = vmatpush1.bf16.msra.mxu0 %v9618
          %11139 = vmatprep.subr.bf16.mxu0 %v9613
          %11140 = vmatpush1.bf16.msra.mxu0 %v9612
          %11141 = vmatprep.subr.bf16.mxu0 %v9607
          %11142 = vmatpush1.bf16.msra.mxu0 %v9606
          %11143 = vmatprep.subr.bf16.mxu0 %v9601
          %11144 = vmatpush1.bf16.msra.mxu0 %v9600
          %11145 = vmatprep.subr.bf16.mxu0 %v9691
          %11146 = vmatpush2.bf16.msra.mxu0 %v9690
          %11147 = vmatprep.subr.bf16.mxu0 %v9685
          %11148 = vmatpush2.bf16.msra.mxu0 %v9684
          %11149 = vmatprep.subr.bf16.mxu0 %v9679
          %11150 = vmatpush2.bf16.msra.mxu0 %v9678
          %11151 = vmatprep.subr.bf16.mxu0 %v9673
          %11152 = vmatpush2.bf16.msra.mxu0 %v9672
          %11153 = vmatprep.subr.bf16.mxu0 %v9667
          %11154 = vmatpush2.bf16.msra.mxu0 %v9666
          %11155 = vmatprep.subr.bf16.mxu0 %v9661
          %11156 = vmatpush2.bf16.msra.mxu0 %v9660
          %11157 = vmatprep.subr.bf16.mxu0 %v9655
          %11158 = vmatpush2.bf16.msra.mxu0 %v9654
          %11159 = vmatprep.subr.bf16.mxu0 %v9649
          %11160 = vmatpush2.bf16.msra.mxu0 %v9648
          %11161 = vmatprep.mubr.bf16.mxu0 %v6824
          %11162 = vmatmul.mubr.bf16.gmra.mxu0 %v6823
          %v11163 = vpop.f32.mrf.mxu0
          %v11164 = vadd.f32 %v11123, %v11163
          %v11165 = vpop.f32.mrf.mxu0
          %v11166 = vadd.f32 %v11125, %v11165
          %v11167 = vpop.f32.mrf.mxu0
          %v11168 = vpop.f32.mrf.mxu0
          %11169 = vdwg.mxu0
          %11170 = vmatprep.subr.bf16.mxu0 %v9739
          %11171 = vmatpush1.bf16.msra.mxu0 %v9738
          %11172 = vmatprep.subr.bf16.mxu0 %v9733
          %11173 = vmatpush1.bf16.msra.mxu0 %v9732
          %11174 = vmatprep.subr.bf16.mxu0 %v9727
          %11175 = vmatpush1.bf16.msra.mxu0 %v9726
          %11176 = vmatprep.subr.bf16.mxu0 %v9721
          %11177 = vmatpush1.bf16.msra.mxu0 %v9720
          %11178 = vmatprep.subr.bf16.mxu0 %v9715
          %11179 = vmatpush1.bf16.msra.mxu0 %v9714
          %11180 = vmatprep.subr.bf16.mxu0 %v9709
          %11181 = vmatpush1.bf16.msra.mxu0 %v9708
          %11182 = vmatprep.subr.bf16.mxu0 %v9703
          %11183 = vmatpush1.bf16.msra.mxu0 %v9702
          %11184 = vmatprep.subr.bf16.mxu0 %v9697
          %11185 = vmatpush1.bf16.msra.mxu0 %v9696
          %11186 = vmatprep.subr.bf16.mxu0 %v9787
          %11187 = vmatpush2.bf16.msra.mxu0 %v9786
          %11188 = vmatprep.subr.bf16.mxu0 %v9781
          %11189 = vmatpush2.bf16.msra.mxu0 %v9780
          %11190 = vmatprep.subr.bf16.mxu0 %v9775
          %11191 = vmatpush2.bf16.msra.mxu0 %v9774
          %11192 = vmatprep.subr.bf16.mxu0 %v9769
          %11193 = vmatpush2.bf16.msra.mxu0 %v9768
          %11194 = vmatprep.subr.bf16.mxu0 %v9763
          %11195 = vmatpush2.bf16.msra.mxu0 %v9762
          %11196 = vmatprep.subr.bf16.mxu0 %v9757
          %11197 = vmatpush2.bf16.msra.mxu0 %v9756
          %11198 = vmatprep.subr.bf16.mxu0 %v9751
          %11199 = vmatpush2.bf16.msra.mxu0 %v9750
          %11200 = vmatprep.subr.bf16.mxu0 %v9745
          %11201 = vmatpush2.bf16.msra.mxu0 %v9744
          %11202 = vmatprep.mubr.bf16.mxu0 %v6826
          %11203 = vmatmul.mubr.bf16.gmra.mxu0 %v6825
          %v11204 = vpop.f32.mrf.mxu0
          %v11205 = vadd.f32 %v11164, %v11204
          %v11206 = vpop.f32.mrf.mxu0
          %v11207 = vadd.f32 %v11166, %v11206
          %v11208 = vpop.f32.mrf.mxu0
          %v11209 = vpop.f32.mrf.mxu0
          %11210 = vdwg.mxu0
          %11211 = vmatprep.subr.bf16.mxu0 0
          %11212 = vmatpush1.bf16.msra.mxu0 0
          %11213 = vmatprep.subr.bf16.mxu0 0
          %11214 = vmatpush1.bf16.msra.mxu0 0
          %11215 = vmatprep.subr.bf16.mxu0 0
          %11216 = vmatpush1.bf16.msra.mxu0 0
          %11217 = vmatprep.subr.bf16.mxu0 0
          %11218 = vmatpush1.bf16.msra.mxu0 0
          %11219 = vmatprep.subr.bf16.mxu0 0
          %11220 = vmatpush1.bf16.msra.mxu0 0
          %11221 = vmatprep.subr.bf16.mxu0 0
          %11222 = vmatpush1.bf16.msra.mxu0 0
          %11223 = vmatprep.subr.bf16.mxu0 %v9799
          %11224 = vmatpush1.bf16.msra.mxu0 %v9798
          %11225 = vmatprep.subr.bf16.mxu0 %v9793
          %11226 = vmatpush1.bf16.msra.mxu0 %v9792
          %11227 = vmatprep.subr.bf16.mxu0 0
          %11228 = vmatpush2.bf16.msra.mxu0 0
          %11229 = vmatprep.subr.bf16.mxu0 0
          %11230 = vmatpush2.bf16.msra.mxu0 0
          %11231 = vmatprep.subr.bf16.mxu0 0
          %11232 = vmatpush2.bf16.msra.mxu0 0
          %11233 = vmatprep.subr.bf16.mxu0 0
          %11234 = vmatpush2.bf16.msra.mxu0 0
          %11235 = vmatprep.subr.bf16.mxu0 0
          %11236 = vmatpush2.bf16.msra.mxu0 0
          %11237 = vmatprep.subr.bf16.mxu0 0
          %11238 = vmatpush2.bf16.msra.mxu0 0
          %11239 = vmatprep.subr.bf16.mxu0 0
          %11240 = vmatpush2.bf16.msra.mxu0 0
          %11241 = vmatprep.subr.bf16.mxu0 0
          %11242 = vmatpush2.bf16.msra.mxu0 0
          %11243 = vmatprep.mubr.bf16.mxu0 0
          %11244 = vmatmul.mubr.bf16.gmra.mxu0 %v10389
          %v11245 = vpop.f32.mrf.mxu0
          %v11246 = vadd.f32 %v11205, %v11245
          %v11247 = vpop.f32.mrf.mxu0
          %v11248 = vadd.f32 %v11207, %v11247
          %v11249 = vpop.f32.mrf.mxu0
          %v11250 = vpop.f32.mrf.mxu0
          %11251 = vdwg.mxu0
          %v11258 = vcombine.low %v10672, %v10674
          %v11259 = vcombine.low %v10959, %v10961
          %v11261 = vunpack.c.l.s4 1983009808
          %v11262 = vunpack.c.0.s8 %v11261
          %v11263 = vlaneseq
          %v11264 = vshrl.u32 %v11263, 7
          %v11265 = vsub.s32 %v11262, %v11264
          %v11266 = vrot.slane %v11258, %v11265
          %v11268 = vunpack.c.l.s4 1983009808
          %v11269 = vunpack.c.0.s8 %v11268
          %v11270 = vlaneseq
          %v11271 = vshrl.u32 %v11270, 7
          %v11272 = vsub.s32 %v11269, %v11271
          %v11273 = vrot.slane %v11259, %v11272
          %v11274 = vcombine.low %v11266, %v11273
          %v11275 = vcombine.low %v11246, %v11248
          %v11277 = vunpack.c.l.s4 1983009808
          %v11278 = vunpack.c.0.s8 %v11277
          %v11279 = vlaneseq
          %v11280 = vshrl.u32 %v11279, 7
          %v11281 = vsub.s32 %v11278, %v11280
          %v11282 = vrot.slane %v11275, %v11281
          %11285 = vst [vmem:[#allocation26] sm:$0xff] %v11274
          %11286 = vst [vmem:[#allocation26 + $0x8] sm:$0xf] %v11282
        $region163: #{resnet50_bridge_forward.1} parent=98 // pred_fallthru
          _
        // Predicated region
        $region164: #{resnet50_bridge_forward.1} parent=98 // pred_check
          %p11287 = pneg %p374
        $region165: #{resnet50_bridge_forward.1} parent=98 // pred_check_branch
          %11289 = sbr.rel (%p11287) target = $region167
        $region166: #{resnet50_bridge_forward.1} parent=98 // pred_region
          %s11291 = ssub.s32 192, 192
          %11292 = vsyncadd [#allocation7], %s11291
          %s11294 = sshll.u32 [#allocation26], 4
          %s11295 = int_to_ptr.vmem [resolvable:$true] %s11294
          %11297 = dma.vmem_to_hbm [thread:$0]  %s11295, 192, %s15, [#allocation7]
        $region167: #{resnet50_bridge_forward.1} parent=98 // pred_fallthru
          _
        // Predicated region
        $region168: #{resnet50_bridge_forward.1} parent=98 // pred_check
          %p11298 = pneg %p374
        $region169: #{resnet50_bridge_forward.1} parent=98 // pred_check_branch
          %11300 = sbr.rel (%p11298) target = $region171
        $region170: #{resnet50_bridge_forward.1} parent=98 // pred_region
          %11301 = dma.done [#allocation7], 192
        $region171: #{resnet50_bridge_forward.1} parent=98 // pred_fallthru
          _
      $region99: #{resnet50_bridge_forward.1} parent=5 // pred_fallthru
        _
      %p11302 = scmp.le.s32.totalorder 2, %s31
      // Predicated region
      $region172: #{resnet50_bridge_forward.1} parent=5 // pred_check
        %p11303 = pneg %p11302
      $region173: #{resnet50_bridge_forward.1} parent=5 // pred_check_branch
        %11305 = sbr.rel (%p11303) target = $region175
      $region174: #{resnet50_bridge_forward.1} parent=5 // pred_region
        %s11306 = ssub.s32 %s31, 2
      $region175: #{resnet50_bridge_forward.1} parent=5 // pred_fallthru
        _
    $region6: #{resnet50_bridge_forward.1} parent=1 // loop_footer
      %s35 = sadd.s32 1, %s31
    $region7: #{resnet50_bridge_forward.1} parent=1 // loop_footer_branch
      %30 = sbr.rel target = $region3
    $region8: #{resnet50_bridge_forward.1} parent=1 // loop_exit
      _
    %11307 = vsyncpa [#allocation6], 1
    %s11308 = scalar_lea.sflag [#allocation6], 1
    %11309 = vsyncpa %s11308, 1
    %11310 = vsyncpa [#allocation9], 1
    %11311 = vsyncpa [#allocation12], 1
    %11312 = vsyncpa [#allocation15], 1
    %11313 = vsyncpa [#allocation18], 1
    %11314 = vsyncpa [#allocation21], 1
    %11315 = vsyncpa [#allocation24], 1
    %11316 = vsyncpa [#allocation7], 1
    %s11317 = scalar_lea.sflag [#allocation7], 1
    %11318 = vsyncpa %s11317, 1

</llo_original>
